<compile_context>
chip_gen: v7x
topology: tpu7x:2x2x1
jax: 0.10.0
libtpu: 0.0.40
codegen_flags: <defaults>
</compile_context>

<pallas_src>
import functools

import numpy as np
import jax
import jax.numpy as jnp
from jax.experimental import pallas as pl
from jax.experimental.pallas import tpu as pltpu

XYZ_DIM = 3
POS_XYZ_FREQS = 4           # pos_xyz_dim
POS_DIR_FREQS = 2           # pos_dir_dim
IN_XYZ = XYZ_DIM + XYZ_DIM * POS_XYZ_FREQS * 2      # 27
IN_DIR = 3 + 3 * POS_DIR_FREQS * 2                  # 15
HID = 32
DIR_CH = HID + IN_DIR                               # 47
OUT_CH = 4

# Row layout of the fused input-projection result t = M_in @ [xyz; dir] + b_in:
#   rows   0:32  -> xyz linear part (includes b_xyz)
#   rows  32:56  -> xyz trig args   (24 = 12 sin + 12 cos, cos via +pi/2 phase)
#   rows  56:88  -> dir linear part (w20 dir-block, no bias)
#   rows  88:104 -> dir trig args   (16 = 6 sin + 6 cos + 4 zero pad)
T_ROWS = 104
S20_ROWS = 48               # 32 (layer '2' h-part) + 1 (sigma head) + 15 pad

_MAX_TILE = 8192            # points per grid step; peak VMEM ~8 MiB at this size


# ----------------------------------------------------------------------------
# Reference-side positional encoding (PyTorch Embedding ordering).
# ----------------------------------------------------------------------------
def _posenc(x, n_freqs):
    """NeRF Embedding: [x, sin(2^0 x), cos(2^0 x), ..., sin(2^{n-1} x), cos(2^{n-1} x)]."""
    outs = [x]
    for i in range(n_freqs):
        f = jnp.float32(2.0 ** i)
        outs.append(jnp.sin(f * x))
        outs.append(jnp.cos(f * x))
    return jnp.concatenate(outs, axis=-1)


# ----------------------------------------------------------------------------
# Fused Pallas kernel (feature-major: activations are (C, TN), points on lanes)
# ----------------------------------------------------------------------------
def _nerf_kernel(x_ref,
                 m_in_ref, b_in_ref,
                 w_sc_ref,
                 w_hid_ref, b_hid_ref,
                 w_s20_ref, b_s20_ref,
                 w_dsc_ref,
                 w_col_ref, b_col_ref,
                 out_ref):
    f32, bf16 = jnp.float32, jnp.bfloat16

    def mm(w_bf16, act_f32):
        # bf16 MXU operands, f32 accumulation.
        return jnp.dot(w_bf16, act_f32.astype(bf16), preferred_element_type=f32)

    xin = x_ref[...]                                            # (6, TN) f32

    # Fused input projection: one block-diagonal K=6 matmul produces the xyz
    # linear part, the xyz posenc arguments, the dir linear part and the dir
    # posenc arguments in a single (104, TN) slab.  Kept in f32 so the sin
    # arguments (scaled by up to 2^3) stay full precision (624 macs/pt).
    t = (jnp.dot(m_in_ref[...], xin, preferred_element_type=f32)
         + b_in_ref[...])                                       # (104, TN)

    # --- embedding_xyz + layer 'xyz' (27 -> 32) + relu ------------------------
    # cos folded into sin via the +pi/2 phase rows baked into b_in.
    h = jax.nn.relu(t[0:32, :] + mm(w_sc_ref[...], jnp.sin(t[32:56, :])))

    # --- main layers '0' and '1': four (32 -> 32) linear + relu ---------------
    for k in range(4):
        h = jax.nn.relu(mm(w_hid_ref[k], h) + b_hid_ref[k])     # (32, TN)

    # --- fused [layer '2' h-part ; sigma head ; pad]: (48, 32) @ (32, TN) -----
    hs = mm(w_s20_ref[...], h) + b_s20_ref[...]                 # (48, TN)
    out_ref[3:4, :] = jax.nn.softplus(hs[32:33, :])             # sigma row, stored directly
    # TODO(synk): torch.nn.Softplus uses a linear cutover above threshold=20;
    # jax.nn.softplus differs only at float32 noise level there.

    # --- dir branch: hs[0:32] already carries b20; add dir linear + trig ------
    h2 = jax.nn.relu(hs[0:32, :] + t[56:88, :]
                     + mm(w_dsc_ref[...], jnp.sin(t[88:104, :])))  # (32, TN)

    # --- color head (f32, 96 macs/pt) + sigmoid, lane-dense store -------------
    rgb = jax.nn.sigmoid(jnp.dot(w_col_ref[...], h2, preferred_element_type=f32)
                         + b_col_ref[...])                      # (3, TN)
    out_ref[0:3, :] = rgb


# ----------------------------------------------------------------------------
# Parameters (PyTorch nn.Linear layout) + repacking into kernel layout.
# ----------------------------------------------------------------------------
def make_params(key):
    """Deterministic PyTorch-Linear-style init. Weights stored as (in, out); bias as (1, out)."""
    shapes = [
        ("w_xyz", (IN_XYZ, HID)), ("b_xyz", (1, HID)),
        ("w00", (HID, HID)), ("b00", (1, HID)),
        ("w01", (HID, HID)), ("b01", (1, HID)),
        ("w10", (HID, HID)), ("b10", (1, HID)),
        ("w11", (HID, HID)), ("b11", (1, HID)),
        ("w_sig", (HID, 1)), ("b_sig", (1, 1)),
        ("w20", (DIR_CH, HID)), ("b20", (1, HID)),
        ("w_col", (HID, 3)), ("b_col", (1, 3)),
    ]
    params = []
    keys = jax.random.split(key, len(shapes))
    for (name, shp), k in zip(shapes, keys):
        fan_in = shp[0] if name.startswith("w") else shp[1]
        bound = 1.0 / np.sqrt(fan_in)
        params.append(jax.random.uniform(k, shp, jnp.float32, -bound, bound))
    return params


def _scale_mat(n_freqs, rows_pad):
    """(rows_pad, 3) matrix mapping xyz/dir -> stacked [sin-args; cos-args] (freq-major)."""
    f32 = jnp.float32
    blocks = [jnp.eye(XYZ_DIM, dtype=f32) * (2.0 ** i) for i in range(n_freqs)]
    s = jnp.concatenate(blocks, axis=0)                 # (3*n_freqs, 3)
    s2 = jnp.concatenate([s, s], axis=0)                # sin rows then cos rows
    pad = rows_pad - s2.shape[0]
    if pad:
        s2 = jnp.concatenate([s2, jnp.zeros((pad, XYZ_DIM), f32)], axis=0)
    return s2


def _pack_params(params):
    """Repack PyTorch-layout params into the feature-major kernel layout.

    Activations are (C, TN), so weights are transposed to (out, in).  The xyz
    and dir encoders plus the posenc scale factors are folded into a single
    block-diagonal (104, 6) input-projection matrix (f32); sin/cos column
    blocks are packed freq-major; the sigma head is fused into the layer-'2'
    h-part weight (48, 32) with zero padding.  bf16 weights feed the MXU.
    """
    (w_xyz, b_xyz, w00, b00, w01, b01, w10, b10, w11, b11,
     w_sig, b_sig, w20, b20, w_col, b_col) = params
    f32, bf16 = jnp.float32, jnp.bfloat16

    # --- xyz encoder blocks (w_xyz rows: [x, sin f0, cos f0, sin f1, cos f1, ...]) ---
    wt_x = w_xyz[0:3].T                                                  # (32, 3)
    xsin = jnp.concatenate([w_xyz[3 + 6 * i: 6 + 6 * i]
                            for i in range(POS_XYZ_FREQS)], axis=0)      # (12, 32)
    xcos = jnp.concatenate([w_xyz[6 + 6 * i: 9 + 6 * i]
                            for i in range(POS_XYZ_FREQS)], axis=0)      # (12, 32)
    w_sc = jnp.concatenate([xsin, xcos], axis=0).T                       # (32, 24)

    # --- dir encoder blocks (w20 rows 32:47 are the dir-enc columns) ---------
    w20_h, w20_d = w20[:HID], w20[HID:]
    wt_d = w20_d[0:3].T                                                  # (32, 3)
    dsin = jnp.concatenate([w20_d[3 + 6 * i: 6 + 6 * i]
                            for i in range(POS_DIR_FREQS)], axis=0)      # (6, 32)
    dcos = jnp.concatenate([w20_d[6 + 6 * i: 9 + 6 * i]
                            for i in range(POS_DIR_FREQS)], axis=0)      # (6, 32)
    w_dsc = jnp.concatenate([jnp.concatenate([dsin, dcos], axis=0).T,
                             jnp.zeros((HID, 4), f32)], axis=1)          # (32, 16)

    # --- block-diagonal input projection (104, 6), f32 ------------------------
    s_x2 = _scale_mat(POS_XYZ_FREQS, 24)                                 # (24, 3)
    s_d2 = _scale_mat(POS_DIR_FREQS, 16)                                 # (16, 3)
    z3 = lambda r: jnp.zeros((r, XYZ_DIM), f32)
    m_in = jnp.concatenate([
        jnp.concatenate([wt_x, z3(32)], axis=1),     # rows  0:32  xyz linear
        jnp.concatenate([s_x2, z3(24)], axis=1),     # rows 32:56  xyz trig args
        jnp.concatenate([z3(32), wt_d], axis=1),     # rows 56:88  dir linear
        jnp.concatenate([z3(16), s_d2], axis=1),     # rows 88:104 dir trig args
    ], axis=0)                                                           # (104, 6)

    half_pi = np.float32(np.pi / 2)
    phase_x = jnp.concatenate([jnp.zeros((12, 1), f32),
                               jnp.full((12, 1), half_pi, f32)], axis=0)  # (24, 1)
    phase_d = jnp.concatenate([jnp.zeros((6, 1), f32),
                               jnp.full((6, 1), half_pi, f32),
                               jnp.zeros((4, 1), f32)], axis=0)           # (16, 1)
    b_in = jnp.concatenate([b_xyz.T, phase_x,
                            jnp.zeros((HID, 1), f32), phase_d], axis=0)   # (104, 1)

    # --- four hidden 32x32 linears stacked (resident slab) --------------------
    w_hid = jnp.stack([w00.T, w01.T, w10.T, w11.T], axis=0)              # (4, 32, 32)
    b_hid = jnp.stack([b00.T, b01.T, b10.T, b11.T], axis=0)              # (4, 32, 1)

    # --- layer '2' h-part + fused sigma head, padded to 48 rows ---------------
    w_s20 = jnp.concatenate([w20_h.T, w_sig.T,
                             jnp.zeros((S20_ROWS - HID - 1, HID), f32)], axis=0)  # (48, 32)
    b_s20 = jnp.concatenate([b20.T, b_sig.T,
                             jnp.zeros((S20_ROWS - HID - 1, 1), f32)], axis=0)    # (48, 1)

    w_col = w_col.T                                                      # (3, 32) f32
    b_col_t = b_col.T                                                    # (3, 1)

    return [m_in.astype(f32), b_in,
            w_sc.astype(bf16),
            w_hid.astype(bf16), b_hid,
            w_s20.astype(bf16), b_s20,
            w_dsc.astype(bf16),
            w_col, b_col_t]


# ----------------------------------------------------------------------------
# Wrapper
# ----------------------------------------------------------------------------
@jax.jit
def nerf_moe_forward(x, params):
    """x: [N, 6] float32 = [xyz(3) | dir(3)]. Returns [N, 4] = [rgb(3), sigma(1)]."""
    n = x.shape[0]

    # Lane-dense tile (multiple of 128); keep >= 2 grid steps when possible so
    # dimension_semantics=("parallel",) can shard across v7x's two TensorCores.
    tile_n = min(_MAX_TILE, max(256, 128 * pl.cdiv(n, 256)))
    n_pad = tile_n * pl.cdiv(n, tile_n)

    # Channel-major lane-dense input slab; pad+transpose fuse into one XLA pass
    # under jit.
    # TODO(synk): if callers store samples channel-major end-to-end, this pass
    # and the final output transpose disappear.
    x_cm = jnp.pad(x, ((0, n_pad - n), (0, 0))).T              # (6, n_pad)

    kparams = _pack_params(params)

    grid = (n_pad // tile_n,)
    in_specs = [pl.BlockSpec((2 * XYZ_DIM, tile_n), lambda i: (0, i))]
    for p in kparams:   # resident weights: full-array block, same index every step
        in_specs.append(pl.BlockSpec(p.shape, lambda i, nd=p.ndim: (0,) * nd))
    out_spec = pl.BlockSpec((OUT_CH, tile_n), lambda i: (0, i))

    # Advisory cost estimate for the XLA scheduler.
    macs = T_ROWS * 6 + HID * 24 + 4 * HID * HID + S20_ROWS * HID + HID * 16 + 3 * HID
    w_bytes = int(sum(int(np.prod(p.shape)) * p.dtype.itemsize for p in kparams))
    cost = pl.CostEstimate(
        flops=2 * macs * n_pad,
        transcendentals=45 * n_pad,
        bytes_accessed=(6 * 4 + OUT_CH * 4) * n_pad + w_bytes)

    out_cm = pl.pallas_call(
        _nerf_kernel,
        out_shape=jax.ShapeDtypeStruct((OUT_CH, n_pad), jnp.float32),
        grid_spec=pltpu.PrefetchScalarGridSpec(
            num_scalar_prefetch=0,
            grid=grid,
            in_specs=in_specs,
            out_specs=out_spec,
        ),
        compiler_params=pltpu.CompilerParams(
            dimension_semantics=("parallel",)),
        cost_estimate=cost,
    )(x_cm, *kparams)                                          # (4, n_pad)

    return out_cm[:, :n].T                                     # (N, 4)


# ----------------------------------------------------------------------------
# Pure-JAX f32 reference of the same forward (natural PyTorch-style formulation).
# ----------------------------------------------------------------------------
def nerf_moe_reference(x, params):
    (w_xyz, b_xyz, w00, b00, w01, b01, w10, b10, w11, b11,
     w_sig, b_sig, w20, b20, w_col, b_col) = params
    xyz, dirs = x[:, :XYZ_DIM], x[:, XYZ_DIM:XYZ_DIM + 3]
    h = jax.nn.relu(_posenc(xyz, POS_XYZ_FREQS) @ w_xyz + b_xyz)
    h = jax.nn.relu(h @ w00 + b00)
    h = jax.nn.relu(h @ w01 + b01)
    h = jax.nn.relu(h @ w10 + b10)
    h = jax.nn.relu(h @ w11 + b11)
    sigma = jax.nn.softplus(h @ w_sig + b_sig)
    h = jnp.concatenate([h, _posenc(dirs, POS_DIR_FREQS)], axis=-1)
    h = jax.nn.relu(h @ w20 + b20)
    rgb = jax.nn.sigmoid(h @ w_col + b_col)
    return jnp.concatenate([rgb, sigma], axis=-1)


# TODO(synk): tutel moe_layer experts/gating, LatentNet latents, appearance
# embedding + affine transform paths are config-gated off here (pure-MLP NeRF path).

if __name__ == "__main__":
    key = jax.random.PRNGKey(0)
    k_x, k_p = jax.random.split(key)

    # Small-but-realistic sample count; exercises N-padding (2000 -> 2048) and a
    # 2-step parallel grid (adaptive tile of 1024 points).
    N = 2000
    x = jax.random.normal(k_x, (N, 6), jnp.float32)   # [xyz(3) | dir(3)]
    params = make_params(k_p)

    out = nerf_moe_forward(x, params)
    out = jax.block_until_ready(out)

    ref = nerf_moe_reference(x, params)
    # Tolerance widened vs the pure-f32 reference because the kernel feeds the
    # MXU bf16 operands (f32 accumulation); observed error is ~1e-3 level.
    np.testing.assert_allclose(np.asarray(out), np.asarray(ref), rtol=2e-2, atol=2e-2)
    assert out.shape == (N, 4)
    print("KERNEL_OK")
</pallas_src>

<mosaic_0001>
module attributes {stable_mosaic.version = 11 : i64} {
  func.func @_nerf_kernel(%arg0: i32, %arg1: memref<6x1024xf32, #tpu.memory_space<vmem>>, %arg2: memref<104x6xf32, #tpu.memory_space<vmem>>, %arg3: memref<104x1xf32, #tpu.memory_space<vmem>>, %arg4: memref<32x24xbf16, #tpu.memory_space<vmem>>, %arg5: memref<4x32x32xbf16, #tpu.memory_space<vmem>>, %arg6: memref<4x32x1xf32, #tpu.memory_space<vmem>>, %arg7: memref<48x32xbf16, #tpu.memory_space<vmem>>, %arg8: memref<48x1xf32, #tpu.memory_space<vmem>>, %arg9: memref<32x16xbf16, #tpu.memory_space<vmem>>, %arg10: memref<3x32xf32, #tpu.memory_space<vmem>>, %arg11: memref<3x1xf32, #tpu.memory_space<vmem>>, %arg12: memref<4x1024xf32, #tpu.memory_space<vmem>>) attributes {dimension_semantics = [#tpu.dimension_semantics<parallel>], iteration_bounds = array<i64: 2>, scalar_prefetch = 0 : i64, scratch_operands = 0 : i64, tpu.core_type = #tpu.core_type<tc>, window_params = [{transform_indices = @transform_0, window_bounds = array<i64: 6, 1024>}, {pipeline_mode = #tpu.pipeline_mode<synchronous>, transform_indices = @transform_1, window_bounds = array<i64: 104, 6>}, {pipeline_mode = #tpu.pipeline_mode<synchronous>, transform_indices = @transform_2, window_bounds = array<i64: 104, 1>}, {pipeline_mode = #tpu.pipeline_mode<synchronous>, transform_indices = @transform_3, window_bounds = array<i64: 32, 24>}, {pipeline_mode = #tpu.pipeline_mode<synchronous>, transform_indices = @transform_4, window_bounds = array<i64: 4, 32, 32>}, {pipeline_mode = #tpu.pipeline_mode<synchronous>, transform_indices = @transform_5, window_bounds = array<i64: 4, 32, 1>}, {pipeline_mode = #tpu.pipeline_mode<synchronous>, transform_indices = @transform_6, window_bounds = array<i64: 48, 32>}, {pipeline_mode = #tpu.pipeline_mode<synchronous>, transform_indices = @transform_7, window_bounds = array<i64: 48, 1>}, {pipeline_mode = #tpu.pipeline_mode<synchronous>, transform_indices = @transform_8, window_bounds = array<i64: 32, 16>}, {pipeline_mode = #tpu.pipeline_mode<synchronous>, transform_indices = @transform_9, window_bounds = array<i64: 3, 32>}, {pipeline_mode = #tpu.pipeline_mode<synchronous>, transform_indices = @transform_10, window_bounds = array<i64: 3, 1>}, {transform_indices = @transform_11, window_bounds = array<i64: 4, 1024>}]} {
    %c0 = arith.constant 0 : index
    %c0_0 = arith.constant 0 : index
    %0 = vector.load %arg1[%c0, %c0_0] : memref<6x1024xf32, #tpu.memory_space<vmem>>, vector<6x1024xf32>
    %c0_1 = arith.constant 0 : index
    %c0_2 = arith.constant 0 : index
    %1 = vector.load %arg2[%c0_1, %c0_2] : memref<104x6xf32, #tpu.memory_space<vmem>>, vector<104x6xf32>
    %cst = arith.constant dense<0.000000e+00> : vector<104x1024xf32>
    %2 = tpu.matmul %1, %0, %cst {dimension_numbers = #tpu.dot_dimension_numbers<[1], [0], [0], [1], [0, 0, 1, 1], [], []>} : vector<104x6xf32>, vector<6x1024xf32>, vector<104x1024xf32> -> vector<104x1024xf32>
    %c0_3 = arith.constant 0 : index
    %c0_4 = arith.constant 0 : index
    %3 = vector.load %arg3[%c0_3, %c0_4] : memref<104x1xf32, #tpu.memory_space<vmem>>, vector<104x1xf32>
    %4 = vector.broadcast %3 : vector<104x1xf32> to vector<104x1024xf32>
    %5 = arith.addf %2, %4 : vector<104x1024xf32>
    %6 = vector.extract_strided_slice %5 {offsets = [0, 0], sizes = [32, 1024], strides = [1, 1]} : vector<104x1024xf32> to vector<32x1024xf32>
    %c0_5 = arith.constant 0 : index
    %c0_6 = arith.constant 0 : index
    %7 = vector.load %arg4[%c0_5, %c0_6] : memref<32x24xbf16, #tpu.memory_space<vmem>>, vector<32x24xbf16>
    %8 = vector.extract_strided_slice %5 {offsets = [32, 0], sizes = [24, 1024], strides = [1, 1]} : vector<104x1024xf32> to vector<24x1024xf32>
    %9 = math.sin %8 : vector<24x1024xf32>
    %10 = arith.truncf %9 : vector<24x1024xf32> to vector<24x1024xbf16>
    %cst_7 = arith.constant dense<0.000000e+00> : vector<32x1024xf32>
    %11 = tpu.matmul %7, %10, %cst_7 {dimension_numbers = #tpu.dot_dimension_numbers<[1], [0], [0], [1], [0, 0, 1, 1], [], []>} : vector<32x24xbf16>, vector<24x1024xbf16>, vector<32x1024xf32> -> vector<32x1024xf32>
    %12 = arith.addf %6, %11 : vector<32x1024xf32>
    %cst_8 = arith.constant 0.000000e+00 : f32
    %13 = vector.broadcast %cst_8 : f32 to vector<32x1024xf32>
    %14 = arith.maximumf %12, %13 : vector<32x1024xf32>
    %c0_9 = arith.constant 0 : index
    %c0_10 = arith.constant 0 : index
    %c0_11 = arith.constant 0 : index
    %15 = vector.load %arg5[%c0_9, %c0_10, %c0_11] : memref<4x32x32xbf16, #tpu.memory_space<vmem>>, vector<1x32x32xbf16>
    %16 = vector.shape_cast %15 : vector<1x32x32xbf16> to vector<32x32xbf16>
    %17 = arith.truncf %14 : vector<32x1024xf32> to vector<32x1024xbf16>
    %cst_12 = arith.constant dense<0.000000e+00> : vector<32x1024xf32>
    %18 = tpu.matmul %16, %17, %cst_12 {dimension_numbers = #tpu.dot_dimension_numbers<[1], [0], [0], [1], [0, 0, 1, 1], [], []>} : vector<32x32xbf16>, vector<32x1024xbf16>, vector<32x1024xf32> -> vector<32x1024xf32>
    %c0_13 = arith.constant 0 : index
    %c0_14 = arith.constant 0 : index
    %c0_15 = arith.constant 0 : index
    %19 = vector.load %arg6[%c0_13, %c0_14, %c0_15] : memref<4x32x1xf32, #tpu.memory_space<vmem>>, vector<1x32x1xf32>
    %20 = vector.shape_cast %19 : vector<1x32x1xf32> to vector<32x1xf32>
    %21 = vector.broadcast %20 : vector<32x1xf32> to vector<32x1024xf32>
    %22 = arith.addf %18, %21 : vector<32x1024xf32>
    %cst_16 = arith.constant 0.000000e+00 : f32
    %23 = vector.broadcast %cst_16 : f32 to vector<32x1024xf32>
    %24 = arith.maximumf %22, %23 : vector<32x1024xf32>
    %c1 = arith.constant 1 : index
    %c0_17 = arith.constant 0 : index
    %c0_18 = arith.constant 0 : index
    %25 = vector.load %arg5[%c1, %c0_17, %c0_18] : memref<4x32x32xbf16, #tpu.memory_space<vmem>>, vector<1x32x32xbf16>
    %26 = vector.shape_cast %25 : vector<1x32x32xbf16> to vector<32x32xbf16>
    %27 = arith.truncf %24 : vector<32x1024xf32> to vector<32x1024xbf16>
    %cst_19 = arith.constant dense<0.000000e+00> : vector<32x1024xf32>
    %28 = tpu.matmul %26, %27, %cst_19 {dimension_numbers = #tpu.dot_dimension_numbers<[1], [0], [0], [1], [0, 0, 1, 1], [], []>} : vector<32x32xbf16>, vector<32x1024xbf16>, vector<32x1024xf32> -> vector<32x1024xf32>
    %c1_20 = arith.constant 1 : index
    %c0_21 = arith.constant 0 : index
    %c0_22 = arith.constant 0 : index
    %29 = vector.load %arg6[%c1_20, %c0_21, %c0_22] : memref<4x32x1xf32, #tpu.memory_space<vmem>>, vector<1x32x1xf32>
    %30 = vector.shape_cast %29 : vector<1x32x1xf32> to vector<32x1xf32>
    %31 = vector.broadcast %30 : vector<32x1xf32> to vector<32x1024xf32>
    %32 = arith.addf %28, %31 : vector<32x1024xf32>
    %cst_23 = arith.constant 0.000000e+00 : f32
    %33 = vector.broadcast %cst_23 : f32 to vector<32x1024xf32>
    %34 = arith.maximumf %32, %33 : vector<32x1024xf32>
    %c2 = arith.constant 2 : index
    %c0_24 = arith.constant 0 : index
    %c0_25 = arith.constant 0 : index
    %35 = vector.load %arg5[%c2, %c0_24, %c0_25] : memref<4x32x32xbf16, #tpu.memory_space<vmem>>, vector<1x32x32xbf16>
    %36 = vector.shape_cast %35 : vector<1x32x32xbf16> to vector<32x32xbf16>
    %37 = arith.truncf %34 : vector<32x1024xf32> to vector<32x1024xbf16>
    %cst_26 = arith.constant dense<0.000000e+00> : vector<32x1024xf32>
    %38 = tpu.matmul %36, %37, %cst_26 {dimension_numbers = #tpu.dot_dimension_numbers<[1], [0], [0], [1], [0, 0, 1, 1], [], []>} : vector<32x32xbf16>, vector<32x1024xbf16>, vector<32x1024xf32> -> vector<32x1024xf32>
    %c2_27 = arith.constant 2 : index
    %c0_28 = arith.constant 0 : index
    %c0_29 = arith.constant 0 : index
    %39 = vector.load %arg6[%c2_27, %c0_28, %c0_29] : memref<4x32x1xf32, #tpu.memory_space<vmem>>, vector<1x32x1xf32>
    %40 = vector.shape_cast %39 : vector<1x32x1xf32> to vector<32x1xf32>
    %41 = vector.broadcast %40 : vector<32x1xf32> to vector<32x1024xf32>
    %42 = arith.addf %38, %41 : vector<32x1024xf32>
    %cst_30 = arith.constant 0.000000e+00 : f32
    %43 = vector.broadcast %cst_30 : f32 to vector<32x1024xf32>
    %44 = arith.maximumf %42, %43 : vector<32x1024xf32>
    %c3 = arith.constant 3 : index
    %c0_31 = arith.constant 0 : index
    %c0_32 = arith.constant 0 : index
    %45 = vector.load %arg5[%c3, %c0_31, %c0_32] : memref<4x32x32xbf16, #tpu.memory_space<vmem>>, vector<1x32x32xbf16>
    %46 = vector.shape_cast %45 : vector<1x32x32xbf16> to vector<32x32xbf16>
    %47 = arith.truncf %44 : vector<32x1024xf32> to vector<32x1024xbf16>
    %cst_33 = arith.constant dense<0.000000e+00> : vector<32x1024xf32>
    %48 = tpu.matmul %46, %47, %cst_33 {dimension_numbers = #tpu.dot_dimension_numbers<[1], [0], [0], [1], [0, 0, 1, 1], [], []>} : vector<32x32xbf16>, vector<32x1024xbf16>, vector<32x1024xf32> -> vector<32x1024xf32>
    %c3_34 = arith.constant 3 : index
    %c0_35 = arith.constant 0 : index
    %c0_36 = arith.constant 0 : index
    %49 = vector.load %arg6[%c3_34, %c0_35, %c0_36] : memref<4x32x1xf32, #tpu.memory_space<vmem>>, vector<1x32x1xf32>
    %50 = vector.shape_cast %49 : vector<1x32x1xf32> to vector<32x1xf32>
    %51 = vector.broadcast %50 : vector<32x1xf32> to vector<32x1024xf32>
    %52 = arith.addf %48, %51 : vector<32x1024xf32>
    %cst_37 = arith.constant 0.000000e+00 : f32
    %53 = vector.broadcast %cst_37 : f32 to vector<32x1024xf32>
    %54 = arith.maximumf %52, %53 : vector<32x1024xf32>
    %c0_38 = arith.constant 0 : index
    %c0_39 = arith.constant 0 : index
    %55 = vector.load %arg7[%c0_38, %c0_39] : memref<48x32xbf16, #tpu.memory_space<vmem>>, vector<48x32xbf16>
    %56 = arith.truncf %54 : vector<32x1024xf32> to vector<32x1024xbf16>
    %cst_40 = arith.constant dense<0.000000e+00> : vector<48x1024xf32>
    %57 = tpu.matmul %55, %56, %cst_40 {dimension_numbers = #tpu.dot_dimension_numbers<[1], [0], [0], [1], [0, 0, 1, 1], [], []>} : vector<48x32xbf16>, vector<32x1024xbf16>, vector<48x1024xf32> -> vector<48x1024xf32>
    %c0_41 = arith.constant 0 : index
    %c0_42 = arith.constant 0 : index
    %58 = vector.load %arg8[%c0_41, %c0_42] : memref<48x1xf32, #tpu.memory_space<vmem>>, vector<48x1xf32>
    %59 = vector.broadcast %58 : vector<48x1xf32> to vector<48x1024xf32>
    %60 = arith.addf %57, %59 : vector<48x1024xf32>
    %61 = vector.extract_strided_slice %60 {offsets = [32, 0], sizes = [1, 1024], strides = [1, 1]} : vector<48x1024xf32> to vector<1x1024xf32>
    %cst_43 = arith.constant 0.000000e+00 : f32
    %62 = vector.broadcast %cst_43 : f32 to vector<1x1024xf32>
    %63 = arith.maximumf %61, %62 : vector<1x1024xf32>
    %64 = vector.broadcast %cst_43 : f32 to vector<1x1024xf32>
    %65 = arith.subf %61, %64 : vector<1x1024xf32>
    %66 = arith.cmpf one, %65, %65 : vector<1x1024xf32>
    %67 = vector.broadcast %cst_43 : f32 to vector<1x1024xf32>
    %68 = arith.addf %61, %67 : vector<1x1024xf32>
    %69 = math.absf %65 : vector<1x1024xf32>
    %cst_44 = arith.constant 0.000000e+00 : f32
    %70 = vector.broadcast %cst_44 : f32 to vector<1x1024xf32>
    %71 = arith.subf %70, %69 : vector<1x1024xf32>
    %72 = math.exp %71 : vector<1x1024xf32>
    %73 = math.log1p %72 : vector<1x1024xf32>
    %74 = arith.addf %63, %73 : vector<1x1024xf32>
    %75 = arith.select %66, %68, %74 : vector<1x1024xi1>, vector<1x1024xf32>
    %c3_45 = arith.constant 3 : index
    %c0_46 = arith.constant 0 : index
    %76 = vector.load %arg12[%c3_45, %c0_46] : memref<4x1024xf32, #tpu.memory_space<vmem>>, vector<1x1024xf32>
    tpu.vector_store %arg12[%c3_45, %c0_46], %75 {strides = array<i32>} : memref<4x1024xf32, #tpu.memory_space<vmem>>, vector<1x1024xf32>,
    %77 = vector.extract_strided_slice %60 {offsets = [0, 0], sizes = [32, 1024], strides = [1, 1]} : vector<48x1024xf32> to vector<32x1024xf32>
    %78 = vector.extract_strided_slice %5 {offsets = [56, 0], sizes = [32, 1024], strides = [1, 1]} : vector<104x1024xf32> to vector<32x1024xf32>
    %79 = arith.addf %77, %78 : vector<32x1024xf32>
    %c0_47 = arith.constant 0 : index
    %c0_48 = arith.constant 0 : index
    %80 = vector.load %arg9[%c0_47, %c0_48] : memref<32x16xbf16, #tpu.memory_space<vmem>>, vector<32x16xbf16>
    %81 = vector.extract_strided_slice %5 {offsets = [88, 0], sizes = [16, 1024], strides = [1, 1]} : vector<104x1024xf32> to vector<16x1024xf32>
    %82 = math.sin %81 : vector<16x1024xf32>
    %83 = arith.truncf %82 : vector<16x1024xf32> to vector<16x1024xbf16>
    %cst_49 = arith.constant dense<0.000000e+00> : vector<32x1024xf32>
    %84 = tpu.matmul %80, %83, %cst_49 {dimension_numbers = #tpu.dot_dimension_numbers<[1], [0], [0], [1], [0, 0, 1, 1], [], []>} : vector<32x16xbf16>, vector<16x1024xbf16>, vector<32x1024xf32> -> vector<32x1024xf32>
    %85 = arith.addf %79, %84 : vector<32x1024xf32>
    %cst_50 = arith.constant 0.000000e+00 : f32
    %86 = vector.broadcast %cst_50 : f32 to vector<32x1024xf32>
    %87 = arith.maximumf %85, %86 : vector<32x1024xf32>
    %c0_51 = arith.constant 0 : index
    %c0_52 = arith.constant 0 : index
    %88 = vector.load %arg10[%c0_51, %c0_52] : memref<3x32xf32, #tpu.memory_space<vmem>>, vector<3x32xf32>
    %cst_53 = arith.constant dense<0.000000e+00> : vector<3x1024xf32>
    %89 = tpu.matmul %88, %87, %cst_53 {dimension_numbers = #tpu.dot_dimension_numbers<[1], [0], [0], [1], [0, 0, 1, 1], [], []>} : vector<3x32xf32>, vector<32x1024xf32>, vector<3x1024xf32> -> vector<3x1024xf32>
    %c0_54 = arith.constant 0 : index
    %c0_55 = arith.constant 0 : index
    %90 = vector.load %arg11[%c0_54, %c0_55] : memref<3x1xf32, #tpu.memory_space<vmem>>, vector<3x1xf32>
    %91 = vector.broadcast %90 : vector<3x1xf32> to vector<3x1024xf32>
    %92 = arith.addf %89, %91 : vector<3x1024xf32>
    %93 = arith.negf %92 : vector<3x1024xf32>
    %94 = math.exp %93 : vector<3x1024xf32>
    %cst_56 = arith.constant 1.000000e+00 : f32
    %95 = vector.broadcast %cst_56 : f32 to vector<3x1024xf32>
    %96 = arith.addf %95, %94 : vector<3x1024xf32>
    %97 = arith.divf %95, %96 : vector<3x1024xf32>
    %c0_57 = arith.constant 0 : index
    %c0_58 = arith.constant 0 : index
    %98 = vector.load %arg12[%c0_57, %c0_58] : memref<4x1024xf32, #tpu.memory_space<vmem>>, vector<3x1024xf32>
    tpu.vector_store %arg12[%c0_57, %c0_58], %97 {strides = array<i32>} : memref<4x1024xf32, #tpu.memory_space<vmem>>, vector<3x1024xf32>,
    return
  }
  func.func @transform_0(%arg0: i32) -> (i32, i32) {
    %c0_i32 = arith.constant 0 : i32
    %c0_i32_0 = arith.constant 0 : i32
    return %c0_i32, %arg0 : i32, i32
  }
  func.func @transform_1(%arg0: i32) -> (i32, i32) {
    %c0_i32 = arith.constant 0 : i32
    %c0_i32_0 = arith.constant 0 : i32
    %c0_i32_1 = arith.constant 0 : i32
    return %c0_i32, %c0_i32_0 : i32, i32
  }
  func.func @transform_2(%arg0: i32) -> (i32, i32) {
    %c0_i32 = arith.constant 0 : i32
    %c0_i32_0 = arith.constant 0 : i32
    %c0_i32_1 = arith.constant 0 : i32
    return %c0_i32, %c0_i32_0 : i32, i32
  }
  func.func @transform_3(%arg0: i32) -> (i32, i32) {
    %c0_i32 = arith.constant 0 : i32
    %c0_i32_0 = arith.constant 0 : i32
    %c0_i32_1 = arith.constant 0 : i32
    return %c0_i32, %c0_i32_0 : i32, i32
  }
  func.func @transform_4(%arg0: i32) -> (i32, i32, i32) {
    %c0_i32 = arith.constant 0 : i32
    %c0_i32_0 = arith.constant 0 : i32
    %c0_i32_1 = arith.constant 0 : i32
    %c0_i32_2 = arith.constant 0 : i32
    return %c0_i32, %c0_i32_0, %c0_i32_1 : i32, i32, i32
  }
  func.func @transform_5(%arg0: i32) -> (i32, i32, i32) {
    %c0_i32 = arith.constant 0 : i32
    %c0_i32_0 = arith.constant 0 : i32
    %c0_i32_1 = arith.constant 0 : i32
    %c0_i32_2 = arith.constant 0 : i32
    return %c0_i32, %c0_i32_0, %c0_i32_1 : i32, i32, i32
  }
  func.func @transform_6(%arg0: i32) -> (i32, i32) {
    %c0_i32 = arith.constant 0 : i32
    %c0_i32_0 = arith.constant 0 : i32
    %c0_i32_1 = arith.constant 0 : i32
    return %c0_i32, %c0_i32_0 : i32, i32
  }
  func.func @transform_7(%arg0: i32) -> (i32, i32) {
    %c0_i32 = arith.constant 0 : i32
    %c0_i32_0 = arith.constant 0 : i32
    %c0_i32_1 = arith.constant 0 : i32
    return %c0_i32, %c0_i32_0 : i32, i32
  }
  func.func @transform_8(%arg0: i32) -> (i32, i32) {
    %c0_i32 = arith.constant 0 : i32
    %c0_i32_0 = arith.constant 0 : i32
    %c0_i32_1 = arith.constant 0 : i32
    return %c0_i32, %c0_i32_0 : i32, i32
  }
  func.func @transform_9(%arg0: i32) -> (i32, i32) {
    %c0_i32 = arith.constant 0 : i32
    %c0_i32_0 = arith.constant 0 : i32
    %c0_i32_1 = arith.constant 0 : i32
    return %c0_i32, %c0_i32_0 : i32, i32
  }
  func.func @transform_10(%arg0: i32) -> (i32, i32) {
    %c0_i32 = arith.constant 0 : i32
    %c0_i32_0 = arith.constant 0 : i32
    %c0_i32_1 = arith.constant 0 : i32
    return %c0_i32, %c0_i32_0 : i32, i32
  }
  func.func @transform_11(%arg0: i32) -> (i32, i32) {
    %c0_i32 = arith.constant 0 : i32
    %c0_i32_0 = arith.constant 0 : i32
    return %c0_i32, %arg0 : i32, i32
  }
}

</mosaic_0001>

<llo_original>
// kernel: nerf_moe_forward.1
$region0: #{nerf_moe_forward.1}
  #allocation0 [shape = 'u32[]', space=smem, size = 0x4, offset = 0x4, fixed_abs, tag = 'smem constant byte address 0x4 - core index']
  #allocation1 [shape = 'u32[144,128]{1,0:T(1,128)}', space=vmem, size = 0x12000, scoped, tag = 'internal scratch']
  %s0 = inlined_call_operand.vmem [shape: f32[6,2048], index: 0, kind: input, shape index: {}]
  %s1 = inlined_call_operand.vmem [shape: f32[104,6], index: 1, kind: input, shape index: {}]
  %s2 = inlined_call_operand.vmem [shape: f32[104,1], index: 2, kind: input, shape index: {}]
  %s3 = inlined_call_operand.vmem [shape: bf16[32,24], index: 3, kind: input, shape index: {}]
  %s4 = inlined_call_operand.vmem [shape: bf16[4,32,32], index: 4, kind: input, shape index: {}]
  %s5 = inlined_call_operand.vmem [shape: f32[4,32,1], index: 5, kind: input, shape index: {}]
  %s6 = inlined_call_operand.vmem [shape: bf16[48,32], index: 6, kind: input, shape index: {}]
  %s7 = inlined_call_operand.vmem [shape: f32[48,1], index: 7, kind: input, shape index: {}]
  %s8 = inlined_call_operand.vmem [shape: bf16[32,16], index: 8, kind: input, shape index: {}]
  %s9 = inlined_call_operand.vmem [shape: f32[3,32], index: 9, kind: input, shape index: {}]
  %s10 = inlined_call_operand.vmem [shape: f32[3,1], index: 10, kind: input, shape index: {}]
  %s11 = inlined_call_operand.vmem [shape: f32[4,2048], index: 11, kind: output, shape index: {}]
  %s12 = sld [smem:[#allocation0]]
  $region77: #{nerf_moe_forward.1} parent=0
    _
  %s14 = ssub.s32 1, %s12
  %s15 = scalar_select 0, %s14, %s12
  loop: start=0, step=1, limit=4
  $region2: #{nerf_moe_forward.1} parent=0 // loop_pre_header
    _
  $region3: #{nerf_moe_forward.1} parent=0 // loop_header
    %s17 = sphi 0, %s21
    %p18 = scmp.ge.s32.totalorder %s17, 4
    %s27 = sphi 0, %s29
    %s30 = sphi 0, %s27
    %s31 = sphi 0, %s30
    %s47 = sphi 0, %s31
    %s51 = sphi 0, %s51
    %s53 = sphi 0, %s51
    %s54 = sphi 0, %s53
    %s68 = sphi 0, %s54
    %s72 = sphi 0, %s72
    %s74 = sphi 0, %s72
    %s75 = sphi 0, %s74
    %s89 = sphi 0, %s75
    %s93 = sphi 0, %s93
    %s95 = sphi 0, %s93
    %s96 = sphi 0, %s95
    %s110 = sphi 0, %s96
    %s114 = sphi 0, %s114
    %s116 = sphi 0, %s114
    %s117 = sphi 0, %s116
    %s131 = sphi 0, %s117
    %s135 = sphi 0, %s135
    %s137 = sphi 0, %s135
    %s138 = sphi 0, %s137
    %s152 = sphi 0, %s138
    %s156 = sphi 0, %s156
    %s158 = sphi 0, %s156
    %s159 = sphi 0, %s158
    %s173 = sphi 0, %s159
    %s177 = sphi 0, %s177
    %s179 = sphi 0, %s177
    %s180 = sphi 0, %s179
    %s194 = sphi 0, %s180
    %s198 = sphi 0, %s198
    %s200 = sphi 0, %s198
    %s201 = sphi 0, %s200
    %s215 = sphi 0, %s201
    %s219 = sphi 0, %s219
    %s221 = sphi 0, %s219
    %s222 = sphi 0, %s221
    %s236 = sphi 0, %s222
    %s240 = sphi 0, %s240
    %s242 = sphi 0, %s240
    %s243 = sphi 0, %s242
    %s257 = sphi 0, %s243
    %s263 = sphi 0, %s265
    %s266 = sphi 0, %s263
    %s267 = sphi 0, %s266
    %s283 = sphi 0, %s267
  $region4: #{nerf_moe_forward.1} parent=0 // loop_header_branch
    %20 = sbr.rel (%p18) target = $region8
  $region5: #{nerf_moe_forward.1} parent=0 // loop_body
    %s22 = ssub.s32 %s17, 1
    %s23 = ssub.s32 %s17, 2
    %s24 = sadd.s32 %s17, 1
    %s25 = ssub.s32 %s17, %s24
    %p26 = scmp.eq.s32.totalorder %s25, 0
    %s28 = sadd.s32 %s27, 1
    %s29 = scalar_select %p26, %s27, %s28
    %p32 = pneg %p26
    %p33 = scmp.eq.s32.totalorder %s17, 1
    %p34 = por %p32, %p33
    %p35 = scmp.ne.s32.totalorder %s27, %s30
    %p36 = scmp.eq.s32.totalorder %s17, 0
    %p37 = por %p35, %p36
    %p38 = scmp.ne.s32.totalorder %s27, %s30
    %p39 = scmp.eq.s32.totalorder %s22, 1
    %p40 = por %p38, %p39
    %p41 = scmp.ne.s32.totalorder %s30, %s31
    %p42 = scmp.eq.s32.totalorder %s22, 0
    %p43 = por %p41, %p42
    %p44 = scmp.ne.s32.totalorder %s30, %s31
    %p45 = scmp.eq.s32.totalorder %s23, 1
    %p46 = por %p44, %p45
    %p48 = scmp.ne.s32.totalorder %s31, %s47
    %p49 = scmp.eq.s32.totalorder %s23, 0
    %p50 = por %p48, %p49
    %s52 = sadd.s32 %s51, 1
    %p55 = scmp.eq.s32.totalorder %s17, 1
    %p56 = scmp.ne.s32.totalorder %s51, %s53
    %p57 = scmp.eq.s32.totalorder %s17, 0
    %p58 = por %p56, %p57
    %p59 = scmp.ne.s32.totalorder %s51, %s53
    %p60 = scmp.eq.s32.totalorder %s22, 1
    %p61 = por %p59, %p60
    %p62 = scmp.ne.s32.totalorder %s53, %s54
    %p63 = scmp.eq.s32.totalorder %s22, 0
    %p64 = por %p62, %p63
    %p65 = scmp.ne.s32.totalorder %s53, %s54
    %p66 = scmp.eq.s32.totalorder %s23, 1
    %p67 = por %p65, %p66
    %p69 = scmp.ne.s32.totalorder %s54, %s68
    %p70 = scmp.eq.s32.totalorder %s23, 0
    %p71 = por %p69, %p70
    %s73 = sadd.s32 %s72, 1
    %p76 = scmp.eq.s32.totalorder %s17, 1
    %p77 = scmp.ne.s32.totalorder %s72, %s74
    %p78 = scmp.eq.s32.totalorder %s17, 0
    %p79 = por %p77, %p78
    %p80 = scmp.ne.s32.totalorder %s72, %s74
    %p81 = scmp.eq.s32.totalorder %s22, 1
    %p82 = por %p80, %p81
    %p83 = scmp.ne.s32.totalorder %s74, %s75
    %p84 = scmp.eq.s32.totalorder %s22, 0
    %p85 = por %p83, %p84
    %p86 = scmp.ne.s32.totalorder %s74, %s75
    %p87 = scmp.eq.s32.totalorder %s23, 1
    %p88 = por %p86, %p87
    %p90 = scmp.ne.s32.totalorder %s75, %s89
    %p91 = scmp.eq.s32.totalorder %s23, 0
    %p92 = por %p90, %p91
    %s94 = sadd.s32 %s93, 1
    %p97 = scmp.eq.s32.totalorder %s17, 1
    %p98 = scmp.ne.s32.totalorder %s93, %s95
    %p99 = scmp.eq.s32.totalorder %s17, 0
    %p100 = por %p98, %p99
    %p101 = scmp.ne.s32.totalorder %s93, %s95
    %p102 = scmp.eq.s32.totalorder %s22, 1
    %p103 = por %p101, %p102
    %p104 = scmp.ne.s32.totalorder %s95, %s96
    %p105 = scmp.eq.s32.totalorder %s22, 0
    %p106 = por %p104, %p105
    %p107 = scmp.ne.s32.totalorder %s95, %s96
    %p108 = scmp.eq.s32.totalorder %s23, 1
    %p109 = por %p107, %p108
    %p111 = scmp.ne.s32.totalorder %s96, %s110
    %p112 = scmp.eq.s32.totalorder %s23, 0
    %p113 = por %p111, %p112
    %s115 = sadd.s32 %s114, 1
    %p118 = scmp.eq.s32.totalorder %s17, 1
    %p119 = scmp.ne.s32.totalorder %s114, %s116
    %p120 = scmp.eq.s32.totalorder %s17, 0
    %p121 = por %p119, %p120
    %p122 = scmp.ne.s32.totalorder %s114, %s116
    %p123 = scmp.eq.s32.totalorder %s22, 1
    %p124 = por %p122, %p123
    %p125 = scmp.ne.s32.totalorder %s116, %s117
    %p126 = scmp.eq.s32.totalorder %s22, 0
    %p127 = por %p125, %p126
    %p128 = scmp.ne.s32.totalorder %s116, %s117
    %p129 = scmp.eq.s32.totalorder %s23, 1
    %p130 = por %p128, %p129
    %p132 = scmp.ne.s32.totalorder %s117, %s131
    %p133 = scmp.eq.s32.totalorder %s23, 0
    %p134 = por %p132, %p133
    %s136 = sadd.s32 %s135, 1
    %p139 = scmp.eq.s32.totalorder %s17, 1
    %p140 = scmp.ne.s32.totalorder %s135, %s137
    %p141 = scmp.eq.s32.totalorder %s17, 0
    %p142 = por %p140, %p141
    %p143 = scmp.ne.s32.totalorder %s135, %s137
    %p144 = scmp.eq.s32.totalorder %s22, 1
    %p145 = por %p143, %p144
    %p146 = scmp.ne.s32.totalorder %s137, %s138
    %p147 = scmp.eq.s32.totalorder %s22, 0
    %p148 = por %p146, %p147
    %p149 = scmp.ne.s32.totalorder %s137, %s138
    %p150 = scmp.eq.s32.totalorder %s23, 1
    %p151 = por %p149, %p150
    %p153 = scmp.ne.s32.totalorder %s138, %s152
    %p154 = scmp.eq.s32.totalorder %s23, 0
    %p155 = por %p153, %p154
    %s157 = sadd.s32 %s156, 1
    %p160 = scmp.eq.s32.totalorder %s17, 1
    %p161 = scmp.ne.s32.totalorder %s156, %s158
    %p162 = scmp.eq.s32.totalorder %s17, 0
    %p163 = por %p161, %p162
    %p164 = scmp.ne.s32.totalorder %s156, %s158
    %p165 = scmp.eq.s32.totalorder %s22, 1
    %p166 = por %p164, %p165
    %p167 = scmp.ne.s32.totalorder %s158, %s159
    %p168 = scmp.eq.s32.totalorder %s22, 0
    %p169 = por %p167, %p168
    %p170 = scmp.ne.s32.totalorder %s158, %s159
    %p171 = scmp.eq.s32.totalorder %s23, 1
    %p172 = por %p170, %p171
    %p174 = scmp.ne.s32.totalorder %s159, %s173
    %p175 = scmp.eq.s32.totalorder %s23, 0
    %p176 = por %p174, %p175
    %s178 = sadd.s32 %s177, 1
    %p181 = scmp.eq.s32.totalorder %s17, 1
    %p182 = scmp.ne.s32.totalorder %s177, %s179
    %p183 = scmp.eq.s32.totalorder %s17, 0
    %p184 = por %p182, %p183
    %p185 = scmp.ne.s32.totalorder %s177, %s179
    %p186 = scmp.eq.s32.totalorder %s22, 1
    %p187 = por %p185, %p186
    %p188 = scmp.ne.s32.totalorder %s179, %s180
    %p189 = scmp.eq.s32.totalorder %s22, 0
    %p190 = por %p188, %p189
    %p191 = scmp.ne.s32.totalorder %s179, %s180
    %p192 = scmp.eq.s32.totalorder %s23, 1
    %p193 = por %p191, %p192
    %p195 = scmp.ne.s32.totalorder %s180, %s194
    %p196 = scmp.eq.s32.totalorder %s23, 0
    %p197 = por %p195, %p196
    %s199 = sadd.s32 %s198, 1
    %p202 = scmp.eq.s32.totalorder %s17, 1
    %p203 = scmp.ne.s32.totalorder %s198, %s200
    %p204 = scmp.eq.s32.totalorder %s17, 0
    %p205 = por %p203, %p204
    %p206 = scmp.ne.s32.totalorder %s198, %s200
    %p207 = scmp.eq.s32.totalorder %s22, 1
    %p208 = por %p206, %p207
    %p209 = scmp.ne.s32.totalorder %s200, %s201
    %p210 = scmp.eq.s32.totalorder %s22, 0
    %p211 = por %p209, %p210
    %p212 = scmp.ne.s32.totalorder %s200, %s201
    %p213 = scmp.eq.s32.totalorder %s23, 1
    %p214 = por %p212, %p213
    %p216 = scmp.ne.s32.totalorder %s201, %s215
    %p217 = scmp.eq.s32.totalorder %s23, 0
    %p218 = por %p216, %p217
    %s220 = sadd.s32 %s219, 1
    %p223 = scmp.eq.s32.totalorder %s17, 1
    %p224 = scmp.ne.s32.totalorder %s219, %s221
    %p225 = scmp.eq.s32.totalorder %s17, 0
    %p226 = por %p224, %p225
    %p227 = scmp.ne.s32.totalorder %s219, %s221
    %p228 = scmp.eq.s32.totalorder %s22, 1
    %p229 = por %p227, %p228
    %p230 = scmp.ne.s32.totalorder %s221, %s222
    %p231 = scmp.eq.s32.totalorder %s22, 0
    %p232 = por %p230, %p231
    %p233 = scmp.ne.s32.totalorder %s221, %s222
    %p234 = scmp.eq.s32.totalorder %s23, 1
    %p235 = por %p233, %p234
    %p237 = scmp.ne.s32.totalorder %s222, %s236
    %p238 = scmp.eq.s32.totalorder %s23, 0
    %p239 = por %p237, %p238
    %s241 = sadd.s32 %s240, 1
    %p244 = scmp.eq.s32.totalorder %s17, 1
    %p245 = scmp.ne.s32.totalorder %s240, %s242
    %p246 = scmp.eq.s32.totalorder %s17, 0
    %p247 = por %p245, %p246
    %p248 = scmp.ne.s32.totalorder %s240, %s242
    %p249 = scmp.eq.s32.totalorder %s22, 1
    %p250 = por %p248, %p249
    %p251 = scmp.ne.s32.totalorder %s242, %s243
    %p252 = scmp.eq.s32.totalorder %s22, 0
    %p253 = por %p251, %p252
    %p254 = scmp.ne.s32.totalorder %s242, %s243
    %p255 = scmp.eq.s32.totalorder %s23, 1
    %p256 = por %p254, %p255
    %p258 = scmp.ne.s32.totalorder %s243, %s257
    %p259 = scmp.eq.s32.totalorder %s23, 0
    %p260 = por %p258, %p259
    %s261 = ssub.s32 %s17, %s24
    %p262 = scmp.eq.s32.totalorder %s261, 0
    %s264 = sadd.s32 %s263, 1
    %s265 = scalar_select %p262, %s263, %s264
    %p268 = pneg %p262
    %p269 = scmp.eq.s32.totalorder %s17, 1
    %p270 = por %p268, %p269
    %p271 = scmp.ne.s32.totalorder %s263, %s266
    %p272 = scmp.eq.s32.totalorder %s17, 0
    %p273 = por %p271, %p272
    %p274 = scmp.ne.s32.totalorder %s263, %s266
    %p275 = scmp.eq.s32.totalorder %s22, 1
    %p276 = por %p274, %p275
    %p277 = scmp.ne.s32.totalorder %s266, %s267
    %p278 = scmp.eq.s32.totalorder %s22, 0
    %p279 = por %p277, %p278
    %p280 = scmp.ne.s32.totalorder %s266, %s267
    %p281 = scmp.eq.s32.totalorder %s23, 1
    %p282 = por %p280, %p281
    %p284 = scmp.ne.s32.totalorder %s267, %s283
    %p285 = scmp.eq.s32.totalorder %s23, 0
    %p286 = por %p284, %p285
    %p287 = scmp.le.s32.totalorder 1, %s17
    %p288 = scmp.lt.s32.totalorder %s17, 3
    %p289 = pnand %p287, %p288
    %p290 = pneg %p289
    // Predicated region
    $region9: #{nerf_moe_forward.1} parent=5 // pred_check
      _
    $region10: #{nerf_moe_forward.1} parent=5 // pred_check_branch
      %292 = sbr.rel (%p289) target = $region12
    $region11: #{nerf_moe_forward.1} parent=5 // pred_region
      %s293 = ssub.s32 %s17, 1
      // Predicated region
      $region13: #{nerf_moe_forward.1} parent=11 // pred_check
        %p294 = pneg %p64
      $region14: #{nerf_moe_forward.1} parent=11 // pred_check_branch
        %296 = sbr.rel (%p294) target = $region16
      $region15: #{nerf_moe_forward.1} parent=11 // pred_region
        _
      $region16: #{nerf_moe_forward.1} parent=11 // pred_fallthru
        _
      // Predicated region
      $region17: #{nerf_moe_forward.1} parent=11 // pred_check
        %p297 = pneg %p85
      $region18: #{nerf_moe_forward.1} parent=11 // pred_check_branch
        %299 = sbr.rel (%p297) target = $region20
      $region19: #{nerf_moe_forward.1} parent=11 // pred_region
        _
      $region20: #{nerf_moe_forward.1} parent=11 // pred_fallthru
        _
      // Predicated region
      $region21: #{nerf_moe_forward.1} parent=11 // pred_check
        %p300 = pneg %p106
      $region22: #{nerf_moe_forward.1} parent=11 // pred_check_branch
        %302 = sbr.rel (%p300) target = $region24
      $region23: #{nerf_moe_forward.1} parent=11 // pred_region
        _
      $region24: #{nerf_moe_forward.1} parent=11 // pred_fallthru
        _
      // Predicated region
      $region25: #{nerf_moe_forward.1} parent=11 // pred_check
        %p303 = pneg %p127
      $region26: #{nerf_moe_forward.1} parent=11 // pred_check_branch
        %305 = sbr.rel (%p303) target = $region28
      $region27: #{nerf_moe_forward.1} parent=11 // pred_region
        _
      $region28: #{nerf_moe_forward.1} parent=11 // pred_fallthru
        _
      // Predicated region
      $region29: #{nerf_moe_forward.1} parent=11 // pred_check
        %p306 = pneg %p148
      $region30: #{nerf_moe_forward.1} parent=11 // pred_check_branch
        %308 = sbr.rel (%p306) target = $region32
      $region31: #{nerf_moe_forward.1} parent=11 // pred_region
        _
      $region32: #{nerf_moe_forward.1} parent=11 // pred_fallthru
        _
      // Predicated region
      $region33: #{nerf_moe_forward.1} parent=11 // pred_check
        %p309 = pneg %p169
      $region34: #{nerf_moe_forward.1} parent=11 // pred_check_branch
        %311 = sbr.rel (%p309) target = $region36
      $region35: #{nerf_moe_forward.1} parent=11 // pred_region
        _
      $region36: #{nerf_moe_forward.1} parent=11 // pred_fallthru
        _
      // Predicated region
      $region37: #{nerf_moe_forward.1} parent=11 // pred_check
        %p312 = pneg %p190
      $region38: #{nerf_moe_forward.1} parent=11 // pred_check_branch
        %314 = sbr.rel (%p312) target = $region40
      $region39: #{nerf_moe_forward.1} parent=11 // pred_region
        _
      $region40: #{nerf_moe_forward.1} parent=11 // pred_fallthru
        _
      // Predicated region
      $region41: #{nerf_moe_forward.1} parent=11 // pred_check
        %p315 = pneg %p211
      $region42: #{nerf_moe_forward.1} parent=11 // pred_check_branch
        %317 = sbr.rel (%p315) target = $region44
      $region43: #{nerf_moe_forward.1} parent=11 // pred_region
        _
      $region44: #{nerf_moe_forward.1} parent=11 // pred_fallthru
        _
      // Predicated region
      $region45: #{nerf_moe_forward.1} parent=11 // pred_check
        %p318 = pneg %p232
      $region46: #{nerf_moe_forward.1} parent=11 // pred_check_branch
        %320 = sbr.rel (%p318) target = $region48
      $region47: #{nerf_moe_forward.1} parent=11 // pred_region
        _
      $region48: #{nerf_moe_forward.1} parent=11 // pred_fallthru
        _
      // Predicated region
      $region49: #{nerf_moe_forward.1} parent=11 // pred_check
        %p321 = pneg %p253
      $region50: #{nerf_moe_forward.1} parent=11 // pred_check_branch
        %323 = sbr.rel (%p321) target = $region52
      $region51: #{nerf_moe_forward.1} parent=11 // pred_region
        _
      $region52: #{nerf_moe_forward.1} parent=11 // pred_fallthru
        _
    $region12: #{nerf_moe_forward.1} parent=5 // pred_fallthru
      _
    %p324 = scmp.lt.s32.totalorder %s17, 2
    // Predicated region
    $region53: #{nerf_moe_forward.1} parent=5 // pred_check
      %p325 = pneg %p324
    $region54: #{nerf_moe_forward.1} parent=5 // pred_check_branch
      %327 = sbr.rel (%p325) target = $region56
    $region55: #{nerf_moe_forward.1} parent=5 // pred_region
      // Predicated region
      $region57: #{nerf_moe_forward.1} parent=55 // pred_check
        %p328 = pneg %p37
      $region58: #{nerf_moe_forward.1} parent=55 // pred_check_branch
        %330 = sbr.rel (%p328) target = $region60
      $region59: #{nerf_moe_forward.1} parent=55 // pred_region
        %s331 = smul.u32 8, %s17
        %p332 = scmp.lt.s32.totalorder %s331, 15
        %s333 = scalar_select %p332, %s331, 15
        %s334 = smul.addr %s333, 8
        %s335 = scalar_lea.vmem %s0, %s334
        %s336 = smul.u32 8, %s17
      $region60: #{nerf_moe_forward.1} parent=55 // pred_fallthru
        _
    $region56: #{nerf_moe_forward.1} parent=5 // pred_fallthru
      _
    %p337 = scmp.le.s32.totalorder 1, %s17
    %p338 = scmp.lt.s32.totalorder %s17, 3
    %p339 = pnand %p337, %p338
    %p340 = pneg %p339
    // Predicated region
    $region61: #{nerf_moe_forward.1} parent=5 // pred_check
      _
    $region62: #{nerf_moe_forward.1} parent=5 // pred_check_branch
      %342 = sbr.rel (%p339) target = $region64
    $region63: #{nerf_moe_forward.1} parent=5 // pred_region
      %s343 = ssub.s32 %s17, 1
      %s344 = smul.u32 8, %s22
      %p345 = scmp.lt.s32.totalorder %s344, 15
      %s346 = scalar_select %p345, %s344, 15
      %s347 = smul.addr %s346, 8
      %s348 = scalar_lea.vmem %s0, %s347
      %p349 = pneg %p43
      %p350 = pneg %p40
      %p351 = pneg %p64
      %p352 = pneg %p61
      %p353 = pneg %p85
      %p354 = pneg %p82
      %p355 = pneg %p106
      %p356 = pneg %p103
      %p357 = pneg %p127
      %p358 = pneg %p124
      %p359 = pneg %p148
      %p360 = pneg %p145
      %p361 = pneg %p169
      %p362 = pneg %p166
      %p363 = pneg %p190
      %p364 = pneg %p187
      %p365 = pneg %p211
      %p366 = pneg %p208
      %p367 = pneg %p232
      %p368 = pneg %p229
      %p369 = pneg %p253
      %p370 = pneg %p250
      %p371 = pneg %p279
      %p372 = pneg %p276
      %s373 = smul.u32 8, %s22
      %p374 = scmp.lt.s32.totalorder %s373, 15
      %s375 = scalar_select %p374, %s373, 15
      %s376 = smul.addr %s375, 4
      %s377 = scalar_lea.vmem %s11, %s376
      %s378 = smul.u32 8, %s22
      %p379 = scmp.lt.s32.totalorder %s378, 15
      %s380 = scalar_select %p379, %s378, 15
      %s381 = smul.addr %s380, 8
      %s382 = scalar_lea.vmem %s0, %s381
      %s383 = smul.u32 8, %s22
      %s384 = smul.u32 8, %s22
      %p385 = scmp.lt.s32.totalorder %s384, 15
      %s386 = scalar_select %p385, %s384, 15
      %s387 = smul.addr %s386, 4
      %s388 = scalar_lea.vmem %s11, %s387
      %s389 = smul.u32 8, %s22
      %v391 = vld [vmem:[%s382] sm:$0x3f]
      %v392 = vld [vmem:[%s382 + $0x8] sm:$0x3f]
      %v393 = vld [vmem:[%s382 + $0x10] sm:$0x3f]
      %v394 = vld [vmem:[%s382 + $0x18] sm:$0x3f]
      %v395 = vld [vmem:[%s382 + $0x20] sm:$0x3f]
      %v396 = vld [vmem:[%s382 + $0x28] sm:$0x3f]
      %v397 = vld [vmem:[%s382 + $0x30] sm:$0x3f]
      %v398 = vld [vmem:[%s382 + $0x38] sm:$0x3f]
      %v399 = vld [vmem:[%s1] sm:$0xff]
      %v400 = vld [vmem:[%s1 + $0x8] sm:$0xff]
      %v401 = vld [vmem:[%s1 + $0x10] sm:$0xff]
      %v402 = vld [vmem:[%s1 + $0x18] sm:$0xff]
      %v403 = vld [vmem:[%s1 + $0x20] sm:$0xff]
      %v404 = vld [vmem:[%s1 + $0x28] sm:$0xff]
      %v405 = vld [vmem:[%s1 + $0x30] sm:$0xff]
      %v406 = vld [vmem:[%s1 + $0x38] sm:$0xff]
      %v407 = vld [vmem:[%s1 + $0x40] sm:$0xff]
      %v408 = vld [vmem:[%s1 + $0x48] sm:$0xff]
      %v409 = vld [vmem:[%s1 + $0x50] sm:$0xff]
      %v410 = vld [vmem:[%s1 + $0x58] sm:$0xff]
      %v411 = vld [vmem:[%s1 + $0x60] sm:$0xff]
      %v412 = vld [vmem:[%s2] sm:$0xff]
      %v413 = vld [vmem:[%s2 + $0x8] sm:$0xff]
      %v414 = vld [vmem:[%s2 + $0x10] sm:$0xff]
      %v415 = vld [vmem:[%s2 + $0x18] sm:$0xff]
      %v416 = vld [vmem:[%s2 + $0x20] sm:$0xff]
      %v417 = vld [vmem:[%s2 + $0x28] sm:$0xff]
      %v418 = vld [vmem:[%s2 + $0x30] sm:$0xff]
      %v419 = vld [vmem:[%s2 + $0x38] sm:$0xff]
      %v420 = vld [vmem:[%s2 + $0x40] sm:$0xff]
      %v421 = vld [vmem:[%s2 + $0x48] sm:$0xff]
      %v422 = vld [vmem:[%s2 + $0x50] sm:$0xff]
      %v423 = vld [vmem:[%s2 + $0x58] sm:$0xff]
      %v424 = vld [vmem:[%s2 + $0x60] sm:$0xff]
      %426 = vset.pattern.permute.xlu0 0
      %427 = vperm.xlu0 %426, %v412
      %v428 = vpop.permute.xlu0 %427
      %431 = vset.pattern.permute.xlu0 0
      %432 = vperm.xlu0 %431, %v413
      %v433 = vpop.permute.xlu0 %432
      %436 = vset.pattern.permute.xlu0 0
      %437 = vperm.xlu0 %436, %v414
      %v438 = vpop.permute.xlu0 %437
      %441 = vset.pattern.permute.xlu0 0
      %442 = vperm.xlu0 %441, %v415
      %v443 = vpop.permute.xlu0 %442
      %446 = vset.pattern.permute.xlu0 0
      %447 = vperm.xlu0 %446, %v416
      %v448 = vpop.permute.xlu0 %447
      %451 = vset.pattern.permute.xlu0 0
      %452 = vperm.xlu0 %451, %v417
      %v453 = vpop.permute.xlu0 %452
      %456 = vset.pattern.permute.xlu0 0
      %457 = vperm.xlu0 %456, %v418
      %v458 = vpop.permute.xlu0 %457
      %461 = vset.pattern.permute.xlu0 0
      %462 = vperm.xlu0 %461, %v419
      %v463 = vpop.permute.xlu0 %462
      %466 = vset.pattern.permute.xlu0 0
      %467 = vperm.xlu0 %466, %v420
      %v468 = vpop.permute.xlu0 %467
      %471 = vset.pattern.permute.xlu0 0
      %472 = vperm.xlu0 %471, %v421
      %v473 = vpop.permute.xlu0 %472
      %476 = vset.pattern.permute.xlu0 0
      %477 = vperm.xlu0 %476, %v422
      %v478 = vpop.permute.xlu0 %477
      %481 = vset.pattern.permute.xlu0 0
      %482 = vperm.xlu0 %481, %v423
      %v483 = vpop.permute.xlu0 %482
      %486 = vset.pattern.permute.xlu0 0
      %487 = vperm.xlu0 %486, %v424
      %v488 = vpop.permute.xlu0 %487
      %vm490 = vcmask 48128
      %v492 = vsel %vm490, %v399, 0
      %v495 = vsel %vm490, %v400, 0
      %v498 = vsel %vm490, %v401, 0
      %v501 = vsel %vm490, %v402, 0
      %v504 = vsel %vm490, %v403, 0
      %v507 = vsel %vm490, %v404, 0
      %v510 = vsel %vm490, %v405, 0
      %v513 = vsel %vm490, %v406, 0
      %v516 = vsel %vm490, %v407, 0
      %v519 = vsel %vm490, %v408, 0
      %v522 = vsel %vm490, %v409, 0
      %v525 = vsel %vm490, %v410, 0
      %v528 = vsel %vm490, %v411, 0
      %vm530 = vcmask 1045504
      %v532 = vsel %vm530, %v391, 0
      %v535 = vsel %vm530, %v392, 0
      %v538 = vsel %vm530, %v393, 0
      %v541 = vsel %vm530, %v394, 0
      %v544 = vsel %vm530, %v395, 0
      %v547 = vsel %vm530, %v396, 0
      %v550 = vsel %vm530, %v397, 0
      %v553 = vsel %vm530, %v398, 0
      %555 = vmatprep.subr.mxu0 %v535
      %556 = vmatpush1.msra.mxu0 %v532
      %557 = vmatprep.subr.mxu0 0.0
      %558 = vmatpush1.msra.mxu0 0.0
      %559 = vmatprep.subr.mxu0 0.0
      %560 = vmatpush1.msra.mxu0 0.0
      %561 = vmatprep.subr.mxu0 0.0
      %562 = vmatpush1.msra.mxu0 0.0
      %563 = vmatprep.subr.mxu0 0.0
      %564 = vmatpush1.msra.mxu0 0.0
      %565 = vmatprep.subr.mxu0 0.0
      %566 = vmatpush1.msra.mxu0 0.0
      %567 = vmatprep.subr.mxu0 0.0
      %568 = vmatpush1.msra.mxu0 0.0
      %569 = vmatprep.subr.mxu0 0.0
      %570 = vmatpush1.msra.mxu0 0.0
      %571 = vmatprep.subr.mxu0 0.0
      %572 = vmatpush1.msra.mxu0 0.0
      %573 = vmatprep.subr.mxu0 0.0
      %574 = vmatpush1.msra.mxu0 0.0
      %575 = vmatprep.subr.mxu0 0.0
      %576 = vmatpush1.msra.mxu0 0.0
      %577 = vmatprep.subr.mxu0 0.0
      %578 = vmatpush1.msra.mxu0 0.0
      %579 = vmatprep.subr.mxu0 0.0
      %580 = vmatpush1.msra.mxu0 0.0
      %581 = vmatprep.subr.mxu0 0.0
      %582 = vmatpush1.msra.mxu0 0.0
      %583 = vmatprep.subr.mxu0 0.0
      %584 = vmatpush1.msra.mxu0 0.0
      %585 = vmatprep.subr.mxu0 0.0
      %586 = vmatpush1.msra.mxu0 0.0
      %587 = vmatprep.subr.mxu0 0.0
      %588 = vmatpush1.msra.mxu0 0.0
      %589 = vmatprep.subr.mxu0 0.0
      %590 = vmatpush1.msra.mxu0 0.0
      %591 = vmatprep.subr.mxu0 0.0
      %592 = vmatpush1.msra.mxu0 0.0
      %593 = vmatprep.subr.mxu0 0.0
      %594 = vmatpush1.msra.mxu0 0.0
      %595 = vmatprep.subr.mxu0 0.0
      %596 = vmatpush1.msra.mxu0 0.0
      %597 = vmatprep.subr.mxu0 0.0
      %598 = vmatpush1.msra.mxu0 0.0
      %599 = vmatprep.subr.mxu0 0.0
      %600 = vmatpush1.msra.mxu0 0.0
      %601 = vmatprep.subr.mxu0 0.0
      %602 = vmatpush1.msra.mxu0 0.0
      %603 = vmatprep.subr.mxu0 0.0
      %604 = vmatpush1.msra.mxu0 0.0
      %605 = vmatprep.subr.mxu0 0.0
      %606 = vmatpush1.msra.mxu0 0.0
      %607 = vmatprep.subr.mxu0 0.0
      %608 = vmatpush1.msra.mxu0 0.0
      %609 = vmatprep.subr.mxu0 0.0
      %610 = vmatpush1.msra.mxu0 0.0
      %611 = vmatprep.subr.mxu0 0.0
      %612 = vmatpush1.msra.mxu0 0.0
      %613 = vmatprep.subr.mxu0 0.0
      %614 = vmatpush1.msra.mxu0 0.0
      %615 = vmatprep.subr.mxu0 0.0
      %616 = vmatpush1.msra.mxu0 0.0
      %617 = vmatprep.subr.mxu0 0.0
      %618 = vmatpush1.msra.mxu0 0.0
      %619 = vmatprep.mubr.f32.mxu0 0.0
      %620 = vmatmul.mubr.f32.gmra.mrb[0].mxu0 %v492
      %v621 = vpop.f32.mrb[0].mxu0
      %v622 = vadd.f32 %v428, %v621
      %v623 = vpop.f32.mrb[0].mxu0
      %v624 = vadd.f32 %v428, %v623
      %625 = vmatprep.mubr.f32.mxu0 0.0
      %626 = vmatmul.mubr.f32.gmra.mrb[0].mxu0 %v495
      %v627 = vpop.f32.mrb[0].mxu0
      %v628 = vadd.f32 %v433, %v627
      %v629 = vpop.f32.mrb[0].mxu0
      %v630 = vadd.f32 %v433, %v629
      %631 = vmatprep.mubr.f32.mxu0 0.0
      %632 = vmatmul.mubr.f32.gmra.mrb[0].mxu0 %v498
      %v633 = vpop.f32.mrb[0].mxu0
      %v634 = vadd.f32 %v438, %v633
      %v635 = vpop.f32.mrb[0].mxu0
      %v636 = vadd.f32 %v438, %v635
      %637 = vmatprep.mubr.f32.mxu0 0.0
      %638 = vmatmul.mubr.f32.gmra.mrb[0].mxu0 %v501
      %v639 = vpop.f32.mrb[0].mxu0
      %v640 = vadd.f32 %v443, %v639
      %v641 = vpop.f32.mrb[0].mxu0
      %v642 = vadd.f32 %v443, %v641
      %643 = vmatprep.mubr.f32.mxu0 0.0
      %644 = vmatmul.mubr.f32.gmra.mrb[0].mxu0 %v504
      %v645 = vpop.f32.mrb[0].mxu0
      %v646 = vadd.f32 %v448, %v645
      %v647 = vpop.f32.mrb[0].mxu0
      %v648 = vadd.f32 %v448, %v647
      %649 = vmatprep.mubr.f32.mxu0 0.0
      %650 = vmatmul.mubr.f32.gmra.mrb[0].mxu0 %v507
      %v651 = vpop.f32.mrb[0].mxu0
      %v652 = vadd.f32 %v453, %v651
      %v653 = vpop.f32.mrb[0].mxu0
      %v654 = vadd.f32 %v453, %v653
      %655 = vmatprep.mubr.f32.mxu0 0.0
      %656 = vmatmul.mubr.f32.gmra.mrb[0].mxu0 %v510
      %v657 = vpop.f32.mrb[0].mxu0
      %v658 = vadd.f32 %v458, %v657
      %v659 = vpop.f32.mrb[0].mxu0
      %v660 = vadd.f32 %v458, %v659
      %661 = vmatprep.mubr.f32.mxu0 0.0
      %662 = vmatmul.mubr.f32.gmra.mrb[0].mxu0 %v513
      %v663 = vpop.f32.mrb[0].mxu0
      %v664 = vadd.f32 %v463, %v663
      %v665 = vpop.f32.mrb[0].mxu0
      %v666 = vadd.f32 %v463, %v665
      %667 = vmatprep.mubr.f32.mxu0 0.0
      %668 = vmatmul.mubr.f32.gmra.mrb[0].mxu0 %v516
      %v669 = vpop.f32.mrb[0].mxu0
      %v670 = vadd.f32 %v468, %v669
      %v671 = vpop.f32.mrb[0].mxu0
      %v672 = vadd.f32 %v468, %v671
      %673 = vmatprep.mubr.f32.mxu0 0.0
      %674 = vmatmul.mubr.f32.gmra.mrb[0].mxu0 %v519
      %v675 = vpop.f32.mrb[0].mxu0
      %v676 = vadd.f32 %v473, %v675
      %v677 = vpop.f32.mrb[0].mxu0
      %v678 = vadd.f32 %v473, %v677
      %679 = vmatprep.mubr.f32.mxu0 0.0
      %680 = vmatmul.mubr.f32.gmra.mrb[0].mxu0 %v522
      %v681 = vpop.f32.mrb[0].mxu0
      %v682 = vadd.f32 %v478, %v681
      %v683 = vpop.f32.mrb[0].mxu0
      %v684 = vadd.f32 %v478, %v683
      %685 = vmatprep.mubr.f32.mxu0 0.0
      %686 = vmatmul.mubr.f32.gmra.mrb[0].mxu0 %v525
      %v687 = vpop.f32.mrb[0].mxu0
      %v688 = vadd.f32 %v483, %v687
      %v689 = vpop.f32.mrb[0].mxu0
      %v690 = vadd.f32 %v483, %v689
      %691 = vmatprep.mubr.f32.mxu0 0.0
      %692 = vmatmul.mubr.f32.gmra.mrb[0].mxu0 %v528
      %v693 = vpop.f32.mrb[0].mxu0
      %v694 = vadd.f32 %v488, %v693
      %v695 = vpop.f32.mrb[0].mxu0
      %v696 = vadd.f32 %v488, %v695
      %697 = vdwg.mxu0
      %698 = vmatprep.subr.mxu0 %v541
      %699 = vmatpush1.msra.mxu0 %v538
      %700 = vmatprep.subr.mxu0 0.0
      %701 = vmatpush1.msra.mxu0 0.0
      %702 = vmatprep.subr.mxu0 0.0
      %703 = vmatpush1.msra.mxu0 0.0
      %704 = vmatprep.subr.mxu0 0.0
      %705 = vmatpush1.msra.mxu0 0.0
      %706 = vmatprep.subr.mxu0 0.0
      %707 = vmatpush1.msra.mxu0 0.0
      %708 = vmatprep.subr.mxu0 0.0
      %709 = vmatpush1.msra.mxu0 0.0
      %710 = vmatprep.subr.mxu0 0.0
      %711 = vmatpush1.msra.mxu0 0.0
      %712 = vmatprep.subr.mxu0 0.0
      %713 = vmatpush1.msra.mxu0 0.0
      %714 = vmatprep.subr.mxu0 0.0
      %715 = vmatpush1.msra.mxu0 0.0
      %716 = vmatprep.subr.mxu0 0.0
      %717 = vmatpush1.msra.mxu0 0.0
      %718 = vmatprep.subr.mxu0 0.0
      %719 = vmatpush1.msra.mxu0 0.0
      %720 = vmatprep.subr.mxu0 0.0
      %721 = vmatpush1.msra.mxu0 0.0
      %722 = vmatprep.subr.mxu0 0.0
      %723 = vmatpush1.msra.mxu0 0.0
      %724 = vmatprep.subr.mxu0 0.0
      %725 = vmatpush1.msra.mxu0 0.0
      %726 = vmatprep.subr.mxu0 0.0
      %727 = vmatpush1.msra.mxu0 0.0
      %728 = vmatprep.subr.mxu0 0.0
      %729 = vmatpush1.msra.mxu0 0.0
      %730 = vmatprep.subr.mxu0 0.0
      %731 = vmatpush1.msra.mxu0 0.0
      %732 = vmatprep.subr.mxu0 0.0
      %733 = vmatpush1.msra.mxu0 0.0
      %734 = vmatprep.subr.mxu0 0.0
      %735 = vmatpush1.msra.mxu0 0.0
      %736 = vmatprep.subr.mxu0 0.0
      %737 = vmatpush1.msra.mxu0 0.0
      %738 = vmatprep.subr.mxu0 0.0
      %739 = vmatpush1.msra.mxu0 0.0
      %740 = vmatprep.subr.mxu0 0.0
      %741 = vmatpush1.msra.mxu0 0.0
      %742 = vmatprep.subr.mxu0 0.0
      %743 = vmatpush1.msra.mxu0 0.0
      %744 = vmatprep.subr.mxu0 0.0
      %745 = vmatpush1.msra.mxu0 0.0
      %746 = vmatprep.subr.mxu0 0.0
      %747 = vmatpush1.msra.mxu0 0.0
      %748 = vmatprep.subr.mxu0 0.0
      %749 = vmatpush1.msra.mxu0 0.0
      %750 = vmatprep.subr.mxu0 0.0
      %751 = vmatpush1.msra.mxu0 0.0
      %752 = vmatprep.subr.mxu0 0.0
      %753 = vmatpush1.msra.mxu0 0.0
      %754 = vmatprep.subr.mxu0 0.0
      %755 = vmatpush1.msra.mxu0 0.0
      %756 = vmatprep.subr.mxu0 0.0
      %757 = vmatpush1.msra.mxu0 0.0
      %758 = vmatprep.subr.mxu0 0.0
      %759 = vmatpush1.msra.mxu0 0.0
      %760 = vmatprep.subr.mxu0 0.0
      %761 = vmatpush1.msra.mxu0 0.0
      %762 = vmatprep.mubr.f32.mxu0 0.0
      %763 = vmatmul.mubr.f32.gmra.mrb[0].mxu0 %v492
      %v764 = vpop.f32.mrb[0].mxu0
      %v765 = vadd.f32 %v428, %v764
      %v766 = vpop.f32.mrb[0].mxu0
      %v767 = vadd.f32 %v428, %v766
      %768 = vmatprep.mubr.f32.mxu0 0.0
      %769 = vmatmul.mubr.f32.gmra.mrb[0].mxu0 %v495
      %v770 = vpop.f32.mrb[0].mxu0
      %v771 = vadd.f32 %v433, %v770
      %v772 = vpop.f32.mrb[0].mxu0
      %v773 = vadd.f32 %v433, %v772
      %774 = vmatprep.mubr.f32.mxu0 0.0
      %775 = vmatmul.mubr.f32.gmra.mrb[0].mxu0 %v498
      %v776 = vpop.f32.mrb[0].mxu0
      %v777 = vadd.f32 %v438, %v776
      %v778 = vpop.f32.mrb[0].mxu0
      %v779 = vadd.f32 %v438, %v778
      %780 = vmatprep.mubr.f32.mxu0 0.0
      %781 = vmatmul.mubr.f32.gmra.mrb[0].mxu0 %v501
      %v782 = vpop.f32.mrb[0].mxu0
      %v783 = vadd.f32 %v443, %v782
      %v784 = vpop.f32.mrb[0].mxu0
      %v785 = vadd.f32 %v443, %v784
      %786 = vmatprep.mubr.f32.mxu0 0.0
      %787 = vmatmul.mubr.f32.gmra.mrb[0].mxu0 %v504
      %v788 = vpop.f32.mrb[0].mxu0
      %v789 = vadd.f32 %v448, %v788
      %v790 = vpop.f32.mrb[0].mxu0
      %v791 = vadd.f32 %v448, %v790
      %792 = vmatprep.mubr.f32.mxu0 0.0
      %793 = vmatmul.mubr.f32.gmra.mrb[0].mxu0 %v507
      %v794 = vpop.f32.mrb[0].mxu0
      %v795 = vadd.f32 %v453, %v794
      %v796 = vpop.f32.mrb[0].mxu0
      %v797 = vadd.f32 %v453, %v796
      %798 = vmatprep.mubr.f32.mxu0 0.0
      %799 = vmatmul.mubr.f32.gmra.mrb[0].mxu0 %v510
      %v800 = vpop.f32.mrb[0].mxu0
      %v801 = vadd.f32 %v458, %v800
      %v802 = vpop.f32.mrb[0].mxu0
      %v803 = vadd.f32 %v458, %v802
      %804 = vmatprep.mubr.f32.mxu0 0.0
      %805 = vmatmul.mubr.f32.gmra.mrb[0].mxu0 %v513
      %v806 = vpop.f32.mrb[0].mxu0
      %v807 = vadd.f32 %v463, %v806
      %v808 = vpop.f32.mrb[0].mxu0
      %v809 = vadd.f32 %v463, %v808
      %810 = vmatprep.mubr.f32.mxu0 0.0
      %811 = vmatmul.mubr.f32.gmra.mrb[0].mxu0 %v516
      %v812 = vpop.f32.mrb[0].mxu0
      %v813 = vadd.f32 %v468, %v812
      %v814 = vpop.f32.mrb[0].mxu0
      %v815 = vadd.f32 %v468, %v814
      %816 = vmatprep.mubr.f32.mxu0 0.0
      %817 = vmatmul.mubr.f32.gmra.mrb[0].mxu0 %v519
      %v818 = vpop.f32.mrb[0].mxu0
      %v819 = vadd.f32 %v473, %v818
      %v820 = vpop.f32.mrb[0].mxu0
      %v821 = vadd.f32 %v473, %v820
      %822 = vmatprep.mubr.f32.mxu0 0.0
      %823 = vmatmul.mubr.f32.gmra.mrb[0].mxu0 %v522
      %v824 = vpop.f32.mrb[0].mxu0
      %v825 = vadd.f32 %v478, %v824
      %v826 = vpop.f32.mrb[0].mxu0
      %v827 = vadd.f32 %v478, %v826
      %828 = vmatprep.mubr.f32.mxu0 0.0
      %829 = vmatmul.mubr.f32.gmra.mrb[0].mxu0 %v525
      %v830 = vpop.f32.mrb[0].mxu0
      %v831 = vadd.f32 %v483, %v830
      %v832 = vpop.f32.mrb[0].mxu0
      %v833 = vadd.f32 %v483, %v832
      %834 = vmatprep.mubr.f32.mxu0 0.0
      %835 = vmatmul.mubr.f32.gmra.mrb[0].mxu0 %v528
      %v836 = vpop.f32.mrb[0].mxu0
      %v837 = vadd.f32 %v488, %v836
      %v838 = vpop.f32.mrb[0].mxu0
      %v839 = vadd.f32 %v488, %v838
      %840 = vdwg.mxu0
      %841 = vmatprep.subr.mxu0 %v547
      %842 = vmatpush1.msra.mxu0 %v544
      %843 = vmatprep.subr.mxu0 0.0
      %844 = vmatpush1.msra.mxu0 0.0
      %845 = vmatprep.subr.mxu0 0.0
      %846 = vmatpush1.msra.mxu0 0.0
      %847 = vmatprep.subr.mxu0 0.0
      %848 = vmatpush1.msra.mxu0 0.0
      %849 = vmatprep.subr.mxu0 0.0
      %850 = vmatpush1.msra.mxu0 0.0
      %851 = vmatprep.subr.mxu0 0.0
      %852 = vmatpush1.msra.mxu0 0.0
      %853 = vmatprep.subr.mxu0 0.0
      %854 = vmatpush1.msra.mxu0 0.0
      %855 = vmatprep.subr.mxu0 0.0
      %856 = vmatpush1.msra.mxu0 0.0
      %857 = vmatprep.subr.mxu0 0.0
      %858 = vmatpush1.msra.mxu0 0.0
      %859 = vmatprep.subr.mxu0 0.0
      %860 = vmatpush1.msra.mxu0 0.0
      %861 = vmatprep.subr.mxu0 0.0
      %862 = vmatpush1.msra.mxu0 0.0
      %863 = vmatprep.subr.mxu0 0.0
      %864 = vmatpush1.msra.mxu0 0.0
      %865 = vmatprep.subr.mxu0 0.0
      %866 = vmatpush1.msra.mxu0 0.0
      %867 = vmatprep.subr.mxu0 0.0
      %868 = vmatpush1.msra.mxu0 0.0
      %869 = vmatprep.subr.mxu0 0.0
      %870 = vmatpush1.msra.mxu0 0.0
      %871 = vmatprep.subr.mxu0 0.0
      %872 = vmatpush1.msra.mxu0 0.0
      %873 = vmatprep.subr.mxu0 0.0
      %874 = vmatpush1.msra.mxu0 0.0
      %875 = vmatprep.subr.mxu0 0.0
      %876 = vmatpush1.msra.mxu0 0.0
      %877 = vmatprep.subr.mxu0 0.0
      %878 = vmatpush1.msra.mxu0 0.0
      %879 = vmatprep.subr.mxu0 0.0
      %880 = vmatpush1.msra.mxu0 0.0
      %881 = vmatprep.subr.mxu0 0.0
      %882 = vmatpush1.msra.mxu0 0.0
      %883 = vmatprep.subr.mxu0 0.0
      %884 = vmatpush1.msra.mxu0 0.0
      %885 = vmatprep.subr.mxu0 0.0
      %886 = vmatpush1.msra.mxu0 0.0
      %887 = vmatprep.subr.mxu0 0.0
      %888 = vmatpush1.msra.mxu0 0.0
      %889 = vmatprep.subr.mxu0 0.0
      %890 = vmatpush1.msra.mxu0 0.0
      %891 = vmatprep.subr.mxu0 0.0
      %892 = vmatpush1.msra.mxu0 0.0
      %893 = vmatprep.subr.mxu0 0.0
      %894 = vmatpush1.msra.mxu0 0.0
      %895 = vmatprep.subr.mxu0 0.0
      %896 = vmatpush1.msra.mxu0 0.0
      %897 = vmatprep.subr.mxu0 0.0
      %898 = vmatpush1.msra.mxu0 0.0
      %899 = vmatprep.subr.mxu0 0.0
      %900 = vmatpush1.msra.mxu0 0.0
      %901 = vmatprep.subr.mxu0 0.0
      %902 = vmatpush1.msra.mxu0 0.0
      %903 = vmatprep.subr.mxu0 0.0
      %904 = vmatpush1.msra.mxu0 0.0
      %905 = vmatprep.mubr.f32.mxu0 0.0
      %906 = vmatmul.mubr.f32.gmra.mrb[0].mxu0 %v492
      %v907 = vpop.f32.mrb[0].mxu0
      %v908 = vadd.f32 %v428, %v907
      %v909 = vpop.f32.mrb[0].mxu0
      %v910 = vadd.f32 %v428, %v909
      %911 = vmatprep.mubr.f32.mxu0 0.0
      %912 = vmatmul.mubr.f32.gmra.mrb[0].mxu0 %v495
      %v913 = vpop.f32.mrb[0].mxu0
      %v914 = vadd.f32 %v433, %v913
      %v915 = vpop.f32.mrb[0].mxu0
      %v916 = vadd.f32 %v433, %v915
      %917 = vmatprep.mubr.f32.mxu0 0.0
      %918 = vmatmul.mubr.f32.gmra.mrb[0].mxu0 %v498
      %v919 = vpop.f32.mrb[0].mxu0
      %v920 = vadd.f32 %v438, %v919
      %v921 = vpop.f32.mrb[0].mxu0
      %v922 = vadd.f32 %v438, %v921
      %923 = vmatprep.mubr.f32.mxu0 0.0
      %924 = vmatmul.mubr.f32.gmra.mrb[0].mxu0 %v501
      %v925 = vpop.f32.mrb[0].mxu0
      %v926 = vadd.f32 %v443, %v925
      %v927 = vpop.f32.mrb[0].mxu0
      %v928 = vadd.f32 %v443, %v927
      %929 = vmatprep.mubr.f32.mxu0 0.0
      %930 = vmatmul.mubr.f32.gmra.mrb[0].mxu0 %v504
      %v931 = vpop.f32.mrb[0].mxu0
      %v932 = vadd.f32 %v448, %v931
      %v933 = vpop.f32.mrb[0].mxu0
      %v934 = vadd.f32 %v448, %v933
      %935 = vmatprep.mubr.f32.mxu0 0.0
      %936 = vmatmul.mubr.f32.gmra.mrb[0].mxu0 %v507
      %v937 = vpop.f32.mrb[0].mxu0
      %v938 = vadd.f32 %v453, %v937
      %v939 = vpop.f32.mrb[0].mxu0
      %v940 = vadd.f32 %v453, %v939
      %941 = vmatprep.mubr.f32.mxu0 0.0
      %942 = vmatmul.mubr.f32.gmra.mrb[0].mxu0 %v510
      %v943 = vpop.f32.mrb[0].mxu0
      %v944 = vadd.f32 %v458, %v943
      %v945 = vpop.f32.mrb[0].mxu0
      %v946 = vadd.f32 %v458, %v945
      %947 = vmatprep.mubr.f32.mxu0 0.0
      %948 = vmatmul.mubr.f32.gmra.mrb[0].mxu0 %v513
      %v949 = vpop.f32.mrb[0].mxu0
      %v950 = vadd.f32 %v463, %v949
      %v951 = vpop.f32.mrb[0].mxu0
      %v952 = vadd.f32 %v463, %v951
      %953 = vmatprep.mubr.f32.mxu0 0.0
      %954 = vmatmul.mubr.f32.gmra.mrb[0].mxu0 %v516
      %v955 = vpop.f32.mrb[0].mxu0
      %v956 = vadd.f32 %v468, %v955
      %v957 = vpop.f32.mrb[0].mxu0
      %v958 = vadd.f32 %v468, %v957
      %959 = vmatprep.mubr.f32.mxu0 0.0
      %960 = vmatmul.mubr.f32.gmra.mrb[0].mxu0 %v519
      %v961 = vpop.f32.mrb[0].mxu0
      %v962 = vadd.f32 %v473, %v961
      %v963 = vpop.f32.mrb[0].mxu0
      %v964 = vadd.f32 %v473, %v963
      %965 = vmatprep.mubr.f32.mxu0 0.0
      %966 = vmatmul.mubr.f32.gmra.mrb[0].mxu0 %v522
      %v967 = vpop.f32.mrb[0].mxu0
      %v968 = vadd.f32 %v478, %v967
      %v969 = vpop.f32.mrb[0].mxu0
      %v970 = vadd.f32 %v478, %v969
      %971 = vmatprep.mubr.f32.mxu0 0.0
      %972 = vmatmul.mubr.f32.gmra.mrb[0].mxu0 %v525
      %v973 = vpop.f32.mrb[0].mxu0
      %v974 = vadd.f32 %v483, %v973
      %v975 = vpop.f32.mrb[0].mxu0
      %v976 = vadd.f32 %v483, %v975
      %977 = vmatprep.mubr.f32.mxu0 0.0
      %978 = vmatmul.mubr.f32.gmra.mrb[0].mxu0 %v528
      %v979 = vpop.f32.mrb[0].mxu0
      %v980 = vadd.f32 %v488, %v979
      %v981 = vpop.f32.mrb[0].mxu0
      %v982 = vadd.f32 %v488, %v981
      %983 = vdwg.mxu0
      %984 = vmatprep.subr.mxu0 %v553
      %985 = vmatpush1.msra.mxu0 %v550
      %986 = vmatprep.subr.mxu0 0.0
      %987 = vmatpush1.msra.mxu0 0.0
      %988 = vmatprep.subr.mxu0 0.0
      %989 = vmatpush1.msra.mxu0 0.0
      %990 = vmatprep.subr.mxu0 0.0
      %991 = vmatpush1.msra.mxu0 0.0
      %992 = vmatprep.subr.mxu0 0.0
      %993 = vmatpush1.msra.mxu0 0.0
      %994 = vmatprep.subr.mxu0 0.0
      %995 = vmatpush1.msra.mxu0 0.0
      %996 = vmatprep.subr.mxu0 0.0
      %997 = vmatpush1.msra.mxu0 0.0
      %998 = vmatprep.subr.mxu0 0.0
      %999 = vmatpush1.msra.mxu0 0.0
      %1000 = vmatprep.subr.mxu0 0.0
      %1001 = vmatpush1.msra.mxu0 0.0
      %1002 = vmatprep.subr.mxu0 0.0
      %1003 = vmatpush1.msra.mxu0 0.0
      %1004 = vmatprep.subr.mxu0 0.0
      %1005 = vmatpush1.msra.mxu0 0.0
      %1006 = vmatprep.subr.mxu0 0.0
      %1007 = vmatpush1.msra.mxu0 0.0
      %1008 = vmatprep.subr.mxu0 0.0
      %1009 = vmatpush1.msra.mxu0 0.0
      %1010 = vmatprep.subr.mxu0 0.0
      %1011 = vmatpush1.msra.mxu0 0.0
      %1012 = vmatprep.subr.mxu0 0.0
      %1013 = vmatpush1.msra.mxu0 0.0
      %1014 = vmatprep.subr.mxu0 0.0
      %1015 = vmatpush1.msra.mxu0 0.0
      %1016 = vmatprep.subr.mxu0 0.0
      %1017 = vmatpush1.msra.mxu0 0.0
      %1018 = vmatprep.subr.mxu0 0.0
      %1019 = vmatpush1.msra.mxu0 0.0
      %1020 = vmatprep.subr.mxu0 0.0
      %1021 = vmatpush1.msra.mxu0 0.0
      %1022 = vmatprep.subr.mxu0 0.0
      %1023 = vmatpush1.msra.mxu0 0.0
      %1024 = vmatprep.subr.mxu0 0.0
      %1025 = vmatpush1.msra.mxu0 0.0
      %1026 = vmatprep.subr.mxu0 0.0
      %1027 = vmatpush1.msra.mxu0 0.0
      %1028 = vmatprep.subr.mxu0 0.0
      %1029 = vmatpush1.msra.mxu0 0.0
      %1030 = vmatprep.subr.mxu0 0.0
      %1031 = vmatpush1.msra.mxu0 0.0
      %1032 = vmatprep.subr.mxu0 0.0
      %1033 = vmatpush1.msra.mxu0 0.0
      %1034 = vmatprep.subr.mxu0 0.0
      %1035 = vmatpush1.msra.mxu0 0.0
      %1036 = vmatprep.subr.mxu0 0.0
      %1037 = vmatpush1.msra.mxu0 0.0
      %1038 = vmatprep.subr.mxu0 0.0
      %1039 = vmatpush1.msra.mxu0 0.0
      %1040 = vmatprep.subr.mxu0 0.0
      %1041 = vmatpush1.msra.mxu0 0.0
      %1042 = vmatprep.subr.mxu0 0.0
      %1043 = vmatpush1.msra.mxu0 0.0
      %1044 = vmatprep.subr.mxu0 0.0
      %1045 = vmatpush1.msra.mxu0 0.0
      %1046 = vmatprep.subr.mxu0 0.0
      %1047 = vmatpush1.msra.mxu0 0.0
      %1048 = vmatprep.mubr.f32.mxu0 0.0
      %1049 = vmatmul.mubr.f32.gmra.mrb[0].mxu0 %v492
      %v1050 = vpop.f32.mrb[0].mxu0
      %v1051 = vadd.f32 %v428, %v1050
      %v1052 = vpop.f32.mrb[0].mxu0
      %v1053 = vadd.f32 %v428, %v1052
      %1054 = vmatprep.mubr.f32.mxu0 0.0
      %1055 = vmatmul.mubr.f32.gmra.mrb[0].mxu0 %v495
      %v1056 = vpop.f32.mrb[0].mxu0
      %v1057 = vadd.f32 %v433, %v1056
      %v1058 = vpop.f32.mrb[0].mxu0
      %v1059 = vadd.f32 %v433, %v1058
      %1060 = vmatprep.mubr.f32.mxu0 0.0
      %1061 = vmatmul.mubr.f32.gmra.mrb[0].mxu0 %v498
      %v1062 = vpop.f32.mrb[0].mxu0
      %v1063 = vadd.f32 %v438, %v1062
      %v1064 = vpop.f32.mrb[0].mxu0
      %v1065 = vadd.f32 %v438, %v1064
      %1066 = vmatprep.mubr.f32.mxu0 0.0
      %1067 = vmatmul.mubr.f32.gmra.mrb[0].mxu0 %v501
      %v1068 = vpop.f32.mrb[0].mxu0
      %v1069 = vadd.f32 %v443, %v1068
      %v1070 = vpop.f32.mrb[0].mxu0
      %v1071 = vadd.f32 %v443, %v1070
      %1072 = vmatprep.mubr.f32.mxu0 0.0
      %1073 = vmatmul.mubr.f32.gmra.mrb[0].mxu0 %v504
      %v1074 = vpop.f32.mrb[0].mxu0
      %v1075 = vadd.f32 %v448, %v1074
      %v1076 = vpop.f32.mrb[0].mxu0
      %v1077 = vadd.f32 %v448, %v1076
      %1078 = vmatprep.mubr.f32.mxu0 0.0
      %1079 = vmatmul.mubr.f32.gmra.mrb[0].mxu0 %v507
      %v1080 = vpop.f32.mrb[0].mxu0
      %v1081 = vadd.f32 %v453, %v1080
      %v1082 = vpop.f32.mrb[0].mxu0
      %v1083 = vadd.f32 %v453, %v1082
      %1084 = vmatprep.mubr.f32.mxu0 0.0
      %1085 = vmatmul.mubr.f32.gmra.mrb[0].mxu0 %v510
      %v1086 = vpop.f32.mrb[0].mxu0
      %v1087 = vadd.f32 %v458, %v1086
      %v1088 = vpop.f32.mrb[0].mxu0
      %v1089 = vadd.f32 %v458, %v1088
      %1090 = vmatprep.mubr.f32.mxu0 0.0
      %1091 = vmatmul.mubr.f32.gmra.mrb[0].mxu0 %v513
      %v1092 = vpop.f32.mrb[0].mxu0
      %v1093 = vadd.f32 %v463, %v1092
      %v1094 = vpop.f32.mrb[0].mxu0
      %v1095 = vadd.f32 %v463, %v1094
      %1096 = vmatprep.mubr.f32.mxu0 0.0
      %1097 = vmatmul.mubr.f32.gmra.mrb[0].mxu0 %v516
      %v1098 = vpop.f32.mrb[0].mxu0
      %v1099 = vadd.f32 %v468, %v1098
      %v1100 = vpop.f32.mrb[0].mxu0
      %v1101 = vadd.f32 %v468, %v1100
      %1102 = vmatprep.mubr.f32.mxu0 0.0
      %1103 = vmatmul.mubr.f32.gmra.mrb[0].mxu0 %v519
      %v1104 = vpop.f32.mrb[0].mxu0
      %v1105 = vadd.f32 %v473, %v1104
      %v1106 = vpop.f32.mrb[0].mxu0
      %v1107 = vadd.f32 %v473, %v1106
      %1108 = vmatprep.mubr.f32.mxu0 0.0
      %1109 = vmatmul.mubr.f32.gmra.mrb[0].mxu0 %v522
      %v1110 = vpop.f32.mrb[0].mxu0
      %v1111 = vadd.f32 %v478, %v1110
      %v1112 = vpop.f32.mrb[0].mxu0
      %v1113 = vadd.f32 %v478, %v1112
      %1114 = vmatprep.mubr.f32.mxu0 0.0
      %1115 = vmatmul.mubr.f32.gmra.mrb[0].mxu0 %v525
      %v1116 = vpop.f32.mrb[0].mxu0
      %v1117 = vadd.f32 %v483, %v1116
      %v1118 = vpop.f32.mrb[0].mxu0
      %v1119 = vadd.f32 %v483, %v1118
      %1120 = vmatprep.mubr.f32.mxu0 0.0
      %1121 = vmatmul.mubr.f32.gmra.mrb[0].mxu0 %v528
      %v1122 = vpop.f32.mrb[0].mxu0
      %v1123 = vadd.f32 %v488, %v1122
      %v1124 = vpop.f32.mrb[0].mxu0
      %v1125 = vadd.f32 %v488, %v1124
      %1126 = vdwg.mxu0
      %v1127 = vld [vmem:[%s3] sm:$0xf]
      %v1128 = vld [vmem:[%s3 + $0x4] sm:$0xf]
      %v1129 = vld [vmem:[%s3 + $0x8] sm:$0xf]
      %v1130 = vld [vmem:[%s3 + $0xc] sm:$0xf]
      %v1131 = vand.u32 2147483647, %v646
      %vm1132 = vcmp.le.f32.partialorder %v1131, 0.7853982
      %vm1133 = vcmp.lt.s32.totalorder %v646, 0
      %v1134 = vand.u32 %v646, 2139095040
      %v1135 = vshrl.u32 %v1134, 23
      %v1136 = vsub.s32 %v1135, 127
      %v1137 = vand.u32 2147483647, %v646
      %v1138 = vand.u32 %v1137, 8388607
      %v1139 = vor.u32 %v1138, 8388608
      %v1140 = vsub.s32 0, %v1139
      %v1141 = vadd.s32 %v1136, 1
      %vm1142 = vcmp.gt.s32.totalorder %v1141, 0
      %v1143 = vsel %vm1142, %v1141, 0
      %v1144 = vshrl.u32 %v1143, 5
      %v1145 = vand.u32 %v1143, 31
      %v1146 = vsub.s32 32, %v1145
      %v1147 = vshrl.u32 683565275, %v1146
      %v1148 = vshll.u32 683565275, %v1145
      %v1149 = vshrl.u32 2475754826, %v1146
      %v1150 = vor.u32 %v1148, %v1149
      %v1151 = vshll.u32 2475754826, %v1145
      %v1152 = vshrl.u32 2131351028, %v1146
      %v1153 = vor.u32 %v1151, %v1152
      %v1154 = vshll.u32 2131351028, %v1145
      %v1155 = vshrl.u32 2102212464, %v1146
      %v1156 = vor.u32 %v1154, %v1155
      %v1157 = vshll.u32 2102212464, %v1145
      %v1158 = vshrl.u32 920167782, %v1146
      %v1159 = vor.u32 %v1157, %v1158
      %v1160 = vshll.u32 920167782, %v1145
      %v1161 = vshrl.u32 1326507024, %v1146
      %v1162 = vor.u32 %v1160, %v1161
      %vm1163 = vcmp.lt.s32.totalorder %v1144, 1
      %vm1164 = vcmp.lt.s32.totalorder %v1144, 2
      %vm1165 = vcmp.lt.s32.totalorder %v1144, 3
      %vm1166 = vcmp.lt.s32.totalorder %v1144, 4
      %v1167 = vsel %vm1163, %v1147, %v1150
      %v1168 = vsel %vm1166, %v1156, 2102212464
      %v1169 = vsel %vm1165, %v1153, %v1168
      %v1170 = vsel %vm1164, %v1167, %v1169
      %v1171 = vsel %vm1163, %v1150, %v1153
      %v1172 = vsel %vm1166, %v1159, 920167782
      %v1173 = vsel %vm1165, %v1156, %v1172
      %v1174 = vsel %vm1164, %v1171, %v1173
      %v1175 = vsel %vm1163, %v1153, %v1156
      %v1176 = vsel %vm1166, %v1162, 1326507024
      %v1177 = vsel %vm1165, %v1159, %v1176
      %v1178 = vsel %vm1164, %v1175, %v1177
      %v1179 = vshll.u32 %v1139, 8
      %v1180 = vmul.u32.u64.compose %v1179, %v1178
      %v1181 = vextract.low.u32 %v1180
      %v1182 = vextract.high.u32 %v1180
      %v1183 = vmul.u32.u64.compose %v1179, %v1174
      %v1184 = vextract.low.u32 %v1183
      %v1185 = vextract.high.u32 %v1183
      %v1186 = vmul.u32 %v1179, %v1170
      %v1187 = vadd.s32 %v1182, %v1184
      %vm1188 = vc.u32 %v1182, %v1184
      %v1189 = vadd.s32 %v1185, 1
      %v1190 = vsel %vm1188, %v1189, %v1185
      %v1191 = vadd.s32 %v1186, %v1190
      %v1192 = vadd.s32 %v1191, 536870912
      %v1193 = vshrl.u32 %v1192, 30
      %v1194 = vshll.u32 %v1193, 30
      %v1195 = vsub.s32 %v1191, %v1194
      %vm1196 = vcmp.lt.s32.totalorder %v1195, 0
      %v1197 = vsub.s32 0, %v1195
      %v1198 = vsel %vm1196, %v1197, %v1195
      %v1199 = vclz %v1198
      %v1200 = vsub.s32 %v1199, 2
      %vm1201 = vcmp.gt.s32.totalorder 0, %v1200
      %v1202 = vsel %vm1201, 0, %v1200
      %v1203 = vsub.s32 32, %v1202
      %v1204 = vshll.u32 %v1195, %v1202
      %v1205 = vshrl.u32 %v1187, %v1203
      %v1206 = vor.u32 %v1204, %v1205
      %v1207 = vsub.s32 4294967266, %v1202
      %v1208 = vadd.s32 %v1207, 127
      %v1209 = vshll.u32 %v1208, 23
      %v1210 = vor.u32 4788187, %v1209
      %v1211 = vand.u32 2147483647, %v1210
      %v1213 = vcvt.s32.f32 %v1206
      %v1214 = vmul.f32 %v1213, %v1211
      %v1215 = vxor.u32 %v1214, 2147483648
      %v1216 = vsel %vm1133, %v1215, %v1214
      %v1217 = vsub.s32 4, %v1193
      %v1218 = vsel %vm1133, %v1217, %v1193
      %v1219 = vsel %vm1132, %v646, %v1216
      %v1220 = vsel %vm1132, 0, %v1218
      %v1221 = vcosq.f32.pop %v1219
      %v1222 = vsinq.f32.pop %v1219
      %vm1223 = vweird.f32 %v646
      %v1224 = vadd.s32 %v1220, 3
      %v1225 = vand.u32 %v1224, 3
      %vm1226 = vcmp.lt.s32.totalorder %v1225, 2
      %vm1227 = vcmp.eq.s32.totalorder %v1225, 0
      %v1228 = vxor.u32 %v1222, 2147483648
      %v1229 = vsel %vm1227, %v1221, %v1228
      %vm1230 = vcmp.eq.s32.totalorder %v1225, 2
      %v1231 = vxor.u32 %v1221, 2147483648
      %v1232 = vsel %vm1230, %v1231, %v1222
      %v1233 = vsel %vm1226, %v1229, %v1232
      %v1234 = vsel %vm1223, nan, %v1233
      %v1235 = vand.u32 2147483647, %v648
      %vm1236 = vcmp.le.f32.partialorder %v1235, 0.7853982
      %vm1237 = vcmp.lt.s32.totalorder %v648, 0
      %v1238 = vand.u32 %v648, 2139095040
      %v1239 = vshrl.u32 %v1238, 23
      %v1240 = vsub.s32 %v1239, 127
      %v1241 = vand.u32 2147483647, %v648
      %v1242 = vand.u32 %v1241, 8388607
      %v1243 = vor.u32 %v1242, 8388608
      %v1244 = vsub.s32 0, %v1243
      %v1245 = vadd.s32 %v1240, 1
      %vm1246 = vcmp.gt.s32.totalorder %v1245, 0
      %v1247 = vsel %vm1246, %v1245, 0
      %v1248 = vshrl.u32 %v1247, 5
      %v1249 = vand.u32 %v1247, 31
      %v1250 = vsub.s32 32, %v1249
      %v1251 = vshrl.u32 683565275, %v1250
      %v1252 = vshll.u32 683565275, %v1249
      %v1253 = vshrl.u32 2475754826, %v1250
      %v1254 = vor.u32 %v1252, %v1253
      %v1255 = vshll.u32 2475754826, %v1249
      %v1256 = vshrl.u32 2131351028, %v1250
      %v1257 = vor.u32 %v1255, %v1256
      %v1258 = vshll.u32 2131351028, %v1249
      %v1259 = vshrl.u32 2102212464, %v1250
      %v1260 = vor.u32 %v1258, %v1259
      %v1261 = vshll.u32 2102212464, %v1249
      %v1262 = vshrl.u32 920167782, %v1250
      %v1263 = vor.u32 %v1261, %v1262
      %v1264 = vshll.u32 920167782, %v1249
      %v1265 = vshrl.u32 1326507024, %v1250
      %v1266 = vor.u32 %v1264, %v1265
      %vm1267 = vcmp.lt.s32.totalorder %v1248, 1
      %vm1268 = vcmp.lt.s32.totalorder %v1248, 2
      %vm1269 = vcmp.lt.s32.totalorder %v1248, 3
      %vm1270 = vcmp.lt.s32.totalorder %v1248, 4
      %v1271 = vsel %vm1267, %v1251, %v1254
      %v1272 = vsel %vm1270, %v1260, 2102212464
      %v1273 = vsel %vm1269, %v1257, %v1272
      %v1274 = vsel %vm1268, %v1271, %v1273
      %v1275 = vsel %vm1267, %v1254, %v1257
      %v1276 = vsel %vm1270, %v1263, 920167782
      %v1277 = vsel %vm1269, %v1260, %v1276
      %v1278 = vsel %vm1268, %v1275, %v1277
      %v1279 = vsel %vm1267, %v1257, %v1260
      %v1280 = vsel %vm1270, %v1266, 1326507024
      %v1281 = vsel %vm1269, %v1263, %v1280
      %v1282 = vsel %vm1268, %v1279, %v1281
      %v1283 = vshll.u32 %v1243, 8
      %v1284 = vmul.u32.u64.compose %v1283, %v1282
      %v1285 = vextract.low.u32 %v1284
      %v1286 = vextract.high.u32 %v1284
      %v1287 = vmul.u32.u64.compose %v1283, %v1278
      %v1288 = vextract.low.u32 %v1287
      %v1289 = vextract.high.u32 %v1287
      %v1290 = vmul.u32 %v1283, %v1274
      %v1291 = vadd.s32 %v1286, %v1288
      %vm1292 = vc.u32 %v1286, %v1288
      %v1293 = vadd.s32 %v1289, 1
      %v1294 = vsel %vm1292, %v1293, %v1289
      %v1295 = vadd.s32 %v1290, %v1294
      %v1296 = vadd.s32 %v1295, 536870912
      %v1297 = vshrl.u32 %v1296, 30
      %v1298 = vshll.u32 %v1297, 30
      %v1299 = vsub.s32 %v1295, %v1298
      %vm1300 = vcmp.lt.s32.totalorder %v1299, 0
      %v1301 = vsub.s32 0, %v1299
      %v1302 = vsel %vm1300, %v1301, %v1299
      %v1303 = vclz %v1302
      %v1304 = vsub.s32 %v1303, 2
      %vm1305 = vcmp.gt.s32.totalorder 0, %v1304
      %v1306 = vsel %vm1305, 0, %v1304
      %v1307 = vsub.s32 32, %v1306
      %v1308 = vshll.u32 %v1299, %v1306
      %v1309 = vshrl.u32 %v1291, %v1307
      %v1310 = vor.u32 %v1308, %v1309
      %v1311 = vsub.s32 4294967266, %v1306
      %v1312 = vadd.s32 %v1311, 127
      %v1313 = vshll.u32 %v1312, 23
      %v1314 = vor.u32 4788187, %v1313
      %v1315 = vand.u32 2147483647, %v1314
      %v1317 = vcvt.s32.f32 %v1310
      %v1318 = vmul.f32 %v1317, %v1315
      %v1319 = vxor.u32 %v1318, 2147483648
      %v1320 = vsel %vm1237, %v1319, %v1318
      %v1321 = vsub.s32 4, %v1297
      %v1322 = vsel %vm1237, %v1321, %v1297
      %v1323 = vsel %vm1236, %v648, %v1320
      %v1324 = vsel %vm1236, 0, %v1322
      %v1325 = vcosq.f32.pop %v1323
      %v1326 = vsinq.f32.pop %v1323
      %vm1327 = vweird.f32 %v648
      %v1328 = vadd.s32 %v1324, 3
      %v1329 = vand.u32 %v1328, 3
      %vm1330 = vcmp.lt.s32.totalorder %v1329, 2
      %vm1331 = vcmp.eq.s32.totalorder %v1329, 0
      %v1332 = vxor.u32 %v1326, 2147483648
      %v1333 = vsel %vm1331, %v1325, %v1332
      %vm1334 = vcmp.eq.s32.totalorder %v1329, 2
      %v1335 = vxor.u32 %v1325, 2147483648
      %v1336 = vsel %vm1334, %v1335, %v1326
      %v1337 = vsel %vm1330, %v1333, %v1336
      %v1338 = vsel %vm1327, nan, %v1337
      %v1339 = vand.u32 2147483647, %v789
      %vm1340 = vcmp.le.f32.partialorder %v1339, 0.7853982
      %vm1341 = vcmp.lt.s32.totalorder %v789, 0
      %v1342 = vand.u32 %v789, 2139095040
      %v1343 = vshrl.u32 %v1342, 23
      %v1344 = vsub.s32 %v1343, 127
      %v1345 = vand.u32 2147483647, %v789
      %v1346 = vand.u32 %v1345, 8388607
      %v1347 = vor.u32 %v1346, 8388608
      %v1348 = vsub.s32 0, %v1347
      %v1349 = vadd.s32 %v1344, 1
      %vm1350 = vcmp.gt.s32.totalorder %v1349, 0
      %v1351 = vsel %vm1350, %v1349, 0
      %v1352 = vshrl.u32 %v1351, 5
      %v1353 = vand.u32 %v1351, 31
      %v1354 = vsub.s32 32, %v1353
      %v1355 = vshrl.u32 683565275, %v1354
      %v1356 = vshll.u32 683565275, %v1353
      %v1357 = vshrl.u32 2475754826, %v1354
      %v1358 = vor.u32 %v1356, %v1357
      %v1359 = vshll.u32 2475754826, %v1353
      %v1360 = vshrl.u32 2131351028, %v1354
      %v1361 = vor.u32 %v1359, %v1360
      %v1362 = vshll.u32 2131351028, %v1353
      %v1363 = vshrl.u32 2102212464, %v1354
      %v1364 = vor.u32 %v1362, %v1363
      %v1365 = vshll.u32 2102212464, %v1353
      %v1366 = vshrl.u32 920167782, %v1354
      %v1367 = vor.u32 %v1365, %v1366
      %v1368 = vshll.u32 920167782, %v1353
      %v1369 = vshrl.u32 1326507024, %v1354
      %v1370 = vor.u32 %v1368, %v1369
      %vm1371 = vcmp.lt.s32.totalorder %v1352, 1
      %vm1372 = vcmp.lt.s32.totalorder %v1352, 2
      %vm1373 = vcmp.lt.s32.totalorder %v1352, 3
      %vm1374 = vcmp.lt.s32.totalorder %v1352, 4
      %v1375 = vsel %vm1371, %v1355, %v1358
      %v1376 = vsel %vm1374, %v1364, 2102212464
      %v1377 = vsel %vm1373, %v1361, %v1376
      %v1378 = vsel %vm1372, %v1375, %v1377
      %v1379 = vsel %vm1371, %v1358, %v1361
      %v1380 = vsel %vm1374, %v1367, 920167782
      %v1381 = vsel %vm1373, %v1364, %v1380
      %v1382 = vsel %vm1372, %v1379, %v1381
      %v1383 = vsel %vm1371, %v1361, %v1364
      %v1384 = vsel %vm1374, %v1370, 1326507024
      %v1385 = vsel %vm1373, %v1367, %v1384
      %v1386 = vsel %vm1372, %v1383, %v1385
      %v1387 = vshll.u32 %v1347, 8
      %v1388 = vmul.u32.u64.compose %v1387, %v1386
      %v1389 = vextract.low.u32 %v1388
      %v1390 = vextract.high.u32 %v1388
      %v1391 = vmul.u32.u64.compose %v1387, %v1382
      %v1392 = vextract.low.u32 %v1391
      %v1393 = vextract.high.u32 %v1391
      %v1394 = vmul.u32 %v1387, %v1378
      %v1395 = vadd.s32 %v1390, %v1392
      %vm1396 = vc.u32 %v1390, %v1392
      %v1397 = vadd.s32 %v1393, 1
      %v1398 = vsel %vm1396, %v1397, %v1393
      %v1399 = vadd.s32 %v1394, %v1398
      %v1400 = vadd.s32 %v1399, 536870912
      %v1401 = vshrl.u32 %v1400, 30
      %v1402 = vshll.u32 %v1401, 30
      %v1403 = vsub.s32 %v1399, %v1402
      %vm1404 = vcmp.lt.s32.totalorder %v1403, 0
      %v1405 = vsub.s32 0, %v1403
      %v1406 = vsel %vm1404, %v1405, %v1403
      %v1407 = vclz %v1406
      %v1408 = vsub.s32 %v1407, 2
      %vm1409 = vcmp.gt.s32.totalorder 0, %v1408
      %v1410 = vsel %vm1409, 0, %v1408
      %v1411 = vsub.s32 32, %v1410
      %v1412 = vshll.u32 %v1403, %v1410
      %v1413 = vshrl.u32 %v1395, %v1411
      %v1414 = vor.u32 %v1412, %v1413
      %v1415 = vsub.s32 4294967266, %v1410
      %v1416 = vadd.s32 %v1415, 127
      %v1417 = vshll.u32 %v1416, 23
      %v1418 = vor.u32 4788187, %v1417
      %v1419 = vand.u32 2147483647, %v1418
      %v1421 = vcvt.s32.f32 %v1414
      %v1422 = vmul.f32 %v1421, %v1419
      %v1423 = vxor.u32 %v1422, 2147483648
      %v1424 = vsel %vm1341, %v1423, %v1422
      %v1425 = vsub.s32 4, %v1401
      %v1426 = vsel %vm1341, %v1425, %v1401
      %v1427 = vsel %vm1340, %v789, %v1424
      %v1428 = vsel %vm1340, 0, %v1426
      %v1429 = vcosq.f32.pop %v1427
      %v1430 = vsinq.f32.pop %v1427
      %vm1431 = vweird.f32 %v789
      %v1432 = vadd.s32 %v1428, 3
      %v1433 = vand.u32 %v1432, 3
      %vm1434 = vcmp.lt.s32.totalorder %v1433, 2
      %vm1435 = vcmp.eq.s32.totalorder %v1433, 0
      %v1436 = vxor.u32 %v1430, 2147483648
      %v1437 = vsel %vm1435, %v1429, %v1436
      %vm1438 = vcmp.eq.s32.totalorder %v1433, 2
      %v1439 = vxor.u32 %v1429, 2147483648
      %v1440 = vsel %vm1438, %v1439, %v1430
      %v1441 = vsel %vm1434, %v1437, %v1440
      %v1442 = vsel %vm1431, nan, %v1441
      %v1443 = vand.u32 2147483647, %v791
      %vm1444 = vcmp.le.f32.partialorder %v1443, 0.7853982
      %vm1445 = vcmp.lt.s32.totalorder %v791, 0
      %v1446 = vand.u32 %v791, 2139095040
      %v1447 = vshrl.u32 %v1446, 23
      %v1448 = vsub.s32 %v1447, 127
      %v1449 = vand.u32 2147483647, %v791
      %v1450 = vand.u32 %v1449, 8388607
      %v1451 = vor.u32 %v1450, 8388608
      %v1452 = vsub.s32 0, %v1451
      %v1453 = vadd.s32 %v1448, 1
      %vm1454 = vcmp.gt.s32.totalorder %v1453, 0
      %v1455 = vsel %vm1454, %v1453, 0
      %v1456 = vshrl.u32 %v1455, 5
      %v1457 = vand.u32 %v1455, 31
      %v1458 = vsub.s32 32, %v1457
      %v1459 = vshrl.u32 683565275, %v1458
      %v1460 = vshll.u32 683565275, %v1457
      %v1461 = vshrl.u32 2475754826, %v1458
      %v1462 = vor.u32 %v1460, %v1461
      %v1463 = vshll.u32 2475754826, %v1457
      %v1464 = vshrl.u32 2131351028, %v1458
      %v1465 = vor.u32 %v1463, %v1464
      %v1466 = vshll.u32 2131351028, %v1457
      %v1467 = vshrl.u32 2102212464, %v1458
      %v1468 = vor.u32 %v1466, %v1467
      %v1469 = vshll.u32 2102212464, %v1457
      %v1470 = vshrl.u32 920167782, %v1458
      %v1471 = vor.u32 %v1469, %v1470
      %v1472 = vshll.u32 920167782, %v1457
      %v1473 = vshrl.u32 1326507024, %v1458
      %v1474 = vor.u32 %v1472, %v1473
      %vm1475 = vcmp.lt.s32.totalorder %v1456, 1
      %vm1476 = vcmp.lt.s32.totalorder %v1456, 2
      %vm1477 = vcmp.lt.s32.totalorder %v1456, 3
      %vm1478 = vcmp.lt.s32.totalorder %v1456, 4
      %v1479 = vsel %vm1475, %v1459, %v1462
      %v1480 = vsel %vm1478, %v1468, 2102212464
      %v1481 = vsel %vm1477, %v1465, %v1480
      %v1482 = vsel %vm1476, %v1479, %v1481
      %v1483 = vsel %vm1475, %v1462, %v1465
      %v1484 = vsel %vm1478, %v1471, 920167782
      %v1485 = vsel %vm1477, %v1468, %v1484
      %v1486 = vsel %vm1476, %v1483, %v1485
      %v1487 = vsel %vm1475, %v1465, %v1468
      %v1488 = vsel %vm1478, %v1474, 1326507024
      %v1489 = vsel %vm1477, %v1471, %v1488
      %v1490 = vsel %vm1476, %v1487, %v1489
      %v1491 = vshll.u32 %v1451, 8
      %v1492 = vmul.u32.u64.compose %v1491, %v1490
      %v1493 = vextract.low.u32 %v1492
      %v1494 = vextract.high.u32 %v1492
      %v1495 = vmul.u32.u64.compose %v1491, %v1486
      %v1496 = vextract.low.u32 %v1495
      %v1497 = vextract.high.u32 %v1495
      %v1498 = vmul.u32 %v1491, %v1482
      %v1499 = vadd.s32 %v1494, %v1496
      %vm1500 = vc.u32 %v1494, %v1496
      %v1501 = vadd.s32 %v1497, 1
      %v1502 = vsel %vm1500, %v1501, %v1497
      %v1503 = vadd.s32 %v1498, %v1502
      %v1504 = vadd.s32 %v1503, 536870912
      %v1505 = vshrl.u32 %v1504, 30
      %v1506 = vshll.u32 %v1505, 30
      %v1507 = vsub.s32 %v1503, %v1506
      %vm1508 = vcmp.lt.s32.totalorder %v1507, 0
      %v1509 = vsub.s32 0, %v1507
      %v1510 = vsel %vm1508, %v1509, %v1507
      %v1511 = vclz %v1510
      %v1512 = vsub.s32 %v1511, 2
      %vm1513 = vcmp.gt.s32.totalorder 0, %v1512
      %v1514 = vsel %vm1513, 0, %v1512
      %v1515 = vsub.s32 32, %v1514
      %v1516 = vshll.u32 %v1507, %v1514
      %v1517 = vshrl.u32 %v1499, %v1515
      %v1518 = vor.u32 %v1516, %v1517
      %v1519 = vsub.s32 4294967266, %v1514
      %v1520 = vadd.s32 %v1519, 127
      %v1521 = vshll.u32 %v1520, 23
      %v1522 = vor.u32 4788187, %v1521
      %v1523 = vand.u32 2147483647, %v1522
      %v1525 = vcvt.s32.f32 %v1518
      %v1526 = vmul.f32 %v1525, %v1523
      %v1527 = vxor.u32 %v1526, 2147483648
      %v1528 = vsel %vm1445, %v1527, %v1526
      %v1529 = vsub.s32 4, %v1505
      %v1530 = vsel %vm1445, %v1529, %v1505
      %v1531 = vsel %vm1444, %v791, %v1528
      %v1532 = vsel %vm1444, 0, %v1530
      %v1533 = vcosq.f32.pop %v1531
      %v1534 = vsinq.f32.pop %v1531
      %vm1535 = vweird.f32 %v791
      %v1536 = vadd.s32 %v1532, 3
      %v1537 = vand.u32 %v1536, 3
      %vm1538 = vcmp.lt.s32.totalorder %v1537, 2
      %vm1539 = vcmp.eq.s32.totalorder %v1537, 0
      %v1540 = vxor.u32 %v1534, 2147483648
      %v1541 = vsel %vm1539, %v1533, %v1540
      %vm1542 = vcmp.eq.s32.totalorder %v1537, 2
      %v1543 = vxor.u32 %v1533, 2147483648
      %v1544 = vsel %vm1542, %v1543, %v1534
      %v1545 = vsel %vm1538, %v1541, %v1544
      %v1546 = vsel %vm1535, nan, %v1545
      %v1547 = vand.u32 2147483647, %v932
      %vm1548 = vcmp.le.f32.partialorder %v1547, 0.7853982
      %vm1549 = vcmp.lt.s32.totalorder %v932, 0
      %v1550 = vand.u32 %v932, 2139095040
      %v1551 = vshrl.u32 %v1550, 23
      %v1552 = vsub.s32 %v1551, 127
      %v1553 = vand.u32 2147483647, %v932
      %v1554 = vand.u32 %v1553, 8388607
      %v1555 = vor.u32 %v1554, 8388608
      %v1556 = vsub.s32 0, %v1555
      %v1557 = vadd.s32 %v1552, 1
      %vm1558 = vcmp.gt.s32.totalorder %v1557, 0
      %v1559 = vsel %vm1558, %v1557, 0
      %v1560 = vshrl.u32 %v1559, 5
      %v1561 = vand.u32 %v1559, 31
      %v1562 = vsub.s32 32, %v1561
      %v1563 = vshrl.u32 683565275, %v1562
      %v1564 = vshll.u32 683565275, %v1561
      %v1565 = vshrl.u32 2475754826, %v1562
      %v1566 = vor.u32 %v1564, %v1565
      %v1567 = vshll.u32 2475754826, %v1561
      %v1568 = vshrl.u32 2131351028, %v1562
      %v1569 = vor.u32 %v1567, %v1568
      %v1570 = vshll.u32 2131351028, %v1561
      %v1571 = vshrl.u32 2102212464, %v1562
      %v1572 = vor.u32 %v1570, %v1571
      %v1573 = vshll.u32 2102212464, %v1561
      %v1574 = vshrl.u32 920167782, %v1562
      %v1575 = vor.u32 %v1573, %v1574
      %v1576 = vshll.u32 920167782, %v1561
      %v1577 = vshrl.u32 1326507024, %v1562
      %v1578 = vor.u32 %v1576, %v1577
      %vm1579 = vcmp.lt.s32.totalorder %v1560, 1
      %vm1580 = vcmp.lt.s32.totalorder %v1560, 2
      %vm1581 = vcmp.lt.s32.totalorder %v1560, 3
      %vm1582 = vcmp.lt.s32.totalorder %v1560, 4
      %v1583 = vsel %vm1579, %v1563, %v1566
      %v1584 = vsel %vm1582, %v1572, 2102212464
      %v1585 = vsel %vm1581, %v1569, %v1584
      %v1586 = vsel %vm1580, %v1583, %v1585
      %v1587 = vsel %vm1579, %v1566, %v1569
      %v1588 = vsel %vm1582, %v1575, 920167782
      %v1589 = vsel %vm1581, %v1572, %v1588
      %v1590 = vsel %vm1580, %v1587, %v1589
      %v1591 = vsel %vm1579, %v1569, %v1572
      %v1592 = vsel %vm1582, %v1578, 1326507024
      %v1593 = vsel %vm1581, %v1575, %v1592
      %v1594 = vsel %vm1580, %v1591, %v1593
      %v1595 = vshll.u32 %v1555, 8
      %v1596 = vmul.u32.u64.compose %v1595, %v1594
      %v1597 = vextract.low.u32 %v1596
      %v1598 = vextract.high.u32 %v1596
      %v1599 = vmul.u32.u64.compose %v1595, %v1590
      %v1600 = vextract.low.u32 %v1599
      %v1601 = vextract.high.u32 %v1599
      %v1602 = vmul.u32 %v1595, %v1586
      %v1603 = vadd.s32 %v1598, %v1600
      %vm1604 = vc.u32 %v1598, %v1600
      %v1605 = vadd.s32 %v1601, 1
      %v1606 = vsel %vm1604, %v1605, %v1601
      %v1607 = vadd.s32 %v1602, %v1606
      %v1608 = vadd.s32 %v1607, 536870912
      %v1609 = vshrl.u32 %v1608, 30
      %v1610 = vshll.u32 %v1609, 30
      %v1611 = vsub.s32 %v1607, %v1610
      %vm1612 = vcmp.lt.s32.totalorder %v1611, 0
      %v1613 = vsub.s32 0, %v1611
      %v1614 = vsel %vm1612, %v1613, %v1611
      %v1615 = vclz %v1614
      %v1616 = vsub.s32 %v1615, 2
      %vm1617 = vcmp.gt.s32.totalorder 0, %v1616
      %v1618 = vsel %vm1617, 0, %v1616
      %v1619 = vsub.s32 32, %v1618
      %v1620 = vshll.u32 %v1611, %v1618
      %v1621 = vshrl.u32 %v1603, %v1619
      %v1622 = vor.u32 %v1620, %v1621
      %v1623 = vsub.s32 4294967266, %v1618
      %v1624 = vadd.s32 %v1623, 127
      %v1625 = vshll.u32 %v1624, 23
      %v1626 = vor.u32 4788187, %v1625
      %v1627 = vand.u32 2147483647, %v1626
      %v1629 = vcvt.s32.f32 %v1622
      %v1630 = vmul.f32 %v1629, %v1627
      %v1631 = vxor.u32 %v1630, 2147483648
      %v1632 = vsel %vm1549, %v1631, %v1630
      %v1633 = vsub.s32 4, %v1609
      %v1634 = vsel %vm1549, %v1633, %v1609
      %v1635 = vsel %vm1548, %v932, %v1632
      %v1636 = vsel %vm1548, 0, %v1634
      %v1637 = vcosq.f32.pop %v1635
      %v1638 = vsinq.f32.pop %v1635
      %vm1639 = vweird.f32 %v932
      %v1640 = vadd.s32 %v1636, 3
      %v1641 = vand.u32 %v1640, 3
      %vm1642 = vcmp.lt.s32.totalorder %v1641, 2
      %vm1643 = vcmp.eq.s32.totalorder %v1641, 0
      %v1644 = vxor.u32 %v1638, 2147483648
      %v1645 = vsel %vm1643, %v1637, %v1644
      %vm1646 = vcmp.eq.s32.totalorder %v1641, 2
      %v1647 = vxor.u32 %v1637, 2147483648
      %v1648 = vsel %vm1646, %v1647, %v1638
      %v1649 = vsel %vm1642, %v1645, %v1648
      %v1650 = vsel %vm1639, nan, %v1649
      %v1651 = vand.u32 2147483647, %v934
      %vm1652 = vcmp.le.f32.partialorder %v1651, 0.7853982
      %vm1653 = vcmp.lt.s32.totalorder %v934, 0
      %v1654 = vand.u32 %v934, 2139095040
      %v1655 = vshrl.u32 %v1654, 23
      %v1656 = vsub.s32 %v1655, 127
      %v1657 = vand.u32 2147483647, %v934
      %v1658 = vand.u32 %v1657, 8388607
      %v1659 = vor.u32 %v1658, 8388608
      %v1660 = vsub.s32 0, %v1659
      %v1661 = vadd.s32 %v1656, 1
      %vm1662 = vcmp.gt.s32.totalorder %v1661, 0
      %v1663 = vsel %vm1662, %v1661, 0
      %v1664 = vshrl.u32 %v1663, 5
      %v1665 = vand.u32 %v1663, 31
      %v1666 = vsub.s32 32, %v1665
      %v1667 = vshrl.u32 683565275, %v1666
      %v1668 = vshll.u32 683565275, %v1665
      %v1669 = vshrl.u32 2475754826, %v1666
      %v1670 = vor.u32 %v1668, %v1669
      %v1671 = vshll.u32 2475754826, %v1665
      %v1672 = vshrl.u32 2131351028, %v1666
      %v1673 = vor.u32 %v1671, %v1672
      %v1674 = vshll.u32 2131351028, %v1665
      %v1675 = vshrl.u32 2102212464, %v1666
      %v1676 = vor.u32 %v1674, %v1675
      %v1677 = vshll.u32 2102212464, %v1665
      %v1678 = vshrl.u32 920167782, %v1666
      %v1679 = vor.u32 %v1677, %v1678
      %v1680 = vshll.u32 920167782, %v1665
      %v1681 = vshrl.u32 1326507024, %v1666
      %v1682 = vor.u32 %v1680, %v1681
      %vm1683 = vcmp.lt.s32.totalorder %v1664, 1
      %vm1684 = vcmp.lt.s32.totalorder %v1664, 2
      %vm1685 = vcmp.lt.s32.totalorder %v1664, 3
      %vm1686 = vcmp.lt.s32.totalorder %v1664, 4
      %v1687 = vsel %vm1683, %v1667, %v1670
      %v1688 = vsel %vm1686, %v1676, 2102212464
      %v1689 = vsel %vm1685, %v1673, %v1688
      %v1690 = vsel %vm1684, %v1687, %v1689
      %v1691 = vsel %vm1683, %v1670, %v1673
      %v1692 = vsel %vm1686, %v1679, 920167782
      %v1693 = vsel %vm1685, %v1676, %v1692
      %v1694 = vsel %vm1684, %v1691, %v1693
      %v1695 = vsel %vm1683, %v1673, %v1676
      %v1696 = vsel %vm1686, %v1682, 1326507024
      %v1697 = vsel %vm1685, %v1679, %v1696
      %v1698 = vsel %vm1684, %v1695, %v1697
      %v1699 = vshll.u32 %v1659, 8
      %v1700 = vmul.u32.u64.compose %v1699, %v1698
      %v1701 = vextract.low.u32 %v1700
      %v1702 = vextract.high.u32 %v1700
      %v1703 = vmul.u32.u64.compose %v1699, %v1694
      %v1704 = vextract.low.u32 %v1703
      %v1705 = vextract.high.u32 %v1703
      %v1706 = vmul.u32 %v1699, %v1690
      %v1707 = vadd.s32 %v1702, %v1704
      %vm1708 = vc.u32 %v1702, %v1704
      %v1709 = vadd.s32 %v1705, 1
      %v1710 = vsel %vm1708, %v1709, %v1705
      %v1711 = vadd.s32 %v1706, %v1710
      %v1712 = vadd.s32 %v1711, 536870912
      %v1713 = vshrl.u32 %v1712, 30
      %v1714 = vshll.u32 %v1713, 30
      %v1715 = vsub.s32 %v1711, %v1714
      %vm1716 = vcmp.lt.s32.totalorder %v1715, 0
      %v1717 = vsub.s32 0, %v1715
      %v1718 = vsel %vm1716, %v1717, %v1715
      %v1719 = vclz %v1718
      %v1720 = vsub.s32 %v1719, 2
      %vm1721 = vcmp.gt.s32.totalorder 0, %v1720
      %v1722 = vsel %vm1721, 0, %v1720
      %v1723 = vsub.s32 32, %v1722
      %v1724 = vshll.u32 %v1715, %v1722
      %v1725 = vshrl.u32 %v1707, %v1723
      %v1726 = vor.u32 %v1724, %v1725
      %v1727 = vsub.s32 4294967266, %v1722
      %v1728 = vadd.s32 %v1727, 127
      %v1729 = vshll.u32 %v1728, 23
      %v1730 = vor.u32 4788187, %v1729
      %v1731 = vand.u32 2147483647, %v1730
      %v1733 = vcvt.s32.f32 %v1726
      %v1734 = vmul.f32 %v1733, %v1731
      %v1735 = vxor.u32 %v1734, 2147483648
      %v1736 = vsel %vm1653, %v1735, %v1734
      %v1737 = vsub.s32 4, %v1713
      %v1738 = vsel %vm1653, %v1737, %v1713
      %v1739 = vsel %vm1652, %v934, %v1736
      %v1740 = vsel %vm1652, 0, %v1738
      %v1741 = vcosq.f32.pop %v1739
      %v1742 = vsinq.f32.pop %v1739
      %vm1743 = vweird.f32 %v934
      %v1744 = vadd.s32 %v1740, 3
      %v1745 = vand.u32 %v1744, 3
      %vm1746 = vcmp.lt.s32.totalorder %v1745, 2
      %vm1747 = vcmp.eq.s32.totalorder %v1745, 0
      %v1748 = vxor.u32 %v1742, 2147483648
      %v1749 = vsel %vm1747, %v1741, %v1748
      %vm1750 = vcmp.eq.s32.totalorder %v1745, 2
      %v1751 = vxor.u32 %v1741, 2147483648
      %v1752 = vsel %vm1750, %v1751, %v1742
      %v1753 = vsel %vm1746, %v1749, %v1752
      %v1754 = vsel %vm1743, nan, %v1753
      %v1755 = vand.u32 2147483647, %v1075
      %vm1756 = vcmp.le.f32.partialorder %v1755, 0.7853982
      %vm1757 = vcmp.lt.s32.totalorder %v1075, 0
      %v1758 = vand.u32 %v1075, 2139095040
      %v1759 = vshrl.u32 %v1758, 23
      %v1760 = vsub.s32 %v1759, 127
      %v1761 = vand.u32 2147483647, %v1075
      %v1762 = vand.u32 %v1761, 8388607
      %v1763 = vor.u32 %v1762, 8388608
      %v1764 = vsub.s32 0, %v1763
      %v1765 = vadd.s32 %v1760, 1
      %vm1766 = vcmp.gt.s32.totalorder %v1765, 0
      %v1767 = vsel %vm1766, %v1765, 0
      %v1768 = vshrl.u32 %v1767, 5
      %v1769 = vand.u32 %v1767, 31
      %v1770 = vsub.s32 32, %v1769
      %v1771 = vshrl.u32 683565275, %v1770
      %v1772 = vshll.u32 683565275, %v1769
      %v1773 = vshrl.u32 2475754826, %v1770
      %v1774 = vor.u32 %v1772, %v1773
      %v1775 = vshll.u32 2475754826, %v1769
      %v1776 = vshrl.u32 2131351028, %v1770
      %v1777 = vor.u32 %v1775, %v1776
      %v1778 = vshll.u32 2131351028, %v1769
      %v1779 = vshrl.u32 2102212464, %v1770
      %v1780 = vor.u32 %v1778, %v1779
      %v1781 = vshll.u32 2102212464, %v1769
      %v1782 = vshrl.u32 920167782, %v1770
      %v1783 = vor.u32 %v1781, %v1782
      %v1784 = vshll.u32 920167782, %v1769
      %v1785 = vshrl.u32 1326507024, %v1770
      %v1786 = vor.u32 %v1784, %v1785
      %vm1787 = vcmp.lt.s32.totalorder %v1768, 1
      %vm1788 = vcmp.lt.s32.totalorder %v1768, 2
      %vm1789 = vcmp.lt.s32.totalorder %v1768, 3
      %vm1790 = vcmp.lt.s32.totalorder %v1768, 4
      %v1791 = vsel %vm1787, %v1771, %v1774
      %v1792 = vsel %vm1790, %v1780, 2102212464
      %v1793 = vsel %vm1789, %v1777, %v1792
      %v1794 = vsel %vm1788, %v1791, %v1793
      %v1795 = vsel %vm1787, %v1774, %v1777
      %v1796 = vsel %vm1790, %v1783, 920167782
      %v1797 = vsel %vm1789, %v1780, %v1796
      %v1798 = vsel %vm1788, %v1795, %v1797
      %v1799 = vsel %vm1787, %v1777, %v1780
      %v1800 = vsel %vm1790, %v1786, 1326507024
      %v1801 = vsel %vm1789, %v1783, %v1800
      %v1802 = vsel %vm1788, %v1799, %v1801
      %v1803 = vshll.u32 %v1763, 8
      %v1804 = vmul.u32.u64.compose %v1803, %v1802
      %v1805 = vextract.low.u32 %v1804
      %v1806 = vextract.high.u32 %v1804
      %v1807 = vmul.u32.u64.compose %v1803, %v1798
      %v1808 = vextract.low.u32 %v1807
      %v1809 = vextract.high.u32 %v1807
      %v1810 = vmul.u32 %v1803, %v1794
      %v1811 = vadd.s32 %v1806, %v1808
      %vm1812 = vc.u32 %v1806, %v1808
      %v1813 = vadd.s32 %v1809, 1
      %v1814 = vsel %vm1812, %v1813, %v1809
      %v1815 = vadd.s32 %v1810, %v1814
      %v1816 = vadd.s32 %v1815, 536870912
      %v1817 = vshrl.u32 %v1816, 30
      %v1818 = vshll.u32 %v1817, 30
      %v1819 = vsub.s32 %v1815, %v1818
      %vm1820 = vcmp.lt.s32.totalorder %v1819, 0
      %v1821 = vsub.s32 0, %v1819
      %v1822 = vsel %vm1820, %v1821, %v1819
      %v1823 = vclz %v1822
      %v1824 = vsub.s32 %v1823, 2
      %vm1825 = vcmp.gt.s32.totalorder 0, %v1824
      %v1826 = vsel %vm1825, 0, %v1824
      %v1827 = vsub.s32 32, %v1826
      %v1828 = vshll.u32 %v1819, %v1826
      %v1829 = vshrl.u32 %v1811, %v1827
      %v1830 = vor.u32 %v1828, %v1829
      %v1831 = vsub.s32 4294967266, %v1826
      %v1832 = vadd.s32 %v1831, 127
      %v1833 = vshll.u32 %v1832, 23
      %v1834 = vor.u32 4788187, %v1833
      %v1835 = vand.u32 2147483647, %v1834
      %v1837 = vcvt.s32.f32 %v1830
      %v1838 = vmul.f32 %v1837, %v1835
      %v1839 = vxor.u32 %v1838, 2147483648
      %v1840 = vsel %vm1757, %v1839, %v1838
      %v1841 = vsub.s32 4, %v1817
      %v1842 = vsel %vm1757, %v1841, %v1817
      %v1843 = vsel %vm1756, %v1075, %v1840
      %v1844 = vsel %vm1756, 0, %v1842
      %v1845 = vcosq.f32.pop %v1843
      %v1846 = vsinq.f32.pop %v1843
      %vm1847 = vweird.f32 %v1075
      %v1848 = vadd.s32 %v1844, 3
      %v1849 = vand.u32 %v1848, 3
      %vm1850 = vcmp.lt.s32.totalorder %v1849, 2
      %vm1851 = vcmp.eq.s32.totalorder %v1849, 0
      %v1852 = vxor.u32 %v1846, 2147483648
      %v1853 = vsel %vm1851, %v1845, %v1852
      %vm1854 = vcmp.eq.s32.totalorder %v1849, 2
      %v1855 = vxor.u32 %v1845, 2147483648
      %v1856 = vsel %vm1854, %v1855, %v1846
      %v1857 = vsel %vm1850, %v1853, %v1856
      %v1858 = vsel %vm1847, nan, %v1857
      %v1859 = vand.u32 2147483647, %v1077
      %vm1860 = vcmp.le.f32.partialorder %v1859, 0.7853982
      %vm1861 = vcmp.lt.s32.totalorder %v1077, 0
      %v1862 = vand.u32 %v1077, 2139095040
      %v1863 = vshrl.u32 %v1862, 23
      %v1864 = vsub.s32 %v1863, 127
      %v1865 = vand.u32 2147483647, %v1077
      %v1866 = vand.u32 %v1865, 8388607
      %v1867 = vor.u32 %v1866, 8388608
      %v1868 = vsub.s32 0, %v1867
      %v1869 = vadd.s32 %v1864, 1
      %vm1870 = vcmp.gt.s32.totalorder %v1869, 0
      %v1871 = vsel %vm1870, %v1869, 0
      %v1872 = vshrl.u32 %v1871, 5
      %v1873 = vand.u32 %v1871, 31
      %v1874 = vsub.s32 32, %v1873
      %v1875 = vshrl.u32 683565275, %v1874
      %v1876 = vshll.u32 683565275, %v1873
      %v1877 = vshrl.u32 2475754826, %v1874
      %v1878 = vor.u32 %v1876, %v1877
      %v1879 = vshll.u32 2475754826, %v1873
      %v1880 = vshrl.u32 2131351028, %v1874
      %v1881 = vor.u32 %v1879, %v1880
      %v1882 = vshll.u32 2131351028, %v1873
      %v1883 = vshrl.u32 2102212464, %v1874
      %v1884 = vor.u32 %v1882, %v1883
      %v1885 = vshll.u32 2102212464, %v1873
      %v1886 = vshrl.u32 920167782, %v1874
      %v1887 = vor.u32 %v1885, %v1886
      %v1888 = vshll.u32 920167782, %v1873
      %v1889 = vshrl.u32 1326507024, %v1874
      %v1890 = vor.u32 %v1888, %v1889
      %vm1891 = vcmp.lt.s32.totalorder %v1872, 1
      %vm1892 = vcmp.lt.s32.totalorder %v1872, 2
      %vm1893 = vcmp.lt.s32.totalorder %v1872, 3
      %vm1894 = vcmp.lt.s32.totalorder %v1872, 4
      %v1895 = vsel %vm1891, %v1875, %v1878
      %v1896 = vsel %vm1894, %v1884, 2102212464
      %v1897 = vsel %vm1893, %v1881, %v1896
      %v1898 = vsel %vm1892, %v1895, %v1897
      %v1899 = vsel %vm1891, %v1878, %v1881
      %v1900 = vsel %vm1894, %v1887, 920167782
      %v1901 = vsel %vm1893, %v1884, %v1900
      %v1902 = vsel %vm1892, %v1899, %v1901
      %v1903 = vsel %vm1891, %v1881, %v1884
      %v1904 = vsel %vm1894, %v1890, 1326507024
      %v1905 = vsel %vm1893, %v1887, %v1904
      %v1906 = vsel %vm1892, %v1903, %v1905
      %v1907 = vshll.u32 %v1867, 8
      %v1908 = vmul.u32.u64.compose %v1907, %v1906
      %v1909 = vextract.low.u32 %v1908
      %v1910 = vextract.high.u32 %v1908
      %v1911 = vmul.u32.u64.compose %v1907, %v1902
      %v1912 = vextract.low.u32 %v1911
      %v1913 = vextract.high.u32 %v1911
      %v1914 = vmul.u32 %v1907, %v1898
      %v1915 = vadd.s32 %v1910, %v1912
      %vm1916 = vc.u32 %v1910, %v1912
      %v1917 = vadd.s32 %v1913, 1
      %v1918 = vsel %vm1916, %v1917, %v1913
      %v1919 = vadd.s32 %v1914, %v1918
      %v1920 = vadd.s32 %v1919, 536870912
      %v1921 = vshrl.u32 %v1920, 30
      %v1922 = vshll.u32 %v1921, 30
      %v1923 = vsub.s32 %v1919, %v1922
      %vm1924 = vcmp.lt.s32.totalorder %v1923, 0
      %v1925 = vsub.s32 0, %v1923
      %v1926 = vsel %vm1924, %v1925, %v1923
      %v1927 = vclz %v1926
      %v1928 = vsub.s32 %v1927, 2
      %vm1929 = vcmp.gt.s32.totalorder 0, %v1928
      %v1930 = vsel %vm1929, 0, %v1928
      %v1931 = vsub.s32 32, %v1930
      %v1932 = vshll.u32 %v1923, %v1930
      %v1933 = vshrl.u32 %v1915, %v1931
      %v1934 = vor.u32 %v1932, %v1933
      %v1935 = vsub.s32 4294967266, %v1930
      %v1936 = vadd.s32 %v1935, 127
      %v1937 = vshll.u32 %v1936, 23
      %v1938 = vor.u32 4788187, %v1937
      %v1939 = vand.u32 2147483647, %v1938
      %v1941 = vcvt.s32.f32 %v1934
      %v1942 = vmul.f32 %v1941, %v1939
      %v1943 = vxor.u32 %v1942, 2147483648
      %v1944 = vsel %vm1861, %v1943, %v1942
      %v1945 = vsub.s32 4, %v1921
      %v1946 = vsel %vm1861, %v1945, %v1921
      %v1947 = vsel %vm1860, %v1077, %v1944
      %v1948 = vsel %vm1860, 0, %v1946
      %v1949 = vcosq.f32.pop %v1947
      %v1950 = vsinq.f32.pop %v1947
      %vm1951 = vweird.f32 %v1077
      %v1952 = vadd.s32 %v1948, 3
      %v1953 = vand.u32 %v1952, 3
      %vm1954 = vcmp.lt.s32.totalorder %v1953, 2
      %vm1955 = vcmp.eq.s32.totalorder %v1953, 0
      %v1956 = vxor.u32 %v1950, 2147483648
      %v1957 = vsel %vm1955, %v1949, %v1956
      %vm1958 = vcmp.eq.s32.totalorder %v1953, 2
      %v1959 = vxor.u32 %v1949, 2147483648
      %v1960 = vsel %vm1958, %v1959, %v1950
      %v1961 = vsel %vm1954, %v1957, %v1960
      %v1962 = vsel %vm1951, nan, %v1961
      %v1963 = vand.u32 2147483647, %v652
      %vm1964 = vcmp.le.f32.partialorder %v1963, 0.7853982
      %vm1965 = vcmp.lt.s32.totalorder %v652, 0
      %v1966 = vand.u32 %v652, 2139095040
      %v1967 = vshrl.u32 %v1966, 23
      %v1968 = vsub.s32 %v1967, 127
      %v1969 = vand.u32 2147483647, %v652
      %v1970 = vand.u32 %v1969, 8388607
      %v1971 = vor.u32 %v1970, 8388608
      %v1972 = vsub.s32 0, %v1971
      %v1973 = vadd.s32 %v1968, 1
      %vm1974 = vcmp.gt.s32.totalorder %v1973, 0
      %v1975 = vsel %vm1974, %v1973, 0
      %v1976 = vshrl.u32 %v1975, 5
      %v1977 = vand.u32 %v1975, 31
      %v1978 = vsub.s32 32, %v1977
      %v1979 = vshrl.u32 683565275, %v1978
      %v1980 = vshll.u32 683565275, %v1977
      %v1981 = vshrl.u32 2475754826, %v1978
      %v1982 = vor.u32 %v1980, %v1981
      %v1983 = vshll.u32 2475754826, %v1977
      %v1984 = vshrl.u32 2131351028, %v1978
      %v1985 = vor.u32 %v1983, %v1984
      %v1986 = vshll.u32 2131351028, %v1977
      %v1987 = vshrl.u32 2102212464, %v1978
      %v1988 = vor.u32 %v1986, %v1987
      %v1989 = vshll.u32 2102212464, %v1977
      %v1990 = vshrl.u32 920167782, %v1978
      %v1991 = vor.u32 %v1989, %v1990
      %v1992 = vshll.u32 920167782, %v1977
      %v1993 = vshrl.u32 1326507024, %v1978
      %v1994 = vor.u32 %v1992, %v1993
      %vm1995 = vcmp.lt.s32.totalorder %v1976, 1
      %vm1996 = vcmp.lt.s32.totalorder %v1976, 2
      %vm1997 = vcmp.lt.s32.totalorder %v1976, 3
      %vm1998 = vcmp.lt.s32.totalorder %v1976, 4
      %v1999 = vsel %vm1995, %v1979, %v1982
      %v2000 = vsel %vm1998, %v1988, 2102212464
      %v2001 = vsel %vm1997, %v1985, %v2000
      %v2002 = vsel %vm1996, %v1999, %v2001
      %v2003 = vsel %vm1995, %v1982, %v1985
      %v2004 = vsel %vm1998, %v1991, 920167782
      %v2005 = vsel %vm1997, %v1988, %v2004
      %v2006 = vsel %vm1996, %v2003, %v2005
      %v2007 = vsel %vm1995, %v1985, %v1988
      %v2008 = vsel %vm1998, %v1994, 1326507024
      %v2009 = vsel %vm1997, %v1991, %v2008
      %v2010 = vsel %vm1996, %v2007, %v2009
      %v2011 = vshll.u32 %v1971, 8
      %v2012 = vmul.u32.u64.compose %v2011, %v2010
      %v2013 = vextract.low.u32 %v2012
      %v2014 = vextract.high.u32 %v2012
      %v2015 = vmul.u32.u64.compose %v2011, %v2006
      %v2016 = vextract.low.u32 %v2015
      %v2017 = vextract.high.u32 %v2015
      %v2018 = vmul.u32 %v2011, %v2002
      %v2019 = vadd.s32 %v2014, %v2016
      %vm2020 = vc.u32 %v2014, %v2016
      %v2021 = vadd.s32 %v2017, 1
      %v2022 = vsel %vm2020, %v2021, %v2017
      %v2023 = vadd.s32 %v2018, %v2022
      %v2024 = vadd.s32 %v2023, 536870912
      %v2025 = vshrl.u32 %v2024, 30
      %v2026 = vshll.u32 %v2025, 30
      %v2027 = vsub.s32 %v2023, %v2026
      %vm2028 = vcmp.lt.s32.totalorder %v2027, 0
      %v2029 = vsub.s32 0, %v2027
      %v2030 = vsel %vm2028, %v2029, %v2027
      %v2031 = vclz %v2030
      %v2032 = vsub.s32 %v2031, 2
      %vm2033 = vcmp.gt.s32.totalorder 0, %v2032
      %v2034 = vsel %vm2033, 0, %v2032
      %v2035 = vsub.s32 32, %v2034
      %v2036 = vshll.u32 %v2027, %v2034
      %v2037 = vshrl.u32 %v2019, %v2035
      %v2038 = vor.u32 %v2036, %v2037
      %v2039 = vsub.s32 4294967266, %v2034
      %v2040 = vadd.s32 %v2039, 127
      %v2041 = vshll.u32 %v2040, 23
      %v2042 = vor.u32 4788187, %v2041
      %v2043 = vand.u32 2147483647, %v2042
      %v2045 = vcvt.s32.f32 %v2038
      %v2046 = vmul.f32 %v2045, %v2043
      %v2047 = vxor.u32 %v2046, 2147483648
      %v2048 = vsel %vm1965, %v2047, %v2046
      %v2049 = vsub.s32 4, %v2025
      %v2050 = vsel %vm1965, %v2049, %v2025
      %v2051 = vsel %vm1964, %v652, %v2048
      %v2052 = vsel %vm1964, 0, %v2050
      %v2053 = vcosq.f32.pop %v2051
      %v2054 = vsinq.f32.pop %v2051
      %vm2055 = vweird.f32 %v652
      %v2056 = vadd.s32 %v2052, 3
      %v2057 = vand.u32 %v2056, 3
      %vm2058 = vcmp.lt.s32.totalorder %v2057, 2
      %vm2059 = vcmp.eq.s32.totalorder %v2057, 0
      %v2060 = vxor.u32 %v2054, 2147483648
      %v2061 = vsel %vm2059, %v2053, %v2060
      %vm2062 = vcmp.eq.s32.totalorder %v2057, 2
      %v2063 = vxor.u32 %v2053, 2147483648
      %v2064 = vsel %vm2062, %v2063, %v2054
      %v2065 = vsel %vm2058, %v2061, %v2064
      %v2066 = vsel %vm2055, nan, %v2065
      %v2067 = vand.u32 2147483647, %v654
      %vm2068 = vcmp.le.f32.partialorder %v2067, 0.7853982
      %vm2069 = vcmp.lt.s32.totalorder %v654, 0
      %v2070 = vand.u32 %v654, 2139095040
      %v2071 = vshrl.u32 %v2070, 23
      %v2072 = vsub.s32 %v2071, 127
      %v2073 = vand.u32 2147483647, %v654
      %v2074 = vand.u32 %v2073, 8388607
      %v2075 = vor.u32 %v2074, 8388608
      %v2076 = vsub.s32 0, %v2075
      %v2077 = vadd.s32 %v2072, 1
      %vm2078 = vcmp.gt.s32.totalorder %v2077, 0
      %v2079 = vsel %vm2078, %v2077, 0
      %v2080 = vshrl.u32 %v2079, 5
      %v2081 = vand.u32 %v2079, 31
      %v2082 = vsub.s32 32, %v2081
      %v2083 = vshrl.u32 683565275, %v2082
      %v2084 = vshll.u32 683565275, %v2081
      %v2085 = vshrl.u32 2475754826, %v2082
      %v2086 = vor.u32 %v2084, %v2085
      %v2087 = vshll.u32 2475754826, %v2081
      %v2088 = vshrl.u32 2131351028, %v2082
      %v2089 = vor.u32 %v2087, %v2088
      %v2090 = vshll.u32 2131351028, %v2081
      %v2091 = vshrl.u32 2102212464, %v2082
      %v2092 = vor.u32 %v2090, %v2091
      %v2093 = vshll.u32 2102212464, %v2081
      %v2094 = vshrl.u32 920167782, %v2082
      %v2095 = vor.u32 %v2093, %v2094
      %v2096 = vshll.u32 920167782, %v2081
      %v2097 = vshrl.u32 1326507024, %v2082
      %v2098 = vor.u32 %v2096, %v2097
      %vm2099 = vcmp.lt.s32.totalorder %v2080, 1
      %vm2100 = vcmp.lt.s32.totalorder %v2080, 2
      %vm2101 = vcmp.lt.s32.totalorder %v2080, 3
      %vm2102 = vcmp.lt.s32.totalorder %v2080, 4
      %v2103 = vsel %vm2099, %v2083, %v2086
      %v2104 = vsel %vm2102, %v2092, 2102212464
      %v2105 = vsel %vm2101, %v2089, %v2104
      %v2106 = vsel %vm2100, %v2103, %v2105
      %v2107 = vsel %vm2099, %v2086, %v2089
      %v2108 = vsel %vm2102, %v2095, 920167782
      %v2109 = vsel %vm2101, %v2092, %v2108
      %v2110 = vsel %vm2100, %v2107, %v2109
      %v2111 = vsel %vm2099, %v2089, %v2092
      %v2112 = vsel %vm2102, %v2098, 1326507024
      %v2113 = vsel %vm2101, %v2095, %v2112
      %v2114 = vsel %vm2100, %v2111, %v2113
      %v2115 = vshll.u32 %v2075, 8
      %v2116 = vmul.u32.u64.compose %v2115, %v2114
      %v2117 = vextract.low.u32 %v2116
      %v2118 = vextract.high.u32 %v2116
      %v2119 = vmul.u32.u64.compose %v2115, %v2110
      %v2120 = vextract.low.u32 %v2119
      %v2121 = vextract.high.u32 %v2119
      %v2122 = vmul.u32 %v2115, %v2106
      %v2123 = vadd.s32 %v2118, %v2120
      %vm2124 = vc.u32 %v2118, %v2120
      %v2125 = vadd.s32 %v2121, 1
      %v2126 = vsel %vm2124, %v2125, %v2121
      %v2127 = vadd.s32 %v2122, %v2126
      %v2128 = vadd.s32 %v2127, 536870912
      %v2129 = vshrl.u32 %v2128, 30
      %v2130 = vshll.u32 %v2129, 30
      %v2131 = vsub.s32 %v2127, %v2130
      %vm2132 = vcmp.lt.s32.totalorder %v2131, 0
      %v2133 = vsub.s32 0, %v2131
      %v2134 = vsel %vm2132, %v2133, %v2131
      %v2135 = vclz %v2134
      %v2136 = vsub.s32 %v2135, 2
      %vm2137 = vcmp.gt.s32.totalorder 0, %v2136
      %v2138 = vsel %vm2137, 0, %v2136
      %v2139 = vsub.s32 32, %v2138
      %v2140 = vshll.u32 %v2131, %v2138
      %v2141 = vshrl.u32 %v2123, %v2139
      %v2142 = vor.u32 %v2140, %v2141
      %v2143 = vsub.s32 4294967266, %v2138
      %v2144 = vadd.s32 %v2143, 127
      %v2145 = vshll.u32 %v2144, 23
      %v2146 = vor.u32 4788187, %v2145
      %v2147 = vand.u32 2147483647, %v2146
      %v2149 = vcvt.s32.f32 %v2142
      %v2150 = vmul.f32 %v2149, %v2147
      %v2151 = vxor.u32 %v2150, 2147483648
      %v2152 = vsel %vm2069, %v2151, %v2150
      %v2153 = vsub.s32 4, %v2129
      %v2154 = vsel %vm2069, %v2153, %v2129
      %v2155 = vsel %vm2068, %v654, %v2152
      %v2156 = vsel %vm2068, 0, %v2154
      %v2157 = vcosq.f32.pop %v2155
      %v2158 = vsinq.f32.pop %v2155
      %vm2159 = vweird.f32 %v654
      %v2160 = vadd.s32 %v2156, 3
      %v2161 = vand.u32 %v2160, 3
      %vm2162 = vcmp.lt.s32.totalorder %v2161, 2
      %vm2163 = vcmp.eq.s32.totalorder %v2161, 0
      %v2164 = vxor.u32 %v2158, 2147483648
      %v2165 = vsel %vm2163, %v2157, %v2164
      %vm2166 = vcmp.eq.s32.totalorder %v2161, 2
      %v2167 = vxor.u32 %v2157, 2147483648
      %v2168 = vsel %vm2166, %v2167, %v2158
      %v2169 = vsel %vm2162, %v2165, %v2168
      %v2170 = vsel %vm2159, nan, %v2169
      %v2171 = vand.u32 2147483647, %v795
      %vm2172 = vcmp.le.f32.partialorder %v2171, 0.7853982
      %vm2173 = vcmp.lt.s32.totalorder %v795, 0
      %v2174 = vand.u32 %v795, 2139095040
      %v2175 = vshrl.u32 %v2174, 23
      %v2176 = vsub.s32 %v2175, 127
      %v2177 = vand.u32 2147483647, %v795
      %v2178 = vand.u32 %v2177, 8388607
      %v2179 = vor.u32 %v2178, 8388608
      %v2180 = vsub.s32 0, %v2179
      %v2181 = vadd.s32 %v2176, 1
      %vm2182 = vcmp.gt.s32.totalorder %v2181, 0
      %v2183 = vsel %vm2182, %v2181, 0
      %v2184 = vshrl.u32 %v2183, 5
      %v2185 = vand.u32 %v2183, 31
      %v2186 = vsub.s32 32, %v2185
      %v2187 = vshrl.u32 683565275, %v2186
      %v2188 = vshll.u32 683565275, %v2185
      %v2189 = vshrl.u32 2475754826, %v2186
      %v2190 = vor.u32 %v2188, %v2189
      %v2191 = vshll.u32 2475754826, %v2185
      %v2192 = vshrl.u32 2131351028, %v2186
      %v2193 = vor.u32 %v2191, %v2192
      %v2194 = vshll.u32 2131351028, %v2185
      %v2195 = vshrl.u32 2102212464, %v2186
      %v2196 = vor.u32 %v2194, %v2195
      %v2197 = vshll.u32 2102212464, %v2185
      %v2198 = vshrl.u32 920167782, %v2186
      %v2199 = vor.u32 %v2197, %v2198
      %v2200 = vshll.u32 920167782, %v2185
      %v2201 = vshrl.u32 1326507024, %v2186
      %v2202 = vor.u32 %v2200, %v2201
      %vm2203 = vcmp.lt.s32.totalorder %v2184, 1
      %vm2204 = vcmp.lt.s32.totalorder %v2184, 2
      %vm2205 = vcmp.lt.s32.totalorder %v2184, 3
      %vm2206 = vcmp.lt.s32.totalorder %v2184, 4
      %v2207 = vsel %vm2203, %v2187, %v2190
      %v2208 = vsel %vm2206, %v2196, 2102212464
      %v2209 = vsel %vm2205, %v2193, %v2208
      %v2210 = vsel %vm2204, %v2207, %v2209
      %v2211 = vsel %vm2203, %v2190, %v2193
      %v2212 = vsel %vm2206, %v2199, 920167782
      %v2213 = vsel %vm2205, %v2196, %v2212
      %v2214 = vsel %vm2204, %v2211, %v2213
      %v2215 = vsel %vm2203, %v2193, %v2196
      %v2216 = vsel %vm2206, %v2202, 1326507024
      %v2217 = vsel %vm2205, %v2199, %v2216
      %v2218 = vsel %vm2204, %v2215, %v2217
      %v2219 = vshll.u32 %v2179, 8
      %v2220 = vmul.u32.u64.compose %v2219, %v2218
      %v2221 = vextract.low.u32 %v2220
      %v2222 = vextract.high.u32 %v2220
      %v2223 = vmul.u32.u64.compose %v2219, %v2214
      %v2224 = vextract.low.u32 %v2223
      %v2225 = vextract.high.u32 %v2223
      %v2226 = vmul.u32 %v2219, %v2210
      %v2227 = vadd.s32 %v2222, %v2224
      %vm2228 = vc.u32 %v2222, %v2224
      %v2229 = vadd.s32 %v2225, 1
      %v2230 = vsel %vm2228, %v2229, %v2225
      %v2231 = vadd.s32 %v2226, %v2230
      %v2232 = vadd.s32 %v2231, 536870912
      %v2233 = vshrl.u32 %v2232, 30
      %v2234 = vshll.u32 %v2233, 30
      %v2235 = vsub.s32 %v2231, %v2234
      %vm2236 = vcmp.lt.s32.totalorder %v2235, 0
      %v2237 = vsub.s32 0, %v2235
      %v2238 = vsel %vm2236, %v2237, %v2235
      %v2239 = vclz %v2238
      %v2240 = vsub.s32 %v2239, 2
      %vm2241 = vcmp.gt.s32.totalorder 0, %v2240
      %v2242 = vsel %vm2241, 0, %v2240
      %v2243 = vsub.s32 32, %v2242
      %v2244 = vshll.u32 %v2235, %v2242
      %v2245 = vshrl.u32 %v2227, %v2243
      %v2246 = vor.u32 %v2244, %v2245
      %v2247 = vsub.s32 4294967266, %v2242
      %v2248 = vadd.s32 %v2247, 127
      %v2249 = vshll.u32 %v2248, 23
      %v2250 = vor.u32 4788187, %v2249
      %v2251 = vand.u32 2147483647, %v2250
      %v2253 = vcvt.s32.f32 %v2246
      %v2254 = vmul.f32 %v2253, %v2251
      %v2255 = vxor.u32 %v2254, 2147483648
      %v2256 = vsel %vm2173, %v2255, %v2254
      %v2257 = vsub.s32 4, %v2233
      %v2258 = vsel %vm2173, %v2257, %v2233
      %v2259 = vsel %vm2172, %v795, %v2256
      %v2260 = vsel %vm2172, 0, %v2258
      %v2261 = vcosq.f32.pop %v2259
      %v2262 = vsinq.f32.pop %v2259
      %vm2263 = vweird.f32 %v795
      %v2264 = vadd.s32 %v2260, 3
      %v2265 = vand.u32 %v2264, 3
      %vm2266 = vcmp.lt.s32.totalorder %v2265, 2
      %vm2267 = vcmp.eq.s32.totalorder %v2265, 0
      %v2268 = vxor.u32 %v2262, 2147483648
      %v2269 = vsel %vm2267, %v2261, %v2268
      %vm2270 = vcmp.eq.s32.totalorder %v2265, 2
      %v2271 = vxor.u32 %v2261, 2147483648
      %v2272 = vsel %vm2270, %v2271, %v2262
      %v2273 = vsel %vm2266, %v2269, %v2272
      %v2274 = vsel %vm2263, nan, %v2273
      %v2275 = vand.u32 2147483647, %v797
      %vm2276 = vcmp.le.f32.partialorder %v2275, 0.7853982
      %vm2277 = vcmp.lt.s32.totalorder %v797, 0
      %v2278 = vand.u32 %v797, 2139095040
      %v2279 = vshrl.u32 %v2278, 23
      %v2280 = vsub.s32 %v2279, 127
      %v2281 = vand.u32 2147483647, %v797
      %v2282 = vand.u32 %v2281, 8388607
      %v2283 = vor.u32 %v2282, 8388608
      %v2284 = vsub.s32 0, %v2283
      %v2285 = vadd.s32 %v2280, 1
      %vm2286 = vcmp.gt.s32.totalorder %v2285, 0
      %v2287 = vsel %vm2286, %v2285, 0
      %v2288 = vshrl.u32 %v2287, 5
      %v2289 = vand.u32 %v2287, 31
      %v2290 = vsub.s32 32, %v2289
      %v2291 = vshrl.u32 683565275, %v2290
      %v2292 = vshll.u32 683565275, %v2289
      %v2293 = vshrl.u32 2475754826, %v2290
      %v2294 = vor.u32 %v2292, %v2293
      %v2295 = vshll.u32 2475754826, %v2289
      %v2296 = vshrl.u32 2131351028, %v2290
      %v2297 = vor.u32 %v2295, %v2296
      %v2298 = vshll.u32 2131351028, %v2289
      %v2299 = vshrl.u32 2102212464, %v2290
      %v2300 = vor.u32 %v2298, %v2299
      %v2301 = vshll.u32 2102212464, %v2289
      %v2302 = vshrl.u32 920167782, %v2290
      %v2303 = vor.u32 %v2301, %v2302
      %v2304 = vshll.u32 920167782, %v2289
      %v2305 = vshrl.u32 1326507024, %v2290
      %v2306 = vor.u32 %v2304, %v2305
      %vm2307 = vcmp.lt.s32.totalorder %v2288, 1
      %vm2308 = vcmp.lt.s32.totalorder %v2288, 2
      %vm2309 = vcmp.lt.s32.totalorder %v2288, 3
      %vm2310 = vcmp.lt.s32.totalorder %v2288, 4
      %v2311 = vsel %vm2307, %v2291, %v2294
      %v2312 = vsel %vm2310, %v2300, 2102212464
      %v2313 = vsel %vm2309, %v2297, %v2312
      %v2314 = vsel %vm2308, %v2311, %v2313
      %v2315 = vsel %vm2307, %v2294, %v2297
      %v2316 = vsel %vm2310, %v2303, 920167782
      %v2317 = vsel %vm2309, %v2300, %v2316
      %v2318 = vsel %vm2308, %v2315, %v2317
      %v2319 = vsel %vm2307, %v2297, %v2300
      %v2320 = vsel %vm2310, %v2306, 1326507024
      %v2321 = vsel %vm2309, %v2303, %v2320
      %v2322 = vsel %vm2308, %v2319, %v2321
      %v2323 = vshll.u32 %v2283, 8
      %v2324 = vmul.u32.u64.compose %v2323, %v2322
      %v2325 = vextract.low.u32 %v2324
      %v2326 = vextract.high.u32 %v2324
      %v2327 = vmul.u32.u64.compose %v2323, %v2318
      %v2328 = vextract.low.u32 %v2327
      %v2329 = vextract.high.u32 %v2327
      %v2330 = vmul.u32 %v2323, %v2314
      %v2331 = vadd.s32 %v2326, %v2328
      %vm2332 = vc.u32 %v2326, %v2328
      %v2333 = vadd.s32 %v2329, 1
      %v2334 = vsel %vm2332, %v2333, %v2329
      %v2335 = vadd.s32 %v2330, %v2334
      %v2336 = vadd.s32 %v2335, 536870912
      %v2337 = vshrl.u32 %v2336, 30
      %v2338 = vshll.u32 %v2337, 30
      %v2339 = vsub.s32 %v2335, %v2338
      %vm2340 = vcmp.lt.s32.totalorder %v2339, 0
      %v2341 = vsub.s32 0, %v2339
      %v2342 = vsel %vm2340, %v2341, %v2339
      %v2343 = vclz %v2342
      %v2344 = vsub.s32 %v2343, 2
      %vm2345 = vcmp.gt.s32.totalorder 0, %v2344
      %v2346 = vsel %vm2345, 0, %v2344
      %v2347 = vsub.s32 32, %v2346
      %v2348 = vshll.u32 %v2339, %v2346
      %v2349 = vshrl.u32 %v2331, %v2347
      %v2350 = vor.u32 %v2348, %v2349
      %v2351 = vsub.s32 4294967266, %v2346
      %v2352 = vadd.s32 %v2351, 127
      %v2353 = vshll.u32 %v2352, 23
      %v2354 = vor.u32 4788187, %v2353
      %v2355 = vand.u32 2147483647, %v2354
      %v2357 = vcvt.s32.f32 %v2350
      %v2358 = vmul.f32 %v2357, %v2355
      %v2359 = vxor.u32 %v2358, 2147483648
      %v2360 = vsel %vm2277, %v2359, %v2358
      %v2361 = vsub.s32 4, %v2337
      %v2362 = vsel %vm2277, %v2361, %v2337
      %v2363 = vsel %vm2276, %v797, %v2360
      %v2364 = vsel %vm2276, 0, %v2362
      %v2365 = vcosq.f32.pop %v2363
      %v2366 = vsinq.f32.pop %v2363
      %vm2367 = vweird.f32 %v797
      %v2368 = vadd.s32 %v2364, 3
      %v2369 = vand.u32 %v2368, 3
      %vm2370 = vcmp.lt.s32.totalorder %v2369, 2
      %vm2371 = vcmp.eq.s32.totalorder %v2369, 0
      %v2372 = vxor.u32 %v2366, 2147483648
      %v2373 = vsel %vm2371, %v2365, %v2372
      %vm2374 = vcmp.eq.s32.totalorder %v2369, 2
      %v2375 = vxor.u32 %v2365, 2147483648
      %v2376 = vsel %vm2374, %v2375, %v2366
      %v2377 = vsel %vm2370, %v2373, %v2376
      %v2378 = vsel %vm2367, nan, %v2377
      %v2379 = vand.u32 2147483647, %v938
      %vm2380 = vcmp.le.f32.partialorder %v2379, 0.7853982
      %vm2381 = vcmp.lt.s32.totalorder %v938, 0
      %v2382 = vand.u32 %v938, 2139095040
      %v2383 = vshrl.u32 %v2382, 23
      %v2384 = vsub.s32 %v2383, 127
      %v2385 = vand.u32 2147483647, %v938
      %v2386 = vand.u32 %v2385, 8388607
      %v2387 = vor.u32 %v2386, 8388608
      %v2388 = vsub.s32 0, %v2387
      %v2389 = vadd.s32 %v2384, 1
      %vm2390 = vcmp.gt.s32.totalorder %v2389, 0
      %v2391 = vsel %vm2390, %v2389, 0
      %v2392 = vshrl.u32 %v2391, 5
      %v2393 = vand.u32 %v2391, 31
      %v2394 = vsub.s32 32, %v2393
      %v2395 = vshrl.u32 683565275, %v2394
      %v2396 = vshll.u32 683565275, %v2393
      %v2397 = vshrl.u32 2475754826, %v2394
      %v2398 = vor.u32 %v2396, %v2397
      %v2399 = vshll.u32 2475754826, %v2393
      %v2400 = vshrl.u32 2131351028, %v2394
      %v2401 = vor.u32 %v2399, %v2400
      %v2402 = vshll.u32 2131351028, %v2393
      %v2403 = vshrl.u32 2102212464, %v2394
      %v2404 = vor.u32 %v2402, %v2403
      %v2405 = vshll.u32 2102212464, %v2393
      %v2406 = vshrl.u32 920167782, %v2394
      %v2407 = vor.u32 %v2405, %v2406
      %v2408 = vshll.u32 920167782, %v2393
      %v2409 = vshrl.u32 1326507024, %v2394
      %v2410 = vor.u32 %v2408, %v2409
      %vm2411 = vcmp.lt.s32.totalorder %v2392, 1
      %vm2412 = vcmp.lt.s32.totalorder %v2392, 2
      %vm2413 = vcmp.lt.s32.totalorder %v2392, 3
      %vm2414 = vcmp.lt.s32.totalorder %v2392, 4
      %v2415 = vsel %vm2411, %v2395, %v2398
      %v2416 = vsel %vm2414, %v2404, 2102212464
      %v2417 = vsel %vm2413, %v2401, %v2416
      %v2418 = vsel %vm2412, %v2415, %v2417
      %v2419 = vsel %vm2411, %v2398, %v2401
      %v2420 = vsel %vm2414, %v2407, 920167782
      %v2421 = vsel %vm2413, %v2404, %v2420
      %v2422 = vsel %vm2412, %v2419, %v2421
      %v2423 = vsel %vm2411, %v2401, %v2404
      %v2424 = vsel %vm2414, %v2410, 1326507024
      %v2425 = vsel %vm2413, %v2407, %v2424
      %v2426 = vsel %vm2412, %v2423, %v2425
      %v2427 = vshll.u32 %v2387, 8
      %v2428 = vmul.u32.u64.compose %v2427, %v2426
      %v2429 = vextract.low.u32 %v2428
      %v2430 = vextract.high.u32 %v2428
      %v2431 = vmul.u32.u64.compose %v2427, %v2422
      %v2432 = vextract.low.u32 %v2431
      %v2433 = vextract.high.u32 %v2431
      %v2434 = vmul.u32 %v2427, %v2418
      %v2435 = vadd.s32 %v2430, %v2432
      %vm2436 = vc.u32 %v2430, %v2432
      %v2437 = vadd.s32 %v2433, 1
      %v2438 = vsel %vm2436, %v2437, %v2433
      %v2439 = vadd.s32 %v2434, %v2438
      %v2440 = vadd.s32 %v2439, 536870912
      %v2441 = vshrl.u32 %v2440, 30
      %v2442 = vshll.u32 %v2441, 30
      %v2443 = vsub.s32 %v2439, %v2442
      %vm2444 = vcmp.lt.s32.totalorder %v2443, 0
      %v2445 = vsub.s32 0, %v2443
      %v2446 = vsel %vm2444, %v2445, %v2443
      %v2447 = vclz %v2446
      %v2448 = vsub.s32 %v2447, 2
      %vm2449 = vcmp.gt.s32.totalorder 0, %v2448
      %v2450 = vsel %vm2449, 0, %v2448
      %v2451 = vsub.s32 32, %v2450
      %v2452 = vshll.u32 %v2443, %v2450
      %v2453 = vshrl.u32 %v2435, %v2451
      %v2454 = vor.u32 %v2452, %v2453
      %v2455 = vsub.s32 4294967266, %v2450
      %v2456 = vadd.s32 %v2455, 127
      %v2457 = vshll.u32 %v2456, 23
      %v2458 = vor.u32 4788187, %v2457
      %v2459 = vand.u32 2147483647, %v2458
      %v2461 = vcvt.s32.f32 %v2454
      %v2462 = vmul.f32 %v2461, %v2459
      %v2463 = vxor.u32 %v2462, 2147483648
      %v2464 = vsel %vm2381, %v2463, %v2462
      %v2465 = vsub.s32 4, %v2441
      %v2466 = vsel %vm2381, %v2465, %v2441
      %v2467 = vsel %vm2380, %v938, %v2464
      %v2468 = vsel %vm2380, 0, %v2466
      %v2469 = vcosq.f32.pop %v2467
      %v2470 = vsinq.f32.pop %v2467
      %vm2471 = vweird.f32 %v938
      %v2472 = vadd.s32 %v2468, 3
      %v2473 = vand.u32 %v2472, 3
      %vm2474 = vcmp.lt.s32.totalorder %v2473, 2
      %vm2475 = vcmp.eq.s32.totalorder %v2473, 0
      %v2476 = vxor.u32 %v2470, 2147483648
      %v2477 = vsel %vm2475, %v2469, %v2476
      %vm2478 = vcmp.eq.s32.totalorder %v2473, 2
      %v2479 = vxor.u32 %v2469, 2147483648
      %v2480 = vsel %vm2478, %v2479, %v2470
      %v2481 = vsel %vm2474, %v2477, %v2480
      %v2482 = vsel %vm2471, nan, %v2481
      %v2483 = vand.u32 2147483647, %v940
      %vm2484 = vcmp.le.f32.partialorder %v2483, 0.7853982
      %vm2485 = vcmp.lt.s32.totalorder %v940, 0
      %v2486 = vand.u32 %v940, 2139095040
      %v2487 = vshrl.u32 %v2486, 23
      %v2488 = vsub.s32 %v2487, 127
      %v2489 = vand.u32 2147483647, %v940
      %v2490 = vand.u32 %v2489, 8388607
      %v2491 = vor.u32 %v2490, 8388608
      %v2492 = vsub.s32 0, %v2491
      %v2493 = vadd.s32 %v2488, 1
      %vm2494 = vcmp.gt.s32.totalorder %v2493, 0
      %v2495 = vsel %vm2494, %v2493, 0
      %v2496 = vshrl.u32 %v2495, 5
      %v2497 = vand.u32 %v2495, 31
      %v2498 = vsub.s32 32, %v2497
      %v2499 = vshrl.u32 683565275, %v2498
      %v2500 = vshll.u32 683565275, %v2497
      %v2501 = vshrl.u32 2475754826, %v2498
      %v2502 = vor.u32 %v2500, %v2501
      %v2503 = vshll.u32 2475754826, %v2497
      %v2504 = vshrl.u32 2131351028, %v2498
      %v2505 = vor.u32 %v2503, %v2504
      %v2506 = vshll.u32 2131351028, %v2497
      %v2507 = vshrl.u32 2102212464, %v2498
      %v2508 = vor.u32 %v2506, %v2507
      %v2509 = vshll.u32 2102212464, %v2497
      %v2510 = vshrl.u32 920167782, %v2498
      %v2511 = vor.u32 %v2509, %v2510
      %v2512 = vshll.u32 920167782, %v2497
      %v2513 = vshrl.u32 1326507024, %v2498
      %v2514 = vor.u32 %v2512, %v2513
      %vm2515 = vcmp.lt.s32.totalorder %v2496, 1
      %vm2516 = vcmp.lt.s32.totalorder %v2496, 2
      %vm2517 = vcmp.lt.s32.totalorder %v2496, 3
      %vm2518 = vcmp.lt.s32.totalorder %v2496, 4
      %v2519 = vsel %vm2515, %v2499, %v2502
      %v2520 = vsel %vm2518, %v2508, 2102212464
      %v2521 = vsel %vm2517, %v2505, %v2520
      %v2522 = vsel %vm2516, %v2519, %v2521
      %v2523 = vsel %vm2515, %v2502, %v2505
      %v2524 = vsel %vm2518, %v2511, 920167782
      %v2525 = vsel %vm2517, %v2508, %v2524
      %v2526 = vsel %vm2516, %v2523, %v2525
      %v2527 = vsel %vm2515, %v2505, %v2508
      %v2528 = vsel %vm2518, %v2514, 1326507024
      %v2529 = vsel %vm2517, %v2511, %v2528
      %v2530 = vsel %vm2516, %v2527, %v2529
      %v2531 = vshll.u32 %v2491, 8
      %v2532 = vmul.u32.u64.compose %v2531, %v2530
      %v2533 = vextract.low.u32 %v2532
      %v2534 = vextract.high.u32 %v2532
      %v2535 = vmul.u32.u64.compose %v2531, %v2526
      %v2536 = vextract.low.u32 %v2535
      %v2537 = vextract.high.u32 %v2535
      %v2538 = vmul.u32 %v2531, %v2522
      %v2539 = vadd.s32 %v2534, %v2536
      %vm2540 = vc.u32 %v2534, %v2536
      %v2541 = vadd.s32 %v2537, 1
      %v2542 = vsel %vm2540, %v2541, %v2537
      %v2543 = vadd.s32 %v2538, %v2542
      %v2544 = vadd.s32 %v2543, 536870912
      %v2545 = vshrl.u32 %v2544, 30
      %v2546 = vshll.u32 %v2545, 30
      %v2547 = vsub.s32 %v2543, %v2546
      %vm2548 = vcmp.lt.s32.totalorder %v2547, 0
      %v2549 = vsub.s32 0, %v2547
      %v2550 = vsel %vm2548, %v2549, %v2547
      %v2551 = vclz %v2550
      %v2552 = vsub.s32 %v2551, 2
      %vm2553 = vcmp.gt.s32.totalorder 0, %v2552
      %v2554 = vsel %vm2553, 0, %v2552
      %v2555 = vsub.s32 32, %v2554
      %v2556 = vshll.u32 %v2547, %v2554
      %v2557 = vshrl.u32 %v2539, %v2555
      %v2558 = vor.u32 %v2556, %v2557
      %v2559 = vsub.s32 4294967266, %v2554
      %v2560 = vadd.s32 %v2559, 127
      %v2561 = vshll.u32 %v2560, 23
      %v2562 = vor.u32 4788187, %v2561
      %v2563 = vand.u32 2147483647, %v2562
      %v2565 = vcvt.s32.f32 %v2558
      %v2566 = vmul.f32 %v2565, %v2563
      %v2567 = vxor.u32 %v2566, 2147483648
      %v2568 = vsel %vm2485, %v2567, %v2566
      %v2569 = vsub.s32 4, %v2545
      %v2570 = vsel %vm2485, %v2569, %v2545
      %v2571 = vsel %vm2484, %v940, %v2568
      %v2572 = vsel %vm2484, 0, %v2570
      %v2573 = vcosq.f32.pop %v2571
      %v2574 = vsinq.f32.pop %v2571
      %vm2575 = vweird.f32 %v940
      %v2576 = vadd.s32 %v2572, 3
      %v2577 = vand.u32 %v2576, 3
      %vm2578 = vcmp.lt.s32.totalorder %v2577, 2
      %vm2579 = vcmp.eq.s32.totalorder %v2577, 0
      %v2580 = vxor.u32 %v2574, 2147483648
      %v2581 = vsel %vm2579, %v2573, %v2580
      %vm2582 = vcmp.eq.s32.totalorder %v2577, 2
      %v2583 = vxor.u32 %v2573, 2147483648
      %v2584 = vsel %vm2582, %v2583, %v2574
      %v2585 = vsel %vm2578, %v2581, %v2584
      %v2586 = vsel %vm2575, nan, %v2585
      %v2587 = vand.u32 2147483647, %v1081
      %vm2588 = vcmp.le.f32.partialorder %v2587, 0.7853982
      %vm2589 = vcmp.lt.s32.totalorder %v1081, 0
      %v2590 = vand.u32 %v1081, 2139095040
      %v2591 = vshrl.u32 %v2590, 23
      %v2592 = vsub.s32 %v2591, 127
      %v2593 = vand.u32 2147483647, %v1081
      %v2594 = vand.u32 %v2593, 8388607
      %v2595 = vor.u32 %v2594, 8388608
      %v2596 = vsub.s32 0, %v2595
      %v2597 = vadd.s32 %v2592, 1
      %vm2598 = vcmp.gt.s32.totalorder %v2597, 0
      %v2599 = vsel %vm2598, %v2597, 0
      %v2600 = vshrl.u32 %v2599, 5
      %v2601 = vand.u32 %v2599, 31
      %v2602 = vsub.s32 32, %v2601
      %v2603 = vshrl.u32 683565275, %v2602
      %v2604 = vshll.u32 683565275, %v2601
      %v2605 = vshrl.u32 2475754826, %v2602
      %v2606 = vor.u32 %v2604, %v2605
      %v2607 = vshll.u32 2475754826, %v2601
      %v2608 = vshrl.u32 2131351028, %v2602
      %v2609 = vor.u32 %v2607, %v2608
      %v2610 = vshll.u32 2131351028, %v2601
      %v2611 = vshrl.u32 2102212464, %v2602
      %v2612 = vor.u32 %v2610, %v2611
      %v2613 = vshll.u32 2102212464, %v2601
      %v2614 = vshrl.u32 920167782, %v2602
      %v2615 = vor.u32 %v2613, %v2614
      %v2616 = vshll.u32 920167782, %v2601
      %v2617 = vshrl.u32 1326507024, %v2602
      %v2618 = vor.u32 %v2616, %v2617
      %vm2619 = vcmp.lt.s32.totalorder %v2600, 1
      %vm2620 = vcmp.lt.s32.totalorder %v2600, 2
      %vm2621 = vcmp.lt.s32.totalorder %v2600, 3
      %vm2622 = vcmp.lt.s32.totalorder %v2600, 4
      %v2623 = vsel %vm2619, %v2603, %v2606
      %v2624 = vsel %vm2622, %v2612, 2102212464
      %v2625 = vsel %vm2621, %v2609, %v2624
      %v2626 = vsel %vm2620, %v2623, %v2625
      %v2627 = vsel %vm2619, %v2606, %v2609
      %v2628 = vsel %vm2622, %v2615, 920167782
      %v2629 = vsel %vm2621, %v2612, %v2628
      %v2630 = vsel %vm2620, %v2627, %v2629
      %v2631 = vsel %vm2619, %v2609, %v2612
      %v2632 = vsel %vm2622, %v2618, 1326507024
      %v2633 = vsel %vm2621, %v2615, %v2632
      %v2634 = vsel %vm2620, %v2631, %v2633
      %v2635 = vshll.u32 %v2595, 8
      %v2636 = vmul.u32.u64.compose %v2635, %v2634
      %v2637 = vextract.low.u32 %v2636
      %v2638 = vextract.high.u32 %v2636
      %v2639 = vmul.u32.u64.compose %v2635, %v2630
      %v2640 = vextract.low.u32 %v2639
      %v2641 = vextract.high.u32 %v2639
      %v2642 = vmul.u32 %v2635, %v2626
      %v2643 = vadd.s32 %v2638, %v2640
      %vm2644 = vc.u32 %v2638, %v2640
      %v2645 = vadd.s32 %v2641, 1
      %v2646 = vsel %vm2644, %v2645, %v2641
      %v2647 = vadd.s32 %v2642, %v2646
      %v2648 = vadd.s32 %v2647, 536870912
      %v2649 = vshrl.u32 %v2648, 30
      %v2650 = vshll.u32 %v2649, 30
      %v2651 = vsub.s32 %v2647, %v2650
      %vm2652 = vcmp.lt.s32.totalorder %v2651, 0
      %v2653 = vsub.s32 0, %v2651
      %v2654 = vsel %vm2652, %v2653, %v2651
      %v2655 = vclz %v2654
      %v2656 = vsub.s32 %v2655, 2
      %vm2657 = vcmp.gt.s32.totalorder 0, %v2656
      %v2658 = vsel %vm2657, 0, %v2656
      %v2659 = vsub.s32 32, %v2658
      %v2660 = vshll.u32 %v2651, %v2658
      %v2661 = vshrl.u32 %v2643, %v2659
      %v2662 = vor.u32 %v2660, %v2661
      %v2663 = vsub.s32 4294967266, %v2658
      %v2664 = vadd.s32 %v2663, 127
      %v2665 = vshll.u32 %v2664, 23
      %v2666 = vor.u32 4788187, %v2665
      %v2667 = vand.u32 2147483647, %v2666
      %v2669 = vcvt.s32.f32 %v2662
      %v2670 = vmul.f32 %v2669, %v2667
      %v2671 = vxor.u32 %v2670, 2147483648
      %v2672 = vsel %vm2589, %v2671, %v2670
      %v2673 = vsub.s32 4, %v2649
      %v2674 = vsel %vm2589, %v2673, %v2649
      %v2675 = vsel %vm2588, %v1081, %v2672
      %v2676 = vsel %vm2588, 0, %v2674
      %v2677 = vcosq.f32.pop %v2675
      %v2678 = vsinq.f32.pop %v2675
      %vm2679 = vweird.f32 %v1081
      %v2680 = vadd.s32 %v2676, 3
      %v2681 = vand.u32 %v2680, 3
      %vm2682 = vcmp.lt.s32.totalorder %v2681, 2
      %vm2683 = vcmp.eq.s32.totalorder %v2681, 0
      %v2684 = vxor.u32 %v2678, 2147483648
      %v2685 = vsel %vm2683, %v2677, %v2684
      %vm2686 = vcmp.eq.s32.totalorder %v2681, 2
      %v2687 = vxor.u32 %v2677, 2147483648
      %v2688 = vsel %vm2686, %v2687, %v2678
      %v2689 = vsel %vm2682, %v2685, %v2688
      %v2690 = vsel %vm2679, nan, %v2689
      %v2691 = vand.u32 2147483647, %v1083
      %vm2692 = vcmp.le.f32.partialorder %v2691, 0.7853982
      %vm2693 = vcmp.lt.s32.totalorder %v1083, 0
      %v2694 = vand.u32 %v1083, 2139095040
      %v2695 = vshrl.u32 %v2694, 23
      %v2696 = vsub.s32 %v2695, 127
      %v2697 = vand.u32 2147483647, %v1083
      %v2698 = vand.u32 %v2697, 8388607
      %v2699 = vor.u32 %v2698, 8388608
      %v2700 = vsub.s32 0, %v2699
      %v2701 = vadd.s32 %v2696, 1
      %vm2702 = vcmp.gt.s32.totalorder %v2701, 0
      %v2703 = vsel %vm2702, %v2701, 0
      %v2704 = vshrl.u32 %v2703, 5
      %v2705 = vand.u32 %v2703, 31
      %v2706 = vsub.s32 32, %v2705
      %v2707 = vshrl.u32 683565275, %v2706
      %v2708 = vshll.u32 683565275, %v2705
      %v2709 = vshrl.u32 2475754826, %v2706
      %v2710 = vor.u32 %v2708, %v2709
      %v2711 = vshll.u32 2475754826, %v2705
      %v2712 = vshrl.u32 2131351028, %v2706
      %v2713 = vor.u32 %v2711, %v2712
      %v2714 = vshll.u32 2131351028, %v2705
      %v2715 = vshrl.u32 2102212464, %v2706
      %v2716 = vor.u32 %v2714, %v2715
      %v2717 = vshll.u32 2102212464, %v2705
      %v2718 = vshrl.u32 920167782, %v2706
      %v2719 = vor.u32 %v2717, %v2718
      %v2720 = vshll.u32 920167782, %v2705
      %v2721 = vshrl.u32 1326507024, %v2706
      %v2722 = vor.u32 %v2720, %v2721
      %vm2723 = vcmp.lt.s32.totalorder %v2704, 1
      %vm2724 = vcmp.lt.s32.totalorder %v2704, 2
      %vm2725 = vcmp.lt.s32.totalorder %v2704, 3
      %vm2726 = vcmp.lt.s32.totalorder %v2704, 4
      %v2727 = vsel %vm2723, %v2707, %v2710
      %v2728 = vsel %vm2726, %v2716, 2102212464
      %v2729 = vsel %vm2725, %v2713, %v2728
      %v2730 = vsel %vm2724, %v2727, %v2729
      %v2731 = vsel %vm2723, %v2710, %v2713
      %v2732 = vsel %vm2726, %v2719, 920167782
      %v2733 = vsel %vm2725, %v2716, %v2732
      %v2734 = vsel %vm2724, %v2731, %v2733
      %v2735 = vsel %vm2723, %v2713, %v2716
      %v2736 = vsel %vm2726, %v2722, 1326507024
      %v2737 = vsel %vm2725, %v2719, %v2736
      %v2738 = vsel %vm2724, %v2735, %v2737
      %v2739 = vshll.u32 %v2699, 8
      %v2740 = vmul.u32.u64.compose %v2739, %v2738
      %v2741 = vextract.low.u32 %v2740
      %v2742 = vextract.high.u32 %v2740
      %v2743 = vmul.u32.u64.compose %v2739, %v2734
      %v2744 = vextract.low.u32 %v2743
      %v2745 = vextract.high.u32 %v2743
      %v2746 = vmul.u32 %v2739, %v2730
      %v2747 = vadd.s32 %v2742, %v2744
      %vm2748 = vc.u32 %v2742, %v2744
      %v2749 = vadd.s32 %v2745, 1
      %v2750 = vsel %vm2748, %v2749, %v2745
      %v2751 = vadd.s32 %v2746, %v2750
      %v2752 = vadd.s32 %v2751, 536870912
      %v2753 = vshrl.u32 %v2752, 30
      %v2754 = vshll.u32 %v2753, 30
      %v2755 = vsub.s32 %v2751, %v2754
      %vm2756 = vcmp.lt.s32.totalorder %v2755, 0
      %v2757 = vsub.s32 0, %v2755
      %v2758 = vsel %vm2756, %v2757, %v2755
      %v2759 = vclz %v2758
      %v2760 = vsub.s32 %v2759, 2
      %vm2761 = vcmp.gt.s32.totalorder 0, %v2760
      %v2762 = vsel %vm2761, 0, %v2760
      %v2763 = vsub.s32 32, %v2762
      %v2764 = vshll.u32 %v2755, %v2762
      %v2765 = vshrl.u32 %v2747, %v2763
      %v2766 = vor.u32 %v2764, %v2765
      %v2767 = vsub.s32 4294967266, %v2762
      %v2768 = vadd.s32 %v2767, 127
      %v2769 = vshll.u32 %v2768, 23
      %v2770 = vor.u32 4788187, %v2769
      %v2771 = vand.u32 2147483647, %v2770
      %v2773 = vcvt.s32.f32 %v2766
      %v2774 = vmul.f32 %v2773, %v2771
      %v2775 = vxor.u32 %v2774, 2147483648
      %v2776 = vsel %vm2693, %v2775, %v2774
      %v2777 = vsub.s32 4, %v2753
      %v2778 = vsel %vm2693, %v2777, %v2753
      %v2779 = vsel %vm2692, %v1083, %v2776
      %v2780 = vsel %vm2692, 0, %v2778
      %v2781 = vcosq.f32.pop %v2779
      %v2782 = vsinq.f32.pop %v2779
      %vm2783 = vweird.f32 %v1083
      %v2784 = vadd.s32 %v2780, 3
      %v2785 = vand.u32 %v2784, 3
      %vm2786 = vcmp.lt.s32.totalorder %v2785, 2
      %vm2787 = vcmp.eq.s32.totalorder %v2785, 0
      %v2788 = vxor.u32 %v2782, 2147483648
      %v2789 = vsel %vm2787, %v2781, %v2788
      %vm2790 = vcmp.eq.s32.totalorder %v2785, 2
      %v2791 = vxor.u32 %v2781, 2147483648
      %v2792 = vsel %vm2790, %v2791, %v2782
      %v2793 = vsel %vm2786, %v2789, %v2792
      %v2794 = vsel %vm2783, nan, %v2793
      %v2795 = vand.u32 2147483647, %v658
      %vm2796 = vcmp.le.f32.partialorder %v2795, 0.7853982
      %vm2797 = vcmp.lt.s32.totalorder %v658, 0
      %v2798 = vand.u32 %v658, 2139095040
      %v2799 = vshrl.u32 %v2798, 23
      %v2800 = vsub.s32 %v2799, 127
      %v2801 = vand.u32 2147483647, %v658
      %v2802 = vand.u32 %v2801, 8388607
      %v2803 = vor.u32 %v2802, 8388608
      %v2804 = vsub.s32 0, %v2803
      %v2805 = vadd.s32 %v2800, 1
      %vm2806 = vcmp.gt.s32.totalorder %v2805, 0
      %v2807 = vsel %vm2806, %v2805, 0
      %v2808 = vshrl.u32 %v2807, 5
      %v2809 = vand.u32 %v2807, 31
      %v2810 = vsub.s32 32, %v2809
      %v2811 = vshrl.u32 683565275, %v2810
      %v2812 = vshll.u32 683565275, %v2809
      %v2813 = vshrl.u32 2475754826, %v2810
      %v2814 = vor.u32 %v2812, %v2813
      %v2815 = vshll.u32 2475754826, %v2809
      %v2816 = vshrl.u32 2131351028, %v2810
      %v2817 = vor.u32 %v2815, %v2816
      %v2818 = vshll.u32 2131351028, %v2809
      %v2819 = vshrl.u32 2102212464, %v2810
      %v2820 = vor.u32 %v2818, %v2819
      %v2821 = vshll.u32 2102212464, %v2809
      %v2822 = vshrl.u32 920167782, %v2810
      %v2823 = vor.u32 %v2821, %v2822
      %v2824 = vshll.u32 920167782, %v2809
      %v2825 = vshrl.u32 1326507024, %v2810
      %v2826 = vor.u32 %v2824, %v2825
      %vm2827 = vcmp.lt.s32.totalorder %v2808, 1
      %vm2828 = vcmp.lt.s32.totalorder %v2808, 2
      %vm2829 = vcmp.lt.s32.totalorder %v2808, 3
      %vm2830 = vcmp.lt.s32.totalorder %v2808, 4
      %v2831 = vsel %vm2827, %v2811, %v2814
      %v2832 = vsel %vm2830, %v2820, 2102212464
      %v2833 = vsel %vm2829, %v2817, %v2832
      %v2834 = vsel %vm2828, %v2831, %v2833
      %v2835 = vsel %vm2827, %v2814, %v2817
      %v2836 = vsel %vm2830, %v2823, 920167782
      %v2837 = vsel %vm2829, %v2820, %v2836
      %v2838 = vsel %vm2828, %v2835, %v2837
      %v2839 = vsel %vm2827, %v2817, %v2820
      %v2840 = vsel %vm2830, %v2826, 1326507024
      %v2841 = vsel %vm2829, %v2823, %v2840
      %v2842 = vsel %vm2828, %v2839, %v2841
      %v2843 = vshll.u32 %v2803, 8
      %v2844 = vmul.u32.u64.compose %v2843, %v2842
      %v2845 = vextract.low.u32 %v2844
      %v2846 = vextract.high.u32 %v2844
      %v2847 = vmul.u32.u64.compose %v2843, %v2838
      %v2848 = vextract.low.u32 %v2847
      %v2849 = vextract.high.u32 %v2847
      %v2850 = vmul.u32 %v2843, %v2834
      %v2851 = vadd.s32 %v2846, %v2848
      %vm2852 = vc.u32 %v2846, %v2848
      %v2853 = vadd.s32 %v2849, 1
      %v2854 = vsel %vm2852, %v2853, %v2849
      %v2855 = vadd.s32 %v2850, %v2854
      %v2856 = vadd.s32 %v2855, 536870912
      %v2857 = vshrl.u32 %v2856, 30
      %v2858 = vshll.u32 %v2857, 30
      %v2859 = vsub.s32 %v2855, %v2858
      %vm2860 = vcmp.lt.s32.totalorder %v2859, 0
      %v2861 = vsub.s32 0, %v2859
      %v2862 = vsel %vm2860, %v2861, %v2859
      %v2863 = vclz %v2862
      %v2864 = vsub.s32 %v2863, 2
      %vm2865 = vcmp.gt.s32.totalorder 0, %v2864
      %v2866 = vsel %vm2865, 0, %v2864
      %v2867 = vsub.s32 32, %v2866
      %v2868 = vshll.u32 %v2859, %v2866
      %v2869 = vshrl.u32 %v2851, %v2867
      %v2870 = vor.u32 %v2868, %v2869
      %v2871 = vsub.s32 4294967266, %v2866
      %v2872 = vadd.s32 %v2871, 127
      %v2873 = vshll.u32 %v2872, 23
      %v2874 = vor.u32 4788187, %v2873
      %v2875 = vand.u32 2147483647, %v2874
      %v2877 = vcvt.s32.f32 %v2870
      %v2878 = vmul.f32 %v2877, %v2875
      %v2879 = vxor.u32 %v2878, 2147483648
      %v2880 = vsel %vm2797, %v2879, %v2878
      %v2881 = vsub.s32 4, %v2857
      %v2882 = vsel %vm2797, %v2881, %v2857
      %v2883 = vsel %vm2796, %v658, %v2880
      %v2884 = vsel %vm2796, 0, %v2882
      %v2885 = vcosq.f32.pop %v2883
      %v2886 = vsinq.f32.pop %v2883
      %vm2887 = vweird.f32 %v658
      %v2888 = vadd.s32 %v2884, 3
      %v2889 = vand.u32 %v2888, 3
      %vm2890 = vcmp.lt.s32.totalorder %v2889, 2
      %vm2891 = vcmp.eq.s32.totalorder %v2889, 0
      %v2892 = vxor.u32 %v2886, 2147483648
      %v2893 = vsel %vm2891, %v2885, %v2892
      %vm2894 = vcmp.eq.s32.totalorder %v2889, 2
      %v2895 = vxor.u32 %v2885, 2147483648
      %v2896 = vsel %vm2894, %v2895, %v2886
      %v2897 = vsel %vm2890, %v2893, %v2896
      %v2898 = vsel %vm2887, nan, %v2897
      %v2899 = vand.u32 2147483647, %v660
      %vm2900 = vcmp.le.f32.partialorder %v2899, 0.7853982
      %vm2901 = vcmp.lt.s32.totalorder %v660, 0
      %v2902 = vand.u32 %v660, 2139095040
      %v2903 = vshrl.u32 %v2902, 23
      %v2904 = vsub.s32 %v2903, 127
      %v2905 = vand.u32 2147483647, %v660
      %v2906 = vand.u32 %v2905, 8388607
      %v2907 = vor.u32 %v2906, 8388608
      %v2908 = vsub.s32 0, %v2907
      %v2909 = vadd.s32 %v2904, 1
      %vm2910 = vcmp.gt.s32.totalorder %v2909, 0
      %v2911 = vsel %vm2910, %v2909, 0
      %v2912 = vshrl.u32 %v2911, 5
      %v2913 = vand.u32 %v2911, 31
      %v2914 = vsub.s32 32, %v2913
      %v2915 = vshrl.u32 683565275, %v2914
      %v2916 = vshll.u32 683565275, %v2913
      %v2917 = vshrl.u32 2475754826, %v2914
      %v2918 = vor.u32 %v2916, %v2917
      %v2919 = vshll.u32 2475754826, %v2913
      %v2920 = vshrl.u32 2131351028, %v2914
      %v2921 = vor.u32 %v2919, %v2920
      %v2922 = vshll.u32 2131351028, %v2913
      %v2923 = vshrl.u32 2102212464, %v2914
      %v2924 = vor.u32 %v2922, %v2923
      %v2925 = vshll.u32 2102212464, %v2913
      %v2926 = vshrl.u32 920167782, %v2914
      %v2927 = vor.u32 %v2925, %v2926
      %v2928 = vshll.u32 920167782, %v2913
      %v2929 = vshrl.u32 1326507024, %v2914
      %v2930 = vor.u32 %v2928, %v2929
      %vm2931 = vcmp.lt.s32.totalorder %v2912, 1
      %vm2932 = vcmp.lt.s32.totalorder %v2912, 2
      %vm2933 = vcmp.lt.s32.totalorder %v2912, 3
      %vm2934 = vcmp.lt.s32.totalorder %v2912, 4
      %v2935 = vsel %vm2931, %v2915, %v2918
      %v2936 = vsel %vm2934, %v2924, 2102212464
      %v2937 = vsel %vm2933, %v2921, %v2936
      %v2938 = vsel %vm2932, %v2935, %v2937
      %v2939 = vsel %vm2931, %v2918, %v2921
      %v2940 = vsel %vm2934, %v2927, 920167782
      %v2941 = vsel %vm2933, %v2924, %v2940
      %v2942 = vsel %vm2932, %v2939, %v2941
      %v2943 = vsel %vm2931, %v2921, %v2924
      %v2944 = vsel %vm2934, %v2930, 1326507024
      %v2945 = vsel %vm2933, %v2927, %v2944
      %v2946 = vsel %vm2932, %v2943, %v2945
      %v2947 = vshll.u32 %v2907, 8
      %v2948 = vmul.u32.u64.compose %v2947, %v2946
      %v2949 = vextract.low.u32 %v2948
      %v2950 = vextract.high.u32 %v2948
      %v2951 = vmul.u32.u64.compose %v2947, %v2942
      %v2952 = vextract.low.u32 %v2951
      %v2953 = vextract.high.u32 %v2951
      %v2954 = vmul.u32 %v2947, %v2938
      %v2955 = vadd.s32 %v2950, %v2952
      %vm2956 = vc.u32 %v2950, %v2952
      %v2957 = vadd.s32 %v2953, 1
      %v2958 = vsel %vm2956, %v2957, %v2953
      %v2959 = vadd.s32 %v2954, %v2958
      %v2960 = vadd.s32 %v2959, 536870912
      %v2961 = vshrl.u32 %v2960, 30
      %v2962 = vshll.u32 %v2961, 30
      %v2963 = vsub.s32 %v2959, %v2962
      %vm2964 = vcmp.lt.s32.totalorder %v2963, 0
      %v2965 = vsub.s32 0, %v2963
      %v2966 = vsel %vm2964, %v2965, %v2963
      %v2967 = vclz %v2966
      %v2968 = vsub.s32 %v2967, 2
      %vm2969 = vcmp.gt.s32.totalorder 0, %v2968
      %v2970 = vsel %vm2969, 0, %v2968
      %v2971 = vsub.s32 32, %v2970
      %v2972 = vshll.u32 %v2963, %v2970
      %v2973 = vshrl.u32 %v2955, %v2971
      %v2974 = vor.u32 %v2972, %v2973
      %v2975 = vsub.s32 4294967266, %v2970
      %v2976 = vadd.s32 %v2975, 127
      %v2977 = vshll.u32 %v2976, 23
      %v2978 = vor.u32 4788187, %v2977
      %v2979 = vand.u32 2147483647, %v2978
      %v2981 = vcvt.s32.f32 %v2974
      %v2982 = vmul.f32 %v2981, %v2979
      %v2983 = vxor.u32 %v2982, 2147483648
      %v2984 = vsel %vm2901, %v2983, %v2982
      %v2985 = vsub.s32 4, %v2961
      %v2986 = vsel %vm2901, %v2985, %v2961
      %v2987 = vsel %vm2900, %v660, %v2984
      %v2988 = vsel %vm2900, 0, %v2986
      %v2989 = vcosq.f32.pop %v2987
      %v2990 = vsinq.f32.pop %v2987
      %vm2991 = vweird.f32 %v660
      %v2992 = vadd.s32 %v2988, 3
      %v2993 = vand.u32 %v2992, 3
      %vm2994 = vcmp.lt.s32.totalorder %v2993, 2
      %vm2995 = vcmp.eq.s32.totalorder %v2993, 0
      %v2996 = vxor.u32 %v2990, 2147483648
      %v2997 = vsel %vm2995, %v2989, %v2996
      %vm2998 = vcmp.eq.s32.totalorder %v2993, 2
      %v2999 = vxor.u32 %v2989, 2147483648
      %v3000 = vsel %vm2998, %v2999, %v2990
      %v3001 = vsel %vm2994, %v2997, %v3000
      %v3002 = vsel %vm2991, nan, %v3001
      %v3003 = vand.u32 2147483647, %v801
      %vm3004 = vcmp.le.f32.partialorder %v3003, 0.7853982
      %vm3005 = vcmp.lt.s32.totalorder %v801, 0
      %v3006 = vand.u32 %v801, 2139095040
      %v3007 = vshrl.u32 %v3006, 23
      %v3008 = vsub.s32 %v3007, 127
      %v3009 = vand.u32 2147483647, %v801
      %v3010 = vand.u32 %v3009, 8388607
      %v3011 = vor.u32 %v3010, 8388608
      %v3012 = vsub.s32 0, %v3011
      %v3013 = vadd.s32 %v3008, 1
      %vm3014 = vcmp.gt.s32.totalorder %v3013, 0
      %v3015 = vsel %vm3014, %v3013, 0
      %v3016 = vshrl.u32 %v3015, 5
      %v3017 = vand.u32 %v3015, 31
      %v3018 = vsub.s32 32, %v3017
      %v3019 = vshrl.u32 683565275, %v3018
      %v3020 = vshll.u32 683565275, %v3017
      %v3021 = vshrl.u32 2475754826, %v3018
      %v3022 = vor.u32 %v3020, %v3021
      %v3023 = vshll.u32 2475754826, %v3017
      %v3024 = vshrl.u32 2131351028, %v3018
      %v3025 = vor.u32 %v3023, %v3024
      %v3026 = vshll.u32 2131351028, %v3017
      %v3027 = vshrl.u32 2102212464, %v3018
      %v3028 = vor.u32 %v3026, %v3027
      %v3029 = vshll.u32 2102212464, %v3017
      %v3030 = vshrl.u32 920167782, %v3018
      %v3031 = vor.u32 %v3029, %v3030
      %v3032 = vshll.u32 920167782, %v3017
      %v3033 = vshrl.u32 1326507024, %v3018
      %v3034 = vor.u32 %v3032, %v3033
      %vm3035 = vcmp.lt.s32.totalorder %v3016, 1
      %vm3036 = vcmp.lt.s32.totalorder %v3016, 2
      %vm3037 = vcmp.lt.s32.totalorder %v3016, 3
      %vm3038 = vcmp.lt.s32.totalorder %v3016, 4
      %v3039 = vsel %vm3035, %v3019, %v3022
      %v3040 = vsel %vm3038, %v3028, 2102212464
      %v3041 = vsel %vm3037, %v3025, %v3040
      %v3042 = vsel %vm3036, %v3039, %v3041
      %v3043 = vsel %vm3035, %v3022, %v3025
      %v3044 = vsel %vm3038, %v3031, 920167782
      %v3045 = vsel %vm3037, %v3028, %v3044
      %v3046 = vsel %vm3036, %v3043, %v3045
      %v3047 = vsel %vm3035, %v3025, %v3028
      %v3048 = vsel %vm3038, %v3034, 1326507024
      %v3049 = vsel %vm3037, %v3031, %v3048
      %v3050 = vsel %vm3036, %v3047, %v3049
      %v3051 = vshll.u32 %v3011, 8
      %v3052 = vmul.u32.u64.compose %v3051, %v3050
      %v3053 = vextract.low.u32 %v3052
      %v3054 = vextract.high.u32 %v3052
      %v3055 = vmul.u32.u64.compose %v3051, %v3046
      %v3056 = vextract.low.u32 %v3055
      %v3057 = vextract.high.u32 %v3055
      %v3058 = vmul.u32 %v3051, %v3042
      %v3059 = vadd.s32 %v3054, %v3056
      %vm3060 = vc.u32 %v3054, %v3056
      %v3061 = vadd.s32 %v3057, 1
      %v3062 = vsel %vm3060, %v3061, %v3057
      %v3063 = vadd.s32 %v3058, %v3062
      %v3064 = vadd.s32 %v3063, 536870912
      %v3065 = vshrl.u32 %v3064, 30
      %v3066 = vshll.u32 %v3065, 30
      %v3067 = vsub.s32 %v3063, %v3066
      %vm3068 = vcmp.lt.s32.totalorder %v3067, 0
      %v3069 = vsub.s32 0, %v3067
      %v3070 = vsel %vm3068, %v3069, %v3067
      %v3071 = vclz %v3070
      %v3072 = vsub.s32 %v3071, 2
      %vm3073 = vcmp.gt.s32.totalorder 0, %v3072
      %v3074 = vsel %vm3073, 0, %v3072
      %v3075 = vsub.s32 32, %v3074
      %v3076 = vshll.u32 %v3067, %v3074
      %v3077 = vshrl.u32 %v3059, %v3075
      %v3078 = vor.u32 %v3076, %v3077
      %v3079 = vsub.s32 4294967266, %v3074
      %v3080 = vadd.s32 %v3079, 127
      %v3081 = vshll.u32 %v3080, 23
      %v3082 = vor.u32 4788187, %v3081
      %v3083 = vand.u32 2147483647, %v3082
      %v3085 = vcvt.s32.f32 %v3078
      %v3086 = vmul.f32 %v3085, %v3083
      %v3087 = vxor.u32 %v3086, 2147483648
      %v3088 = vsel %vm3005, %v3087, %v3086
      %v3089 = vsub.s32 4, %v3065
      %v3090 = vsel %vm3005, %v3089, %v3065
      %v3091 = vsel %vm3004, %v801, %v3088
      %v3092 = vsel %vm3004, 0, %v3090
      %v3093 = vcosq.f32.pop %v3091
      %v3094 = vsinq.f32.pop %v3091
      %vm3095 = vweird.f32 %v801
      %v3096 = vadd.s32 %v3092, 3
      %v3097 = vand.u32 %v3096, 3
      %vm3098 = vcmp.lt.s32.totalorder %v3097, 2
      %vm3099 = vcmp.eq.s32.totalorder %v3097, 0
      %v3100 = vxor.u32 %v3094, 2147483648
      %v3101 = vsel %vm3099, %v3093, %v3100
      %vm3102 = vcmp.eq.s32.totalorder %v3097, 2
      %v3103 = vxor.u32 %v3093, 2147483648
      %v3104 = vsel %vm3102, %v3103, %v3094
      %v3105 = vsel %vm3098, %v3101, %v3104
      %v3106 = vsel %vm3095, nan, %v3105
      %v3107 = vand.u32 2147483647, %v803
      %vm3108 = vcmp.le.f32.partialorder %v3107, 0.7853982
      %vm3109 = vcmp.lt.s32.totalorder %v803, 0
      %v3110 = vand.u32 %v803, 2139095040
      %v3111 = vshrl.u32 %v3110, 23
      %v3112 = vsub.s32 %v3111, 127
      %v3113 = vand.u32 2147483647, %v803
      %v3114 = vand.u32 %v3113, 8388607
      %v3115 = vor.u32 %v3114, 8388608
      %v3116 = vsub.s32 0, %v3115
      %v3117 = vadd.s32 %v3112, 1
      %vm3118 = vcmp.gt.s32.totalorder %v3117, 0
      %v3119 = vsel %vm3118, %v3117, 0
      %v3120 = vshrl.u32 %v3119, 5
      %v3121 = vand.u32 %v3119, 31
      %v3122 = vsub.s32 32, %v3121
      %v3123 = vshrl.u32 683565275, %v3122
      %v3124 = vshll.u32 683565275, %v3121
      %v3125 = vshrl.u32 2475754826, %v3122
      %v3126 = vor.u32 %v3124, %v3125
      %v3127 = vshll.u32 2475754826, %v3121
      %v3128 = vshrl.u32 2131351028, %v3122
      %v3129 = vor.u32 %v3127, %v3128
      %v3130 = vshll.u32 2131351028, %v3121
      %v3131 = vshrl.u32 2102212464, %v3122
      %v3132 = vor.u32 %v3130, %v3131
      %v3133 = vshll.u32 2102212464, %v3121
      %v3134 = vshrl.u32 920167782, %v3122
      %v3135 = vor.u32 %v3133, %v3134
      %v3136 = vshll.u32 920167782, %v3121
      %v3137 = vshrl.u32 1326507024, %v3122
      %v3138 = vor.u32 %v3136, %v3137
      %vm3139 = vcmp.lt.s32.totalorder %v3120, 1
      %vm3140 = vcmp.lt.s32.totalorder %v3120, 2
      %vm3141 = vcmp.lt.s32.totalorder %v3120, 3
      %vm3142 = vcmp.lt.s32.totalorder %v3120, 4
      %v3143 = vsel %vm3139, %v3123, %v3126
      %v3144 = vsel %vm3142, %v3132, 2102212464
      %v3145 = vsel %vm3141, %v3129, %v3144
      %v3146 = vsel %vm3140, %v3143, %v3145
      %v3147 = vsel %vm3139, %v3126, %v3129
      %v3148 = vsel %vm3142, %v3135, 920167782
      %v3149 = vsel %vm3141, %v3132, %v3148
      %v3150 = vsel %vm3140, %v3147, %v3149
      %v3151 = vsel %vm3139, %v3129, %v3132
      %v3152 = vsel %vm3142, %v3138, 1326507024
      %v3153 = vsel %vm3141, %v3135, %v3152
      %v3154 = vsel %vm3140, %v3151, %v3153
      %v3155 = vshll.u32 %v3115, 8
      %v3156 = vmul.u32.u64.compose %v3155, %v3154
      %v3157 = vextract.low.u32 %v3156
      %v3158 = vextract.high.u32 %v3156
      %v3159 = vmul.u32.u64.compose %v3155, %v3150
      %v3160 = vextract.low.u32 %v3159
      %v3161 = vextract.high.u32 %v3159
      %v3162 = vmul.u32 %v3155, %v3146
      %v3163 = vadd.s32 %v3158, %v3160
      %vm3164 = vc.u32 %v3158, %v3160
      %v3165 = vadd.s32 %v3161, 1
      %v3166 = vsel %vm3164, %v3165, %v3161
      %v3167 = vadd.s32 %v3162, %v3166
      %v3168 = vadd.s32 %v3167, 536870912
      %v3169 = vshrl.u32 %v3168, 30
      %v3170 = vshll.u32 %v3169, 30
      %v3171 = vsub.s32 %v3167, %v3170
      %vm3172 = vcmp.lt.s32.totalorder %v3171, 0
      %v3173 = vsub.s32 0, %v3171
      %v3174 = vsel %vm3172, %v3173, %v3171
      %v3175 = vclz %v3174
      %v3176 = vsub.s32 %v3175, 2
      %vm3177 = vcmp.gt.s32.totalorder 0, %v3176
      %v3178 = vsel %vm3177, 0, %v3176
      %v3179 = vsub.s32 32, %v3178
      %v3180 = vshll.u32 %v3171, %v3178
      %v3181 = vshrl.u32 %v3163, %v3179
      %v3182 = vor.u32 %v3180, %v3181
      %v3183 = vsub.s32 4294967266, %v3178
      %v3184 = vadd.s32 %v3183, 127
      %v3185 = vshll.u32 %v3184, 23
      %v3186 = vor.u32 4788187, %v3185
      %v3187 = vand.u32 2147483647, %v3186
      %v3189 = vcvt.s32.f32 %v3182
      %v3190 = vmul.f32 %v3189, %v3187
      %v3191 = vxor.u32 %v3190, 2147483648
      %v3192 = vsel %vm3109, %v3191, %v3190
      %v3193 = vsub.s32 4, %v3169
      %v3194 = vsel %vm3109, %v3193, %v3169
      %v3195 = vsel %vm3108, %v803, %v3192
      %v3196 = vsel %vm3108, 0, %v3194
      %v3197 = vcosq.f32.pop %v3195
      %v3198 = vsinq.f32.pop %v3195
      %vm3199 = vweird.f32 %v803
      %v3200 = vadd.s32 %v3196, 3
      %v3201 = vand.u32 %v3200, 3
      %vm3202 = vcmp.lt.s32.totalorder %v3201, 2
      %vm3203 = vcmp.eq.s32.totalorder %v3201, 0
      %v3204 = vxor.u32 %v3198, 2147483648
      %v3205 = vsel %vm3203, %v3197, %v3204
      %vm3206 = vcmp.eq.s32.totalorder %v3201, 2
      %v3207 = vxor.u32 %v3197, 2147483648
      %v3208 = vsel %vm3206, %v3207, %v3198
      %v3209 = vsel %vm3202, %v3205, %v3208
      %v3210 = vsel %vm3199, nan, %v3209
      %v3211 = vand.u32 2147483647, %v944
      %vm3212 = vcmp.le.f32.partialorder %v3211, 0.7853982
      %vm3213 = vcmp.lt.s32.totalorder %v944, 0
      %v3214 = vand.u32 %v944, 2139095040
      %v3215 = vshrl.u32 %v3214, 23
      %v3216 = vsub.s32 %v3215, 127
      %v3217 = vand.u32 2147483647, %v944
      %v3218 = vand.u32 %v3217, 8388607
      %v3219 = vor.u32 %v3218, 8388608
      %v3220 = vsub.s32 0, %v3219
      %v3221 = vadd.s32 %v3216, 1
      %vm3222 = vcmp.gt.s32.totalorder %v3221, 0
      %v3223 = vsel %vm3222, %v3221, 0
      %v3224 = vshrl.u32 %v3223, 5
      %v3225 = vand.u32 %v3223, 31
      %v3226 = vsub.s32 32, %v3225
      %v3227 = vshrl.u32 683565275, %v3226
      %v3228 = vshll.u32 683565275, %v3225
      %v3229 = vshrl.u32 2475754826, %v3226
      %v3230 = vor.u32 %v3228, %v3229
      %v3231 = vshll.u32 2475754826, %v3225
      %v3232 = vshrl.u32 2131351028, %v3226
      %v3233 = vor.u32 %v3231, %v3232
      %v3234 = vshll.u32 2131351028, %v3225
      %v3235 = vshrl.u32 2102212464, %v3226
      %v3236 = vor.u32 %v3234, %v3235
      %v3237 = vshll.u32 2102212464, %v3225
      %v3238 = vshrl.u32 920167782, %v3226
      %v3239 = vor.u32 %v3237, %v3238
      %v3240 = vshll.u32 920167782, %v3225
      %v3241 = vshrl.u32 1326507024, %v3226
      %v3242 = vor.u32 %v3240, %v3241
      %vm3243 = vcmp.lt.s32.totalorder %v3224, 1
      %vm3244 = vcmp.lt.s32.totalorder %v3224, 2
      %vm3245 = vcmp.lt.s32.totalorder %v3224, 3
      %vm3246 = vcmp.lt.s32.totalorder %v3224, 4
      %v3247 = vsel %vm3243, %v3227, %v3230
      %v3248 = vsel %vm3246, %v3236, 2102212464
      %v3249 = vsel %vm3245, %v3233, %v3248
      %v3250 = vsel %vm3244, %v3247, %v3249
      %v3251 = vsel %vm3243, %v3230, %v3233
      %v3252 = vsel %vm3246, %v3239, 920167782
      %v3253 = vsel %vm3245, %v3236, %v3252
      %v3254 = vsel %vm3244, %v3251, %v3253
      %v3255 = vsel %vm3243, %v3233, %v3236
      %v3256 = vsel %vm3246, %v3242, 1326507024
      %v3257 = vsel %vm3245, %v3239, %v3256
      %v3258 = vsel %vm3244, %v3255, %v3257
      %v3259 = vshll.u32 %v3219, 8
      %v3260 = vmul.u32.u64.compose %v3259, %v3258
      %v3261 = vextract.low.u32 %v3260
      %v3262 = vextract.high.u32 %v3260
      %v3263 = vmul.u32.u64.compose %v3259, %v3254
      %v3264 = vextract.low.u32 %v3263
      %v3265 = vextract.high.u32 %v3263
      %v3266 = vmul.u32 %v3259, %v3250
      %v3267 = vadd.s32 %v3262, %v3264
      %vm3268 = vc.u32 %v3262, %v3264
      %v3269 = vadd.s32 %v3265, 1
      %v3270 = vsel %vm3268, %v3269, %v3265
      %v3271 = vadd.s32 %v3266, %v3270
      %v3272 = vadd.s32 %v3271, 536870912
      %v3273 = vshrl.u32 %v3272, 30
      %v3274 = vshll.u32 %v3273, 30
      %v3275 = vsub.s32 %v3271, %v3274
      %vm3276 = vcmp.lt.s32.totalorder %v3275, 0
      %v3277 = vsub.s32 0, %v3275
      %v3278 = vsel %vm3276, %v3277, %v3275
      %v3279 = vclz %v3278
      %v3280 = vsub.s32 %v3279, 2
      %vm3281 = vcmp.gt.s32.totalorder 0, %v3280
      %v3282 = vsel %vm3281, 0, %v3280
      %v3283 = vsub.s32 32, %v3282
      %v3284 = vshll.u32 %v3275, %v3282
      %v3285 = vshrl.u32 %v3267, %v3283
      %v3286 = vor.u32 %v3284, %v3285
      %v3287 = vsub.s32 4294967266, %v3282
      %v3288 = vadd.s32 %v3287, 127
      %v3289 = vshll.u32 %v3288, 23
      %v3290 = vor.u32 4788187, %v3289
      %v3291 = vand.u32 2147483647, %v3290
      %v3293 = vcvt.s32.f32 %v3286
      %v3294 = vmul.f32 %v3293, %v3291
      %v3295 = vxor.u32 %v3294, 2147483648
      %v3296 = vsel %vm3213, %v3295, %v3294
      %v3297 = vsub.s32 4, %v3273
      %v3298 = vsel %vm3213, %v3297, %v3273
      %v3299 = vsel %vm3212, %v944, %v3296
      %v3300 = vsel %vm3212, 0, %v3298
      %v3301 = vcosq.f32.pop %v3299
      %v3302 = vsinq.f32.pop %v3299
      %vm3303 = vweird.f32 %v944
      %v3304 = vadd.s32 %v3300, 3
      %v3305 = vand.u32 %v3304, 3
      %vm3306 = vcmp.lt.s32.totalorder %v3305, 2
      %vm3307 = vcmp.eq.s32.totalorder %v3305, 0
      %v3308 = vxor.u32 %v3302, 2147483648
      %v3309 = vsel %vm3307, %v3301, %v3308
      %vm3310 = vcmp.eq.s32.totalorder %v3305, 2
      %v3311 = vxor.u32 %v3301, 2147483648
      %v3312 = vsel %vm3310, %v3311, %v3302
      %v3313 = vsel %vm3306, %v3309, %v3312
      %v3314 = vsel %vm3303, nan, %v3313
      %v3315 = vand.u32 2147483647, %v946
      %vm3316 = vcmp.le.f32.partialorder %v3315, 0.7853982
      %vm3317 = vcmp.lt.s32.totalorder %v946, 0
      %v3318 = vand.u32 %v946, 2139095040
      %v3319 = vshrl.u32 %v3318, 23
      %v3320 = vsub.s32 %v3319, 127
      %v3321 = vand.u32 2147483647, %v946
      %v3322 = vand.u32 %v3321, 8388607
      %v3323 = vor.u32 %v3322, 8388608
      %v3324 = vsub.s32 0, %v3323
      %v3325 = vadd.s32 %v3320, 1
      %vm3326 = vcmp.gt.s32.totalorder %v3325, 0
      %v3327 = vsel %vm3326, %v3325, 0
      %v3328 = vshrl.u32 %v3327, 5
      %v3329 = vand.u32 %v3327, 31
      %v3330 = vsub.s32 32, %v3329
      %v3331 = vshrl.u32 683565275, %v3330
      %v3332 = vshll.u32 683565275, %v3329
      %v3333 = vshrl.u32 2475754826, %v3330
      %v3334 = vor.u32 %v3332, %v3333
      %v3335 = vshll.u32 2475754826, %v3329
      %v3336 = vshrl.u32 2131351028, %v3330
      %v3337 = vor.u32 %v3335, %v3336
      %v3338 = vshll.u32 2131351028, %v3329
      %v3339 = vshrl.u32 2102212464, %v3330
      %v3340 = vor.u32 %v3338, %v3339
      %v3341 = vshll.u32 2102212464, %v3329
      %v3342 = vshrl.u32 920167782, %v3330
      %v3343 = vor.u32 %v3341, %v3342
      %v3344 = vshll.u32 920167782, %v3329
      %v3345 = vshrl.u32 1326507024, %v3330
      %v3346 = vor.u32 %v3344, %v3345
      %vm3347 = vcmp.lt.s32.totalorder %v3328, 1
      %vm3348 = vcmp.lt.s32.totalorder %v3328, 2
      %vm3349 = vcmp.lt.s32.totalorder %v3328, 3
      %vm3350 = vcmp.lt.s32.totalorder %v3328, 4
      %v3351 = vsel %vm3347, %v3331, %v3334
      %v3352 = vsel %vm3350, %v3340, 2102212464
      %v3353 = vsel %vm3349, %v3337, %v3352
      %v3354 = vsel %vm3348, %v3351, %v3353
      %v3355 = vsel %vm3347, %v3334, %v3337
      %v3356 = vsel %vm3350, %v3343, 920167782
      %v3357 = vsel %vm3349, %v3340, %v3356
      %v3358 = vsel %vm3348, %v3355, %v3357
      %v3359 = vsel %vm3347, %v3337, %v3340
      %v3360 = vsel %vm3350, %v3346, 1326507024
      %v3361 = vsel %vm3349, %v3343, %v3360
      %v3362 = vsel %vm3348, %v3359, %v3361
      %v3363 = vshll.u32 %v3323, 8
      %v3364 = vmul.u32.u64.compose %v3363, %v3362
      %v3365 = vextract.low.u32 %v3364
      %v3366 = vextract.high.u32 %v3364
      %v3367 = vmul.u32.u64.compose %v3363, %v3358
      %v3368 = vextract.low.u32 %v3367
      %v3369 = vextract.high.u32 %v3367
      %v3370 = vmul.u32 %v3363, %v3354
      %v3371 = vadd.s32 %v3366, %v3368
      %vm3372 = vc.u32 %v3366, %v3368
      %v3373 = vadd.s32 %v3369, 1
      %v3374 = vsel %vm3372, %v3373, %v3369
      %v3375 = vadd.s32 %v3370, %v3374
      %v3376 = vadd.s32 %v3375, 536870912
      %v3377 = vshrl.u32 %v3376, 30
      %v3378 = vshll.u32 %v3377, 30
      %v3379 = vsub.s32 %v3375, %v3378
      %vm3380 = vcmp.lt.s32.totalorder %v3379, 0
      %v3381 = vsub.s32 0, %v3379
      %v3382 = vsel %vm3380, %v3381, %v3379
      %v3383 = vclz %v3382
      %v3384 = vsub.s32 %v3383, 2
      %vm3385 = vcmp.gt.s32.totalorder 0, %v3384
      %v3386 = vsel %vm3385, 0, %v3384
      %v3387 = vsub.s32 32, %v3386
      %v3388 = vshll.u32 %v3379, %v3386
      %v3389 = vshrl.u32 %v3371, %v3387
      %v3390 = vor.u32 %v3388, %v3389
      %v3391 = vsub.s32 4294967266, %v3386
      %v3392 = vadd.s32 %v3391, 127
      %v3393 = vshll.u32 %v3392, 23
      %v3394 = vor.u32 4788187, %v3393
      %v3395 = vand.u32 2147483647, %v3394
      %v3397 = vcvt.s32.f32 %v3390
      %v3398 = vmul.f32 %v3397, %v3395
      %v3399 = vxor.u32 %v3398, 2147483648
      %v3400 = vsel %vm3317, %v3399, %v3398
      %v3401 = vsub.s32 4, %v3377
      %v3402 = vsel %vm3317, %v3401, %v3377
      %v3403 = vsel %vm3316, %v946, %v3400
      %v3404 = vsel %vm3316, 0, %v3402
      %v3405 = vcosq.f32.pop %v3403
      %v3406 = vsinq.f32.pop %v3403
      %vm3407 = vweird.f32 %v946
      %v3408 = vadd.s32 %v3404, 3
      %v3409 = vand.u32 %v3408, 3
      %vm3410 = vcmp.lt.s32.totalorder %v3409, 2
      %vm3411 = vcmp.eq.s32.totalorder %v3409, 0
      %v3412 = vxor.u32 %v3406, 2147483648
      %v3413 = vsel %vm3411, %v3405, %v3412
      %vm3414 = vcmp.eq.s32.totalorder %v3409, 2
      %v3415 = vxor.u32 %v3405, 2147483648
      %v3416 = vsel %vm3414, %v3415, %v3406
      %v3417 = vsel %vm3410, %v3413, %v3416
      %v3418 = vsel %vm3407, nan, %v3417
      %v3419 = vand.u32 2147483647, %v1087
      %vm3420 = vcmp.le.f32.partialorder %v3419, 0.7853982
      %vm3421 = vcmp.lt.s32.totalorder %v1087, 0
      %v3422 = vand.u32 %v1087, 2139095040
      %v3423 = vshrl.u32 %v3422, 23
      %v3424 = vsub.s32 %v3423, 127
      %v3425 = vand.u32 2147483647, %v1087
      %v3426 = vand.u32 %v3425, 8388607
      %v3427 = vor.u32 %v3426, 8388608
      %v3428 = vsub.s32 0, %v3427
      %v3429 = vadd.s32 %v3424, 1
      %vm3430 = vcmp.gt.s32.totalorder %v3429, 0
      %v3431 = vsel %vm3430, %v3429, 0
      %v3432 = vshrl.u32 %v3431, 5
      %v3433 = vand.u32 %v3431, 31
      %v3434 = vsub.s32 32, %v3433
      %v3435 = vshrl.u32 683565275, %v3434
      %v3436 = vshll.u32 683565275, %v3433
      %v3437 = vshrl.u32 2475754826, %v3434
      %v3438 = vor.u32 %v3436, %v3437
      %v3439 = vshll.u32 2475754826, %v3433
      %v3440 = vshrl.u32 2131351028, %v3434
      %v3441 = vor.u32 %v3439, %v3440
      %v3442 = vshll.u32 2131351028, %v3433
      %v3443 = vshrl.u32 2102212464, %v3434
      %v3444 = vor.u32 %v3442, %v3443
      %v3445 = vshll.u32 2102212464, %v3433
      %v3446 = vshrl.u32 920167782, %v3434
      %v3447 = vor.u32 %v3445, %v3446
      %v3448 = vshll.u32 920167782, %v3433
      %v3449 = vshrl.u32 1326507024, %v3434
      %v3450 = vor.u32 %v3448, %v3449
      %vm3451 = vcmp.lt.s32.totalorder %v3432, 1
      %vm3452 = vcmp.lt.s32.totalorder %v3432, 2
      %vm3453 = vcmp.lt.s32.totalorder %v3432, 3
      %vm3454 = vcmp.lt.s32.totalorder %v3432, 4
      %v3455 = vsel %vm3451, %v3435, %v3438
      %v3456 = vsel %vm3454, %v3444, 2102212464
      %v3457 = vsel %vm3453, %v3441, %v3456
      %v3458 = vsel %vm3452, %v3455, %v3457
      %v3459 = vsel %vm3451, %v3438, %v3441
      %v3460 = vsel %vm3454, %v3447, 920167782
      %v3461 = vsel %vm3453, %v3444, %v3460
      %v3462 = vsel %vm3452, %v3459, %v3461
      %v3463 = vsel %vm3451, %v3441, %v3444
      %v3464 = vsel %vm3454, %v3450, 1326507024
      %v3465 = vsel %vm3453, %v3447, %v3464
      %v3466 = vsel %vm3452, %v3463, %v3465
      %v3467 = vshll.u32 %v3427, 8
      %v3468 = vmul.u32.u64.compose %v3467, %v3466
      %v3469 = vextract.low.u32 %v3468
      %v3470 = vextract.high.u32 %v3468
      %v3471 = vmul.u32.u64.compose %v3467, %v3462
      %v3472 = vextract.low.u32 %v3471
      %v3473 = vextract.high.u32 %v3471
      %v3474 = vmul.u32 %v3467, %v3458
      %v3475 = vadd.s32 %v3470, %v3472
      %vm3476 = vc.u32 %v3470, %v3472
      %v3477 = vadd.s32 %v3473, 1
      %v3478 = vsel %vm3476, %v3477, %v3473
      %v3479 = vadd.s32 %v3474, %v3478
      %v3480 = vadd.s32 %v3479, 536870912
      %v3481 = vshrl.u32 %v3480, 30
      %v3482 = vshll.u32 %v3481, 30
      %v3483 = vsub.s32 %v3479, %v3482
      %vm3484 = vcmp.lt.s32.totalorder %v3483, 0
      %v3485 = vsub.s32 0, %v3483
      %v3486 = vsel %vm3484, %v3485, %v3483
      %v3487 = vclz %v3486
      %v3488 = vsub.s32 %v3487, 2
      %vm3489 = vcmp.gt.s32.totalorder 0, %v3488
      %v3490 = vsel %vm3489, 0, %v3488
      %v3491 = vsub.s32 32, %v3490
      %v3492 = vshll.u32 %v3483, %v3490
      %v3493 = vshrl.u32 %v3475, %v3491
      %v3494 = vor.u32 %v3492, %v3493
      %v3495 = vsub.s32 4294967266, %v3490
      %v3496 = vadd.s32 %v3495, 127
      %v3497 = vshll.u32 %v3496, 23
      %v3498 = vor.u32 4788187, %v3497
      %v3499 = vand.u32 2147483647, %v3498
      %v3501 = vcvt.s32.f32 %v3494
      %v3502 = vmul.f32 %v3501, %v3499
      %v3503 = vxor.u32 %v3502, 2147483648
      %v3504 = vsel %vm3421, %v3503, %v3502
      %v3505 = vsub.s32 4, %v3481
      %v3506 = vsel %vm3421, %v3505, %v3481
      %v3507 = vsel %vm3420, %v1087, %v3504
      %v3508 = vsel %vm3420, 0, %v3506
      %v3509 = vcosq.f32.pop %v3507
      %v3510 = vsinq.f32.pop %v3507
      %vm3511 = vweird.f32 %v1087
      %v3512 = vadd.s32 %v3508, 3
      %v3513 = vand.u32 %v3512, 3
      %vm3514 = vcmp.lt.s32.totalorder %v3513, 2
      %vm3515 = vcmp.eq.s32.totalorder %v3513, 0
      %v3516 = vxor.u32 %v3510, 2147483648
      %v3517 = vsel %vm3515, %v3509, %v3516
      %vm3518 = vcmp.eq.s32.totalorder %v3513, 2
      %v3519 = vxor.u32 %v3509, 2147483648
      %v3520 = vsel %vm3518, %v3519, %v3510
      %v3521 = vsel %vm3514, %v3517, %v3520
      %v3522 = vsel %vm3511, nan, %v3521
      %v3523 = vand.u32 2147483647, %v1089
      %vm3524 = vcmp.le.f32.partialorder %v3523, 0.7853982
      %vm3525 = vcmp.lt.s32.totalorder %v1089, 0
      %v3526 = vand.u32 %v1089, 2139095040
      %v3527 = vshrl.u32 %v3526, 23
      %v3528 = vsub.s32 %v3527, 127
      %v3529 = vand.u32 2147483647, %v1089
      %v3530 = vand.u32 %v3529, 8388607
      %v3531 = vor.u32 %v3530, 8388608
      %v3532 = vsub.s32 0, %v3531
      %v3533 = vadd.s32 %v3528, 1
      %vm3534 = vcmp.gt.s32.totalorder %v3533, 0
      %v3535 = vsel %vm3534, %v3533, 0
      %v3536 = vshrl.u32 %v3535, 5
      %v3537 = vand.u32 %v3535, 31
      %v3538 = vsub.s32 32, %v3537
      %v3539 = vshrl.u32 683565275, %v3538
      %v3540 = vshll.u32 683565275, %v3537
      %v3541 = vshrl.u32 2475754826, %v3538
      %v3542 = vor.u32 %v3540, %v3541
      %v3543 = vshll.u32 2475754826, %v3537
      %v3544 = vshrl.u32 2131351028, %v3538
      %v3545 = vor.u32 %v3543, %v3544
      %v3546 = vshll.u32 2131351028, %v3537
      %v3547 = vshrl.u32 2102212464, %v3538
      %v3548 = vor.u32 %v3546, %v3547
      %v3549 = vshll.u32 2102212464, %v3537
      %v3550 = vshrl.u32 920167782, %v3538
      %v3551 = vor.u32 %v3549, %v3550
      %v3552 = vshll.u32 920167782, %v3537
      %v3553 = vshrl.u32 1326507024, %v3538
      %v3554 = vor.u32 %v3552, %v3553
      %vm3555 = vcmp.lt.s32.totalorder %v3536, 1
      %vm3556 = vcmp.lt.s32.totalorder %v3536, 2
      %vm3557 = vcmp.lt.s32.totalorder %v3536, 3
      %vm3558 = vcmp.lt.s32.totalorder %v3536, 4
      %v3559 = vsel %vm3555, %v3539, %v3542
      %v3560 = vsel %vm3558, %v3548, 2102212464
      %v3561 = vsel %vm3557, %v3545, %v3560
      %v3562 = vsel %vm3556, %v3559, %v3561
      %v3563 = vsel %vm3555, %v3542, %v3545
      %v3564 = vsel %vm3558, %v3551, 920167782
      %v3565 = vsel %vm3557, %v3548, %v3564
      %v3566 = vsel %vm3556, %v3563, %v3565
      %v3567 = vsel %vm3555, %v3545, %v3548
      %v3568 = vsel %vm3558, %v3554, 1326507024
      %v3569 = vsel %vm3557, %v3551, %v3568
      %v3570 = vsel %vm3556, %v3567, %v3569
      %v3571 = vshll.u32 %v3531, 8
      %v3572 = vmul.u32.u64.compose %v3571, %v3570
      %v3573 = vextract.low.u32 %v3572
      %v3574 = vextract.high.u32 %v3572
      %v3575 = vmul.u32.u64.compose %v3571, %v3566
      %v3576 = vextract.low.u32 %v3575
      %v3577 = vextract.high.u32 %v3575
      %v3578 = vmul.u32 %v3571, %v3562
      %v3579 = vadd.s32 %v3574, %v3576
      %vm3580 = vc.u32 %v3574, %v3576
      %v3581 = vadd.s32 %v3577, 1
      %v3582 = vsel %vm3580, %v3581, %v3577
      %v3583 = vadd.s32 %v3578, %v3582
      %v3584 = vadd.s32 %v3583, 536870912
      %v3585 = vshrl.u32 %v3584, 30
      %v3586 = vshll.u32 %v3585, 30
      %v3587 = vsub.s32 %v3583, %v3586
      %vm3588 = vcmp.lt.s32.totalorder %v3587, 0
      %v3589 = vsub.s32 0, %v3587
      %v3590 = vsel %vm3588, %v3589, %v3587
      %v3591 = vclz %v3590
      %v3592 = vsub.s32 %v3591, 2
      %vm3593 = vcmp.gt.s32.totalorder 0, %v3592
      %v3594 = vsel %vm3593, 0, %v3592
      %v3595 = vsub.s32 32, %v3594
      %v3596 = vshll.u32 %v3587, %v3594
      %v3597 = vshrl.u32 %v3579, %v3595
      %v3598 = vor.u32 %v3596, %v3597
      %v3599 = vsub.s32 4294967266, %v3594
      %v3600 = vadd.s32 %v3599, 127
      %v3601 = vshll.u32 %v3600, 23
      %v3602 = vor.u32 4788187, %v3601
      %v3603 = vand.u32 2147483647, %v3602
      %v3605 = vcvt.s32.f32 %v3598
      %v3606 = vmul.f32 %v3605, %v3603
      %v3607 = vxor.u32 %v3606, 2147483648
      %v3608 = vsel %vm3525, %v3607, %v3606
      %v3609 = vsub.s32 4, %v3585
      %v3610 = vsel %vm3525, %v3609, %v3585
      %v3611 = vsel %vm3524, %v1089, %v3608
      %v3612 = vsel %vm3524, 0, %v3610
      %v3613 = vcosq.f32.pop %v3611
      %v3614 = vsinq.f32.pop %v3611
      %vm3615 = vweird.f32 %v1089
      %v3616 = vadd.s32 %v3612, 3
      %v3617 = vand.u32 %v3616, 3
      %vm3618 = vcmp.lt.s32.totalorder %v3617, 2
      %vm3619 = vcmp.eq.s32.totalorder %v3617, 0
      %v3620 = vxor.u32 %v3614, 2147483648
      %v3621 = vsel %vm3619, %v3613, %v3620
      %vm3622 = vcmp.eq.s32.totalorder %v3617, 2
      %v3623 = vxor.u32 %v3613, 2147483648
      %v3624 = vsel %vm3622, %v3623, %v3614
      %v3625 = vsel %vm3618, %v3621, %v3624
      %v3626 = vsel %vm3615, nan, %v3625
      %v3627 = vpack.c.bf16 %v2066, %v1234
      %v3628 = vpack.c.bf16 %v2170, %v1338
      %v3629 = vpack.c.bf16 %v2274, %v1442
      %v3630 = vpack.c.bf16 %v2378, %v1546
      %v3631 = vpack.c.bf16 %v2482, %v1650
      %v3632 = vpack.c.bf16 %v2586, %v1754
      %v3633 = vpack.c.bf16 %v2690, %v1858
      %v3634 = vpack.c.bf16 %v2794, %v1962
      %v3635 = vpack.c.bf16 %v2898, %v2898
      %v3636 = vpack.c.bf16 %v3002, %v3002
      %v3637 = vpack.c.bf16 %v3106, %v3106
      %v3638 = vpack.c.bf16 %v3210, %v3210
      %v3639 = vpack.c.bf16 %v3314, %v3314
      %v3640 = vpack.c.bf16 %v3418, %v3418
      %v3641 = vpack.c.bf16 %v3522, %v3522
      %v3642 = vpack.c.bf16 %v3626, %v3626
      %v3647 = vunpack.c.l.b16 %v1127
      %v3648 = vunpack.c.l.b16 %v1128
      %v3649 = vunpack.c.l.b16 %v1129
      %v3650 = vunpack.c.l.b16 %v1130
      %v3651 = vpack.c.b16 %v3648, %v3647
      %v3652 = vpack.c.b16 %v3650, %v3649
      %vm3653 = vcmask 195584
      %v3655 = vsel %vm3653, %v3651, 0
      %v3658 = vsel %vm3653, %v3652, 0
      %vm3660 = vcmask 1043456
      %v3662 = vsel %vm3660, %v3635, 0
      %v3665 = vsel %vm3660, %v3636, 0
      %v3668 = vsel %vm3660, %v3637, 0
      %v3671 = vsel %vm3660, %v3638, 0
      %v3674 = vsel %vm3660, %v3639, 0
      %v3677 = vsel %vm3660, %v3640, 0
      %v3680 = vsel %vm3660, %v3641, 0
      %v3683 = vsel %vm3660, %v3642, 0
      %3685 = vmatprep.subr.bf16.mxu0 %v3628
      %3686 = vmatpush1.bf16.msra.mxu0 %v3627
      %3687 = vmatprep.subr.bf16.mxu0 %v3665
      %3688 = vmatpush1.bf16.msra.mxu0 %v3662
      %3689 = vmatprep.subr.bf16.mxu0 0
      %3690 = vmatpush1.bf16.msra.mxu0 0
      %3691 = vmatprep.subr.bf16.mxu0 0
      %3692 = vmatpush1.bf16.msra.mxu0 0
      %3693 = vmatprep.subr.bf16.mxu0 0
      %3694 = vmatpush1.bf16.msra.mxu0 0
      %3695 = vmatprep.subr.bf16.mxu0 0
      %3696 = vmatpush1.bf16.msra.mxu0 0
      %3697 = vmatprep.subr.bf16.mxu0 0
      %3698 = vmatpush1.bf16.msra.mxu0 0
      %3699 = vmatprep.subr.bf16.mxu0 0
      %3700 = vmatpush1.bf16.msra.mxu0 0
      %3701 = vmatprep.subr.bf16.mxu0 0
      %3702 = vmatpush1.bf16.msra.mxu0 0
      %3703 = vmatprep.subr.bf16.mxu0 0
      %3704 = vmatpush1.bf16.msra.mxu0 0
      %3705 = vmatprep.subr.bf16.mxu0 0
      %3706 = vmatpush1.bf16.msra.mxu0 0
      %3707 = vmatprep.subr.bf16.mxu0 0
      %3708 = vmatpush1.bf16.msra.mxu0 0
      %3709 = vmatprep.subr.bf16.mxu0 0
      %3710 = vmatpush1.bf16.msra.mxu0 0
      %3711 = vmatprep.subr.bf16.mxu0 0
      %3712 = vmatpush1.bf16.msra.mxu0 0
      %3713 = vmatprep.subr.bf16.mxu0 0
      %3714 = vmatpush1.bf16.msra.mxu0 0
      %3715 = vmatprep.subr.bf16.mxu0 0
      %3716 = vmatpush1.bf16.msra.mxu0 0
      %3717 = vmatprep.mubr.bf16.mxu0 0
      %3718 = vmatmul.mubr.bf16.gmra.mrb[0].mxu0 %v3655
      %v3719 = vpop.f32.mrb[0].mxu0
      %v3720 = vadd.f32 0.0, %v3719
      %v3721 = vpop.f32.mrb[0].mxu0
      %v3722 = vadd.f32 0.0, %v3721
      %v3723 = vpop.f32.mrb[0].mxu0
      %v3724 = vadd.f32 0.0, %v3723
      %v3725 = vpop.f32.mrb[0].mxu0
      %v3726 = vadd.f32 0.0, %v3725
      %3727 = vmatprep.mubr.bf16.mxu0 0
      %3728 = vmatmul.mubr.bf16.gmra.mrb[0].mxu0 %v3658
      %v3729 = vpop.f32.mrb[0].mxu0
      %v3730 = vadd.f32 0.0, %v3729
      %v3731 = vpop.f32.mrb[0].mxu0
      %v3732 = vadd.f32 0.0, %v3731
      %v3733 = vpop.f32.mrb[0].mxu0
      %v3734 = vadd.f32 0.0, %v3733
      %v3735 = vpop.f32.mrb[0].mxu0
      %v3736 = vadd.f32 0.0, %v3735
      %3737 = vdwg.mxu0
      %3738 = vmatprep.subr.bf16.mxu0 %v3630
      %3739 = vmatpush1.bf16.msra.mxu0 %v3629
      %3740 = vmatprep.subr.bf16.mxu0 %v3671
      %3741 = vmatpush1.bf16.msra.mxu0 %v3668
      %3742 = vmatprep.subr.bf16.mxu0 0
      %3743 = vmatpush1.bf16.msra.mxu0 0
      %3744 = vmatprep.subr.bf16.mxu0 0
      %3745 = vmatpush1.bf16.msra.mxu0 0
      %3746 = vmatprep.subr.bf16.mxu0 0
      %3747 = vmatpush1.bf16.msra.mxu0 0
      %3748 = vmatprep.subr.bf16.mxu0 0
      %3749 = vmatpush1.bf16.msra.mxu0 0
      %3750 = vmatprep.subr.bf16.mxu0 0
      %3751 = vmatpush1.bf16.msra.mxu0 0
      %3752 = vmatprep.subr.bf16.mxu0 0
      %3753 = vmatpush1.bf16.msra.mxu0 0
      %3754 = vmatprep.subr.bf16.mxu0 0
      %3755 = vmatpush1.bf16.msra.mxu0 0
      %3756 = vmatprep.subr.bf16.mxu0 0
      %3757 = vmatpush1.bf16.msra.mxu0 0
      %3758 = vmatprep.subr.bf16.mxu0 0
      %3759 = vmatpush1.bf16.msra.mxu0 0
      %3760 = vmatprep.subr.bf16.mxu0 0
      %3761 = vmatpush1.bf16.msra.mxu0 0
      %3762 = vmatprep.subr.bf16.mxu0 0
      %3763 = vmatpush1.bf16.msra.mxu0 0
      %3764 = vmatprep.subr.bf16.mxu0 0
      %3765 = vmatpush1.bf16.msra.mxu0 0
      %3766 = vmatprep.subr.bf16.mxu0 0
      %3767 = vmatpush1.bf16.msra.mxu0 0
      %3768 = vmatprep.subr.bf16.mxu0 0
      %3769 = vmatpush1.bf16.msra.mxu0 0
      %3770 = vmatprep.mubr.bf16.mxu0 0
      %3771 = vmatmul.mubr.bf16.gmra.mrb[0].mxu0 %v3655
      %v3772 = vpop.f32.mrb[0].mxu0
      %v3773 = vadd.f32 0.0, %v3772
      %v3774 = vpop.f32.mrb[0].mxu0
      %v3775 = vadd.f32 0.0, %v3774
      %v3776 = vpop.f32.mrb[0].mxu0
      %v3777 = vadd.f32 0.0, %v3776
      %v3778 = vpop.f32.mrb[0].mxu0
      %v3779 = vadd.f32 0.0, %v3778
      %3780 = vmatprep.mubr.bf16.mxu0 0
      %3781 = vmatmul.mubr.bf16.gmra.mrb[0].mxu0 %v3658
      %v3782 = vpop.f32.mrb[0].mxu0
      %v3783 = vadd.f32 0.0, %v3782
      %v3784 = vpop.f32.mrb[0].mxu0
      %v3785 = vadd.f32 0.0, %v3784
      %v3786 = vpop.f32.mrb[0].mxu0
      %v3787 = vadd.f32 0.0, %v3786
      %v3788 = vpop.f32.mrb[0].mxu0
      %v3789 = vadd.f32 0.0, %v3788
      %3790 = vdwg.mxu0
      %3791 = vmatprep.subr.bf16.mxu0 %v3632
      %3792 = vmatpush1.bf16.msra.mxu0 %v3631
      %3793 = vmatprep.subr.bf16.mxu0 %v3677
      %3794 = vmatpush1.bf16.msra.mxu0 %v3674
      %3795 = vmatprep.subr.bf16.mxu0 0
      %3796 = vmatpush1.bf16.msra.mxu0 0
      %3797 = vmatprep.subr.bf16.mxu0 0
      %3798 = vmatpush1.bf16.msra.mxu0 0
      %3799 = vmatprep.subr.bf16.mxu0 0
      %3800 = vmatpush1.bf16.msra.mxu0 0
      %3801 = vmatprep.subr.bf16.mxu0 0
      %3802 = vmatpush1.bf16.msra.mxu0 0
      %3803 = vmatprep.subr.bf16.mxu0 0
      %3804 = vmatpush1.bf16.msra.mxu0 0
      %3805 = vmatprep.subr.bf16.mxu0 0
      %3806 = vmatpush1.bf16.msra.mxu0 0
      %3807 = vmatprep.subr.bf16.mxu0 0
      %3808 = vmatpush1.bf16.msra.mxu0 0
      %3809 = vmatprep.subr.bf16.mxu0 0
      %3810 = vmatpush1.bf16.msra.mxu0 0
      %3811 = vmatprep.subr.bf16.mxu0 0
      %3812 = vmatpush1.bf16.msra.mxu0 0
      %3813 = vmatprep.subr.bf16.mxu0 0
      %3814 = vmatpush1.bf16.msra.mxu0 0
      %3815 = vmatprep.subr.bf16.mxu0 0
      %3816 = vmatpush1.bf16.msra.mxu0 0
      %3817 = vmatprep.subr.bf16.mxu0 0
      %3818 = vmatpush1.bf16.msra.mxu0 0
      %3819 = vmatprep.subr.bf16.mxu0 0
      %3820 = vmatpush1.bf16.msra.mxu0 0
      %3821 = vmatprep.subr.bf16.mxu0 0
      %3822 = vmatpush1.bf16.msra.mxu0 0
      %3823 = vmatprep.mubr.bf16.mxu0 0
      %3824 = vmatmul.mubr.bf16.gmra.mrb[0].mxu0 %v3655
      %v3825 = vpop.f32.mrb[0].mxu0
      %v3826 = vadd.f32 0.0, %v3825
      %v3827 = vpop.f32.mrb[0].mxu0
      %v3828 = vadd.f32 0.0, %v3827
      %v3829 = vpop.f32.mrb[0].mxu0
      %v3830 = vadd.f32 0.0, %v3829
      %v3831 = vpop.f32.mrb[0].mxu0
      %v3832 = vadd.f32 0.0, %v3831
      %3833 = vmatprep.mubr.bf16.mxu0 0
      %3834 = vmatmul.mubr.bf16.gmra.mrb[0].mxu0 %v3658
      %v3835 = vpop.f32.mrb[0].mxu0
      %v3836 = vadd.f32 0.0, %v3835
      %v3837 = vpop.f32.mrb[0].mxu0
      %v3838 = vadd.f32 0.0, %v3837
      %v3839 = vpop.f32.mrb[0].mxu0
      %v3840 = vadd.f32 0.0, %v3839
      %v3841 = vpop.f32.mrb[0].mxu0
      %v3842 = vadd.f32 0.0, %v3841
      %3843 = vdwg.mxu0
      %3844 = vmatprep.subr.bf16.mxu0 %v3634
      %3845 = vmatpush1.bf16.msra.mxu0 %v3633
      %3846 = vmatprep.subr.bf16.mxu0 %v3683
      %3847 = vmatpush1.bf16.msra.mxu0 %v3680
      %3848 = vmatprep.subr.bf16.mxu0 0
      %3849 = vmatpush1.bf16.msra.mxu0 0
      %3850 = vmatprep.subr.bf16.mxu0 0
      %3851 = vmatpush1.bf16.msra.mxu0 0
      %3852 = vmatprep.subr.bf16.mxu0 0
      %3853 = vmatpush1.bf16.msra.mxu0 0
      %3854 = vmatprep.subr.bf16.mxu0 0
      %3855 = vmatpush1.bf16.msra.mxu0 0
      %3856 = vmatprep.subr.bf16.mxu0 0
      %3857 = vmatpush1.bf16.msra.mxu0 0
      %3858 = vmatprep.subr.bf16.mxu0 0
      %3859 = vmatpush1.bf16.msra.mxu0 0
      %3860 = vmatprep.subr.bf16.mxu0 0
      %3861 = vmatpush1.bf16.msra.mxu0 0
      %3862 = vmatprep.subr.bf16.mxu0 0
      %3863 = vmatpush1.bf16.msra.mxu0 0
      %3864 = vmatprep.subr.bf16.mxu0 0
      %3865 = vmatpush1.bf16.msra.mxu0 0
      %3866 = vmatprep.subr.bf16.mxu0 0
      %3867 = vmatpush1.bf16.msra.mxu0 0
      %3868 = vmatprep.subr.bf16.mxu0 0
      %3869 = vmatpush1.bf16.msra.mxu0 0
      %3870 = vmatprep.subr.bf16.mxu0 0
      %3871 = vmatpush1.bf16.msra.mxu0 0
      %3872 = vmatprep.subr.bf16.mxu0 0
      %3873 = vmatpush1.bf16.msra.mxu0 0
      %3874 = vmatprep.subr.bf16.mxu0 0
      %3875 = vmatpush1.bf16.msra.mxu0 0
      %3876 = vmatprep.mubr.bf16.mxu0 0
      %3877 = vmatmul.mubr.bf16.gmra.mrb[0].mxu0 %v3655
      %v3878 = vpop.f32.mrb[0].mxu0
      %v3879 = vadd.f32 0.0, %v3878
      %v3880 = vpop.f32.mrb[0].mxu0
      %v3881 = vadd.f32 0.0, %v3880
      %v3882 = vpop.f32.mrb[0].mxu0
      %v3883 = vadd.f32 0.0, %v3882
      %v3884 = vpop.f32.mrb[0].mxu0
      %v3885 = vadd.f32 0.0, %v3884
      %3886 = vmatprep.mubr.bf16.mxu0 0
      %3887 = vmatmul.mubr.bf16.gmra.mrb[0].mxu0 %v3658
      %v3888 = vpop.f32.mrb[0].mxu0
      %v3889 = vadd.f32 0.0, %v3888
      %v3890 = vpop.f32.mrb[0].mxu0
      %v3891 = vadd.f32 0.0, %v3890
      %v3892 = vpop.f32.mrb[0].mxu0
      %v3893 = vadd.f32 0.0, %v3892
      %v3894 = vpop.f32.mrb[0].mxu0
      %v3895 = vadd.f32 0.0, %v3894
      %3896 = vdwg.mxu0
      %v3897 = vadd.f32 %v622, %v3720
      %v3898 = vadd.f32 %v624, %v3722
      %v3899 = vadd.f32 %v765, %v3773
      %v3900 = vadd.f32 %v767, %v3775
      %v3901 = vadd.f32 %v908, %v3826
      %v3902 = vadd.f32 %v910, %v3828
      %v3903 = vadd.f32 %v1051, %v3879
      %v3904 = vadd.f32 %v1053, %v3881
      %v3905 = vadd.f32 %v628, %v3724
      %v3906 = vadd.f32 %v630, %v3726
      %v3907 = vadd.f32 %v771, %v3777
      %v3908 = vadd.f32 %v773, %v3779
      %v3909 = vadd.f32 %v914, %v3830
      %v3910 = vadd.f32 %v916, %v3832
      %v3911 = vadd.f32 %v1057, %v3883
      %v3912 = vadd.f32 %v1059, %v3885
      %v3913 = vadd.f32 %v634, %v3730
      %v3914 = vadd.f32 %v636, %v3732
      %v3915 = vadd.f32 %v777, %v3783
      %v3916 = vadd.f32 %v779, %v3785
      %v3917 = vadd.f32 %v920, %v3836
      %v3918 = vadd.f32 %v922, %v3838
      %v3919 = vadd.f32 %v1063, %v3889
      %v3920 = vadd.f32 %v1065, %v3891
      %v3921 = vadd.f32 %v640, %v3734
      %v3922 = vadd.f32 %v642, %v3736
      %v3923 = vadd.f32 %v783, %v3787
      %v3924 = vadd.f32 %v785, %v3789
      %v3925 = vadd.f32 %v926, %v3840
      %v3926 = vadd.f32 %v928, %v3842
      %v3927 = vadd.f32 %v1069, %v3893
      %v3928 = vadd.f32 %v1071, %v3895
      %v3929 = vmax.f32 %v3897, 0.0
      %v3930 = vmax.f32 %v3898, 0.0
      %v3931 = vmax.f32 %v3899, 0.0
      %v3932 = vmax.f32 %v3900, 0.0
      %v3933 = vmax.f32 %v3901, 0.0
      %v3934 = vmax.f32 %v3902, 0.0
      %v3935 = vmax.f32 %v3903, 0.0
      %v3936 = vmax.f32 %v3904, 0.0
      %v3937 = vmax.f32 %v3905, 0.0
      %v3938 = vmax.f32 %v3906, 0.0
      %v3939 = vmax.f32 %v3907, 0.0
      %v3940 = vmax.f32 %v3908, 0.0
      %v3941 = vmax.f32 %v3909, 0.0
      %v3942 = vmax.f32 %v3910, 0.0
      %v3943 = vmax.f32 %v3911, 0.0
      %v3944 = vmax.f32 %v3912, 0.0
      %v3945 = vmax.f32 %v3913, 0.0
      %v3946 = vmax.f32 %v3914, 0.0
      %v3947 = vmax.f32 %v3915, 0.0
      %v3948 = vmax.f32 %v3916, 0.0
      %v3949 = vmax.f32 %v3917, 0.0
      %v3950 = vmax.f32 %v3918, 0.0
      %v3951 = vmax.f32 %v3919, 0.0
      %v3952 = vmax.f32 %v3920, 0.0
      %v3953 = vmax.f32 %v3921, 0.0
      %v3954 = vmax.f32 %v3922, 0.0
      %v3955 = vmax.f32 %v3923, 0.0
      %v3956 = vmax.f32 %v3924, 0.0
      %v3957 = vmax.f32 %v3925, 0.0
      %v3958 = vmax.f32 %v3926, 0.0
      %v3959 = vmax.f32 %v3927, 0.0
      %v3960 = vmax.f32 %v3928, 0.0
      %v3961 = vld [vmem:[%s4] sm:$0xf]
      %v3962 = vld [vmem:[%s4 + $0x4] sm:$0xf]
      %v3963 = vld [vmem:[%s4 + $0x8] sm:$0xf]
      %v3964 = vld [vmem:[%s4 + $0xc] sm:$0xf]
      %v3965 = vpack.c.bf16 %v3937, %v3929
      %v3966 = vpack.c.bf16 %v3938, %v3930
      %v3967 = vpack.c.bf16 %v3939, %v3931
      %v3968 = vpack.c.bf16 %v3940, %v3932
      %v3969 = vpack.c.bf16 %v3941, %v3933
      %v3970 = vpack.c.bf16 %v3942, %v3934
      %v3971 = vpack.c.bf16 %v3943, %v3935
      %v3972 = vpack.c.bf16 %v3944, %v3936
      %v3973 = vpack.c.bf16 %v3953, %v3945
      %v3974 = vpack.c.bf16 %v3954, %v3946
      %v3975 = vpack.c.bf16 %v3955, %v3947
      %v3976 = vpack.c.bf16 %v3956, %v3948
      %v3977 = vpack.c.bf16 %v3957, %v3949
      %v3978 = vpack.c.bf16 %v3958, %v3950
      %v3979 = vpack.c.bf16 %v3959, %v3951
      %v3980 = vpack.c.bf16 %v3960, %v3952
      %v3981 = vld [vmem:[%s5] sm:$0xff]
      %v3982 = vld [vmem:[%s5 + $0x8] sm:$0xff]
      %v3983 = vld [vmem:[%s5 + $0x10] sm:$0xff]
      %v3984 = vld [vmem:[%s5 + $0x18] sm:$0xff]
      %3986 = vset.pattern.permute.xlu0 0
      %3987 = vperm.xlu0 %3986, %v3981
      %v3988 = vpop.permute.xlu0 %3987
      %3991 = vset.pattern.permute.xlu0 0
      %3992 = vperm.xlu0 %3991, %v3982
      %v3993 = vpop.permute.xlu0 %3992
      %3996 = vset.pattern.permute.xlu0 0
      %3997 = vperm.xlu0 %3996, %v3983
      %v3998 = vpop.permute.xlu0 %3997
      %4001 = vset.pattern.permute.xlu0 0
      %4002 = vperm.xlu0 %4001, %v3984
      %v4003 = vpop.permute.xlu0 %4002
      %v4009 = vunpack.c.l.b16 %v3961
      %v4010 = vunpack.c.l.b16 %v3962
      %v4011 = vunpack.c.l.b16 %v3963
      %v4012 = vunpack.c.l.b16 %v3964
      %v4013 = vpack.c.b16 %v4010, %v4009
      %v4014 = vpack.c.b16 %v4012, %v4011
      %vm4015 = vcmask 261120
      %v4017 = vsel %vm4015, %v4013, 0
      %v4020 = vsel %vm4015, %v4014, 0
      %4022 = vmatprep.subr.bf16.mxu0 %v3966
      %4023 = vmatpush1.bf16.msra.mxu0 %v3965
      %4024 = vmatprep.subr.bf16.mxu0 %v3974
      %4025 = vmatpush1.bf16.msra.mxu0 %v3973
      %4026 = vmatprep.subr.bf16.mxu0 0
      %4027 = vmatpush1.bf16.msra.mxu0 0
      %4028 = vmatprep.subr.bf16.mxu0 0
      %4029 = vmatpush1.bf16.msra.mxu0 0
      %4030 = vmatprep.subr.bf16.mxu0 0
      %4031 = vmatpush1.bf16.msra.mxu0 0
      %4032 = vmatprep.subr.bf16.mxu0 0
      %4033 = vmatpush1.bf16.msra.mxu0 0
      %4034 = vmatprep.subr.bf16.mxu0 0
      %4035 = vmatpush1.bf16.msra.mxu0 0
      %4036 = vmatprep.subr.bf16.mxu0 0
      %4037 = vmatpush1.bf16.msra.mxu0 0
      %4038 = vmatprep.subr.bf16.mxu0 0
      %4039 = vmatpush1.bf16.msra.mxu0 0
      %4040 = vmatprep.subr.bf16.mxu0 0
      %4041 = vmatpush1.bf16.msra.mxu0 0
      %4042 = vmatprep.subr.bf16.mxu0 0
      %4043 = vmatpush1.bf16.msra.mxu0 0
      %4044 = vmatprep.subr.bf16.mxu0 0
      %4045 = vmatpush1.bf16.msra.mxu0 0
      %4046 = vmatprep.subr.bf16.mxu0 0
      %4047 = vmatpush1.bf16.msra.mxu0 0
      %4048 = vmatprep.subr.bf16.mxu0 0
      %4049 = vmatpush1.bf16.msra.mxu0 0
      %4050 = vmatprep.subr.bf16.mxu0 0
      %4051 = vmatpush1.bf16.msra.mxu0 0
      %4052 = vmatprep.subr.bf16.mxu0 0
      %4053 = vmatpush1.bf16.msra.mxu0 0
      %4054 = vmatprep.mubr.bf16.mxu0 0
      %4055 = vmatmul.mubr.bf16.gmra.mrb[0].mxu0 %v4017
      %v4056 = vpop.f32.mrb[0].mxu0
      %v4057 = vadd.f32 %v3988, %v4056
      %v4058 = vpop.f32.mrb[0].mxu0
      %v4059 = vadd.f32 %v3988, %v4058
      %v4060 = vpop.f32.mrb[0].mxu0
      %v4061 = vadd.f32 %v3993, %v4060
      %v4062 = vpop.f32.mrb[0].mxu0
      %v4063 = vadd.f32 %v3993, %v4062
      %4064 = vmatprep.mubr.bf16.mxu0 0
      %4065 = vmatmul.mubr.bf16.gmra.mrb[0].mxu0 %v4020
      %v4066 = vpop.f32.mrb[0].mxu0
      %v4067 = vadd.f32 %v3998, %v4066
      %v4068 = vpop.f32.mrb[0].mxu0
      %v4069 = vadd.f32 %v3998, %v4068
      %v4070 = vpop.f32.mrb[0].mxu0
      %v4071 = vadd.f32 %v4003, %v4070
      %v4072 = vpop.f32.mrb[0].mxu0
      %v4073 = vadd.f32 %v4003, %v4072
      %4074 = vdwg.mxu0
      %4075 = vmatprep.subr.bf16.mxu0 %v3968
      %4076 = vmatpush1.bf16.msra.mxu0 %v3967
      %4077 = vmatprep.subr.bf16.mxu0 %v3976
      %4078 = vmatpush1.bf16.msra.mxu0 %v3975
      %4079 = vmatprep.subr.bf16.mxu0 0
      %4080 = vmatpush1.bf16.msra.mxu0 0
      %4081 = vmatprep.subr.bf16.mxu0 0
      %4082 = vmatpush1.bf16.msra.mxu0 0
      %4083 = vmatprep.subr.bf16.mxu0 0
      %4084 = vmatpush1.bf16.msra.mxu0 0
      %4085 = vmatprep.subr.bf16.mxu0 0
      %4086 = vmatpush1.bf16.msra.mxu0 0
      %4087 = vmatprep.subr.bf16.mxu0 0
      %4088 = vmatpush1.bf16.msra.mxu0 0
      %4089 = vmatprep.subr.bf16.mxu0 0
      %4090 = vmatpush1.bf16.msra.mxu0 0
      %4091 = vmatprep.subr.bf16.mxu0 0
      %4092 = vmatpush1.bf16.msra.mxu0 0
      %4093 = vmatprep.subr.bf16.mxu0 0
      %4094 = vmatpush1.bf16.msra.mxu0 0
      %4095 = vmatprep.subr.bf16.mxu0 0
      %4096 = vmatpush1.bf16.msra.mxu0 0
      %4097 = vmatprep.subr.bf16.mxu0 0
      %4098 = vmatpush1.bf16.msra.mxu0 0
      %4099 = vmatprep.subr.bf16.mxu0 0
      %4100 = vmatpush1.bf16.msra.mxu0 0
      %4101 = vmatprep.subr.bf16.mxu0 0
      %4102 = vmatpush1.bf16.msra.mxu0 0
      %4103 = vmatprep.subr.bf16.mxu0 0
      %4104 = vmatpush1.bf16.msra.mxu0 0
      %4105 = vmatprep.subr.bf16.mxu0 0
      %4106 = vmatpush1.bf16.msra.mxu0 0
      %4107 = vmatprep.mubr.bf16.mxu0 0
      %4108 = vmatmul.mubr.bf16.gmra.mrb[0].mxu0 %v4017
      %v4109 = vpop.f32.mrb[0].mxu0
      %v4110 = vadd.f32 %v3988, %v4109
      %v4111 = vpop.f32.mrb[0].mxu0
      %v4112 = vadd.f32 %v3988, %v4111
      %v4113 = vpop.f32.mrb[0].mxu0
      %v4114 = vadd.f32 %v3993, %v4113
      %v4115 = vpop.f32.mrb[0].mxu0
      %v4116 = vadd.f32 %v3993, %v4115
      %4117 = vmatprep.mubr.bf16.mxu0 0
      %4118 = vmatmul.mubr.bf16.gmra.mrb[0].mxu0 %v4020
      %v4119 = vpop.f32.mrb[0].mxu0
      %v4120 = vadd.f32 %v3998, %v4119
      %v4121 = vpop.f32.mrb[0].mxu0
      %v4122 = vadd.f32 %v3998, %v4121
      %v4123 = vpop.f32.mrb[0].mxu0
      %v4124 = vadd.f32 %v4003, %v4123
      %v4125 = vpop.f32.mrb[0].mxu0
      %v4126 = vadd.f32 %v4003, %v4125
      %4127 = vdwg.mxu0
      %4128 = vmatprep.subr.bf16.mxu0 %v3970
      %4129 = vmatpush1.bf16.msra.mxu0 %v3969
      %4130 = vmatprep.subr.bf16.mxu0 %v3978
      %4131 = vmatpush1.bf16.msra.mxu0 %v3977
      %4132 = vmatprep.subr.bf16.mxu0 0
      %4133 = vmatpush1.bf16.msra.mxu0 0
      %4134 = vmatprep.subr.bf16.mxu0 0
      %4135 = vmatpush1.bf16.msra.mxu0 0
      %4136 = vmatprep.subr.bf16.mxu0 0
      %4137 = vmatpush1.bf16.msra.mxu0 0
      %4138 = vmatprep.subr.bf16.mxu0 0
      %4139 = vmatpush1.bf16.msra.mxu0 0
      %4140 = vmatprep.subr.bf16.mxu0 0
      %4141 = vmatpush1.bf16.msra.mxu0 0
      %4142 = vmatprep.subr.bf16.mxu0 0
      %4143 = vmatpush1.bf16.msra.mxu0 0
      %4144 = vmatprep.subr.bf16.mxu0 0
      %4145 = vmatpush1.bf16.msra.mxu0 0
      %4146 = vmatprep.subr.bf16.mxu0 0
      %4147 = vmatpush1.bf16.msra.mxu0 0
      %4148 = vmatprep.subr.bf16.mxu0 0
      %4149 = vmatpush1.bf16.msra.mxu0 0
      %4150 = vmatprep.subr.bf16.mxu0 0
      %4151 = vmatpush1.bf16.msra.mxu0 0
      %4152 = vmatprep.subr.bf16.mxu0 0
      %4153 = vmatpush1.bf16.msra.mxu0 0
      %4154 = vmatprep.subr.bf16.mxu0 0
      %4155 = vmatpush1.bf16.msra.mxu0 0
      %4156 = vmatprep.subr.bf16.mxu0 0
      %4157 = vmatpush1.bf16.msra.mxu0 0
      %4158 = vmatprep.subr.bf16.mxu0 0
      %4159 = vmatpush1.bf16.msra.mxu0 0
      %4160 = vmatprep.mubr.bf16.mxu0 0
      %4161 = vmatmul.mubr.bf16.gmra.mrb[0].mxu0 %v4017
      %v4162 = vpop.f32.mrb[0].mxu0
      %v4163 = vadd.f32 %v3988, %v4162
      %v4164 = vpop.f32.mrb[0].mxu0
      %v4165 = vadd.f32 %v3988, %v4164
      %v4166 = vpop.f32.mrb[0].mxu0
      %v4167 = vadd.f32 %v3993, %v4166
      %v4168 = vpop.f32.mrb[0].mxu0
      %v4169 = vadd.f32 %v3993, %v4168
      %4170 = vmatprep.mubr.bf16.mxu0 0
      %4171 = vmatmul.mubr.bf16.gmra.mrb[0].mxu0 %v4020
      %v4172 = vpop.f32.mrb[0].mxu0
      %v4173 = vadd.f32 %v3998, %v4172
      %v4174 = vpop.f32.mrb[0].mxu0
      %v4175 = vadd.f32 %v3998, %v4174
      %v4176 = vpop.f32.mrb[0].mxu0
      %v4177 = vadd.f32 %v4003, %v4176
      %v4178 = vpop.f32.mrb[0].mxu0
      %v4179 = vadd.f32 %v4003, %v4178
      %4180 = vdwg.mxu0
      %4181 = vmatprep.subr.bf16.mxu0 %v3972
      %4182 = vmatpush1.bf16.msra.mxu0 %v3971
      %4183 = vmatprep.subr.bf16.mxu0 %v3980
      %4184 = vmatpush1.bf16.msra.mxu0 %v3979
      %4185 = vmatprep.subr.bf16.mxu0 0
      %4186 = vmatpush1.bf16.msra.mxu0 0
      %4187 = vmatprep.subr.bf16.mxu0 0
      %4188 = vmatpush1.bf16.msra.mxu0 0
      %4189 = vmatprep.subr.bf16.mxu0 0
      %4190 = vmatpush1.bf16.msra.mxu0 0
      %4191 = vmatprep.subr.bf16.mxu0 0
      %4192 = vmatpush1.bf16.msra.mxu0 0
      %4193 = vmatprep.subr.bf16.mxu0 0
      %4194 = vmatpush1.bf16.msra.mxu0 0
      %4195 = vmatprep.subr.bf16.mxu0 0
      %4196 = vmatpush1.bf16.msra.mxu0 0
      %4197 = vmatprep.subr.bf16.mxu0 0
      %4198 = vmatpush1.bf16.msra.mxu0 0
      %4199 = vmatprep.subr.bf16.mxu0 0
      %4200 = vmatpush1.bf16.msra.mxu0 0
      %4201 = vmatprep.subr.bf16.mxu0 0
      %4202 = vmatpush1.bf16.msra.mxu0 0
      %4203 = vmatprep.subr.bf16.mxu0 0
      %4204 = vmatpush1.bf16.msra.mxu0 0
      %4205 = vmatprep.subr.bf16.mxu0 0
      %4206 = vmatpush1.bf16.msra.mxu0 0
      %4207 = vmatprep.subr.bf16.mxu0 0
      %4208 = vmatpush1.bf16.msra.mxu0 0
      %4209 = vmatprep.subr.bf16.mxu0 0
      %4210 = vmatpush1.bf16.msra.mxu0 0
      %4211 = vmatprep.subr.bf16.mxu0 0
      %4212 = vmatpush1.bf16.msra.mxu0 0
      %4213 = vmatprep.mubr.bf16.mxu0 0
      %4214 = vmatmul.mubr.bf16.gmra.mrb[0].mxu0 %v4017
      %v4215 = vpop.f32.mrb[0].mxu0
      %v4216 = vadd.f32 %v3988, %v4215
      %v4217 = vpop.f32.mrb[0].mxu0
      %v4218 = vadd.f32 %v3988, %v4217
      %v4219 = vpop.f32.mrb[0].mxu0
      %v4220 = vadd.f32 %v3993, %v4219
      %v4221 = vpop.f32.mrb[0].mxu0
      %v4222 = vadd.f32 %v3993, %v4221
      %4223 = vmatprep.mubr.bf16.mxu0 0
      %4224 = vmatmul.mubr.bf16.gmra.mrb[0].mxu0 %v4020
      %v4225 = vpop.f32.mrb[0].mxu0
      %v4226 = vadd.f32 %v3998, %v4225
      %v4227 = vpop.f32.mrb[0].mxu0
      %v4228 = vadd.f32 %v3998, %v4227
      %v4229 = vpop.f32.mrb[0].mxu0
      %v4230 = vadd.f32 %v4003, %v4229
      %v4231 = vpop.f32.mrb[0].mxu0
      %v4232 = vadd.f32 %v4003, %v4231
      %4233 = vdwg.mxu0
      %v4234 = vmax.f32 %v4057, 0.0
      %v4235 = vmax.f32 %v4059, 0.0
      %v4236 = vmax.f32 %v4110, 0.0
      %v4237 = vmax.f32 %v4112, 0.0
      %v4238 = vmax.f32 %v4163, 0.0
      %v4239 = vmax.f32 %v4165, 0.0
      %v4240 = vmax.f32 %v4216, 0.0
      %v4241 = vmax.f32 %v4218, 0.0
      %v4242 = vmax.f32 %v4061, 0.0
      %v4243 = vmax.f32 %v4063, 0.0
      %v4244 = vmax.f32 %v4114, 0.0
      %v4245 = vmax.f32 %v4116, 0.0
      %v4246 = vmax.f32 %v4167, 0.0
      %v4247 = vmax.f32 %v4169, 0.0
      %v4248 = vmax.f32 %v4220, 0.0
      %v4249 = vmax.f32 %v4222, 0.0
      %v4250 = vmax.f32 %v4067, 0.0
      %v4251 = vmax.f32 %v4069, 0.0
      %v4252 = vmax.f32 %v4120, 0.0
      %v4253 = vmax.f32 %v4122, 0.0
      %v4254 = vmax.f32 %v4173, 0.0
      %v4255 = vmax.f32 %v4175, 0.0
      %v4256 = vmax.f32 %v4226, 0.0
      %v4257 = vmax.f32 %v4228, 0.0
      %v4258 = vmax.f32 %v4071, 0.0
      %v4259 = vmax.f32 %v4073, 0.0
      %v4260 = vmax.f32 %v4124, 0.0
      %v4261 = vmax.f32 %v4126, 0.0
      %v4262 = vmax.f32 %v4177, 0.0
      %v4263 = vmax.f32 %v4179, 0.0
      %v4264 = vmax.f32 %v4230, 0.0
      %v4265 = vmax.f32 %v4232, 0.0
      %s4266 = scalar_lea.vmem %s4, 16
      %v4267 = vld [vmem:[%s4266] sm:$0xf]
      %v4268 = vld [vmem:[%s4266 + $0x4] sm:$0xf]
      %v4269 = vld [vmem:[%s4266 + $0x8] sm:$0xf]
      %v4270 = vld [vmem:[%s4266 + $0xc] sm:$0xf]
      %v4271 = vpack.c.bf16 %v4242, %v4234
      %v4272 = vpack.c.bf16 %v4243, %v4235
      %v4273 = vpack.c.bf16 %v4244, %v4236
      %v4274 = vpack.c.bf16 %v4245, %v4237
      %v4275 = vpack.c.bf16 %v4246, %v4238
      %v4276 = vpack.c.bf16 %v4247, %v4239
      %v4277 = vpack.c.bf16 %v4248, %v4240
      %v4278 = vpack.c.bf16 %v4249, %v4241
      %v4279 = vpack.c.bf16 %v4258, %v4250
      %v4280 = vpack.c.bf16 %v4259, %v4251
      %v4281 = vpack.c.bf16 %v4260, %v4252
      %v4282 = vpack.c.bf16 %v4261, %v4253
      %v4283 = vpack.c.bf16 %v4262, %v4254
      %v4284 = vpack.c.bf16 %v4263, %v4255
      %v4285 = vpack.c.bf16 %v4264, %v4256
      %v4286 = vpack.c.bf16 %v4265, %v4257
      %s4287 = scalar_lea.vmem %s5, 32
      %v4288 = vld [vmem:[%s4287] sm:$0xff]
      %v4289 = vld [vmem:[%s4287 + $0x8] sm:$0xff]
      %v4290 = vld [vmem:[%s4287 + $0x10] sm:$0xff]
      %v4291 = vld [vmem:[%s4287 + $0x18] sm:$0xff]
      %4293 = vset.pattern.permute.xlu0 0
      %4294 = vperm.xlu0 %4293, %v4288
      %v4295 = vpop.permute.xlu0 %4294
      %4298 = vset.pattern.permute.xlu0 0
      %4299 = vperm.xlu0 %4298, %v4289
      %v4300 = vpop.permute.xlu0 %4299
      %4303 = vset.pattern.permute.xlu0 0
      %4304 = vperm.xlu0 %4303, %v4290
      %v4305 = vpop.permute.xlu0 %4304
      %4308 = vset.pattern.permute.xlu0 0
      %4309 = vperm.xlu0 %4308, %v4291
      %v4310 = vpop.permute.xlu0 %4309
      %v4316 = vunpack.c.l.b16 %v4267
      %v4317 = vunpack.c.l.b16 %v4268
      %v4318 = vunpack.c.l.b16 %v4269
      %v4319 = vunpack.c.l.b16 %v4270
      %v4320 = vpack.c.b16 %v4317, %v4316
      %v4321 = vpack.c.b16 %v4319, %v4318
      %v4323 = vsel %vm4015, %v4320, 0
      %v4326 = vsel %vm4015, %v4321, 0
      %4328 = vmatprep.subr.bf16.mxu0 %v4272
      %4329 = vmatpush1.bf16.msra.mxu0 %v4271
      %4330 = vmatprep.subr.bf16.mxu0 %v4280
      %4331 = vmatpush1.bf16.msra.mxu0 %v4279
      %4332 = vmatprep.subr.bf16.mxu0 0
      %4333 = vmatpush1.bf16.msra.mxu0 0
      %4334 = vmatprep.subr.bf16.mxu0 0
      %4335 = vmatpush1.bf16.msra.mxu0 0
      %4336 = vmatprep.subr.bf16.mxu0 0
      %4337 = vmatpush1.bf16.msra.mxu0 0
      %4338 = vmatprep.subr.bf16.mxu0 0
      %4339 = vmatpush1.bf16.msra.mxu0 0
      %4340 = vmatprep.subr.bf16.mxu0 0
      %4341 = vmatpush1.bf16.msra.mxu0 0
      %4342 = vmatprep.subr.bf16.mxu0 0
      %4343 = vmatpush1.bf16.msra.mxu0 0
      %4344 = vmatprep.subr.bf16.mxu0 0
      %4345 = vmatpush1.bf16.msra.mxu0 0
      %4346 = vmatprep.subr.bf16.mxu0 0
      %4347 = vmatpush1.bf16.msra.mxu0 0
      %4348 = vmatprep.subr.bf16.mxu0 0
      %4349 = vmatpush1.bf16.msra.mxu0 0
      %4350 = vmatprep.subr.bf16.mxu0 0
      %4351 = vmatpush1.bf16.msra.mxu0 0
      %4352 = vmatprep.subr.bf16.mxu0 0
      %4353 = vmatpush1.bf16.msra.mxu0 0
      %4354 = vmatprep.subr.bf16.mxu0 0
      %4355 = vmatpush1.bf16.msra.mxu0 0
      %4356 = vmatprep.subr.bf16.mxu0 0
      %4357 = vmatpush1.bf16.msra.mxu0 0
      %4358 = vmatprep.subr.bf16.mxu0 0
      %4359 = vmatpush1.bf16.msra.mxu0 0
      %4360 = vmatprep.mubr.bf16.mxu0 0
      %4361 = vmatmul.mubr.bf16.gmra.mrb[0].mxu0 %v4323
      %v4362 = vpop.f32.mrb[0].mxu0
      %v4363 = vadd.f32 %v4295, %v4362
      %v4364 = vpop.f32.mrb[0].mxu0
      %v4365 = vadd.f32 %v4295, %v4364
      %v4366 = vpop.f32.mrb[0].mxu0
      %v4367 = vadd.f32 %v4300, %v4366
      %v4368 = vpop.f32.mrb[0].mxu0
      %v4369 = vadd.f32 %v4300, %v4368
      %4370 = vmatprep.mubr.bf16.mxu0 0
      %4371 = vmatmul.mubr.bf16.gmra.mrb[0].mxu0 %v4326
      %v4372 = vpop.f32.mrb[0].mxu0
      %v4373 = vadd.f32 %v4305, %v4372
      %v4374 = vpop.f32.mrb[0].mxu0
      %v4375 = vadd.f32 %v4305, %v4374
      %v4376 = vpop.f32.mrb[0].mxu0
      %v4377 = vadd.f32 %v4310, %v4376
      %v4378 = vpop.f32.mrb[0].mxu0
      %v4379 = vadd.f32 %v4310, %v4378
      %4380 = vdwg.mxu0
      %4381 = vmatprep.subr.bf16.mxu0 %v4274
      %4382 = vmatpush1.bf16.msra.mxu0 %v4273
      %4383 = vmatprep.subr.bf16.mxu0 %v4282
      %4384 = vmatpush1.bf16.msra.mxu0 %v4281
      %4385 = vmatprep.subr.bf16.mxu0 0
      %4386 = vmatpush1.bf16.msra.mxu0 0
      %4387 = vmatprep.subr.bf16.mxu0 0
      %4388 = vmatpush1.bf16.msra.mxu0 0
      %4389 = vmatprep.subr.bf16.mxu0 0
      %4390 = vmatpush1.bf16.msra.mxu0 0
      %4391 = vmatprep.subr.bf16.mxu0 0
      %4392 = vmatpush1.bf16.msra.mxu0 0
      %4393 = vmatprep.subr.bf16.mxu0 0
      %4394 = vmatpush1.bf16.msra.mxu0 0
      %4395 = vmatprep.subr.bf16.mxu0 0
      %4396 = vmatpush1.bf16.msra.mxu0 0
      %4397 = vmatprep.subr.bf16.mxu0 0
      %4398 = vmatpush1.bf16.msra.mxu0 0
      %4399 = vmatprep.subr.bf16.mxu0 0
      %4400 = vmatpush1.bf16.msra.mxu0 0
      %4401 = vmatprep.subr.bf16.mxu0 0
      %4402 = vmatpush1.bf16.msra.mxu0 0
      %4403 = vmatprep.subr.bf16.mxu0 0
      %4404 = vmatpush1.bf16.msra.mxu0 0
      %4405 = vmatprep.subr.bf16.mxu0 0
      %4406 = vmatpush1.bf16.msra.mxu0 0
      %4407 = vmatprep.subr.bf16.mxu0 0
      %4408 = vmatpush1.bf16.msra.mxu0 0
      %4409 = vmatprep.subr.bf16.mxu0 0
      %4410 = vmatpush1.bf16.msra.mxu0 0
      %4411 = vmatprep.subr.bf16.mxu0 0
      %4412 = vmatpush1.bf16.msra.mxu0 0
      %4413 = vmatprep.mubr.bf16.mxu0 0
      %4414 = vmatmul.mubr.bf16.gmra.mrb[0].mxu0 %v4323
      %v4415 = vpop.f32.mrb[0].mxu0
      %v4416 = vadd.f32 %v4295, %v4415
      %v4417 = vpop.f32.mrb[0].mxu0
      %v4418 = vadd.f32 %v4295, %v4417
      %v4419 = vpop.f32.mrb[0].mxu0
      %v4420 = vadd.f32 %v4300, %v4419
      %v4421 = vpop.f32.mrb[0].mxu0
      %v4422 = vadd.f32 %v4300, %v4421
      %4423 = vmatprep.mubr.bf16.mxu0 0
      %4424 = vmatmul.mubr.bf16.gmra.mrb[0].mxu0 %v4326
      %v4425 = vpop.f32.mrb[0].mxu0
      %v4426 = vadd.f32 %v4305, %v4425
      %v4427 = vpop.f32.mrb[0].mxu0
      %v4428 = vadd.f32 %v4305, %v4427
      %v4429 = vpop.f32.mrb[0].mxu0
      %v4430 = vadd.f32 %v4310, %v4429
      %v4431 = vpop.f32.mrb[0].mxu0
      %v4432 = vadd.f32 %v4310, %v4431
      %4433 = vdwg.mxu0
      %4434 = vmatprep.subr.bf16.mxu0 %v4276
      %4435 = vmatpush1.bf16.msra.mxu0 %v4275
      %4436 = vmatprep.subr.bf16.mxu0 %v4284
      %4437 = vmatpush1.bf16.msra.mxu0 %v4283
      %4438 = vmatprep.subr.bf16.mxu0 0
      %4439 = vmatpush1.bf16.msra.mxu0 0
      %4440 = vmatprep.subr.bf16.mxu0 0
      %4441 = vmatpush1.bf16.msra.mxu0 0
      %4442 = vmatprep.subr.bf16.mxu0 0
      %4443 = vmatpush1.bf16.msra.mxu0 0
      %4444 = vmatprep.subr.bf16.mxu0 0
      %4445 = vmatpush1.bf16.msra.mxu0 0
      %4446 = vmatprep.subr.bf16.mxu0 0
      %4447 = vmatpush1.bf16.msra.mxu0 0
      %4448 = vmatprep.subr.bf16.mxu0 0
      %4449 = vmatpush1.bf16.msra.mxu0 0
      %4450 = vmatprep.subr.bf16.mxu0 0
      %4451 = vmatpush1.bf16.msra.mxu0 0
      %4452 = vmatprep.subr.bf16.mxu0 0
      %4453 = vmatpush1.bf16.msra.mxu0 0
      %4454 = vmatprep.subr.bf16.mxu0 0
      %4455 = vmatpush1.bf16.msra.mxu0 0
      %4456 = vmatprep.subr.bf16.mxu0 0
      %4457 = vmatpush1.bf16.msra.mxu0 0
      %4458 = vmatprep.subr.bf16.mxu0 0
      %4459 = vmatpush1.bf16.msra.mxu0 0
      %4460 = vmatprep.subr.bf16.mxu0 0
      %4461 = vmatpush1.bf16.msra.mxu0 0
      %4462 = vmatprep.subr.bf16.mxu0 0
      %4463 = vmatpush1.bf16.msra.mxu0 0
      %4464 = vmatprep.subr.bf16.mxu0 0
      %4465 = vmatpush1.bf16.msra.mxu0 0
      %4466 = vmatprep.mubr.bf16.mxu0 0
      %4467 = vmatmul.mubr.bf16.gmra.mrb[0].mxu0 %v4323
      %v4468 = vpop.f32.mrb[0].mxu0
      %v4469 = vadd.f32 %v4295, %v4468
      %v4470 = vpop.f32.mrb[0].mxu0
      %v4471 = vadd.f32 %v4295, %v4470
      %v4472 = vpop.f32.mrb[0].mxu0
      %v4473 = vadd.f32 %v4300, %v4472
      %v4474 = vpop.f32.mrb[0].mxu0
      %v4475 = vadd.f32 %v4300, %v4474
      %4476 = vmatprep.mubr.bf16.mxu0 0
      %4477 = vmatmul.mubr.bf16.gmra.mrb[0].mxu0 %v4326
      %v4478 = vpop.f32.mrb[0].mxu0
      %v4479 = vadd.f32 %v4305, %v4478
      %v4480 = vpop.f32.mrb[0].mxu0
      %v4481 = vadd.f32 %v4305, %v4480
      %v4482 = vpop.f32.mrb[0].mxu0
      %v4483 = vadd.f32 %v4310, %v4482
      %v4484 = vpop.f32.mrb[0].mxu0
      %v4485 = vadd.f32 %v4310, %v4484
      %4486 = vdwg.mxu0
      %4487 = vmatprep.subr.bf16.mxu0 %v4278
      %4488 = vmatpush1.bf16.msra.mxu0 %v4277
      %4489 = vmatprep.subr.bf16.mxu0 %v4286
      %4490 = vmatpush1.bf16.msra.mxu0 %v4285
      %4491 = vmatprep.subr.bf16.mxu0 0
      %4492 = vmatpush1.bf16.msra.mxu0 0
      %4493 = vmatprep.subr.bf16.mxu0 0
      %4494 = vmatpush1.bf16.msra.mxu0 0
      %4495 = vmatprep.subr.bf16.mxu0 0
      %4496 = vmatpush1.bf16.msra.mxu0 0
      %4497 = vmatprep.subr.bf16.mxu0 0
      %4498 = vmatpush1.bf16.msra.mxu0 0
      %4499 = vmatprep.subr.bf16.mxu0 0
      %4500 = vmatpush1.bf16.msra.mxu0 0
      %4501 = vmatprep.subr.bf16.mxu0 0
      %4502 = vmatpush1.bf16.msra.mxu0 0
      %4503 = vmatprep.subr.bf16.mxu0 0
      %4504 = vmatpush1.bf16.msra.mxu0 0
      %4505 = vmatprep.subr.bf16.mxu0 0
      %4506 = vmatpush1.bf16.msra.mxu0 0
      %4507 = vmatprep.subr.bf16.mxu0 0
      %4508 = vmatpush1.bf16.msra.mxu0 0
      %4509 = vmatprep.subr.bf16.mxu0 0
      %4510 = vmatpush1.bf16.msra.mxu0 0
      %4511 = vmatprep.subr.bf16.mxu0 0
      %4512 = vmatpush1.bf16.msra.mxu0 0
      %4513 = vmatprep.subr.bf16.mxu0 0
      %4514 = vmatpush1.bf16.msra.mxu0 0
      %4515 = vmatprep.subr.bf16.mxu0 0
      %4516 = vmatpush1.bf16.msra.mxu0 0
      %4517 = vmatprep.subr.bf16.mxu0 0
      %4518 = vmatpush1.bf16.msra.mxu0 0
      %4519 = vmatprep.mubr.bf16.mxu0 0
      %4520 = vmatmul.mubr.bf16.gmra.mrb[0].mxu0 %v4323
      %v4521 = vpop.f32.mrb[0].mxu0
      %v4522 = vadd.f32 %v4295, %v4521
      %v4523 = vpop.f32.mrb[0].mxu0
      %v4524 = vadd.f32 %v4295, %v4523
      %v4525 = vpop.f32.mrb[0].mxu0
      %v4526 = vadd.f32 %v4300, %v4525
      %v4527 = vpop.f32.mrb[0].mxu0
      %v4528 = vadd.f32 %v4300, %v4527
      %4529 = vmatprep.mubr.bf16.mxu0 0
      %4530 = vmatmul.mubr.bf16.gmra.mrb[0].mxu0 %v4326
      %v4531 = vpop.f32.mrb[0].mxu0
      %v4532 = vadd.f32 %v4305, %v4531
      %v4533 = vpop.f32.mrb[0].mxu0
      %v4534 = vadd.f32 %v4305, %v4533
      %v4535 = vpop.f32.mrb[0].mxu0
      %v4536 = vadd.f32 %v4310, %v4535
      %v4537 = vpop.f32.mrb[0].mxu0
      %v4538 = vadd.f32 %v4310, %v4537
      %4539 = vdwg.mxu0
      %v4540 = vmax.f32 %v4363, 0.0
      %v4541 = vmax.f32 %v4365, 0.0
      %v4542 = vmax.f32 %v4416, 0.0
      %v4543 = vmax.f32 %v4418, 0.0
      %v4544 = vmax.f32 %v4469, 0.0
      %v4545 = vmax.f32 %v4471, 0.0
      %v4546 = vmax.f32 %v4522, 0.0
      %v4547 = vmax.f32 %v4524, 0.0
      %v4548 = vmax.f32 %v4367, 0.0
      %v4549 = vmax.f32 %v4369, 0.0
      %v4550 = vmax.f32 %v4420, 0.0
      %v4551 = vmax.f32 %v4422, 0.0
      %v4552 = vmax.f32 %v4473, 0.0
      %v4553 = vmax.f32 %v4475, 0.0
      %v4554 = vmax.f32 %v4526, 0.0
      %v4555 = vmax.f32 %v4528, 0.0
      %v4556 = vmax.f32 %v4373, 0.0
      %v4557 = vmax.f32 %v4375, 0.0
      %v4558 = vmax.f32 %v4426, 0.0
      %v4559 = vmax.f32 %v4428, 0.0
      %v4560 = vmax.f32 %v4479, 0.0
      %v4561 = vmax.f32 %v4481, 0.0
      %v4562 = vmax.f32 %v4532, 0.0
      %v4563 = vmax.f32 %v4534, 0.0
      %v4564 = vmax.f32 %v4377, 0.0
      %v4565 = vmax.f32 %v4379, 0.0
      %v4566 = vmax.f32 %v4430, 0.0
      %v4567 = vmax.f32 %v4432, 0.0
      %v4568 = vmax.f32 %v4483, 0.0
      %v4569 = vmax.f32 %v4485, 0.0
      %v4570 = vmax.f32 %v4536, 0.0
      %v4571 = vmax.f32 %v4538, 0.0
      %s4572 = scalar_lea.vmem %s4, 32
      %v4573 = vld [vmem:[%s4572] sm:$0xf]
      %v4574 = vld [vmem:[%s4572 + $0x4] sm:$0xf]
      %v4575 = vld [vmem:[%s4572 + $0x8] sm:$0xf]
      %v4576 = vld [vmem:[%s4572 + $0xc] sm:$0xf]
      %v4577 = vpack.c.bf16 %v4548, %v4540
      %v4578 = vpack.c.bf16 %v4549, %v4541
      %v4579 = vpack.c.bf16 %v4550, %v4542
      %v4580 = vpack.c.bf16 %v4551, %v4543
      %v4581 = vpack.c.bf16 %v4552, %v4544
      %v4582 = vpack.c.bf16 %v4553, %v4545
      %v4583 = vpack.c.bf16 %v4554, %v4546
      %v4584 = vpack.c.bf16 %v4555, %v4547
      %v4585 = vpack.c.bf16 %v4564, %v4556
      %v4586 = vpack.c.bf16 %v4565, %v4557
      %v4587 = vpack.c.bf16 %v4566, %v4558
      %v4588 = vpack.c.bf16 %v4567, %v4559
      %v4589 = vpack.c.bf16 %v4568, %v4560
      %v4590 = vpack.c.bf16 %v4569, %v4561
      %v4591 = vpack.c.bf16 %v4570, %v4562
      %v4592 = vpack.c.bf16 %v4571, %v4563
      %s4593 = scalar_lea.vmem %s5, 64
      %v4594 = vld [vmem:[%s4593] sm:$0xff]
      %v4595 = vld [vmem:[%s4593 + $0x8] sm:$0xff]
      %v4596 = vld [vmem:[%s4593 + $0x10] sm:$0xff]
      %v4597 = vld [vmem:[%s4593 + $0x18] sm:$0xff]
      %4599 = vset.pattern.permute.xlu0 0
      %4600 = vperm.xlu0 %4599, %v4594
      %v4601 = vpop.permute.xlu0 %4600
      %4604 = vset.pattern.permute.xlu0 0
      %4605 = vperm.xlu0 %4604, %v4595
      %v4606 = vpop.permute.xlu0 %4605
      %4609 = vset.pattern.permute.xlu0 0
      %4610 = vperm.xlu0 %4609, %v4596
      %v4611 = vpop.permute.xlu0 %4610
      %4614 = vset.pattern.permute.xlu0 0
      %4615 = vperm.xlu0 %4614, %v4597
      %v4616 = vpop.permute.xlu0 %4615
      %v4622 = vunpack.c.l.b16 %v4573
      %v4623 = vunpack.c.l.b16 %v4574
      %v4624 = vunpack.c.l.b16 %v4575
      %v4625 = vunpack.c.l.b16 %v4576
      %v4626 = vpack.c.b16 %v4623, %v4622
      %v4627 = vpack.c.b16 %v4625, %v4624
      %v4629 = vsel %vm4015, %v4626, 0
      %v4632 = vsel %vm4015, %v4627, 0
      %4634 = vmatprep.subr.bf16.mxu0 %v4578
      %4635 = vmatpush1.bf16.msra.mxu0 %v4577
      %4636 = vmatprep.subr.bf16.mxu0 %v4586
      %4637 = vmatpush1.bf16.msra.mxu0 %v4585
      %4638 = vmatprep.subr.bf16.mxu0 0
      %4639 = vmatpush1.bf16.msra.mxu0 0
      %4640 = vmatprep.subr.bf16.mxu0 0
      %4641 = vmatpush1.bf16.msra.mxu0 0
      %4642 = vmatprep.subr.bf16.mxu0 0
      %4643 = vmatpush1.bf16.msra.mxu0 0
      %4644 = vmatprep.subr.bf16.mxu0 0
      %4645 = vmatpush1.bf16.msra.mxu0 0
      %4646 = vmatprep.subr.bf16.mxu0 0
      %4647 = vmatpush1.bf16.msra.mxu0 0
      %4648 = vmatprep.subr.bf16.mxu0 0
      %4649 = vmatpush1.bf16.msra.mxu0 0
      %4650 = vmatprep.subr.bf16.mxu0 0
      %4651 = vmatpush1.bf16.msra.mxu0 0
      %4652 = vmatprep.subr.bf16.mxu0 0
      %4653 = vmatpush1.bf16.msra.mxu0 0
      %4654 = vmatprep.subr.bf16.mxu0 0
      %4655 = vmatpush1.bf16.msra.mxu0 0
      %4656 = vmatprep.subr.bf16.mxu0 0
      %4657 = vmatpush1.bf16.msra.mxu0 0
      %4658 = vmatprep.subr.bf16.mxu0 0
      %4659 = vmatpush1.bf16.msra.mxu0 0
      %4660 = vmatprep.subr.bf16.mxu0 0
      %4661 = vmatpush1.bf16.msra.mxu0 0
      %4662 = vmatprep.subr.bf16.mxu0 0
      %4663 = vmatpush1.bf16.msra.mxu0 0
      %4664 = vmatprep.subr.bf16.mxu0 0
      %4665 = vmatpush1.bf16.msra.mxu0 0
      %4666 = vmatprep.mubr.bf16.mxu0 0
      %4667 = vmatmul.mubr.bf16.gmra.mrb[0].mxu0 %v4629
      %v4668 = vpop.f32.mrb[0].mxu0
      %v4669 = vadd.f32 %v4601, %v4668
      %v4670 = vpop.f32.mrb[0].mxu0
      %v4671 = vadd.f32 %v4601, %v4670
      %v4672 = vpop.f32.mrb[0].mxu0
      %v4673 = vadd.f32 %v4606, %v4672
      %v4674 = vpop.f32.mrb[0].mxu0
      %v4675 = vadd.f32 %v4606, %v4674
      %4676 = vmatprep.mubr.bf16.mxu0 0
      %4677 = vmatmul.mubr.bf16.gmra.mrb[0].mxu0 %v4632
      %v4678 = vpop.f32.mrb[0].mxu0
      %v4679 = vadd.f32 %v4611, %v4678
      %v4680 = vpop.f32.mrb[0].mxu0
      %v4681 = vadd.f32 %v4611, %v4680
      %v4682 = vpop.f32.mrb[0].mxu0
      %v4683 = vadd.f32 %v4616, %v4682
      %v4684 = vpop.f32.mrb[0].mxu0
      %v4685 = vadd.f32 %v4616, %v4684
      %4686 = vdwg.mxu0
      %4687 = vmatprep.subr.bf16.mxu0 %v4580
      %4688 = vmatpush1.bf16.msra.mxu0 %v4579
      %4689 = vmatprep.subr.bf16.mxu0 %v4588
      %4690 = vmatpush1.bf16.msra.mxu0 %v4587
      %4691 = vmatprep.subr.bf16.mxu0 0
      %4692 = vmatpush1.bf16.msra.mxu0 0
      %4693 = vmatprep.subr.bf16.mxu0 0
      %4694 = vmatpush1.bf16.msra.mxu0 0
      %4695 = vmatprep.subr.bf16.mxu0 0
      %4696 = vmatpush1.bf16.msra.mxu0 0
      %4697 = vmatprep.subr.bf16.mxu0 0
      %4698 = vmatpush1.bf16.msra.mxu0 0
      %4699 = vmatprep.subr.bf16.mxu0 0
      %4700 = vmatpush1.bf16.msra.mxu0 0
      %4701 = vmatprep.subr.bf16.mxu0 0
      %4702 = vmatpush1.bf16.msra.mxu0 0
      %4703 = vmatprep.subr.bf16.mxu0 0
      %4704 = vmatpush1.bf16.msra.mxu0 0
      %4705 = vmatprep.subr.bf16.mxu0 0
      %4706 = vmatpush1.bf16.msra.mxu0 0
      %4707 = vmatprep.subr.bf16.mxu0 0
      %4708 = vmatpush1.bf16.msra.mxu0 0
      %4709 = vmatprep.subr.bf16.mxu0 0
      %4710 = vmatpush1.bf16.msra.mxu0 0
      %4711 = vmatprep.subr.bf16.mxu0 0
      %4712 = vmatpush1.bf16.msra.mxu0 0
      %4713 = vmatprep.subr.bf16.mxu0 0
      %4714 = vmatpush1.bf16.msra.mxu0 0
      %4715 = vmatprep.subr.bf16.mxu0 0
      %4716 = vmatpush1.bf16.msra.mxu0 0
      %4717 = vmatprep.subr.bf16.mxu0 0
      %4718 = vmatpush1.bf16.msra.mxu0 0
      %4719 = vmatprep.mubr.bf16.mxu0 0
      %4720 = vmatmul.mubr.bf16.gmra.mrb[0].mxu0 %v4629
      %v4721 = vpop.f32.mrb[0].mxu0
      %v4722 = vadd.f32 %v4601, %v4721
      %v4723 = vpop.f32.mrb[0].mxu0
      %v4724 = vadd.f32 %v4601, %v4723
      %v4725 = vpop.f32.mrb[0].mxu0
      %v4726 = vadd.f32 %v4606, %v4725
      %v4727 = vpop.f32.mrb[0].mxu0
      %v4728 = vadd.f32 %v4606, %v4727
      %4729 = vmatprep.mubr.bf16.mxu0 0
      %4730 = vmatmul.mubr.bf16.gmra.mrb[0].mxu0 %v4632
      %v4731 = vpop.f32.mrb[0].mxu0
      %v4732 = vadd.f32 %v4611, %v4731
      %v4733 = vpop.f32.mrb[0].mxu0
      %v4734 = vadd.f32 %v4611, %v4733
      %v4735 = vpop.f32.mrb[0].mxu0
      %v4736 = vadd.f32 %v4616, %v4735
      %v4737 = vpop.f32.mrb[0].mxu0
      %v4738 = vadd.f32 %v4616, %v4737
      %4739 = vdwg.mxu0
      %4740 = vmatprep.subr.bf16.mxu0 %v4582
      %4741 = vmatpush1.bf16.msra.mxu0 %v4581
      %4742 = vmatprep.subr.bf16.mxu0 %v4590
      %4743 = vmatpush1.bf16.msra.mxu0 %v4589
      %4744 = vmatprep.subr.bf16.mxu0 0
      %4745 = vmatpush1.bf16.msra.mxu0 0
      %4746 = vmatprep.subr.bf16.mxu0 0
      %4747 = vmatpush1.bf16.msra.mxu0 0
      %4748 = vmatprep.subr.bf16.mxu0 0
      %4749 = vmatpush1.bf16.msra.mxu0 0
      %4750 = vmatprep.subr.bf16.mxu0 0
      %4751 = vmatpush1.bf16.msra.mxu0 0
      %4752 = vmatprep.subr.bf16.mxu0 0
      %4753 = vmatpush1.bf16.msra.mxu0 0
      %4754 = vmatprep.subr.bf16.mxu0 0
      %4755 = vmatpush1.bf16.msra.mxu0 0
      %4756 = vmatprep.subr.bf16.mxu0 0
      %4757 = vmatpush1.bf16.msra.mxu0 0
      %4758 = vmatprep.subr.bf16.mxu0 0
      %4759 = vmatpush1.bf16.msra.mxu0 0
      %4760 = vmatprep.subr.bf16.mxu0 0
      %4761 = vmatpush1.bf16.msra.mxu0 0
      %4762 = vmatprep.subr.bf16.mxu0 0
      %4763 = vmatpush1.bf16.msra.mxu0 0
      %4764 = vmatprep.subr.bf16.mxu0 0
      %4765 = vmatpush1.bf16.msra.mxu0 0
      %4766 = vmatprep.subr.bf16.mxu0 0
      %4767 = vmatpush1.bf16.msra.mxu0 0
      %4768 = vmatprep.subr.bf16.mxu0 0
      %4769 = vmatpush1.bf16.msra.mxu0 0
      %4770 = vmatprep.subr.bf16.mxu0 0
      %4771 = vmatpush1.bf16.msra.mxu0 0
      %4772 = vmatprep.mubr.bf16.mxu0 0
      %4773 = vmatmul.mubr.bf16.gmra.mrb[0].mxu0 %v4629
      %v4774 = vpop.f32.mrb[0].mxu0
      %v4775 = vadd.f32 %v4601, %v4774
      %v4776 = vpop.f32.mrb[0].mxu0
      %v4777 = vadd.f32 %v4601, %v4776
      %v4778 = vpop.f32.mrb[0].mxu0
      %v4779 = vadd.f32 %v4606, %v4778
      %v4780 = vpop.f32.mrb[0].mxu0
      %v4781 = vadd.f32 %v4606, %v4780
      %4782 = vmatprep.mubr.bf16.mxu0 0
      %4783 = vmatmul.mubr.bf16.gmra.mrb[0].mxu0 %v4632
      %v4784 = vpop.f32.mrb[0].mxu0
      %v4785 = vadd.f32 %v4611, %v4784
      %v4786 = vpop.f32.mrb[0].mxu0
      %v4787 = vadd.f32 %v4611, %v4786
      %v4788 = vpop.f32.mrb[0].mxu0
      %v4789 = vadd.f32 %v4616, %v4788
      %v4790 = vpop.f32.mrb[0].mxu0
      %v4791 = vadd.f32 %v4616, %v4790
      %4792 = vdwg.mxu0
      %4793 = vmatprep.subr.bf16.mxu0 %v4584
      %4794 = vmatpush1.bf16.msra.mxu0 %v4583
      %4795 = vmatprep.subr.bf16.mxu0 %v4592
      %4796 = vmatpush1.bf16.msra.mxu0 %v4591
      %4797 = vmatprep.subr.bf16.mxu0 0
      %4798 = vmatpush1.bf16.msra.mxu0 0
      %4799 = vmatprep.subr.bf16.mxu0 0
      %4800 = vmatpush1.bf16.msra.mxu0 0
      %4801 = vmatprep.subr.bf16.mxu0 0
      %4802 = vmatpush1.bf16.msra.mxu0 0
      %4803 = vmatprep.subr.bf16.mxu0 0
      %4804 = vmatpush1.bf16.msra.mxu0 0
      %4805 = vmatprep.subr.bf16.mxu0 0
      %4806 = vmatpush1.bf16.msra.mxu0 0
      %4807 = vmatprep.subr.bf16.mxu0 0
      %4808 = vmatpush1.bf16.msra.mxu0 0
      %4809 = vmatprep.subr.bf16.mxu0 0
      %4810 = vmatpush1.bf16.msra.mxu0 0
      %4811 = vmatprep.subr.bf16.mxu0 0
      %4812 = vmatpush1.bf16.msra.mxu0 0
      %4813 = vmatprep.subr.bf16.mxu0 0
      %4814 = vmatpush1.bf16.msra.mxu0 0
      %4815 = vmatprep.subr.bf16.mxu0 0
      %4816 = vmatpush1.bf16.msra.mxu0 0
      %4817 = vmatprep.subr.bf16.mxu0 0
      %4818 = vmatpush1.bf16.msra.mxu0 0
      %4819 = vmatprep.subr.bf16.mxu0 0
      %4820 = vmatpush1.bf16.msra.mxu0 0
      %4821 = vmatprep.subr.bf16.mxu0 0
      %4822 = vmatpush1.bf16.msra.mxu0 0
      %4823 = vmatprep.subr.bf16.mxu0 0
      %4824 = vmatpush1.bf16.msra.mxu0 0
      %4825 = vmatprep.mubr.bf16.mxu0 0
      %4826 = vmatmul.mubr.bf16.gmra.mrb[0].mxu0 %v4629
      %v4827 = vpop.f32.mrb[0].mxu0
      %v4828 = vadd.f32 %v4601, %v4827
      %v4829 = vpop.f32.mrb[0].mxu0
      %v4830 = vadd.f32 %v4601, %v4829
      %v4831 = vpop.f32.mrb[0].mxu0
      %v4832 = vadd.f32 %v4606, %v4831
      %v4833 = vpop.f32.mrb[0].mxu0
      %v4834 = vadd.f32 %v4606, %v4833
      %4835 = vmatprep.mubr.bf16.mxu0 0
      %4836 = vmatmul.mubr.bf16.gmra.mrb[0].mxu0 %v4632
      %v4837 = vpop.f32.mrb[0].mxu0
      %v4838 = vadd.f32 %v4611, %v4837
      %v4839 = vpop.f32.mrb[0].mxu0
      %v4840 = vadd.f32 %v4611, %v4839
      %v4841 = vpop.f32.mrb[0].mxu0
      %v4842 = vadd.f32 %v4616, %v4841
      %v4843 = vpop.f32.mrb[0].mxu0
      %v4844 = vadd.f32 %v4616, %v4843
      %4845 = vdwg.mxu0
      %v4846 = vmax.f32 %v4669, 0.0
      %v4847 = vmax.f32 %v4671, 0.0
      %v4848 = vmax.f32 %v4722, 0.0
      %v4849 = vmax.f32 %v4724, 0.0
      %v4850 = vmax.f32 %v4775, 0.0
      %v4851 = vmax.f32 %v4777, 0.0
      %v4852 = vmax.f32 %v4828, 0.0
      %v4853 = vmax.f32 %v4830, 0.0
      %v4854 = vmax.f32 %v4673, 0.0
      %v4855 = vmax.f32 %v4675, 0.0
      %v4856 = vmax.f32 %v4726, 0.0
      %v4857 = vmax.f32 %v4728, 0.0
      %v4858 = vmax.f32 %v4779, 0.0
      %v4859 = vmax.f32 %v4781, 0.0
      %v4860 = vmax.f32 %v4832, 0.0
      %v4861 = vmax.f32 %v4834, 0.0
      %v4862 = vmax.f32 %v4679, 0.0
      %v4863 = vmax.f32 %v4681, 0.0
      %v4864 = vmax.f32 %v4732, 0.0
      %v4865 = vmax.f32 %v4734, 0.0
      %v4866 = vmax.f32 %v4785, 0.0
      %v4867 = vmax.f32 %v4787, 0.0
      %v4868 = vmax.f32 %v4838, 0.0
      %v4869 = vmax.f32 %v4840, 0.0
      %v4870 = vmax.f32 %v4683, 0.0
      %v4871 = vmax.f32 %v4685, 0.0
      %v4872 = vmax.f32 %v4736, 0.0
      %v4873 = vmax.f32 %v4738, 0.0
      %v4874 = vmax.f32 %v4789, 0.0
      %v4875 = vmax.f32 %v4791, 0.0
      %v4876 = vmax.f32 %v4842, 0.0
      %v4877 = vmax.f32 %v4844, 0.0
      %s4878 = scalar_lea.vmem %s4, 48
      %v4879 = vld [vmem:[%s4878] sm:$0xf]
      %v4880 = vld [vmem:[%s4878 + $0x4] sm:$0xf]
      %v4881 = vld [vmem:[%s4878 + $0x8] sm:$0xf]
      %v4882 = vld [vmem:[%s4878 + $0xc] sm:$0xf]
      %v4883 = vpack.c.bf16 %v4854, %v4846
      %v4884 = vpack.c.bf16 %v4855, %v4847
      %v4885 = vpack.c.bf16 %v4856, %v4848
      %v4886 = vpack.c.bf16 %v4857, %v4849
      %v4887 = vpack.c.bf16 %v4858, %v4850
      %v4888 = vpack.c.bf16 %v4859, %v4851
      %v4889 = vpack.c.bf16 %v4860, %v4852
      %v4890 = vpack.c.bf16 %v4861, %v4853
      %v4891 = vpack.c.bf16 %v4870, %v4862
      %v4892 = vpack.c.bf16 %v4871, %v4863
      %v4893 = vpack.c.bf16 %v4872, %v4864
      %v4894 = vpack.c.bf16 %v4873, %v4865
      %v4895 = vpack.c.bf16 %v4874, %v4866
      %v4896 = vpack.c.bf16 %v4875, %v4867
      %v4897 = vpack.c.bf16 %v4876, %v4868
      %v4898 = vpack.c.bf16 %v4877, %v4869
      %s4899 = scalar_lea.vmem %s5, 96
      %v4900 = vld [vmem:[%s4899] sm:$0xff]
      %v4901 = vld [vmem:[%s4899 + $0x8] sm:$0xff]
      %v4902 = vld [vmem:[%s4899 + $0x10] sm:$0xff]
      %v4903 = vld [vmem:[%s4899 + $0x18] sm:$0xff]
      %4905 = vset.pattern.permute.xlu0 0
      %4906 = vperm.xlu0 %4905, %v4900
      %v4907 = vpop.permute.xlu0 %4906
      %4910 = vset.pattern.permute.xlu0 0
      %4911 = vperm.xlu0 %4910, %v4901
      %v4912 = vpop.permute.xlu0 %4911
      %4915 = vset.pattern.permute.xlu0 0
      %4916 = vperm.xlu0 %4915, %v4902
      %v4917 = vpop.permute.xlu0 %4916
      %4920 = vset.pattern.permute.xlu0 0
      %4921 = vperm.xlu0 %4920, %v4903
      %v4922 = vpop.permute.xlu0 %4921
      %v4928 = vunpack.c.l.b16 %v4879
      %v4929 = vunpack.c.l.b16 %v4880
      %v4930 = vunpack.c.l.b16 %v4881
      %v4931 = vunpack.c.l.b16 %v4882
      %v4932 = vpack.c.b16 %v4929, %v4928
      %v4933 = vpack.c.b16 %v4931, %v4930
      %v4935 = vsel %vm4015, %v4932, 0
      %v4938 = vsel %vm4015, %v4933, 0
      %4940 = vmatprep.subr.bf16.mxu0 %v4884
      %4941 = vmatpush1.bf16.msra.mxu0 %v4883
      %4942 = vmatprep.subr.bf16.mxu0 %v4892
      %4943 = vmatpush1.bf16.msra.mxu0 %v4891
      %4944 = vmatprep.subr.bf16.mxu0 0
      %4945 = vmatpush1.bf16.msra.mxu0 0
      %4946 = vmatprep.subr.bf16.mxu0 0
      %4947 = vmatpush1.bf16.msra.mxu0 0
      %4948 = vmatprep.subr.bf16.mxu0 0
      %4949 = vmatpush1.bf16.msra.mxu0 0
      %4950 = vmatprep.subr.bf16.mxu0 0
      %4951 = vmatpush1.bf16.msra.mxu0 0
      %4952 = vmatprep.subr.bf16.mxu0 0
      %4953 = vmatpush1.bf16.msra.mxu0 0
      %4954 = vmatprep.subr.bf16.mxu0 0
      %4955 = vmatpush1.bf16.msra.mxu0 0
      %4956 = vmatprep.subr.bf16.mxu0 0
      %4957 = vmatpush1.bf16.msra.mxu0 0
      %4958 = vmatprep.subr.bf16.mxu0 0
      %4959 = vmatpush1.bf16.msra.mxu0 0
      %4960 = vmatprep.subr.bf16.mxu0 0
      %4961 = vmatpush1.bf16.msra.mxu0 0
      %4962 = vmatprep.subr.bf16.mxu0 0
      %4963 = vmatpush1.bf16.msra.mxu0 0
      %4964 = vmatprep.subr.bf16.mxu0 0
      %4965 = vmatpush1.bf16.msra.mxu0 0
      %4966 = vmatprep.subr.bf16.mxu0 0
      %4967 = vmatpush1.bf16.msra.mxu0 0
      %4968 = vmatprep.subr.bf16.mxu0 0
      %4969 = vmatpush1.bf16.msra.mxu0 0
      %4970 = vmatprep.subr.bf16.mxu0 0
      %4971 = vmatpush1.bf16.msra.mxu0 0
      %4972 = vmatprep.mubr.bf16.mxu0 0
      %4973 = vmatmul.mubr.bf16.gmra.mrb[0].mxu0 %v4935
      %v4974 = vpop.f32.mrb[0].mxu0
      %v4975 = vadd.f32 %v4907, %v4974
      %v4976 = vpop.f32.mrb[0].mxu0
      %v4977 = vadd.f32 %v4907, %v4976
      %v4978 = vpop.f32.mrb[0].mxu0
      %v4979 = vadd.f32 %v4912, %v4978
      %v4980 = vpop.f32.mrb[0].mxu0
      %v4981 = vadd.f32 %v4912, %v4980
      %4982 = vmatprep.mubr.bf16.mxu0 0
      %4983 = vmatmul.mubr.bf16.gmra.mrb[0].mxu0 %v4938
      %v4984 = vpop.f32.mrb[0].mxu0
      %v4985 = vadd.f32 %v4917, %v4984
      %v4986 = vpop.f32.mrb[0].mxu0
      %v4987 = vadd.f32 %v4917, %v4986
      %v4988 = vpop.f32.mrb[0].mxu0
      %v4989 = vadd.f32 %v4922, %v4988
      %v4990 = vpop.f32.mrb[0].mxu0
      %v4991 = vadd.f32 %v4922, %v4990
      %4992 = vdwg.mxu0
      %4993 = vmatprep.subr.bf16.mxu0 %v4886
      %4994 = vmatpush1.bf16.msra.mxu0 %v4885
      %4995 = vmatprep.subr.bf16.mxu0 %v4894
      %4996 = vmatpush1.bf16.msra.mxu0 %v4893
      %4997 = vmatprep.subr.bf16.mxu0 0
      %4998 = vmatpush1.bf16.msra.mxu0 0
      %4999 = vmatprep.subr.bf16.mxu0 0
      %5000 = vmatpush1.bf16.msra.mxu0 0
      %5001 = vmatprep.subr.bf16.mxu0 0
      %5002 = vmatpush1.bf16.msra.mxu0 0
      %5003 = vmatprep.subr.bf16.mxu0 0
      %5004 = vmatpush1.bf16.msra.mxu0 0
      %5005 = vmatprep.subr.bf16.mxu0 0
      %5006 = vmatpush1.bf16.msra.mxu0 0
      %5007 = vmatprep.subr.bf16.mxu0 0
      %5008 = vmatpush1.bf16.msra.mxu0 0
      %5009 = vmatprep.subr.bf16.mxu0 0
      %5010 = vmatpush1.bf16.msra.mxu0 0
      %5011 = vmatprep.subr.bf16.mxu0 0
      %5012 = vmatpush1.bf16.msra.mxu0 0
      %5013 = vmatprep.subr.bf16.mxu0 0
      %5014 = vmatpush1.bf16.msra.mxu0 0
      %5015 = vmatprep.subr.bf16.mxu0 0
      %5016 = vmatpush1.bf16.msra.mxu0 0
      %5017 = vmatprep.subr.bf16.mxu0 0
      %5018 = vmatpush1.bf16.msra.mxu0 0
      %5019 = vmatprep.subr.bf16.mxu0 0
      %5020 = vmatpush1.bf16.msra.mxu0 0
      %5021 = vmatprep.subr.bf16.mxu0 0
      %5022 = vmatpush1.bf16.msra.mxu0 0
      %5023 = vmatprep.subr.bf16.mxu0 0
      %5024 = vmatpush1.bf16.msra.mxu0 0
      %5025 = vmatprep.mubr.bf16.mxu0 0
      %5026 = vmatmul.mubr.bf16.gmra.mrb[0].mxu0 %v4935
      %v5027 = vpop.f32.mrb[0].mxu0
      %v5028 = vadd.f32 %v4907, %v5027
      %v5029 = vpop.f32.mrb[0].mxu0
      %v5030 = vadd.f32 %v4907, %v5029
      %v5031 = vpop.f32.mrb[0].mxu0
      %v5032 = vadd.f32 %v4912, %v5031
      %v5033 = vpop.f32.mrb[0].mxu0
      %v5034 = vadd.f32 %v4912, %v5033
      %5035 = vmatprep.mubr.bf16.mxu0 0
      %5036 = vmatmul.mubr.bf16.gmra.mrb[0].mxu0 %v4938
      %v5037 = vpop.f32.mrb[0].mxu0
      %v5038 = vadd.f32 %v4917, %v5037
      %v5039 = vpop.f32.mrb[0].mxu0
      %v5040 = vadd.f32 %v4917, %v5039
      %v5041 = vpop.f32.mrb[0].mxu0
      %v5042 = vadd.f32 %v4922, %v5041
      %v5043 = vpop.f32.mrb[0].mxu0
      %v5044 = vadd.f32 %v4922, %v5043
      %5045 = vdwg.mxu0
      %5046 = vmatprep.subr.bf16.mxu0 %v4888
      %5047 = vmatpush1.bf16.msra.mxu0 %v4887
      %5048 = vmatprep.subr.bf16.mxu0 %v4896
      %5049 = vmatpush1.bf16.msra.mxu0 %v4895
      %5050 = vmatprep.subr.bf16.mxu0 0
      %5051 = vmatpush1.bf16.msra.mxu0 0
      %5052 = vmatprep.subr.bf16.mxu0 0
      %5053 = vmatpush1.bf16.msra.mxu0 0
      %5054 = vmatprep.subr.bf16.mxu0 0
      %5055 = vmatpush1.bf16.msra.mxu0 0
      %5056 = vmatprep.subr.bf16.mxu0 0
      %5057 = vmatpush1.bf16.msra.mxu0 0
      %5058 = vmatprep.subr.bf16.mxu0 0
      %5059 = vmatpush1.bf16.msra.mxu0 0
      %5060 = vmatprep.subr.bf16.mxu0 0
      %5061 = vmatpush1.bf16.msra.mxu0 0
      %5062 = vmatprep.subr.bf16.mxu0 0
      %5063 = vmatpush1.bf16.msra.mxu0 0
      %5064 = vmatprep.subr.bf16.mxu0 0
      %5065 = vmatpush1.bf16.msra.mxu0 0
      %5066 = vmatprep.subr.bf16.mxu0 0
      %5067 = vmatpush1.bf16.msra.mxu0 0
      %5068 = vmatprep.subr.bf16.mxu0 0
      %5069 = vmatpush1.bf16.msra.mxu0 0
      %5070 = vmatprep.subr.bf16.mxu0 0
      %5071 = vmatpush1.bf16.msra.mxu0 0
      %5072 = vmatprep.subr.bf16.mxu0 0
      %5073 = vmatpush1.bf16.msra.mxu0 0
      %5074 = vmatprep.subr.bf16.mxu0 0
      %5075 = vmatpush1.bf16.msra.mxu0 0
      %5076 = vmatprep.subr.bf16.mxu0 0
      %5077 = vmatpush1.bf16.msra.mxu0 0
      %5078 = vmatprep.mubr.bf16.mxu0 0
      %5079 = vmatmul.mubr.bf16.gmra.mrb[0].mxu0 %v4935
      %v5080 = vpop.f32.mrb[0].mxu0
      %v5081 = vadd.f32 %v4907, %v5080
      %v5082 = vpop.f32.mrb[0].mxu0
      %v5083 = vadd.f32 %v4907, %v5082
      %v5084 = vpop.f32.mrb[0].mxu0
      %v5085 = vadd.f32 %v4912, %v5084
      %v5086 = vpop.f32.mrb[0].mxu0
      %v5087 = vadd.f32 %v4912, %v5086
      %5088 = vmatprep.mubr.bf16.mxu0 0
      %5089 = vmatmul.mubr.bf16.gmra.mrb[0].mxu0 %v4938
      %v5090 = vpop.f32.mrb[0].mxu0
      %v5091 = vadd.f32 %v4917, %v5090
      %v5092 = vpop.f32.mrb[0].mxu0
      %v5093 = vadd.f32 %v4917, %v5092
      %v5094 = vpop.f32.mrb[0].mxu0
      %v5095 = vadd.f32 %v4922, %v5094
      %v5096 = vpop.f32.mrb[0].mxu0
      %v5097 = vadd.f32 %v4922, %v5096
      %5098 = vdwg.mxu0
      %5099 = vmatprep.subr.bf16.mxu0 %v4890
      %5100 = vmatpush1.bf16.msra.mxu0 %v4889
      %5101 = vmatprep.subr.bf16.mxu0 %v4898
      %5102 = vmatpush1.bf16.msra.mxu0 %v4897
      %5103 = vmatprep.subr.bf16.mxu0 0
      %5104 = vmatpush1.bf16.msra.mxu0 0
      %5105 = vmatprep.subr.bf16.mxu0 0
      %5106 = vmatpush1.bf16.msra.mxu0 0
      %5107 = vmatprep.subr.bf16.mxu0 0
      %5108 = vmatpush1.bf16.msra.mxu0 0
      %5109 = vmatprep.subr.bf16.mxu0 0
      %5110 = vmatpush1.bf16.msra.mxu0 0
      %5111 = vmatprep.subr.bf16.mxu0 0
      %5112 = vmatpush1.bf16.msra.mxu0 0
      %5113 = vmatprep.subr.bf16.mxu0 0
      %5114 = vmatpush1.bf16.msra.mxu0 0
      %5115 = vmatprep.subr.bf16.mxu0 0
      %5116 = vmatpush1.bf16.msra.mxu0 0
      %5117 = vmatprep.subr.bf16.mxu0 0
      %5118 = vmatpush1.bf16.msra.mxu0 0
      %5119 = vmatprep.subr.bf16.mxu0 0
      %5120 = vmatpush1.bf16.msra.mxu0 0
      %5121 = vmatprep.subr.bf16.mxu0 0
      %5122 = vmatpush1.bf16.msra.mxu0 0
      %5123 = vmatprep.subr.bf16.mxu0 0
      %5124 = vmatpush1.bf16.msra.mxu0 0
      %5125 = vmatprep.subr.bf16.mxu0 0
      %5126 = vmatpush1.bf16.msra.mxu0 0
      %5127 = vmatprep.subr.bf16.mxu0 0
      %5128 = vmatpush1.bf16.msra.mxu0 0
      %5129 = vmatprep.subr.bf16.mxu0 0
      %5130 = vmatpush1.bf16.msra.mxu0 0
      %5131 = vmatprep.mubr.bf16.mxu0 0
      %5132 = vmatmul.mubr.bf16.gmra.mrb[0].mxu0 %v4935
      %v5133 = vpop.f32.mrb[0].mxu0
      %v5134 = vadd.f32 %v4907, %v5133
      %v5135 = vpop.f32.mrb[0].mxu0
      %v5136 = vadd.f32 %v4907, %v5135
      %v5137 = vpop.f32.mrb[0].mxu0
      %v5138 = vadd.f32 %v4912, %v5137
      %v5139 = vpop.f32.mrb[0].mxu0
      %v5140 = vadd.f32 %v4912, %v5139
      %5141 = vmatprep.mubr.bf16.mxu0 0
      %5142 = vmatmul.mubr.bf16.gmra.mrb[0].mxu0 %v4938
      %v5143 = vpop.f32.mrb[0].mxu0
      %v5144 = vadd.f32 %v4917, %v5143
      %v5145 = vpop.f32.mrb[0].mxu0
      %v5146 = vadd.f32 %v4917, %v5145
      %v5147 = vpop.f32.mrb[0].mxu0
      %v5148 = vadd.f32 %v4922, %v5147
      %v5149 = vpop.f32.mrb[0].mxu0
      %v5150 = vadd.f32 %v4922, %v5149
      %5151 = vdwg.mxu0
      %v5152 = vmax.f32 %v4975, 0.0
      %v5153 = vmax.f32 %v4977, 0.0
      %v5154 = vmax.f32 %v5028, 0.0
      %v5155 = vmax.f32 %v5030, 0.0
      %v5156 = vmax.f32 %v5081, 0.0
      %v5157 = vmax.f32 %v5083, 0.0
      %v5158 = vmax.f32 %v5134, 0.0
      %v5159 = vmax.f32 %v5136, 0.0
      %v5160 = vmax.f32 %v4979, 0.0
      %v5161 = vmax.f32 %v4981, 0.0
      %v5162 = vmax.f32 %v5032, 0.0
      %v5163 = vmax.f32 %v5034, 0.0
      %v5164 = vmax.f32 %v5085, 0.0
      %v5165 = vmax.f32 %v5087, 0.0
      %v5166 = vmax.f32 %v5138, 0.0
      %v5167 = vmax.f32 %v5140, 0.0
      %v5168 = vmax.f32 %v4985, 0.0
      %v5169 = vmax.f32 %v4987, 0.0
      %v5170 = vmax.f32 %v5038, 0.0
      %v5171 = vmax.f32 %v5040, 0.0
      %v5172 = vmax.f32 %v5091, 0.0
      %v5173 = vmax.f32 %v5093, 0.0
      %v5174 = vmax.f32 %v5144, 0.0
      %v5175 = vmax.f32 %v5146, 0.0
      %v5176 = vmax.f32 %v4989, 0.0
      %v5177 = vmax.f32 %v4991, 0.0
      %v5178 = vmax.f32 %v5042, 0.0
      %v5179 = vmax.f32 %v5044, 0.0
      %v5180 = vmax.f32 %v5095, 0.0
      %v5181 = vmax.f32 %v5097, 0.0
      %v5182 = vmax.f32 %v5148, 0.0
      %v5183 = vmax.f32 %v5150, 0.0
      %v5184 = vld [vmem:[%s6] sm:$0xf]
      %v5185 = vld [vmem:[%s6 + $0x4] sm:$0xf]
      %v5186 = vld [vmem:[%s6 + $0x8] sm:$0xf]
      %v5187 = vld [vmem:[%s6 + $0xc] sm:$0xf]
      %v5188 = vld [vmem:[%s6 + $0x10] sm:$0xf]
      %v5189 = vld [vmem:[%s6 + $0x14] sm:$0xf]
      %v5190 = vpack.c.bf16 %v5160, %v5152
      %v5191 = vpack.c.bf16 %v5161, %v5153
      %v5192 = vpack.c.bf16 %v5162, %v5154
      %v5193 = vpack.c.bf16 %v5163, %v5155
      %v5194 = vpack.c.bf16 %v5164, %v5156
      %v5195 = vpack.c.bf16 %v5165, %v5157
      %v5196 = vpack.c.bf16 %v5166, %v5158
      %v5197 = vpack.c.bf16 %v5167, %v5159
      %v5198 = vpack.c.bf16 %v5176, %v5168
      %v5199 = vpack.c.bf16 %v5177, %v5169
      %v5200 = vpack.c.bf16 %v5178, %v5170
      %v5201 = vpack.c.bf16 %v5179, %v5171
      %v5202 = vpack.c.bf16 %v5180, %v5172
      %v5203 = vpack.c.bf16 %v5181, %v5173
      %v5204 = vpack.c.bf16 %v5182, %v5174
      %v5205 = vpack.c.bf16 %v5183, %v5175
      %v5206 = vld [vmem:[%s7] sm:$0xff]
      %v5207 = vld [vmem:[%s7 + $0x8] sm:$0xff]
      %v5208 = vld [vmem:[%s7 + $0x10] sm:$0xff]
      %v5209 = vld [vmem:[%s7 + $0x18] sm:$0xff]
      %v5210 = vld [vmem:[%s7 + $0x20] sm:$0xff]
      %v5211 = vld [vmem:[%s7 + $0x28] sm:$0xff]
      %5213 = vset.pattern.permute.xlu0 0
      %5214 = vperm.xlu0 %5213, %v5206
      %v5215 = vpop.permute.xlu0 %5214
      %5218 = vset.pattern.permute.xlu0 0
      %5219 = vperm.xlu0 %5218, %v5207
      %v5220 = vpop.permute.xlu0 %5219
      %5223 = vset.pattern.permute.xlu0 0
      %5224 = vperm.xlu0 %5223, %v5208
      %v5225 = vpop.permute.xlu0 %5224
      %5228 = vset.pattern.permute.xlu0 0
      %5229 = vperm.xlu0 %5228, %v5209
      %v5230 = vpop.permute.xlu0 %5229
      %5233 = vset.pattern.permute.xlu0 0
      %5234 = vperm.xlu0 %5233, %v5210
      %v5235 = vpop.permute.xlu0 %5234
      %5238 = vset.pattern.permute.xlu0 0
      %5239 = vperm.xlu0 %5238, %v5211
      %v5240 = vpop.permute.xlu0 %5239
      %v5247 = vunpack.c.l.b16 %v5184
      %v5248 = vunpack.c.l.b16 %v5185
      %v5249 = vunpack.c.l.b16 %v5186
      %v5250 = vunpack.c.l.b16 %v5187
      %v5251 = vunpack.c.l.b16 %v5188
      %v5252 = vunpack.c.l.b16 %v5189
      %v5253 = vpack.c.b16 %v5248, %v5247
      %v5254 = vpack.c.b16 %v5250, %v5249
      %v5255 = vpack.c.b16 %v5252, %v5251
      %v5257 = vsel %vm4015, %v5253, 0
      %v5260 = vsel %vm4015, %v5254, 0
      %v5263 = vsel %vm4015, %v5255, 0
      %5265 = vmatprep.subr.bf16.mxu0 %v5191
      %5266 = vmatpush1.bf16.msra.mxu0 %v5190
      %5267 = vmatprep.subr.bf16.mxu0 %v5199
      %5268 = vmatpush1.bf16.msra.mxu0 %v5198
      %5269 = vmatprep.subr.bf16.mxu0 0
      %5270 = vmatpush1.bf16.msra.mxu0 0
      %5271 = vmatprep.subr.bf16.mxu0 0
      %5272 = vmatpush1.bf16.msra.mxu0 0
      %5273 = vmatprep.subr.bf16.mxu0 0
      %5274 = vmatpush1.bf16.msra.mxu0 0
      %5275 = vmatprep.subr.bf16.mxu0 0
      %5276 = vmatpush1.bf16.msra.mxu0 0
      %5277 = vmatprep.subr.bf16.mxu0 0
      %5278 = vmatpush1.bf16.msra.mxu0 0
      %5279 = vmatprep.subr.bf16.mxu0 0
      %5280 = vmatpush1.bf16.msra.mxu0 0
      %5281 = vmatprep.subr.bf16.mxu0 0
      %5282 = vmatpush1.bf16.msra.mxu0 0
      %5283 = vmatprep.subr.bf16.mxu0 0
      %5284 = vmatpush1.bf16.msra.mxu0 0
      %5285 = vmatprep.subr.bf16.mxu0 0
      %5286 = vmatpush1.bf16.msra.mxu0 0
      %5287 = vmatprep.subr.bf16.mxu0 0
      %5288 = vmatpush1.bf16.msra.mxu0 0
      %5289 = vmatprep.subr.bf16.mxu0 0
      %5290 = vmatpush1.bf16.msra.mxu0 0
      %5291 = vmatprep.subr.bf16.mxu0 0
      %5292 = vmatpush1.bf16.msra.mxu0 0
      %5293 = vmatprep.subr.bf16.mxu0 0
      %5294 = vmatpush1.bf16.msra.mxu0 0
      %5295 = vmatprep.subr.bf16.mxu0 0
      %5296 = vmatpush1.bf16.msra.mxu0 0
      %5297 = vmatprep.mubr.bf16.mxu0 0
      %5298 = vmatmul.mubr.bf16.gmra.mrb[0].mxu0 %v5257
      %v5299 = vpop.f32.mrb[0].mxu0
      %v5300 = vadd.f32 %v5215, %v5299
      %v5301 = vpop.f32.mrb[0].mxu0
      %v5302 = vadd.f32 %v5215, %v5301
      %v5303 = vpop.f32.mrb[0].mxu0
      %v5304 = vadd.f32 %v5220, %v5303
      %v5305 = vpop.f32.mrb[0].mxu0
      %v5306 = vadd.f32 %v5220, %v5305
      %5307 = vmatprep.mubr.bf16.mxu0 0
      %5308 = vmatmul.mubr.bf16.gmra.mrb[0].mxu0 %v5260
      %v5309 = vpop.f32.mrb[0].mxu0
      %v5310 = vadd.f32 %v5225, %v5309
      %v5311 = vpop.f32.mrb[0].mxu0
      %v5312 = vadd.f32 %v5225, %v5311
      %v5313 = vpop.f32.mrb[0].mxu0
      %v5314 = vadd.f32 %v5230, %v5313
      %v5315 = vpop.f32.mrb[0].mxu0
      %v5316 = vadd.f32 %v5230, %v5315
      %5317 = vmatprep.mubr.bf16.mxu0 0
      %5318 = vmatmul.mubr.bf16.gmra.mrb[0].mxu0 %v5263
      %v5319 = vpop.f32.mrb[0].mxu0
      %v5320 = vadd.f32 %v5235, %v5319
      %v5321 = vpop.f32.mrb[0].mxu0
      %v5322 = vadd.f32 %v5235, %v5321
      %v5323 = vpop.f32.mrb[0].mxu0
      %v5324 = vpop.f32.mrb[0].mxu0
      %5325 = vdwg.mxu0
      %5326 = vmatprep.subr.bf16.mxu0 %v5193
      %5327 = vmatpush1.bf16.msra.mxu0 %v5192
      %5328 = vmatprep.subr.bf16.mxu0 %v5201
      %5329 = vmatpush1.bf16.msra.mxu0 %v5200
      %5330 = vmatprep.subr.bf16.mxu0 0
      %5331 = vmatpush1.bf16.msra.mxu0 0
      %5332 = vmatprep.subr.bf16.mxu0 0
      %5333 = vmatpush1.bf16.msra.mxu0 0
      %5334 = vmatprep.subr.bf16.mxu0 0
      %5335 = vmatpush1.bf16.msra.mxu0 0
      %5336 = vmatprep.subr.bf16.mxu0 0
      %5337 = vmatpush1.bf16.msra.mxu0 0
      %5338 = vmatprep.subr.bf16.mxu0 0
      %5339 = vmatpush1.bf16.msra.mxu0 0
      %5340 = vmatprep.subr.bf16.mxu0 0
      %5341 = vmatpush1.bf16.msra.mxu0 0
      %5342 = vmatprep.subr.bf16.mxu0 0
      %5343 = vmatpush1.bf16.msra.mxu0 0
      %5344 = vmatprep.subr.bf16.mxu0 0
      %5345 = vmatpush1.bf16.msra.mxu0 0
      %5346 = vmatprep.subr.bf16.mxu0 0
      %5347 = vmatpush1.bf16.msra.mxu0 0
      %5348 = vmatprep.subr.bf16.mxu0 0
      %5349 = vmatpush1.bf16.msra.mxu0 0
      %5350 = vmatprep.subr.bf16.mxu0 0
      %5351 = vmatpush1.bf16.msra.mxu0 0
      %5352 = vmatprep.subr.bf16.mxu0 0
      %5353 = vmatpush1.bf16.msra.mxu0 0
      %5354 = vmatprep.subr.bf16.mxu0 0
      %5355 = vmatpush1.bf16.msra.mxu0 0
      %5356 = vmatprep.subr.bf16.mxu0 0
      %5357 = vmatpush1.bf16.msra.mxu0 0
      %5358 = vmatprep.mubr.bf16.mxu0 0
      %5359 = vmatmul.mubr.bf16.gmra.mrb[0].mxu0 %v5257
      %v5360 = vpop.f32.mrb[0].mxu0
      %v5361 = vadd.f32 %v5215, %v5360
      %v5362 = vpop.f32.mrb[0].mxu0
      %v5363 = vadd.f32 %v5215, %v5362
      %v5364 = vpop.f32.mrb[0].mxu0
      %v5365 = vadd.f32 %v5220, %v5364
      %v5366 = vpop.f32.mrb[0].mxu0
      %v5367 = vadd.f32 %v5220, %v5366
      %5368 = vmatprep.mubr.bf16.mxu0 0
      %5369 = vmatmul.mubr.bf16.gmra.mrb[0].mxu0 %v5260
      %v5370 = vpop.f32.mrb[0].mxu0
      %v5371 = vadd.f32 %v5225, %v5370
      %v5372 = vpop.f32.mrb[0].mxu0
      %v5373 = vadd.f32 %v5225, %v5372
      %v5374 = vpop.f32.mrb[0].mxu0
      %v5375 = vadd.f32 %v5230, %v5374
      %v5376 = vpop.f32.mrb[0].mxu0
      %v5377 = vadd.f32 %v5230, %v5376
      %5378 = vmatprep.mubr.bf16.mxu0 0
      %5379 = vmatmul.mubr.bf16.gmra.mrb[0].mxu0 %v5263
      %v5380 = vpop.f32.mrb[0].mxu0
      %v5381 = vadd.f32 %v5235, %v5380
      %v5382 = vpop.f32.mrb[0].mxu0
      %v5383 = vadd.f32 %v5235, %v5382
      %v5384 = vpop.f32.mrb[0].mxu0
      %v5385 = vpop.f32.mrb[0].mxu0
      %5386 = vdwg.mxu0
      %5387 = vmatprep.subr.bf16.mxu0 %v5195
      %5388 = vmatpush1.bf16.msra.mxu0 %v5194
      %5389 = vmatprep.subr.bf16.mxu0 %v5203
      %5390 = vmatpush1.bf16.msra.mxu0 %v5202
      %5391 = vmatprep.subr.bf16.mxu0 0
      %5392 = vmatpush1.bf16.msra.mxu0 0
      %5393 = vmatprep.subr.bf16.mxu0 0
      %5394 = vmatpush1.bf16.msra.mxu0 0
      %5395 = vmatprep.subr.bf16.mxu0 0
      %5396 = vmatpush1.bf16.msra.mxu0 0
      %5397 = vmatprep.subr.bf16.mxu0 0
      %5398 = vmatpush1.bf16.msra.mxu0 0
      %5399 = vmatprep.subr.bf16.mxu0 0
      %5400 = vmatpush1.bf16.msra.mxu0 0
      %5401 = vmatprep.subr.bf16.mxu0 0
      %5402 = vmatpush1.bf16.msra.mxu0 0
      %5403 = vmatprep.subr.bf16.mxu0 0
      %5404 = vmatpush1.bf16.msra.mxu0 0
      %5405 = vmatprep.subr.bf16.mxu0 0
      %5406 = vmatpush1.bf16.msra.mxu0 0
      %5407 = vmatprep.subr.bf16.mxu0 0
      %5408 = vmatpush1.bf16.msra.mxu0 0
      %5409 = vmatprep.subr.bf16.mxu0 0
      %5410 = vmatpush1.bf16.msra.mxu0 0
      %5411 = vmatprep.subr.bf16.mxu0 0
      %5412 = vmatpush1.bf16.msra.mxu0 0
      %5413 = vmatprep.subr.bf16.mxu0 0
      %5414 = vmatpush1.bf16.msra.mxu0 0
      %5415 = vmatprep.subr.bf16.mxu0 0
      %5416 = vmatpush1.bf16.msra.mxu0 0
      %5417 = vmatprep.subr.bf16.mxu0 0
      %5418 = vmatpush1.bf16.msra.mxu0 0
      %5419 = vmatprep.mubr.bf16.mxu0 0
      %5420 = vmatmul.mubr.bf16.gmra.mrb[0].mxu0 %v5257
      %v5421 = vpop.f32.mrb[0].mxu0
      %v5422 = vadd.f32 %v5215, %v5421
      %v5423 = vpop.f32.mrb[0].mxu0
      %v5424 = vadd.f32 %v5215, %v5423
      %v5425 = vpop.f32.mrb[0].mxu0
      %v5426 = vadd.f32 %v5220, %v5425
      %v5427 = vpop.f32.mrb[0].mxu0
      %v5428 = vadd.f32 %v5220, %v5427
      %5429 = vmatprep.mubr.bf16.mxu0 0
      %5430 = vmatmul.mubr.bf16.gmra.mrb[0].mxu0 %v5260
      %v5431 = vpop.f32.mrb[0].mxu0
      %v5432 = vadd.f32 %v5225, %v5431
      %v5433 = vpop.f32.mrb[0].mxu0
      %v5434 = vadd.f32 %v5225, %v5433
      %v5435 = vpop.f32.mrb[0].mxu0
      %v5436 = vadd.f32 %v5230, %v5435
      %v5437 = vpop.f32.mrb[0].mxu0
      %v5438 = vadd.f32 %v5230, %v5437
      %5439 = vmatprep.mubr.bf16.mxu0 0
      %5440 = vmatmul.mubr.bf16.gmra.mrb[0].mxu0 %v5263
      %v5441 = vpop.f32.mrb[0].mxu0
      %v5442 = vadd.f32 %v5235, %v5441
      %v5443 = vpop.f32.mrb[0].mxu0
      %v5444 = vadd.f32 %v5235, %v5443
      %v5445 = vpop.f32.mrb[0].mxu0
      %v5446 = vpop.f32.mrb[0].mxu0
      %5447 = vdwg.mxu0
      %5448 = vmatprep.subr.bf16.mxu0 %v5197
      %5449 = vmatpush1.bf16.msra.mxu0 %v5196
      %5450 = vmatprep.subr.bf16.mxu0 %v5205
      %5451 = vmatpush1.bf16.msra.mxu0 %v5204
      %5452 = vmatprep.subr.bf16.mxu0 0
      %5453 = vmatpush1.bf16.msra.mxu0 0
      %5454 = vmatprep.subr.bf16.mxu0 0
      %5455 = vmatpush1.bf16.msra.mxu0 0
      %5456 = vmatprep.subr.bf16.mxu0 0
      %5457 = vmatpush1.bf16.msra.mxu0 0
      %5458 = vmatprep.subr.bf16.mxu0 0
      %5459 = vmatpush1.bf16.msra.mxu0 0
      %5460 = vmatprep.subr.bf16.mxu0 0
      %5461 = vmatpush1.bf16.msra.mxu0 0
      %5462 = vmatprep.subr.bf16.mxu0 0
      %5463 = vmatpush1.bf16.msra.mxu0 0
      %5464 = vmatprep.subr.bf16.mxu0 0
      %5465 = vmatpush1.bf16.msra.mxu0 0
      %5466 = vmatprep.subr.bf16.mxu0 0
      %5467 = vmatpush1.bf16.msra.mxu0 0
      %5468 = vmatprep.subr.bf16.mxu0 0
      %5469 = vmatpush1.bf16.msra.mxu0 0
      %5470 = vmatprep.subr.bf16.mxu0 0
      %5471 = vmatpush1.bf16.msra.mxu0 0
      %5472 = vmatprep.subr.bf16.mxu0 0
      %5473 = vmatpush1.bf16.msra.mxu0 0
      %5474 = vmatprep.subr.bf16.mxu0 0
      %5475 = vmatpush1.bf16.msra.mxu0 0
      %5476 = vmatprep.subr.bf16.mxu0 0
      %5477 = vmatpush1.bf16.msra.mxu0 0
      %5478 = vmatprep.subr.bf16.mxu0 0
      %5479 = vmatpush1.bf16.msra.mxu0 0
      %5480 = vmatprep.mubr.bf16.mxu0 0
      %5481 = vmatmul.mubr.bf16.gmra.mrb[0].mxu0 %v5257
      %v5482 = vpop.f32.mrb[0].mxu0
      %v5483 = vadd.f32 %v5215, %v5482
      %v5484 = vpop.f32.mrb[0].mxu0
      %v5485 = vadd.f32 %v5215, %v5484
      %v5486 = vpop.f32.mrb[0].mxu0
      %v5487 = vadd.f32 %v5220, %v5486
      %v5488 = vpop.f32.mrb[0].mxu0
      %v5489 = vadd.f32 %v5220, %v5488
      %5490 = vmatprep.mubr.bf16.mxu0 0
      %5491 = vmatmul.mubr.bf16.gmra.mrb[0].mxu0 %v5260
      %v5492 = vpop.f32.mrb[0].mxu0
      %v5493 = vadd.f32 %v5225, %v5492
      %v5494 = vpop.f32.mrb[0].mxu0
      %v5495 = vadd.f32 %v5225, %v5494
      %v5496 = vpop.f32.mrb[0].mxu0
      %v5497 = vadd.f32 %v5230, %v5496
      %v5498 = vpop.f32.mrb[0].mxu0
      %v5499 = vadd.f32 %v5230, %v5498
      %5500 = vmatprep.mubr.bf16.mxu0 0
      %5501 = vmatmul.mubr.bf16.gmra.mrb[0].mxu0 %v5263
      %v5502 = vpop.f32.mrb[0].mxu0
      %v5503 = vadd.f32 %v5235, %v5502
      %v5504 = vpop.f32.mrb[0].mxu0
      %v5505 = vadd.f32 %v5235, %v5504
      %v5506 = vpop.f32.mrb[0].mxu0
      %v5507 = vpop.f32.mrb[0].mxu0
      %5508 = vdwg.mxu0
      %v5509 = vmax.f32 %v5320, 0.0
      %v5510 = vmax.f32 %v5322, 0.0
      %v5511 = vmax.f32 %v5381, 0.0
      %v5512 = vmax.f32 %v5383, 0.0
      %v5513 = vmax.f32 %v5442, 0.0
      %v5514 = vmax.f32 %v5444, 0.0
      %v5515 = vmax.f32 %v5503, 0.0
      %v5516 = vmax.f32 %v5505, 0.0
      %vm5517 = vcmp.ne.f32.partialorder %v5320, %v5320
      %vm5518 = vcmp.ne.f32.partialorder %v5322, %v5322
      %vm5519 = vcmp.ne.f32.partialorder %v5381, %v5381
      %vm5520 = vcmp.ne.f32.partialorder %v5383, %v5383
      %vm5521 = vcmp.ne.f32.partialorder %v5442, %v5442
      %vm5522 = vcmp.ne.f32.partialorder %v5444, %v5444
      %vm5523 = vcmp.ne.f32.partialorder %v5503, %v5503
      %vm5524 = vcmp.ne.f32.partialorder %v5505, %v5505
      %v5525 = vadd.f32 %v5320, 0.0
      %v5526 = vadd.f32 %v5322, 0.0
      %v5527 = vadd.f32 %v5381, 0.0
      %v5528 = vadd.f32 %v5383, 0.0
      %v5529 = vadd.f32 %v5442, 0.0
      %v5530 = vadd.f32 %v5444, 0.0
      %v5531 = vadd.f32 %v5503, 0.0
      %v5532 = vadd.f32 %v5505, 0.0
      %v5533 = vand.u32 2147483647, %v5320
      %v5534 = vand.u32 2147483647, %v5322
      %v5535 = vand.u32 2147483647, %v5381
      %v5536 = vand.u32 2147483647, %v5383
      %v5537 = vand.u32 2147483647, %v5442
      %v5538 = vand.u32 2147483647, %v5444
      %v5539 = vand.u32 2147483647, %v5503
      %v5540 = vand.u32 2147483647, %v5505
      %v5541 = vsub.f32 0.0, %v5533
      %v5542 = vsub.f32 0.0, %v5534
      %v5543 = vsub.f32 0.0, %v5535
      %v5544 = vsub.f32 0.0, %v5536
      %v5545 = vsub.f32 0.0, %v5537
      %v5546 = vsub.f32 0.0, %v5538
      %v5547 = vsub.f32 0.0, %v5539
      %v5548 = vsub.f32 0.0, %v5540
      %v5549 = vmul.f32 %v5541, 1.442695
      %v5550 = vpow.pop %v5549
      %v5551 = vmul.f32 %v5542, 1.442695
      %v5552 = vpow.pop %v5551
      %v5553 = vmul.f32 %v5543, 1.442695
      %v5554 = vpow.pop %v5553
      %v5555 = vmul.f32 %v5544, 1.442695
      %v5556 = vpow.pop %v5555
      %v5557 = vmul.f32 %v5545, 1.442695
      %v5558 = vpow.pop %v5557
      %v5559 = vmul.f32 %v5546, 1.442695
      %v5560 = vpow.pop %v5559
      %v5561 = vmul.f32 %v5547, 1.442695
      %v5562 = vpow.pop %v5561
      %v5563 = vmul.f32 %v5548, 1.442695
      %v5564 = vpow.pop %v5563
      %v5565 = vadd.f32 %v5550, 1.0
      %v5566 = vlog2.pop %v5565
      %v5567 = vmul.f32 %v5566, 0.6931472
      %v5568 = vmul.f32 -0.5, %v5550
      %v5569 = vadd.f32 %v5568, 1.0
      %v5570 = vmul.f32 %v5569, %v5550
      %v5571 = vand.u32 2147483647, %v5550
      %vm5572 = vcmp.lt.f32.partialorder %v5571, 0.0004427343
      %v5573 = vsel %vm5572, %v5570, %v5567
      %v5574 = vadd.f32 %v5552, 1.0
      %v5575 = vlog2.pop %v5574
      %v5576 = vmul.f32 %v5575, 0.6931472
      %v5577 = vmul.f32 -0.5, %v5552
      %v5578 = vadd.f32 %v5577, 1.0
      %v5579 = vmul.f32 %v5578, %v5552
      %v5580 = vand.u32 2147483647, %v5552
      %vm5581 = vcmp.lt.f32.partialorder %v5580, 0.0004427343
      %v5582 = vsel %vm5581, %v5579, %v5576
      %v5583 = vadd.f32 %v5554, 1.0
      %v5584 = vlog2.pop %v5583
      %v5585 = vmul.f32 %v5584, 0.6931472
      %v5586 = vmul.f32 -0.5, %v5554
      %v5587 = vadd.f32 %v5586, 1.0
      %v5588 = vmul.f32 %v5587, %v5554
      %v5589 = vand.u32 2147483647, %v5554
      %vm5590 = vcmp.lt.f32.partialorder %v5589, 0.0004427343
      %v5591 = vsel %vm5590, %v5588, %v5585
      %v5592 = vadd.f32 %v5556, 1.0
      %v5593 = vlog2.pop %v5592
      %v5594 = vmul.f32 %v5593, 0.6931472
      %v5595 = vmul.f32 -0.5, %v5556
      %v5596 = vadd.f32 %v5595, 1.0
      %v5597 = vmul.f32 %v5596, %v5556
      %v5598 = vand.u32 2147483647, %v5556
      %vm5599 = vcmp.lt.f32.partialorder %v5598, 0.0004427343
      %v5600 = vsel %vm5599, %v5597, %v5594
      %v5601 = vadd.f32 %v5558, 1.0
      %v5602 = vlog2.pop %v5601
      %v5603 = vmul.f32 %v5602, 0.6931472
      %v5604 = vmul.f32 -0.5, %v5558
      %v5605 = vadd.f32 %v5604, 1.0
      %v5606 = vmul.f32 %v5605, %v5558
      %v5607 = vand.u32 2147483647, %v5558
      %vm5608 = vcmp.lt.f32.partialorder %v5607, 0.0004427343
      %v5609 = vsel %vm5608, %v5606, %v5603
      %v5610 = vadd.f32 %v5560, 1.0
      %v5611 = vlog2.pop %v5610
      %v5612 = vmul.f32 %v5611, 0.6931472
      %v5613 = vmul.f32 -0.5, %v5560
      %v5614 = vadd.f32 %v5613, 1.0
      %v5615 = vmul.f32 %v5614, %v5560
      %v5616 = vand.u32 2147483647, %v5560
      %vm5617 = vcmp.lt.f32.partialorder %v5616, 0.0004427343
      %v5618 = vsel %vm5617, %v5615, %v5612
      %v5619 = vadd.f32 %v5562, 1.0
      %v5620 = vlog2.pop %v5619
      %v5621 = vmul.f32 %v5620, 0.6931472
      %v5622 = vmul.f32 -0.5, %v5562
      %v5623 = vadd.f32 %v5622, 1.0
      %v5624 = vmul.f32 %v5623, %v5562
      %v5625 = vand.u32 2147483647, %v5562
      %vm5626 = vcmp.lt.f32.partialorder %v5625, 0.0004427343
      %v5627 = vsel %vm5626, %v5624, %v5621
      %v5628 = vadd.f32 %v5564, 1.0
      %v5629 = vlog2.pop %v5628
      %v5630 = vmul.f32 %v5629, 0.6931472
      %v5631 = vmul.f32 -0.5, %v5564
      %v5632 = vadd.f32 %v5631, 1.0
      %v5633 = vmul.f32 %v5632, %v5564
      %v5634 = vand.u32 2147483647, %v5564
      %vm5635 = vcmp.lt.f32.partialorder %v5634, 0.0004427343
      %v5636 = vsel %vm5635, %v5633, %v5630
      %v5637 = vadd.f32 %v5509, %v5573
      %v5638 = vadd.f32 %v5510, %v5582
      %v5639 = vadd.f32 %v5511, %v5591
      %v5640 = vadd.f32 %v5512, %v5600
      %v5641 = vadd.f32 %v5513, %v5609
      %v5642 = vadd.f32 %v5514, %v5618
      %v5643 = vadd.f32 %v5515, %v5627
      %v5644 = vadd.f32 %v5516, %v5636
      %v5645 = vsel %vm5517, %v5525, %v5637
      %v5646 = vsel %vm5518, %v5526, %v5638
      %v5647 = vsel %vm5519, %v5527, %v5639
      %v5648 = vsel %vm5520, %v5528, %v5640
      %v5649 = vsel %vm5521, %v5529, %v5641
      %v5650 = vsel %vm5522, %v5530, %v5642
      %v5651 = vsel %vm5523, %v5531, %v5643
      %v5652 = vsel %vm5524, %v5532, %v5644
      %v5661 = vcombine.low %v5645, %v5646
      %v5662 = vcombine.low %v5647, %v5648
      %v5663 = vcombine.low %v5649, %v5650
      %v5664 = vcombine.low %v5651, %v5652
      %v5666 = vunpack.c.l.s4 1966171168
      %v5667 = vunpack.c.0.s8 %v5666
      %v5668 = vlaneseq
      %v5669 = vshrl.u32 %v5668, 7
      %v5670 = vsub.s32 %v5667, %v5669
      %v5671 = vrot.slane %v5661, %v5670
      %v5673 = vunpack.c.l.s4 1966171168
      %v5674 = vunpack.c.0.s8 %v5673
      %v5675 = vlaneseq
      %v5676 = vshrl.u32 %v5675, 7
      %v5677 = vsub.s32 %v5674, %v5676
      %v5678 = vrot.slane %v5662, %v5677
      %v5680 = vunpack.c.l.s4 1966171168
      %v5681 = vunpack.c.0.s8 %v5680
      %v5682 = vlaneseq
      %v5683 = vshrl.u32 %v5682, 7
      %v5684 = vsub.s32 %v5681, %v5683
      %v5685 = vrot.slane %v5663, %v5684
      %v5687 = vunpack.c.l.s4 1966171168
      %v5688 = vunpack.c.0.s8 %v5687
      %v5689 = vlaneseq
      %v5690 = vshrl.u32 %v5689, 7
      %v5691 = vsub.s32 %v5688, %v5690
      %v5692 = vrot.slane %v5664, %v5691
      %v5693 = vcombine.low %v5671, %v5678
      %v5694 = vcombine.low %v5685, %v5692
      %v5696 = vunpack.c.l.s4 1966171168
      %v5697 = vunpack.c.0.s8 %v5696
      %v5698 = vlaneseq
      %v5699 = vshrl.u32 %v5698, 7
      %v5700 = vsub.s32 %v5697, %v5699
      %v5701 = vrot.slane %v5693, %v5700
      %v5703 = vunpack.c.l.s4 1966171168
      %v5704 = vunpack.c.0.s8 %v5703
      %v5705 = vlaneseq
      %v5706 = vshrl.u32 %v5705, 7
      %v5707 = vsub.s32 %v5704, %v5706
      %v5708 = vrot.slane %v5694, %v5707
      %v5709 = vcombine.low %v5701, %v5708
      %s5711 = scalar_lea.vmem %s388, 3
      %5712 = vst [vmem:[%s5711] ss:$4 sm:$0xff] %v5709
      %v5713 = vadd.f32 %v5300, %v664
      %v5714 = vadd.f32 %v5302, %v666
      %v5715 = vadd.f32 %v5361, %v807
      %v5716 = vadd.f32 %v5363, %v809
      %v5717 = vadd.f32 %v5422, %v950
      %v5718 = vadd.f32 %v5424, %v952
      %v5719 = vadd.f32 %v5483, %v1093
      %v5720 = vadd.f32 %v5485, %v1095
      %v5721 = vadd.f32 %v5304, %v670
      %v5722 = vadd.f32 %v5306, %v672
      %v5723 = vadd.f32 %v5365, %v813
      %v5724 = vadd.f32 %v5367, %v815
      %v5725 = vadd.f32 %v5426, %v956
      %v5726 = vadd.f32 %v5428, %v958
      %v5727 = vadd.f32 %v5487, %v1099
      %v5728 = vadd.f32 %v5489, %v1101
      %v5729 = vadd.f32 %v5310, %v676
      %v5730 = vadd.f32 %v5312, %v678
      %v5731 = vadd.f32 %v5371, %v819
      %v5732 = vadd.f32 %v5373, %v821
      %v5733 = vadd.f32 %v5432, %v962
      %v5734 = vadd.f32 %v5434, %v964
      %v5735 = vadd.f32 %v5493, %v1105
      %v5736 = vadd.f32 %v5495, %v1107
      %v5737 = vadd.f32 %v5314, %v682
      %v5738 = vadd.f32 %v5316, %v684
      %v5739 = vadd.f32 %v5375, %v825
      %v5740 = vadd.f32 %v5377, %v827
      %v5741 = vadd.f32 %v5436, %v968
      %v5742 = vadd.f32 %v5438, %v970
      %v5743 = vadd.f32 %v5497, %v1111
      %v5744 = vadd.f32 %v5499, %v1113
      %v5745 = vld [vmem:[%s8] sm:$0xf]
      %v5746 = vld [vmem:[%s8 + $0x4] sm:$0xf]
      %v5747 = vld [vmem:[%s8 + $0x8] sm:$0xf]
      %v5748 = vld [vmem:[%s8 + $0xc] sm:$0xf]
      %v5749 = vand.u32 2147483647, %v688
      %vm5750 = vcmp.le.f32.partialorder %v5749, 0.7853982
      %vm5751 = vcmp.lt.s32.totalorder %v688, 0
      %v5752 = vand.u32 %v688, 2139095040
      %v5753 = vshrl.u32 %v5752, 23
      %v5754 = vsub.s32 %v5753, 127
      %v5755 = vand.u32 2147483647, %v688
      %v5756 = vand.u32 %v5755, 8388607
      %v5757 = vor.u32 %v5756, 8388608
      %v5758 = vsub.s32 0, %v5757
      %v5759 = vadd.s32 %v5754, 1
      %vm5760 = vcmp.gt.s32.totalorder %v5759, 0
      %v5761 = vsel %vm5760, %v5759, 0
      %v5762 = vshrl.u32 %v5761, 5
      %v5763 = vand.u32 %v5761, 31
      %v5764 = vsub.s32 32, %v5763
      %v5765 = vshrl.u32 683565275, %v5764
      %v5766 = vshll.u32 683565275, %v5763
      %v5767 = vshrl.u32 2475754826, %v5764
      %v5768 = vor.u32 %v5766, %v5767
      %v5769 = vshll.u32 2475754826, %v5763
      %v5770 = vshrl.u32 2131351028, %v5764
      %v5771 = vor.u32 %v5769, %v5770
      %v5772 = vshll.u32 2131351028, %v5763
      %v5773 = vshrl.u32 2102212464, %v5764
      %v5774 = vor.u32 %v5772, %v5773
      %v5775 = vshll.u32 2102212464, %v5763
      %v5776 = vshrl.u32 920167782, %v5764
      %v5777 = vor.u32 %v5775, %v5776
      %v5778 = vshll.u32 920167782, %v5763
      %v5779 = vshrl.u32 1326507024, %v5764
      %v5780 = vor.u32 %v5778, %v5779
      %vm5781 = vcmp.lt.s32.totalorder %v5762, 1
      %vm5782 = vcmp.lt.s32.totalorder %v5762, 2
      %vm5783 = vcmp.lt.s32.totalorder %v5762, 3
      %vm5784 = vcmp.lt.s32.totalorder %v5762, 4
      %v5785 = vsel %vm5781, %v5765, %v5768
      %v5786 = vsel %vm5784, %v5774, 2102212464
      %v5787 = vsel %vm5783, %v5771, %v5786
      %v5788 = vsel %vm5782, %v5785, %v5787
      %v5789 = vsel %vm5781, %v5768, %v5771
      %v5790 = vsel %vm5784, %v5777, 920167782
      %v5791 = vsel %vm5783, %v5774, %v5790
      %v5792 = vsel %vm5782, %v5789, %v5791
      %v5793 = vsel %vm5781, %v5771, %v5774
      %v5794 = vsel %vm5784, %v5780, 1326507024
      %v5795 = vsel %vm5783, %v5777, %v5794
      %v5796 = vsel %vm5782, %v5793, %v5795
      %v5797 = vshll.u32 %v5757, 8
      %v5798 = vmul.u32.u64.compose %v5797, %v5796
      %v5799 = vextract.low.u32 %v5798
      %v5800 = vextract.high.u32 %v5798
      %v5801 = vmul.u32.u64.compose %v5797, %v5792
      %v5802 = vextract.low.u32 %v5801
      %v5803 = vextract.high.u32 %v5801
      %v5804 = vmul.u32 %v5797, %v5788
      %v5805 = vadd.s32 %v5800, %v5802
      %vm5806 = vc.u32 %v5800, %v5802
      %v5807 = vadd.s32 %v5803, 1
      %v5808 = vsel %vm5806, %v5807, %v5803
      %v5809 = vadd.s32 %v5804, %v5808
      %v5810 = vadd.s32 %v5809, 536870912
      %v5811 = vshrl.u32 %v5810, 30
      %v5812 = vshll.u32 %v5811, 30
      %v5813 = vsub.s32 %v5809, %v5812
      %vm5814 = vcmp.lt.s32.totalorder %v5813, 0
      %v5815 = vsub.s32 0, %v5813
      %v5816 = vsel %vm5814, %v5815, %v5813
      %v5817 = vclz %v5816
      %v5818 = vsub.s32 %v5817, 2
      %vm5819 = vcmp.gt.s32.totalorder 0, %v5818
      %v5820 = vsel %vm5819, 0, %v5818
      %v5821 = vsub.s32 32, %v5820
      %v5822 = vshll.u32 %v5813, %v5820
      %v5823 = vshrl.u32 %v5805, %v5821
      %v5824 = vor.u32 %v5822, %v5823
      %v5825 = vsub.s32 4294967266, %v5820
      %v5826 = vadd.s32 %v5825, 127
      %v5827 = vshll.u32 %v5826, 23
      %v5828 = vor.u32 4788187, %v5827
      %v5829 = vand.u32 2147483647, %v5828
      %v5831 = vcvt.s32.f32 %v5824
      %v5832 = vmul.f32 %v5831, %v5829
      %v5833 = vxor.u32 %v5832, 2147483648
      %v5834 = vsel %vm5751, %v5833, %v5832
      %v5835 = vsub.s32 4, %v5811
      %v5836 = vsel %vm5751, %v5835, %v5811
      %v5837 = vsel %vm5750, %v688, %v5834
      %v5838 = vsel %vm5750, 0, %v5836
      %v5839 = vcosq.f32.pop %v5837
      %v5840 = vsinq.f32.pop %v5837
      %vm5841 = vweird.f32 %v688
      %v5842 = vadd.s32 %v5838, 3
      %v5843 = vand.u32 %v5842, 3
      %vm5844 = vcmp.lt.s32.totalorder %v5843, 2
      %vm5845 = vcmp.eq.s32.totalorder %v5843, 0
      %v5846 = vxor.u32 %v5840, 2147483648
      %v5847 = vsel %vm5845, %v5839, %v5846
      %vm5848 = vcmp.eq.s32.totalorder %v5843, 2
      %v5849 = vxor.u32 %v5839, 2147483648
      %v5850 = vsel %vm5848, %v5849, %v5840
      %v5851 = vsel %vm5844, %v5847, %v5850
      %v5852 = vsel %vm5841, nan, %v5851
      %v5853 = vand.u32 2147483647, %v690
      %vm5854 = vcmp.le.f32.partialorder %v5853, 0.7853982
      %vm5855 = vcmp.lt.s32.totalorder %v690, 0
      %v5856 = vand.u32 %v690, 2139095040
      %v5857 = vshrl.u32 %v5856, 23
      %v5858 = vsub.s32 %v5857, 127
      %v5859 = vand.u32 2147483647, %v690
      %v5860 = vand.u32 %v5859, 8388607
      %v5861 = vor.u32 %v5860, 8388608
      %v5862 = vsub.s32 0, %v5861
      %v5863 = vadd.s32 %v5858, 1
      %vm5864 = vcmp.gt.s32.totalorder %v5863, 0
      %v5865 = vsel %vm5864, %v5863, 0
      %v5866 = vshrl.u32 %v5865, 5
      %v5867 = vand.u32 %v5865, 31
      %v5868 = vsub.s32 32, %v5867
      %v5869 = vshrl.u32 683565275, %v5868
      %v5870 = vshll.u32 683565275, %v5867
      %v5871 = vshrl.u32 2475754826, %v5868
      %v5872 = vor.u32 %v5870, %v5871
      %v5873 = vshll.u32 2475754826, %v5867
      %v5874 = vshrl.u32 2131351028, %v5868
      %v5875 = vor.u32 %v5873, %v5874
      %v5876 = vshll.u32 2131351028, %v5867
      %v5877 = vshrl.u32 2102212464, %v5868
      %v5878 = vor.u32 %v5876, %v5877
      %v5879 = vshll.u32 2102212464, %v5867
      %v5880 = vshrl.u32 920167782, %v5868
      %v5881 = vor.u32 %v5879, %v5880
      %v5882 = vshll.u32 920167782, %v5867
      %v5883 = vshrl.u32 1326507024, %v5868
      %v5884 = vor.u32 %v5882, %v5883
      %vm5885 = vcmp.lt.s32.totalorder %v5866, 1
      %vm5886 = vcmp.lt.s32.totalorder %v5866, 2
      %vm5887 = vcmp.lt.s32.totalorder %v5866, 3
      %vm5888 = vcmp.lt.s32.totalorder %v5866, 4
      %v5889 = vsel %vm5885, %v5869, %v5872
      %v5890 = vsel %vm5888, %v5878, 2102212464
      %v5891 = vsel %vm5887, %v5875, %v5890
      %v5892 = vsel %vm5886, %v5889, %v5891
      %v5893 = vsel %vm5885, %v5872, %v5875
      %v5894 = vsel %vm5888, %v5881, 920167782
      %v5895 = vsel %vm5887, %v5878, %v5894
      %v5896 = vsel %vm5886, %v5893, %v5895
      %v5897 = vsel %vm5885, %v5875, %v5878
      %v5898 = vsel %vm5888, %v5884, 1326507024
      %v5899 = vsel %vm5887, %v5881, %v5898
      %v5900 = vsel %vm5886, %v5897, %v5899
      %v5901 = vshll.u32 %v5861, 8
      %v5902 = vmul.u32.u64.compose %v5901, %v5900
      %v5903 = vextract.low.u32 %v5902
      %v5904 = vextract.high.u32 %v5902
      %v5905 = vmul.u32.u64.compose %v5901, %v5896
      %v5906 = vextract.low.u32 %v5905
      %v5907 = vextract.high.u32 %v5905
      %v5908 = vmul.u32 %v5901, %v5892
      %v5909 = vadd.s32 %v5904, %v5906
      %vm5910 = vc.u32 %v5904, %v5906
      %v5911 = vadd.s32 %v5907, 1
      %v5912 = vsel %vm5910, %v5911, %v5907
      %v5913 = vadd.s32 %v5908, %v5912
      %v5914 = vadd.s32 %v5913, 536870912
      %v5915 = vshrl.u32 %v5914, 30
      %v5916 = vshll.u32 %v5915, 30
      %v5917 = vsub.s32 %v5913, %v5916
      %vm5918 = vcmp.lt.s32.totalorder %v5917, 0
      %v5919 = vsub.s32 0, %v5917
      %v5920 = vsel %vm5918, %v5919, %v5917
      %v5921 = vclz %v5920
      %v5922 = vsub.s32 %v5921, 2
      %vm5923 = vcmp.gt.s32.totalorder 0, %v5922
      %v5924 = vsel %vm5923, 0, %v5922
      %v5925 = vsub.s32 32, %v5924
      %v5926 = vshll.u32 %v5917, %v5924
      %v5927 = vshrl.u32 %v5909, %v5925
      %v5928 = vor.u32 %v5926, %v5927
      %v5929 = vsub.s32 4294967266, %v5924
      %v5930 = vadd.s32 %v5929, 127
      %v5931 = vshll.u32 %v5930, 23
      %v5932 = vor.u32 4788187, %v5931
      %v5933 = vand.u32 2147483647, %v5932
      %v5935 = vcvt.s32.f32 %v5928
      %v5936 = vmul.f32 %v5935, %v5933
      %v5937 = vxor.u32 %v5936, 2147483648
      %v5938 = vsel %vm5855, %v5937, %v5936
      %v5939 = vsub.s32 4, %v5915
      %v5940 = vsel %vm5855, %v5939, %v5915
      %v5941 = vsel %vm5854, %v690, %v5938
      %v5942 = vsel %vm5854, 0, %v5940
      %v5943 = vcosq.f32.pop %v5941
      %v5944 = vsinq.f32.pop %v5941
      %vm5945 = vweird.f32 %v690
      %v5946 = vadd.s32 %v5942, 3
      %v5947 = vand.u32 %v5946, 3
      %vm5948 = vcmp.lt.s32.totalorder %v5947, 2
      %vm5949 = vcmp.eq.s32.totalorder %v5947, 0
      %v5950 = vxor.u32 %v5944, 2147483648
      %v5951 = vsel %vm5949, %v5943, %v5950
      %vm5952 = vcmp.eq.s32.totalorder %v5947, 2
      %v5953 = vxor.u32 %v5943, 2147483648
      %v5954 = vsel %vm5952, %v5953, %v5944
      %v5955 = vsel %vm5948, %v5951, %v5954
      %v5956 = vsel %vm5945, nan, %v5955
      %v5957 = vand.u32 2147483647, %v831
      %vm5958 = vcmp.le.f32.partialorder %v5957, 0.7853982
      %vm5959 = vcmp.lt.s32.totalorder %v831, 0
      %v5960 = vand.u32 %v831, 2139095040
      %v5961 = vshrl.u32 %v5960, 23
      %v5962 = vsub.s32 %v5961, 127
      %v5963 = vand.u32 2147483647, %v831
      %v5964 = vand.u32 %v5963, 8388607
      %v5965 = vor.u32 %v5964, 8388608
      %v5966 = vsub.s32 0, %v5965
      %v5967 = vadd.s32 %v5962, 1
      %vm5968 = vcmp.gt.s32.totalorder %v5967, 0
      %v5969 = vsel %vm5968, %v5967, 0
      %v5970 = vshrl.u32 %v5969, 5
      %v5971 = vand.u32 %v5969, 31
      %v5972 = vsub.s32 32, %v5971
      %v5973 = vshrl.u32 683565275, %v5972
      %v5974 = vshll.u32 683565275, %v5971
      %v5975 = vshrl.u32 2475754826, %v5972
      %v5976 = vor.u32 %v5974, %v5975
      %v5977 = vshll.u32 2475754826, %v5971
      %v5978 = vshrl.u32 2131351028, %v5972
      %v5979 = vor.u32 %v5977, %v5978
      %v5980 = vshll.u32 2131351028, %v5971
      %v5981 = vshrl.u32 2102212464, %v5972
      %v5982 = vor.u32 %v5980, %v5981
      %v5983 = vshll.u32 2102212464, %v5971
      %v5984 = vshrl.u32 920167782, %v5972
      %v5985 = vor.u32 %v5983, %v5984
      %v5986 = vshll.u32 920167782, %v5971
      %v5987 = vshrl.u32 1326507024, %v5972
      %v5988 = vor.u32 %v5986, %v5987
      %vm5989 = vcmp.lt.s32.totalorder %v5970, 1
      %vm5990 = vcmp.lt.s32.totalorder %v5970, 2
      %vm5991 = vcmp.lt.s32.totalorder %v5970, 3
      %vm5992 = vcmp.lt.s32.totalorder %v5970, 4
      %v5993 = vsel %vm5989, %v5973, %v5976
      %v5994 = vsel %vm5992, %v5982, 2102212464
      %v5995 = vsel %vm5991, %v5979, %v5994
      %v5996 = vsel %vm5990, %v5993, %v5995
      %v5997 = vsel %vm5989, %v5976, %v5979
      %v5998 = vsel %vm5992, %v5985, 920167782
      %v5999 = vsel %vm5991, %v5982, %v5998
      %v6000 = vsel %vm5990, %v5997, %v5999
      %v6001 = vsel %vm5989, %v5979, %v5982
      %v6002 = vsel %vm5992, %v5988, 1326507024
      %v6003 = vsel %vm5991, %v5985, %v6002
      %v6004 = vsel %vm5990, %v6001, %v6003
      %v6005 = vshll.u32 %v5965, 8
      %v6006 = vmul.u32.u64.compose %v6005, %v6004
      %v6007 = vextract.low.u32 %v6006
      %v6008 = vextract.high.u32 %v6006
      %v6009 = vmul.u32.u64.compose %v6005, %v6000
      %v6010 = vextract.low.u32 %v6009
      %v6011 = vextract.high.u32 %v6009
      %v6012 = vmul.u32 %v6005, %v5996
      %v6013 = vadd.s32 %v6008, %v6010
      %vm6014 = vc.u32 %v6008, %v6010
      %v6015 = vadd.s32 %v6011, 1
      %v6016 = vsel %vm6014, %v6015, %v6011
      %v6017 = vadd.s32 %v6012, %v6016
      %v6018 = vadd.s32 %v6017, 536870912
      %v6019 = vshrl.u32 %v6018, 30
      %v6020 = vshll.u32 %v6019, 30
      %v6021 = vsub.s32 %v6017, %v6020
      %vm6022 = vcmp.lt.s32.totalorder %v6021, 0
      %v6023 = vsub.s32 0, %v6021
      %v6024 = vsel %vm6022, %v6023, %v6021
      %v6025 = vclz %v6024
      %v6026 = vsub.s32 %v6025, 2
      %vm6027 = vcmp.gt.s32.totalorder 0, %v6026
      %v6028 = vsel %vm6027, 0, %v6026
      %v6029 = vsub.s32 32, %v6028
      %v6030 = vshll.u32 %v6021, %v6028
      %v6031 = vshrl.u32 %v6013, %v6029
      %v6032 = vor.u32 %v6030, %v6031
      %v6033 = vsub.s32 4294967266, %v6028
      %v6034 = vadd.s32 %v6033, 127
      %v6035 = vshll.u32 %v6034, 23
      %v6036 = vor.u32 4788187, %v6035
      %v6037 = vand.u32 2147483647, %v6036
      %v6039 = vcvt.s32.f32 %v6032
      %v6040 = vmul.f32 %v6039, %v6037
      %v6041 = vxor.u32 %v6040, 2147483648
      %v6042 = vsel %vm5959, %v6041, %v6040
      %v6043 = vsub.s32 4, %v6019
      %v6044 = vsel %vm5959, %v6043, %v6019
      %v6045 = vsel %vm5958, %v831, %v6042
      %v6046 = vsel %vm5958, 0, %v6044
      %v6047 = vcosq.f32.pop %v6045
      %v6048 = vsinq.f32.pop %v6045
      %vm6049 = vweird.f32 %v831
      %v6050 = vadd.s32 %v6046, 3
      %v6051 = vand.u32 %v6050, 3
      %vm6052 = vcmp.lt.s32.totalorder %v6051, 2
      %vm6053 = vcmp.eq.s32.totalorder %v6051, 0
      %v6054 = vxor.u32 %v6048, 2147483648
      %v6055 = vsel %vm6053, %v6047, %v6054
      %vm6056 = vcmp.eq.s32.totalorder %v6051, 2
      %v6057 = vxor.u32 %v6047, 2147483648
      %v6058 = vsel %vm6056, %v6057, %v6048
      %v6059 = vsel %vm6052, %v6055, %v6058
      %v6060 = vsel %vm6049, nan, %v6059
      %v6061 = vand.u32 2147483647, %v833
      %vm6062 = vcmp.le.f32.partialorder %v6061, 0.7853982
      %vm6063 = vcmp.lt.s32.totalorder %v833, 0
      %v6064 = vand.u32 %v833, 2139095040
      %v6065 = vshrl.u32 %v6064, 23
      %v6066 = vsub.s32 %v6065, 127
      %v6067 = vand.u32 2147483647, %v833
      %v6068 = vand.u32 %v6067, 8388607
      %v6069 = vor.u32 %v6068, 8388608
      %v6070 = vsub.s32 0, %v6069
      %v6071 = vadd.s32 %v6066, 1
      %vm6072 = vcmp.gt.s32.totalorder %v6071, 0
      %v6073 = vsel %vm6072, %v6071, 0
      %v6074 = vshrl.u32 %v6073, 5
      %v6075 = vand.u32 %v6073, 31
      %v6076 = vsub.s32 32, %v6075
      %v6077 = vshrl.u32 683565275, %v6076
      %v6078 = vshll.u32 683565275, %v6075
      %v6079 = vshrl.u32 2475754826, %v6076
      %v6080 = vor.u32 %v6078, %v6079
      %v6081 = vshll.u32 2475754826, %v6075
      %v6082 = vshrl.u32 2131351028, %v6076
      %v6083 = vor.u32 %v6081, %v6082
      %v6084 = vshll.u32 2131351028, %v6075
      %v6085 = vshrl.u32 2102212464, %v6076
      %v6086 = vor.u32 %v6084, %v6085
      %v6087 = vshll.u32 2102212464, %v6075
      %v6088 = vshrl.u32 920167782, %v6076
      %v6089 = vor.u32 %v6087, %v6088
      %v6090 = vshll.u32 920167782, %v6075
      %v6091 = vshrl.u32 1326507024, %v6076
      %v6092 = vor.u32 %v6090, %v6091
      %vm6093 = vcmp.lt.s32.totalorder %v6074, 1
      %vm6094 = vcmp.lt.s32.totalorder %v6074, 2
      %vm6095 = vcmp.lt.s32.totalorder %v6074, 3
      %vm6096 = vcmp.lt.s32.totalorder %v6074, 4
      %v6097 = vsel %vm6093, %v6077, %v6080
      %v6098 = vsel %vm6096, %v6086, 2102212464
      %v6099 = vsel %vm6095, %v6083, %v6098
      %v6100 = vsel %vm6094, %v6097, %v6099
      %v6101 = vsel %vm6093, %v6080, %v6083
      %v6102 = vsel %vm6096, %v6089, 920167782
      %v6103 = vsel %vm6095, %v6086, %v6102
      %v6104 = vsel %vm6094, %v6101, %v6103
      %v6105 = vsel %vm6093, %v6083, %v6086
      %v6106 = vsel %vm6096, %v6092, 1326507024
      %v6107 = vsel %vm6095, %v6089, %v6106
      %v6108 = vsel %vm6094, %v6105, %v6107
      %v6109 = vshll.u32 %v6069, 8
      %v6110 = vmul.u32.u64.compose %v6109, %v6108
      %v6111 = vextract.low.u32 %v6110
      %v6112 = vextract.high.u32 %v6110
      %v6113 = vmul.u32.u64.compose %v6109, %v6104
      %v6114 = vextract.low.u32 %v6113
      %v6115 = vextract.high.u32 %v6113
      %v6116 = vmul.u32 %v6109, %v6100
      %v6117 = vadd.s32 %v6112, %v6114
      %vm6118 = vc.u32 %v6112, %v6114
      %v6119 = vadd.s32 %v6115, 1
      %v6120 = vsel %vm6118, %v6119, %v6115
      %v6121 = vadd.s32 %v6116, %v6120
      %v6122 = vadd.s32 %v6121, 536870912
      %v6123 = vshrl.u32 %v6122, 30
      %v6124 = vshll.u32 %v6123, 30
      %v6125 = vsub.s32 %v6121, %v6124
      %vm6126 = vcmp.lt.s32.totalorder %v6125, 0
      %v6127 = vsub.s32 0, %v6125
      %v6128 = vsel %vm6126, %v6127, %v6125
      %v6129 = vclz %v6128
      %v6130 = vsub.s32 %v6129, 2
      %vm6131 = vcmp.gt.s32.totalorder 0, %v6130
      %v6132 = vsel %vm6131, 0, %v6130
      %v6133 = vsub.s32 32, %v6132
      %v6134 = vshll.u32 %v6125, %v6132
      %v6135 = vshrl.u32 %v6117, %v6133
      %v6136 = vor.u32 %v6134, %v6135
      %v6137 = vsub.s32 4294967266, %v6132
      %v6138 = vadd.s32 %v6137, 127
      %v6139 = vshll.u32 %v6138, 23
      %v6140 = vor.u32 4788187, %v6139
      %v6141 = vand.u32 2147483647, %v6140
      %v6143 = vcvt.s32.f32 %v6136
      %v6144 = vmul.f32 %v6143, %v6141
      %v6145 = vxor.u32 %v6144, 2147483648
      %v6146 = vsel %vm6063, %v6145, %v6144
      %v6147 = vsub.s32 4, %v6123
      %v6148 = vsel %vm6063, %v6147, %v6123
      %v6149 = vsel %vm6062, %v833, %v6146
      %v6150 = vsel %vm6062, 0, %v6148
      %v6151 = vcosq.f32.pop %v6149
      %v6152 = vsinq.f32.pop %v6149
      %vm6153 = vweird.f32 %v833
      %v6154 = vadd.s32 %v6150, 3
      %v6155 = vand.u32 %v6154, 3
      %vm6156 = vcmp.lt.s32.totalorder %v6155, 2
      %vm6157 = vcmp.eq.s32.totalorder %v6155, 0
      %v6158 = vxor.u32 %v6152, 2147483648
      %v6159 = vsel %vm6157, %v6151, %v6158
      %vm6160 = vcmp.eq.s32.totalorder %v6155, 2
      %v6161 = vxor.u32 %v6151, 2147483648
      %v6162 = vsel %vm6160, %v6161, %v6152
      %v6163 = vsel %vm6156, %v6159, %v6162
      %v6164 = vsel %vm6153, nan, %v6163
      %v6165 = vand.u32 2147483647, %v974
      %vm6166 = vcmp.le.f32.partialorder %v6165, 0.7853982
      %vm6167 = vcmp.lt.s32.totalorder %v974, 0
      %v6168 = vand.u32 %v974, 2139095040
      %v6169 = vshrl.u32 %v6168, 23
      %v6170 = vsub.s32 %v6169, 127
      %v6171 = vand.u32 2147483647, %v974
      %v6172 = vand.u32 %v6171, 8388607
      %v6173 = vor.u32 %v6172, 8388608
      %v6174 = vsub.s32 0, %v6173
      %v6175 = vadd.s32 %v6170, 1
      %vm6176 = vcmp.gt.s32.totalorder %v6175, 0
      %v6177 = vsel %vm6176, %v6175, 0
      %v6178 = vshrl.u32 %v6177, 5
      %v6179 = vand.u32 %v6177, 31
      %v6180 = vsub.s32 32, %v6179
      %v6181 = vshrl.u32 683565275, %v6180
      %v6182 = vshll.u32 683565275, %v6179
      %v6183 = vshrl.u32 2475754826, %v6180
      %v6184 = vor.u32 %v6182, %v6183
      %v6185 = vshll.u32 2475754826, %v6179
      %v6186 = vshrl.u32 2131351028, %v6180
      %v6187 = vor.u32 %v6185, %v6186
      %v6188 = vshll.u32 2131351028, %v6179
      %v6189 = vshrl.u32 2102212464, %v6180
      %v6190 = vor.u32 %v6188, %v6189
      %v6191 = vshll.u32 2102212464, %v6179
      %v6192 = vshrl.u32 920167782, %v6180
      %v6193 = vor.u32 %v6191, %v6192
      %v6194 = vshll.u32 920167782, %v6179
      %v6195 = vshrl.u32 1326507024, %v6180
      %v6196 = vor.u32 %v6194, %v6195
      %vm6197 = vcmp.lt.s32.totalorder %v6178, 1
      %vm6198 = vcmp.lt.s32.totalorder %v6178, 2
      %vm6199 = vcmp.lt.s32.totalorder %v6178, 3
      %vm6200 = vcmp.lt.s32.totalorder %v6178, 4
      %v6201 = vsel %vm6197, %v6181, %v6184
      %v6202 = vsel %vm6200, %v6190, 2102212464
      %v6203 = vsel %vm6199, %v6187, %v6202
      %v6204 = vsel %vm6198, %v6201, %v6203
      %v6205 = vsel %vm6197, %v6184, %v6187
      %v6206 = vsel %vm6200, %v6193, 920167782
      %v6207 = vsel %vm6199, %v6190, %v6206
      %v6208 = vsel %vm6198, %v6205, %v6207
      %v6209 = vsel %vm6197, %v6187, %v6190
      %v6210 = vsel %vm6200, %v6196, 1326507024
      %v6211 = vsel %vm6199, %v6193, %v6210
      %v6212 = vsel %vm6198, %v6209, %v6211
      %v6213 = vshll.u32 %v6173, 8
      %v6214 = vmul.u32.u64.compose %v6213, %v6212
      %v6215 = vextract.low.u32 %v6214
      %v6216 = vextract.high.u32 %v6214
      %v6217 = vmul.u32.u64.compose %v6213, %v6208
      %v6218 = vextract.low.u32 %v6217
      %v6219 = vextract.high.u32 %v6217
      %v6220 = vmul.u32 %v6213, %v6204
      %v6221 = vadd.s32 %v6216, %v6218
      %vm6222 = vc.u32 %v6216, %v6218
      %v6223 = vadd.s32 %v6219, 1
      %v6224 = vsel %vm6222, %v6223, %v6219
      %v6225 = vadd.s32 %v6220, %v6224
      %v6226 = vadd.s32 %v6225, 536870912
      %v6227 = vshrl.u32 %v6226, 30
      %v6228 = vshll.u32 %v6227, 30
      %v6229 = vsub.s32 %v6225, %v6228
      %vm6230 = vcmp.lt.s32.totalorder %v6229, 0
      %v6231 = vsub.s32 0, %v6229
      %v6232 = vsel %vm6230, %v6231, %v6229
      %v6233 = vclz %v6232
      %v6234 = vsub.s32 %v6233, 2
      %vm6235 = vcmp.gt.s32.totalorder 0, %v6234
      %v6236 = vsel %vm6235, 0, %v6234
      %v6237 = vsub.s32 32, %v6236
      %v6238 = vshll.u32 %v6229, %v6236
      %v6239 = vshrl.u32 %v6221, %v6237
      %v6240 = vor.u32 %v6238, %v6239
      %v6241 = vsub.s32 4294967266, %v6236
      %v6242 = vadd.s32 %v6241, 127
      %v6243 = vshll.u32 %v6242, 23
      %v6244 = vor.u32 4788187, %v6243
      %v6245 = vand.u32 2147483647, %v6244
      %v6247 = vcvt.s32.f32 %v6240
      %v6248 = vmul.f32 %v6247, %v6245
      %v6249 = vxor.u32 %v6248, 2147483648
      %v6250 = vsel %vm6167, %v6249, %v6248
      %v6251 = vsub.s32 4, %v6227
      %v6252 = vsel %vm6167, %v6251, %v6227
      %v6253 = vsel %vm6166, %v974, %v6250
      %v6254 = vsel %vm6166, 0, %v6252
      %v6255 = vcosq.f32.pop %v6253
      %v6256 = vsinq.f32.pop %v6253
      %vm6257 = vweird.f32 %v974
      %v6258 = vadd.s32 %v6254, 3
      %v6259 = vand.u32 %v6258, 3
      %vm6260 = vcmp.lt.s32.totalorder %v6259, 2
      %vm6261 = vcmp.eq.s32.totalorder %v6259, 0
      %v6262 = vxor.u32 %v6256, 2147483648
      %v6263 = vsel %vm6261, %v6255, %v6262
      %vm6264 = vcmp.eq.s32.totalorder %v6259, 2
      %v6265 = vxor.u32 %v6255, 2147483648
      %v6266 = vsel %vm6264, %v6265, %v6256
      %v6267 = vsel %vm6260, %v6263, %v6266
      %v6268 = vsel %vm6257, nan, %v6267
      %v6269 = vand.u32 2147483647, %v976
      %vm6270 = vcmp.le.f32.partialorder %v6269, 0.7853982
      %vm6271 = vcmp.lt.s32.totalorder %v976, 0
      %v6272 = vand.u32 %v976, 2139095040
      %v6273 = vshrl.u32 %v6272, 23
      %v6274 = vsub.s32 %v6273, 127
      %v6275 = vand.u32 2147483647, %v976
      %v6276 = vand.u32 %v6275, 8388607
      %v6277 = vor.u32 %v6276, 8388608
      %v6278 = vsub.s32 0, %v6277
      %v6279 = vadd.s32 %v6274, 1
      %vm6280 = vcmp.gt.s32.totalorder %v6279, 0
      %v6281 = vsel %vm6280, %v6279, 0
      %v6282 = vshrl.u32 %v6281, 5
      %v6283 = vand.u32 %v6281, 31
      %v6284 = vsub.s32 32, %v6283
      %v6285 = vshrl.u32 683565275, %v6284
      %v6286 = vshll.u32 683565275, %v6283
      %v6287 = vshrl.u32 2475754826, %v6284
      %v6288 = vor.u32 %v6286, %v6287
      %v6289 = vshll.u32 2475754826, %v6283
      %v6290 = vshrl.u32 2131351028, %v6284
      %v6291 = vor.u32 %v6289, %v6290
      %v6292 = vshll.u32 2131351028, %v6283
      %v6293 = vshrl.u32 2102212464, %v6284
      %v6294 = vor.u32 %v6292, %v6293
      %v6295 = vshll.u32 2102212464, %v6283
      %v6296 = vshrl.u32 920167782, %v6284
      %v6297 = vor.u32 %v6295, %v6296
      %v6298 = vshll.u32 920167782, %v6283
      %v6299 = vshrl.u32 1326507024, %v6284
      %v6300 = vor.u32 %v6298, %v6299
      %vm6301 = vcmp.lt.s32.totalorder %v6282, 1
      %vm6302 = vcmp.lt.s32.totalorder %v6282, 2
      %vm6303 = vcmp.lt.s32.totalorder %v6282, 3
      %vm6304 = vcmp.lt.s32.totalorder %v6282, 4
      %v6305 = vsel %vm6301, %v6285, %v6288
      %v6306 = vsel %vm6304, %v6294, 2102212464
      %v6307 = vsel %vm6303, %v6291, %v6306
      %v6308 = vsel %vm6302, %v6305, %v6307
      %v6309 = vsel %vm6301, %v6288, %v6291
      %v6310 = vsel %vm6304, %v6297, 920167782
      %v6311 = vsel %vm6303, %v6294, %v6310
      %v6312 = vsel %vm6302, %v6309, %v6311
      %v6313 = vsel %vm6301, %v6291, %v6294
      %v6314 = vsel %vm6304, %v6300, 1326507024
      %v6315 = vsel %vm6303, %v6297, %v6314
      %v6316 = vsel %vm6302, %v6313, %v6315
      %v6317 = vshll.u32 %v6277, 8
      %v6318 = vmul.u32.u64.compose %v6317, %v6316
      %v6319 = vextract.low.u32 %v6318
      %v6320 = vextract.high.u32 %v6318
      %v6321 = vmul.u32.u64.compose %v6317, %v6312
      %v6322 = vextract.low.u32 %v6321
      %v6323 = vextract.high.u32 %v6321
      %v6324 = vmul.u32 %v6317, %v6308
      %v6325 = vadd.s32 %v6320, %v6322
      %vm6326 = vc.u32 %v6320, %v6322
      %v6327 = vadd.s32 %v6323, 1
      %v6328 = vsel %vm6326, %v6327, %v6323
      %v6329 = vadd.s32 %v6324, %v6328
      %v6330 = vadd.s32 %v6329, 536870912
      %v6331 = vshrl.u32 %v6330, 30
      %v6332 = vshll.u32 %v6331, 30
      %v6333 = vsub.s32 %v6329, %v6332
      %vm6334 = vcmp.lt.s32.totalorder %v6333, 0
      %v6335 = vsub.s32 0, %v6333
      %v6336 = vsel %vm6334, %v6335, %v6333
      %v6337 = vclz %v6336
      %v6338 = vsub.s32 %v6337, 2
      %vm6339 = vcmp.gt.s32.totalorder 0, %v6338
      %v6340 = vsel %vm6339, 0, %v6338
      %v6341 = vsub.s32 32, %v6340
      %v6342 = vshll.u32 %v6333, %v6340
      %v6343 = vshrl.u32 %v6325, %v6341
      %v6344 = vor.u32 %v6342, %v6343
      %v6345 = vsub.s32 4294967266, %v6340
      %v6346 = vadd.s32 %v6345, 127
      %v6347 = vshll.u32 %v6346, 23
      %v6348 = vor.u32 4788187, %v6347
      %v6349 = vand.u32 2147483647, %v6348
      %v6351 = vcvt.s32.f32 %v6344
      %v6352 = vmul.f32 %v6351, %v6349
      %v6353 = vxor.u32 %v6352, 2147483648
      %v6354 = vsel %vm6271, %v6353, %v6352
      %v6355 = vsub.s32 4, %v6331
      %v6356 = vsel %vm6271, %v6355, %v6331
      %v6357 = vsel %vm6270, %v976, %v6354
      %v6358 = vsel %vm6270, 0, %v6356
      %v6359 = vcosq.f32.pop %v6357
      %v6360 = vsinq.f32.pop %v6357
      %vm6361 = vweird.f32 %v976
      %v6362 = vadd.s32 %v6358, 3
      %v6363 = vand.u32 %v6362, 3
      %vm6364 = vcmp.lt.s32.totalorder %v6363, 2
      %vm6365 = vcmp.eq.s32.totalorder %v6363, 0
      %v6366 = vxor.u32 %v6360, 2147483648
      %v6367 = vsel %vm6365, %v6359, %v6366
      %vm6368 = vcmp.eq.s32.totalorder %v6363, 2
      %v6369 = vxor.u32 %v6359, 2147483648
      %v6370 = vsel %vm6368, %v6369, %v6360
      %v6371 = vsel %vm6364, %v6367, %v6370
      %v6372 = vsel %vm6361, nan, %v6371
      %v6373 = vand.u32 2147483647, %v1117
      %vm6374 = vcmp.le.f32.partialorder %v6373, 0.7853982
      %vm6375 = vcmp.lt.s32.totalorder %v1117, 0
      %v6376 = vand.u32 %v1117, 2139095040
      %v6377 = vshrl.u32 %v6376, 23
      %v6378 = vsub.s32 %v6377, 127
      %v6379 = vand.u32 2147483647, %v1117
      %v6380 = vand.u32 %v6379, 8388607
      %v6381 = vor.u32 %v6380, 8388608
      %v6382 = vsub.s32 0, %v6381
      %v6383 = vadd.s32 %v6378, 1
      %vm6384 = vcmp.gt.s32.totalorder %v6383, 0
      %v6385 = vsel %vm6384, %v6383, 0
      %v6386 = vshrl.u32 %v6385, 5
      %v6387 = vand.u32 %v6385, 31
      %v6388 = vsub.s32 32, %v6387
      %v6389 = vshrl.u32 683565275, %v6388
      %v6390 = vshll.u32 683565275, %v6387
      %v6391 = vshrl.u32 2475754826, %v6388
      %v6392 = vor.u32 %v6390, %v6391
      %v6393 = vshll.u32 2475754826, %v6387
      %v6394 = vshrl.u32 2131351028, %v6388
      %v6395 = vor.u32 %v6393, %v6394
      %v6396 = vshll.u32 2131351028, %v6387
      %v6397 = vshrl.u32 2102212464, %v6388
      %v6398 = vor.u32 %v6396, %v6397
      %v6399 = vshll.u32 2102212464, %v6387
      %v6400 = vshrl.u32 920167782, %v6388
      %v6401 = vor.u32 %v6399, %v6400
      %v6402 = vshll.u32 920167782, %v6387
      %v6403 = vshrl.u32 1326507024, %v6388
      %v6404 = vor.u32 %v6402, %v6403
      %vm6405 = vcmp.lt.s32.totalorder %v6386, 1
      %vm6406 = vcmp.lt.s32.totalorder %v6386, 2
      %vm6407 = vcmp.lt.s32.totalorder %v6386, 3
      %vm6408 = vcmp.lt.s32.totalorder %v6386, 4
      %v6409 = vsel %vm6405, %v6389, %v6392
      %v6410 = vsel %vm6408, %v6398, 2102212464
      %v6411 = vsel %vm6407, %v6395, %v6410
      %v6412 = vsel %vm6406, %v6409, %v6411
      %v6413 = vsel %vm6405, %v6392, %v6395
      %v6414 = vsel %vm6408, %v6401, 920167782
      %v6415 = vsel %vm6407, %v6398, %v6414
      %v6416 = vsel %vm6406, %v6413, %v6415
      %v6417 = vsel %vm6405, %v6395, %v6398
      %v6418 = vsel %vm6408, %v6404, 1326507024
      %v6419 = vsel %vm6407, %v6401, %v6418
      %v6420 = vsel %vm6406, %v6417, %v6419
      %v6421 = vshll.u32 %v6381, 8
      %v6422 = vmul.u32.u64.compose %v6421, %v6420
      %v6423 = vextract.low.u32 %v6422
      %v6424 = vextract.high.u32 %v6422
      %v6425 = vmul.u32.u64.compose %v6421, %v6416
      %v6426 = vextract.low.u32 %v6425
      %v6427 = vextract.high.u32 %v6425
      %v6428 = vmul.u32 %v6421, %v6412
      %v6429 = vadd.s32 %v6424, %v6426
      %vm6430 = vc.u32 %v6424, %v6426
      %v6431 = vadd.s32 %v6427, 1
      %v6432 = vsel %vm6430, %v6431, %v6427
      %v6433 = vadd.s32 %v6428, %v6432
      %v6434 = vadd.s32 %v6433, 536870912
      %v6435 = vshrl.u32 %v6434, 30
      %v6436 = vshll.u32 %v6435, 30
      %v6437 = vsub.s32 %v6433, %v6436
      %vm6438 = vcmp.lt.s32.totalorder %v6437, 0
      %v6439 = vsub.s32 0, %v6437
      %v6440 = vsel %vm6438, %v6439, %v6437
      %v6441 = vclz %v6440
      %v6442 = vsub.s32 %v6441, 2
      %vm6443 = vcmp.gt.s32.totalorder 0, %v6442
      %v6444 = vsel %vm6443, 0, %v6442
      %v6445 = vsub.s32 32, %v6444
      %v6446 = vshll.u32 %v6437, %v6444
      %v6447 = vshrl.u32 %v6429, %v6445
      %v6448 = vor.u32 %v6446, %v6447
      %v6449 = vsub.s32 4294967266, %v6444
      %v6450 = vadd.s32 %v6449, 127
      %v6451 = vshll.u32 %v6450, 23
      %v6452 = vor.u32 4788187, %v6451
      %v6453 = vand.u32 2147483647, %v6452
      %v6455 = vcvt.s32.f32 %v6448
      %v6456 = vmul.f32 %v6455, %v6453
      %v6457 = vxor.u32 %v6456, 2147483648
      %v6458 = vsel %vm6375, %v6457, %v6456
      %v6459 = vsub.s32 4, %v6435
      %v6460 = vsel %vm6375, %v6459, %v6435
      %v6461 = vsel %vm6374, %v1117, %v6458
      %v6462 = vsel %vm6374, 0, %v6460
      %v6463 = vcosq.f32.pop %v6461
      %v6464 = vsinq.f32.pop %v6461
      %vm6465 = vweird.f32 %v1117
      %v6466 = vadd.s32 %v6462, 3
      %v6467 = vand.u32 %v6466, 3
      %vm6468 = vcmp.lt.s32.totalorder %v6467, 2
      %vm6469 = vcmp.eq.s32.totalorder %v6467, 0
      %v6470 = vxor.u32 %v6464, 2147483648
      %v6471 = vsel %vm6469, %v6463, %v6470
      %vm6472 = vcmp.eq.s32.totalorder %v6467, 2
      %v6473 = vxor.u32 %v6463, 2147483648
      %v6474 = vsel %vm6472, %v6473, %v6464
      %v6475 = vsel %vm6468, %v6471, %v6474
      %v6476 = vsel %vm6465, nan, %v6475
      %v6477 = vand.u32 2147483647, %v1119
      %vm6478 = vcmp.le.f32.partialorder %v6477, 0.7853982
      %vm6479 = vcmp.lt.s32.totalorder %v1119, 0
      %v6480 = vand.u32 %v1119, 2139095040
      %v6481 = vshrl.u32 %v6480, 23
      %v6482 = vsub.s32 %v6481, 127
      %v6483 = vand.u32 2147483647, %v1119
      %v6484 = vand.u32 %v6483, 8388607
      %v6485 = vor.u32 %v6484, 8388608
      %v6486 = vsub.s32 0, %v6485
      %v6487 = vadd.s32 %v6482, 1
      %vm6488 = vcmp.gt.s32.totalorder %v6487, 0
      %v6489 = vsel %vm6488, %v6487, 0
      %v6490 = vshrl.u32 %v6489, 5
      %v6491 = vand.u32 %v6489, 31
      %v6492 = vsub.s32 32, %v6491
      %v6493 = vshrl.u32 683565275, %v6492
      %v6494 = vshll.u32 683565275, %v6491
      %v6495 = vshrl.u32 2475754826, %v6492
      %v6496 = vor.u32 %v6494, %v6495
      %v6497 = vshll.u32 2475754826, %v6491
      %v6498 = vshrl.u32 2131351028, %v6492
      %v6499 = vor.u32 %v6497, %v6498
      %v6500 = vshll.u32 2131351028, %v6491
      %v6501 = vshrl.u32 2102212464, %v6492
      %v6502 = vor.u32 %v6500, %v6501
      %v6503 = vshll.u32 2102212464, %v6491
      %v6504 = vshrl.u32 920167782, %v6492
      %v6505 = vor.u32 %v6503, %v6504
      %v6506 = vshll.u32 920167782, %v6491
      %v6507 = vshrl.u32 1326507024, %v6492
      %v6508 = vor.u32 %v6506, %v6507
      %vm6509 = vcmp.lt.s32.totalorder %v6490, 1
      %vm6510 = vcmp.lt.s32.totalorder %v6490, 2
      %vm6511 = vcmp.lt.s32.totalorder %v6490, 3
      %vm6512 = vcmp.lt.s32.totalorder %v6490, 4
      %v6513 = vsel %vm6509, %v6493, %v6496
      %v6514 = vsel %vm6512, %v6502, 2102212464
      %v6515 = vsel %vm6511, %v6499, %v6514
      %v6516 = vsel %vm6510, %v6513, %v6515
      %v6517 = vsel %vm6509, %v6496, %v6499
      %v6518 = vsel %vm6512, %v6505, 920167782
      %v6519 = vsel %vm6511, %v6502, %v6518
      %v6520 = vsel %vm6510, %v6517, %v6519
      %v6521 = vsel %vm6509, %v6499, %v6502
      %v6522 = vsel %vm6512, %v6508, 1326507024
      %v6523 = vsel %vm6511, %v6505, %v6522
      %v6524 = vsel %vm6510, %v6521, %v6523
      %v6525 = vshll.u32 %v6485, 8
      %v6526 = vmul.u32.u64.compose %v6525, %v6524
      %v6527 = vextract.low.u32 %v6526
      %v6528 = vextract.high.u32 %v6526
      %v6529 = vmul.u32.u64.compose %v6525, %v6520
      %v6530 = vextract.low.u32 %v6529
      %v6531 = vextract.high.u32 %v6529
      %v6532 = vmul.u32 %v6525, %v6516
      %v6533 = vadd.s32 %v6528, %v6530
      %vm6534 = vc.u32 %v6528, %v6530
      %v6535 = vadd.s32 %v6531, 1
      %v6536 = vsel %vm6534, %v6535, %v6531
      %v6537 = vadd.s32 %v6532, %v6536
      %v6538 = vadd.s32 %v6537, 536870912
      %v6539 = vshrl.u32 %v6538, 30
      %v6540 = vshll.u32 %v6539, 30
      %v6541 = vsub.s32 %v6537, %v6540
      %vm6542 = vcmp.lt.s32.totalorder %v6541, 0
      %v6543 = vsub.s32 0, %v6541
      %v6544 = vsel %vm6542, %v6543, %v6541
      %v6545 = vclz %v6544
      %v6546 = vsub.s32 %v6545, 2
      %vm6547 = vcmp.gt.s32.totalorder 0, %v6546
      %v6548 = vsel %vm6547, 0, %v6546
      %v6549 = vsub.s32 32, %v6548
      %v6550 = vshll.u32 %v6541, %v6548
      %v6551 = vshrl.u32 %v6533, %v6549
      %v6552 = vor.u32 %v6550, %v6551
      %v6553 = vsub.s32 4294967266, %v6548
      %v6554 = vadd.s32 %v6553, 127
      %v6555 = vshll.u32 %v6554, 23
      %v6556 = vor.u32 4788187, %v6555
      %v6557 = vand.u32 2147483647, %v6556
      %v6559 = vcvt.s32.f32 %v6552
      %v6560 = vmul.f32 %v6559, %v6557
      %v6561 = vxor.u32 %v6560, 2147483648
      %v6562 = vsel %vm6479, %v6561, %v6560
      %v6563 = vsub.s32 4, %v6539
      %v6564 = vsel %vm6479, %v6563, %v6539
      %v6565 = vsel %vm6478, %v1119, %v6562
      %v6566 = vsel %vm6478, 0, %v6564
      %v6567 = vcosq.f32.pop %v6565
      %v6568 = vsinq.f32.pop %v6565
      %vm6569 = vweird.f32 %v1119
      %v6570 = vadd.s32 %v6566, 3
      %v6571 = vand.u32 %v6570, 3
      %vm6572 = vcmp.lt.s32.totalorder %v6571, 2
      %vm6573 = vcmp.eq.s32.totalorder %v6571, 0
      %v6574 = vxor.u32 %v6568, 2147483648
      %v6575 = vsel %vm6573, %v6567, %v6574
      %vm6576 = vcmp.eq.s32.totalorder %v6571, 2
      %v6577 = vxor.u32 %v6567, 2147483648
      %v6578 = vsel %vm6576, %v6577, %v6568
      %v6579 = vsel %vm6572, %v6575, %v6578
      %v6580 = vsel %vm6569, nan, %v6579
      %v6581 = vand.u32 2147483647, %v694
      %vm6582 = vcmp.le.f32.partialorder %v6581, 0.7853982
      %vm6583 = vcmp.lt.s32.totalorder %v694, 0
      %v6584 = vand.u32 %v694, 2139095040
      %v6585 = vshrl.u32 %v6584, 23
      %v6586 = vsub.s32 %v6585, 127
      %v6587 = vand.u32 2147483647, %v694
      %v6588 = vand.u32 %v6587, 8388607
      %v6589 = vor.u32 %v6588, 8388608
      %v6590 = vsub.s32 0, %v6589
      %v6591 = vadd.s32 %v6586, 1
      %vm6592 = vcmp.gt.s32.totalorder %v6591, 0
      %v6593 = vsel %vm6592, %v6591, 0
      %v6594 = vshrl.u32 %v6593, 5
      %v6595 = vand.u32 %v6593, 31
      %v6596 = vsub.s32 32, %v6595
      %v6597 = vshrl.u32 683565275, %v6596
      %v6598 = vshll.u32 683565275, %v6595
      %v6599 = vshrl.u32 2475754826, %v6596
      %v6600 = vor.u32 %v6598, %v6599
      %v6601 = vshll.u32 2475754826, %v6595
      %v6602 = vshrl.u32 2131351028, %v6596
      %v6603 = vor.u32 %v6601, %v6602
      %v6604 = vshll.u32 2131351028, %v6595
      %v6605 = vshrl.u32 2102212464, %v6596
      %v6606 = vor.u32 %v6604, %v6605
      %v6607 = vshll.u32 2102212464, %v6595
      %v6608 = vshrl.u32 920167782, %v6596
      %v6609 = vor.u32 %v6607, %v6608
      %v6610 = vshll.u32 920167782, %v6595
      %v6611 = vshrl.u32 1326507024, %v6596
      %v6612 = vor.u32 %v6610, %v6611
      %vm6613 = vcmp.lt.s32.totalorder %v6594, 1
      %vm6614 = vcmp.lt.s32.totalorder %v6594, 2
      %vm6615 = vcmp.lt.s32.totalorder %v6594, 3
      %vm6616 = vcmp.lt.s32.totalorder %v6594, 4
      %v6617 = vsel %vm6613, %v6597, %v6600
      %v6618 = vsel %vm6616, %v6606, 2102212464
      %v6619 = vsel %vm6615, %v6603, %v6618
      %v6620 = vsel %vm6614, %v6617, %v6619
      %v6621 = vsel %vm6613, %v6600, %v6603
      %v6622 = vsel %vm6616, %v6609, 920167782
      %v6623 = vsel %vm6615, %v6606, %v6622
      %v6624 = vsel %vm6614, %v6621, %v6623
      %v6625 = vsel %vm6613, %v6603, %v6606
      %v6626 = vsel %vm6616, %v6612, 1326507024
      %v6627 = vsel %vm6615, %v6609, %v6626
      %v6628 = vsel %vm6614, %v6625, %v6627
      %v6629 = vshll.u32 %v6589, 8
      %v6630 = vmul.u32.u64.compose %v6629, %v6628
      %v6631 = vextract.low.u32 %v6630
      %v6632 = vextract.high.u32 %v6630
      %v6633 = vmul.u32.u64.compose %v6629, %v6624
      %v6634 = vextract.low.u32 %v6633
      %v6635 = vextract.high.u32 %v6633
      %v6636 = vmul.u32 %v6629, %v6620
      %v6637 = vadd.s32 %v6632, %v6634
      %vm6638 = vc.u32 %v6632, %v6634
      %v6639 = vadd.s32 %v6635, 1
      %v6640 = vsel %vm6638, %v6639, %v6635
      %v6641 = vadd.s32 %v6636, %v6640
      %v6642 = vadd.s32 %v6641, 536870912
      %v6643 = vshrl.u32 %v6642, 30
      %v6644 = vshll.u32 %v6643, 30
      %v6645 = vsub.s32 %v6641, %v6644
      %vm6646 = vcmp.lt.s32.totalorder %v6645, 0
      %v6647 = vsub.s32 0, %v6645
      %v6648 = vsel %vm6646, %v6647, %v6645
      %v6649 = vclz %v6648
      %v6650 = vsub.s32 %v6649, 2
      %vm6651 = vcmp.gt.s32.totalorder 0, %v6650
      %v6652 = vsel %vm6651, 0, %v6650
      %v6653 = vsub.s32 32, %v6652
      %v6654 = vshll.u32 %v6645, %v6652
      %v6655 = vshrl.u32 %v6637, %v6653
      %v6656 = vor.u32 %v6654, %v6655
      %v6657 = vsub.s32 4294967266, %v6652
      %v6658 = vadd.s32 %v6657, 127
      %v6659 = vshll.u32 %v6658, 23
      %v6660 = vor.u32 4788187, %v6659
      %v6661 = vand.u32 2147483647, %v6660
      %v6663 = vcvt.s32.f32 %v6656
      %v6664 = vmul.f32 %v6663, %v6661
      %v6665 = vxor.u32 %v6664, 2147483648
      %v6666 = vsel %vm6583, %v6665, %v6664
      %v6667 = vsub.s32 4, %v6643
      %v6668 = vsel %vm6583, %v6667, %v6643
      %v6669 = vsel %vm6582, %v694, %v6666
      %v6670 = vsel %vm6582, 0, %v6668
      %v6671 = vcosq.f32.pop %v6669
      %v6672 = vsinq.f32.pop %v6669
      %vm6673 = vweird.f32 %v694
      %v6674 = vadd.s32 %v6670, 3
      %v6675 = vand.u32 %v6674, 3
      %vm6676 = vcmp.lt.s32.totalorder %v6675, 2
      %vm6677 = vcmp.eq.s32.totalorder %v6675, 0
      %v6678 = vxor.u32 %v6672, 2147483648
      %v6679 = vsel %vm6677, %v6671, %v6678
      %vm6680 = vcmp.eq.s32.totalorder %v6675, 2
      %v6681 = vxor.u32 %v6671, 2147483648
      %v6682 = vsel %vm6680, %v6681, %v6672
      %v6683 = vsel %vm6676, %v6679, %v6682
      %v6684 = vsel %vm6673, nan, %v6683
      %v6685 = vand.u32 2147483647, %v696
      %vm6686 = vcmp.le.f32.partialorder %v6685, 0.7853982
      %vm6687 = vcmp.lt.s32.totalorder %v696, 0
      %v6688 = vand.u32 %v696, 2139095040
      %v6689 = vshrl.u32 %v6688, 23
      %v6690 = vsub.s32 %v6689, 127
      %v6691 = vand.u32 2147483647, %v696
      %v6692 = vand.u32 %v6691, 8388607
      %v6693 = vor.u32 %v6692, 8388608
      %v6694 = vsub.s32 0, %v6693
      %v6695 = vadd.s32 %v6690, 1
      %vm6696 = vcmp.gt.s32.totalorder %v6695, 0
      %v6697 = vsel %vm6696, %v6695, 0
      %v6698 = vshrl.u32 %v6697, 5
      %v6699 = vand.u32 %v6697, 31
      %v6700 = vsub.s32 32, %v6699
      %v6701 = vshrl.u32 683565275, %v6700
      %v6702 = vshll.u32 683565275, %v6699
      %v6703 = vshrl.u32 2475754826, %v6700
      %v6704 = vor.u32 %v6702, %v6703
      %v6705 = vshll.u32 2475754826, %v6699
      %v6706 = vshrl.u32 2131351028, %v6700
      %v6707 = vor.u32 %v6705, %v6706
      %v6708 = vshll.u32 2131351028, %v6699
      %v6709 = vshrl.u32 2102212464, %v6700
      %v6710 = vor.u32 %v6708, %v6709
      %v6711 = vshll.u32 2102212464, %v6699
      %v6712 = vshrl.u32 920167782, %v6700
      %v6713 = vor.u32 %v6711, %v6712
      %v6714 = vshll.u32 920167782, %v6699
      %v6715 = vshrl.u32 1326507024, %v6700
      %v6716 = vor.u32 %v6714, %v6715
      %vm6717 = vcmp.lt.s32.totalorder %v6698, 1
      %vm6718 = vcmp.lt.s32.totalorder %v6698, 2
      %vm6719 = vcmp.lt.s32.totalorder %v6698, 3
      %vm6720 = vcmp.lt.s32.totalorder %v6698, 4
      %v6721 = vsel %vm6717, %v6701, %v6704
      %v6722 = vsel %vm6720, %v6710, 2102212464
      %v6723 = vsel %vm6719, %v6707, %v6722
      %v6724 = vsel %vm6718, %v6721, %v6723
      %v6725 = vsel %vm6717, %v6704, %v6707
      %v6726 = vsel %vm6720, %v6713, 920167782
      %v6727 = vsel %vm6719, %v6710, %v6726
      %v6728 = vsel %vm6718, %v6725, %v6727
      %v6729 = vsel %vm6717, %v6707, %v6710
      %v6730 = vsel %vm6720, %v6716, 1326507024
      %v6731 = vsel %vm6719, %v6713, %v6730
      %v6732 = vsel %vm6718, %v6729, %v6731
      %v6733 = vshll.u32 %v6693, 8
      %v6734 = vmul.u32.u64.compose %v6733, %v6732
      %v6735 = vextract.low.u32 %v6734
      %v6736 = vextract.high.u32 %v6734
      %v6737 = vmul.u32.u64.compose %v6733, %v6728
      %v6738 = vextract.low.u32 %v6737
      %v6739 = vextract.high.u32 %v6737
      %v6740 = vmul.u32 %v6733, %v6724
      %v6741 = vadd.s32 %v6736, %v6738
      %vm6742 = vc.u32 %v6736, %v6738
      %v6743 = vadd.s32 %v6739, 1
      %v6744 = vsel %vm6742, %v6743, %v6739
      %v6745 = vadd.s32 %v6740, %v6744
      %v6746 = vadd.s32 %v6745, 536870912
      %v6747 = vshrl.u32 %v6746, 30
      %v6748 = vshll.u32 %v6747, 30
      %v6749 = vsub.s32 %v6745, %v6748
      %vm6750 = vcmp.lt.s32.totalorder %v6749, 0
      %v6751 = vsub.s32 0, %v6749
      %v6752 = vsel %vm6750, %v6751, %v6749
      %v6753 = vclz %v6752
      %v6754 = vsub.s32 %v6753, 2
      %vm6755 = vcmp.gt.s32.totalorder 0, %v6754
      %v6756 = vsel %vm6755, 0, %v6754
      %v6757 = vsub.s32 32, %v6756
      %v6758 = vshll.u32 %v6749, %v6756
      %v6759 = vshrl.u32 %v6741, %v6757
      %v6760 = vor.u32 %v6758, %v6759
      %v6761 = vsub.s32 4294967266, %v6756
      %v6762 = vadd.s32 %v6761, 127
      %v6763 = vshll.u32 %v6762, 23
      %v6764 = vor.u32 4788187, %v6763
      %v6765 = vand.u32 2147483647, %v6764
      %v6767 = vcvt.s32.f32 %v6760
      %v6768 = vmul.f32 %v6767, %v6765
      %v6769 = vxor.u32 %v6768, 2147483648
      %v6770 = vsel %vm6687, %v6769, %v6768
      %v6771 = vsub.s32 4, %v6747
      %v6772 = vsel %vm6687, %v6771, %v6747
      %v6773 = vsel %vm6686, %v696, %v6770
      %v6774 = vsel %vm6686, 0, %v6772
      %v6775 = vcosq.f32.pop %v6773
      %v6776 = vsinq.f32.pop %v6773
      %vm6777 = vweird.f32 %v696
      %v6778 = vadd.s32 %v6774, 3
      %v6779 = vand.u32 %v6778, 3
      %vm6780 = vcmp.lt.s32.totalorder %v6779, 2
      %vm6781 = vcmp.eq.s32.totalorder %v6779, 0
      %v6782 = vxor.u32 %v6776, 2147483648
      %v6783 = vsel %vm6781, %v6775, %v6782
      %vm6784 = vcmp.eq.s32.totalorder %v6779, 2
      %v6785 = vxor.u32 %v6775, 2147483648
      %v6786 = vsel %vm6784, %v6785, %v6776
      %v6787 = vsel %vm6780, %v6783, %v6786
      %v6788 = vsel %vm6777, nan, %v6787
      %v6789 = vand.u32 2147483647, %v837
      %vm6790 = vcmp.le.f32.partialorder %v6789, 0.7853982
      %vm6791 = vcmp.lt.s32.totalorder %v837, 0
      %v6792 = vand.u32 %v837, 2139095040
      %v6793 = vshrl.u32 %v6792, 23
      %v6794 = vsub.s32 %v6793, 127
      %v6795 = vand.u32 2147483647, %v837
      %v6796 = vand.u32 %v6795, 8388607
      %v6797 = vor.u32 %v6796, 8388608
      %v6798 = vsub.s32 0, %v6797
      %v6799 = vadd.s32 %v6794, 1
      %vm6800 = vcmp.gt.s32.totalorder %v6799, 0
      %v6801 = vsel %vm6800, %v6799, 0
      %v6802 = vshrl.u32 %v6801, 5
      %v6803 = vand.u32 %v6801, 31
      %v6804 = vsub.s32 32, %v6803
      %v6805 = vshrl.u32 683565275, %v6804
      %v6806 = vshll.u32 683565275, %v6803
      %v6807 = vshrl.u32 2475754826, %v6804
      %v6808 = vor.u32 %v6806, %v6807
      %v6809 = vshll.u32 2475754826, %v6803
      %v6810 = vshrl.u32 2131351028, %v6804
      %v6811 = vor.u32 %v6809, %v6810
      %v6812 = vshll.u32 2131351028, %v6803
      %v6813 = vshrl.u32 2102212464, %v6804
      %v6814 = vor.u32 %v6812, %v6813
      %v6815 = vshll.u32 2102212464, %v6803
      %v6816 = vshrl.u32 920167782, %v6804
      %v6817 = vor.u32 %v6815, %v6816
      %v6818 = vshll.u32 920167782, %v6803
      %v6819 = vshrl.u32 1326507024, %v6804
      %v6820 = vor.u32 %v6818, %v6819
      %vm6821 = vcmp.lt.s32.totalorder %v6802, 1
      %vm6822 = vcmp.lt.s32.totalorder %v6802, 2
      %vm6823 = vcmp.lt.s32.totalorder %v6802, 3
      %vm6824 = vcmp.lt.s32.totalorder %v6802, 4
      %v6825 = vsel %vm6821, %v6805, %v6808
      %v6826 = vsel %vm6824, %v6814, 2102212464
      %v6827 = vsel %vm6823, %v6811, %v6826
      %v6828 = vsel %vm6822, %v6825, %v6827
      %v6829 = vsel %vm6821, %v6808, %v6811
      %v6830 = vsel %vm6824, %v6817, 920167782
      %v6831 = vsel %vm6823, %v6814, %v6830
      %v6832 = vsel %vm6822, %v6829, %v6831
      %v6833 = vsel %vm6821, %v6811, %v6814
      %v6834 = vsel %vm6824, %v6820, 1326507024
      %v6835 = vsel %vm6823, %v6817, %v6834
      %v6836 = vsel %vm6822, %v6833, %v6835
      %v6837 = vshll.u32 %v6797, 8
      %v6838 = vmul.u32.u64.compose %v6837, %v6836
      %v6839 = vextract.low.u32 %v6838
      %v6840 = vextract.high.u32 %v6838
      %v6841 = vmul.u32.u64.compose %v6837, %v6832
      %v6842 = vextract.low.u32 %v6841
      %v6843 = vextract.high.u32 %v6841
      %v6844 = vmul.u32 %v6837, %v6828
      %v6845 = vadd.s32 %v6840, %v6842
      %vm6846 = vc.u32 %v6840, %v6842
      %v6847 = vadd.s32 %v6843, 1
      %v6848 = vsel %vm6846, %v6847, %v6843
      %v6849 = vadd.s32 %v6844, %v6848
      %v6850 = vadd.s32 %v6849, 536870912
      %v6851 = vshrl.u32 %v6850, 30
      %v6852 = vshll.u32 %v6851, 30
      %v6853 = vsub.s32 %v6849, %v6852
      %vm6854 = vcmp.lt.s32.totalorder %v6853, 0
      %v6855 = vsub.s32 0, %v6853
      %v6856 = vsel %vm6854, %v6855, %v6853
      %v6857 = vclz %v6856
      %v6858 = vsub.s32 %v6857, 2
      %vm6859 = vcmp.gt.s32.totalorder 0, %v6858
      %v6860 = vsel %vm6859, 0, %v6858
      %v6861 = vsub.s32 32, %v6860
      %v6862 = vshll.u32 %v6853, %v6860
      %v6863 = vshrl.u32 %v6845, %v6861
      %v6864 = vor.u32 %v6862, %v6863
      %v6865 = vsub.s32 4294967266, %v6860
      %v6866 = vadd.s32 %v6865, 127
      %v6867 = vshll.u32 %v6866, 23
      %v6868 = vor.u32 4788187, %v6867
      %v6869 = vand.u32 2147483647, %v6868
      %v6871 = vcvt.s32.f32 %v6864
      %v6872 = vmul.f32 %v6871, %v6869
      %v6873 = vxor.u32 %v6872, 2147483648
      %v6874 = vsel %vm6791, %v6873, %v6872
      %v6875 = vsub.s32 4, %v6851
      %v6876 = vsel %vm6791, %v6875, %v6851
      %v6877 = vsel %vm6790, %v837, %v6874
      %v6878 = vsel %vm6790, 0, %v6876
      %v6879 = vcosq.f32.pop %v6877
      %v6880 = vsinq.f32.pop %v6877
      %vm6881 = vweird.f32 %v837
      %v6882 = vadd.s32 %v6878, 3
      %v6883 = vand.u32 %v6882, 3
      %vm6884 = vcmp.lt.s32.totalorder %v6883, 2
      %vm6885 = vcmp.eq.s32.totalorder %v6883, 0
      %v6886 = vxor.u32 %v6880, 2147483648
      %v6887 = vsel %vm6885, %v6879, %v6886
      %vm6888 = vcmp.eq.s32.totalorder %v6883, 2
      %v6889 = vxor.u32 %v6879, 2147483648
      %v6890 = vsel %vm6888, %v6889, %v6880
      %v6891 = vsel %vm6884, %v6887, %v6890
      %v6892 = vsel %vm6881, nan, %v6891
      %v6893 = vand.u32 2147483647, %v839
      %vm6894 = vcmp.le.f32.partialorder %v6893, 0.7853982
      %vm6895 = vcmp.lt.s32.totalorder %v839, 0
      %v6896 = vand.u32 %v839, 2139095040
      %v6897 = vshrl.u32 %v6896, 23
      %v6898 = vsub.s32 %v6897, 127
      %v6899 = vand.u32 2147483647, %v839
      %v6900 = vand.u32 %v6899, 8388607
      %v6901 = vor.u32 %v6900, 8388608
      %v6902 = vsub.s32 0, %v6901
      %v6903 = vadd.s32 %v6898, 1
      %vm6904 = vcmp.gt.s32.totalorder %v6903, 0
      %v6905 = vsel %vm6904, %v6903, 0
      %v6906 = vshrl.u32 %v6905, 5
      %v6907 = vand.u32 %v6905, 31
      %v6908 = vsub.s32 32, %v6907
      %v6909 = vshrl.u32 683565275, %v6908
      %v6910 = vshll.u32 683565275, %v6907
      %v6911 = vshrl.u32 2475754826, %v6908
      %v6912 = vor.u32 %v6910, %v6911
      %v6913 = vshll.u32 2475754826, %v6907
      %v6914 = vshrl.u32 2131351028, %v6908
      %v6915 = vor.u32 %v6913, %v6914
      %v6916 = vshll.u32 2131351028, %v6907
      %v6917 = vshrl.u32 2102212464, %v6908
      %v6918 = vor.u32 %v6916, %v6917
      %v6919 = vshll.u32 2102212464, %v6907
      %v6920 = vshrl.u32 920167782, %v6908
      %v6921 = vor.u32 %v6919, %v6920
      %v6922 = vshll.u32 920167782, %v6907
      %v6923 = vshrl.u32 1326507024, %v6908
      %v6924 = vor.u32 %v6922, %v6923
      %vm6925 = vcmp.lt.s32.totalorder %v6906, 1
      %vm6926 = vcmp.lt.s32.totalorder %v6906, 2
      %vm6927 = vcmp.lt.s32.totalorder %v6906, 3
      %vm6928 = vcmp.lt.s32.totalorder %v6906, 4
      %v6929 = vsel %vm6925, %v6909, %v6912
      %v6930 = vsel %vm6928, %v6918, 2102212464
      %v6931 = vsel %vm6927, %v6915, %v6930
      %v6932 = vsel %vm6926, %v6929, %v6931
      %v6933 = vsel %vm6925, %v6912, %v6915
      %v6934 = vsel %vm6928, %v6921, 920167782
      %v6935 = vsel %vm6927, %v6918, %v6934
      %v6936 = vsel %vm6926, %v6933, %v6935
      %v6937 = vsel %vm6925, %v6915, %v6918
      %v6938 = vsel %vm6928, %v6924, 1326507024
      %v6939 = vsel %vm6927, %v6921, %v6938
      %v6940 = vsel %vm6926, %v6937, %v6939
      %v6941 = vshll.u32 %v6901, 8
      %v6942 = vmul.u32.u64.compose %v6941, %v6940
      %v6943 = vextract.low.u32 %v6942
      %v6944 = vextract.high.u32 %v6942
      %v6945 = vmul.u32.u64.compose %v6941, %v6936
      %v6946 = vextract.low.u32 %v6945
      %v6947 = vextract.high.u32 %v6945
      %v6948 = vmul.u32 %v6941, %v6932
      %v6949 = vadd.s32 %v6944, %v6946
      %vm6950 = vc.u32 %v6944, %v6946
      %v6951 = vadd.s32 %v6947, 1
      %v6952 = vsel %vm6950, %v6951, %v6947
      %v6953 = vadd.s32 %v6948, %v6952
      %v6954 = vadd.s32 %v6953, 536870912
      %v6955 = vshrl.u32 %v6954, 30
      %v6956 = vshll.u32 %v6955, 30
      %v6957 = vsub.s32 %v6953, %v6956
      %vm6958 = vcmp.lt.s32.totalorder %v6957, 0
      %v6959 = vsub.s32 0, %v6957
      %v6960 = vsel %vm6958, %v6959, %v6957
      %v6961 = vclz %v6960
      %v6962 = vsub.s32 %v6961, 2
      %vm6963 = vcmp.gt.s32.totalorder 0, %v6962
      %v6964 = vsel %vm6963, 0, %v6962
      %v6965 = vsub.s32 32, %v6964
      %v6966 = vshll.u32 %v6957, %v6964
      %v6967 = vshrl.u32 %v6949, %v6965
      %v6968 = vor.u32 %v6966, %v6967
      %v6969 = vsub.s32 4294967266, %v6964
      %v6970 = vadd.s32 %v6969, 127
      %v6971 = vshll.u32 %v6970, 23
      %v6972 = vor.u32 4788187, %v6971
      %v6973 = vand.u32 2147483647, %v6972
      %v6975 = vcvt.s32.f32 %v6968
      %v6976 = vmul.f32 %v6975, %v6973
      %v6977 = vxor.u32 %v6976, 2147483648
      %v6978 = vsel %vm6895, %v6977, %v6976
      %v6979 = vsub.s32 4, %v6955
      %v6980 = vsel %vm6895, %v6979, %v6955
      %v6981 = vsel %vm6894, %v839, %v6978
      %v6982 = vsel %vm6894, 0, %v6980
      %v6983 = vcosq.f32.pop %v6981
      %v6984 = vsinq.f32.pop %v6981
      %vm6985 = vweird.f32 %v839
      %v6986 = vadd.s32 %v6982, 3
      %v6987 = vand.u32 %v6986, 3
      %vm6988 = vcmp.lt.s32.totalorder %v6987, 2
      %vm6989 = vcmp.eq.s32.totalorder %v6987, 0
      %v6990 = vxor.u32 %v6984, 2147483648
      %v6991 = vsel %vm6989, %v6983, %v6990
      %vm6992 = vcmp.eq.s32.totalorder %v6987, 2
      %v6993 = vxor.u32 %v6983, 2147483648
      %v6994 = vsel %vm6992, %v6993, %v6984
      %v6995 = vsel %vm6988, %v6991, %v6994
      %v6996 = vsel %vm6985, nan, %v6995
      %v6997 = vand.u32 2147483647, %v980
      %vm6998 = vcmp.le.f32.partialorder %v6997, 0.7853982
      %vm6999 = vcmp.lt.s32.totalorder %v980, 0
      %v7000 = vand.u32 %v980, 2139095040
      %v7001 = vshrl.u32 %v7000, 23
      %v7002 = vsub.s32 %v7001, 127
      %v7003 = vand.u32 2147483647, %v980
      %v7004 = vand.u32 %v7003, 8388607
      %v7005 = vor.u32 %v7004, 8388608
      %v7006 = vsub.s32 0, %v7005
      %v7007 = vadd.s32 %v7002, 1
      %vm7008 = vcmp.gt.s32.totalorder %v7007, 0
      %v7009 = vsel %vm7008, %v7007, 0
      %v7010 = vshrl.u32 %v7009, 5
      %v7011 = vand.u32 %v7009, 31
      %v7012 = vsub.s32 32, %v7011
      %v7013 = vshrl.u32 683565275, %v7012
      %v7014 = vshll.u32 683565275, %v7011
      %v7015 = vshrl.u32 2475754826, %v7012
      %v7016 = vor.u32 %v7014, %v7015
      %v7017 = vshll.u32 2475754826, %v7011
      %v7018 = vshrl.u32 2131351028, %v7012
      %v7019 = vor.u32 %v7017, %v7018
      %v7020 = vshll.u32 2131351028, %v7011
      %v7021 = vshrl.u32 2102212464, %v7012
      %v7022 = vor.u32 %v7020, %v7021
      %v7023 = vshll.u32 2102212464, %v7011
      %v7024 = vshrl.u32 920167782, %v7012
      %v7025 = vor.u32 %v7023, %v7024
      %v7026 = vshll.u32 920167782, %v7011
      %v7027 = vshrl.u32 1326507024, %v7012
      %v7028 = vor.u32 %v7026, %v7027
      %vm7029 = vcmp.lt.s32.totalorder %v7010, 1
      %vm7030 = vcmp.lt.s32.totalorder %v7010, 2
      %vm7031 = vcmp.lt.s32.totalorder %v7010, 3
      %vm7032 = vcmp.lt.s32.totalorder %v7010, 4
      %v7033 = vsel %vm7029, %v7013, %v7016
      %v7034 = vsel %vm7032, %v7022, 2102212464
      %v7035 = vsel %vm7031, %v7019, %v7034
      %v7036 = vsel %vm7030, %v7033, %v7035
      %v7037 = vsel %vm7029, %v7016, %v7019
      %v7038 = vsel %vm7032, %v7025, 920167782
      %v7039 = vsel %vm7031, %v7022, %v7038
      %v7040 = vsel %vm7030, %v7037, %v7039
      %v7041 = vsel %vm7029, %v7019, %v7022
      %v7042 = vsel %vm7032, %v7028, 1326507024
      %v7043 = vsel %vm7031, %v7025, %v7042
      %v7044 = vsel %vm7030, %v7041, %v7043
      %v7045 = vshll.u32 %v7005, 8
      %v7046 = vmul.u32.u64.compose %v7045, %v7044
      %v7047 = vextract.low.u32 %v7046
      %v7048 = vextract.high.u32 %v7046
      %v7049 = vmul.u32.u64.compose %v7045, %v7040
      %v7050 = vextract.low.u32 %v7049
      %v7051 = vextract.high.u32 %v7049
      %v7052 = vmul.u32 %v7045, %v7036
      %v7053 = vadd.s32 %v7048, %v7050
      %vm7054 = vc.u32 %v7048, %v7050
      %v7055 = vadd.s32 %v7051, 1
      %v7056 = vsel %vm7054, %v7055, %v7051
      %v7057 = vadd.s32 %v7052, %v7056
      %v7058 = vadd.s32 %v7057, 536870912
      %v7059 = vshrl.u32 %v7058, 30
      %v7060 = vshll.u32 %v7059, 30
      %v7061 = vsub.s32 %v7057, %v7060
      %vm7062 = vcmp.lt.s32.totalorder %v7061, 0
      %v7063 = vsub.s32 0, %v7061
      %v7064 = vsel %vm7062, %v7063, %v7061
      %v7065 = vclz %v7064
      %v7066 = vsub.s32 %v7065, 2
      %vm7067 = vcmp.gt.s32.totalorder 0, %v7066
      %v7068 = vsel %vm7067, 0, %v7066
      %v7069 = vsub.s32 32, %v7068
      %v7070 = vshll.u32 %v7061, %v7068
      %v7071 = vshrl.u32 %v7053, %v7069
      %v7072 = vor.u32 %v7070, %v7071
      %v7073 = vsub.s32 4294967266, %v7068
      %v7074 = vadd.s32 %v7073, 127
      %v7075 = vshll.u32 %v7074, 23
      %v7076 = vor.u32 4788187, %v7075
      %v7077 = vand.u32 2147483647, %v7076
      %v7079 = vcvt.s32.f32 %v7072
      %v7080 = vmul.f32 %v7079, %v7077
      %v7081 = vxor.u32 %v7080, 2147483648
      %v7082 = vsel %vm6999, %v7081, %v7080
      %v7083 = vsub.s32 4, %v7059
      %v7084 = vsel %vm6999, %v7083, %v7059
      %v7085 = vsel %vm6998, %v980, %v7082
      %v7086 = vsel %vm6998, 0, %v7084
      %v7087 = vcosq.f32.pop %v7085
      %v7088 = vsinq.f32.pop %v7085
      %vm7089 = vweird.f32 %v980
      %v7090 = vadd.s32 %v7086, 3
      %v7091 = vand.u32 %v7090, 3
      %vm7092 = vcmp.lt.s32.totalorder %v7091, 2
      %vm7093 = vcmp.eq.s32.totalorder %v7091, 0
      %v7094 = vxor.u32 %v7088, 2147483648
      %v7095 = vsel %vm7093, %v7087, %v7094
      %vm7096 = vcmp.eq.s32.totalorder %v7091, 2
      %v7097 = vxor.u32 %v7087, 2147483648
      %v7098 = vsel %vm7096, %v7097, %v7088
      %v7099 = vsel %vm7092, %v7095, %v7098
      %v7100 = vsel %vm7089, nan, %v7099
      %v7101 = vand.u32 2147483647, %v982
      %vm7102 = vcmp.le.f32.partialorder %v7101, 0.7853982
      %vm7103 = vcmp.lt.s32.totalorder %v982, 0
      %v7104 = vand.u32 %v982, 2139095040
      %v7105 = vshrl.u32 %v7104, 23
      %v7106 = vsub.s32 %v7105, 127
      %v7107 = vand.u32 2147483647, %v982
      %v7108 = vand.u32 %v7107, 8388607
      %v7109 = vor.u32 %v7108, 8388608
      %v7110 = vsub.s32 0, %v7109
      %v7111 = vadd.s32 %v7106, 1
      %vm7112 = vcmp.gt.s32.totalorder %v7111, 0
      %v7113 = vsel %vm7112, %v7111, 0
      %v7114 = vshrl.u32 %v7113, 5
      %v7115 = vand.u32 %v7113, 31
      %v7116 = vsub.s32 32, %v7115
      %v7117 = vshrl.u32 683565275, %v7116
      %v7118 = vshll.u32 683565275, %v7115
      %v7119 = vshrl.u32 2475754826, %v7116
      %v7120 = vor.u32 %v7118, %v7119
      %v7121 = vshll.u32 2475754826, %v7115
      %v7122 = vshrl.u32 2131351028, %v7116
      %v7123 = vor.u32 %v7121, %v7122
      %v7124 = vshll.u32 2131351028, %v7115
      %v7125 = vshrl.u32 2102212464, %v7116
      %v7126 = vor.u32 %v7124, %v7125
      %v7127 = vshll.u32 2102212464, %v7115
      %v7128 = vshrl.u32 920167782, %v7116
      %v7129 = vor.u32 %v7127, %v7128
      %v7130 = vshll.u32 920167782, %v7115
      %v7131 = vshrl.u32 1326507024, %v7116
      %v7132 = vor.u32 %v7130, %v7131
      %vm7133 = vcmp.lt.s32.totalorder %v7114, 1
      %vm7134 = vcmp.lt.s32.totalorder %v7114, 2
      %vm7135 = vcmp.lt.s32.totalorder %v7114, 3
      %vm7136 = vcmp.lt.s32.totalorder %v7114, 4
      %v7137 = vsel %vm7133, %v7117, %v7120
      %v7138 = vsel %vm7136, %v7126, 2102212464
      %v7139 = vsel %vm7135, %v7123, %v7138
      %v7140 = vsel %vm7134, %v7137, %v7139
      %v7141 = vsel %vm7133, %v7120, %v7123
      %v7142 = vsel %vm7136, %v7129, 920167782
      %v7143 = vsel %vm7135, %v7126, %v7142
      %v7144 = vsel %vm7134, %v7141, %v7143
      %v7145 = vsel %vm7133, %v7123, %v7126
      %v7146 = vsel %vm7136, %v7132, 1326507024
      %v7147 = vsel %vm7135, %v7129, %v7146
      %v7148 = vsel %vm7134, %v7145, %v7147
      %v7149 = vshll.u32 %v7109, 8
      %v7150 = vmul.u32.u64.compose %v7149, %v7148
      %v7151 = vextract.low.u32 %v7150
      %v7152 = vextract.high.u32 %v7150
      %v7153 = vmul.u32.u64.compose %v7149, %v7144
      %v7154 = vextract.low.u32 %v7153
      %v7155 = vextract.high.u32 %v7153
      %v7156 = vmul.u32 %v7149, %v7140
      %v7157 = vadd.s32 %v7152, %v7154
      %vm7158 = vc.u32 %v7152, %v7154
      %v7159 = vadd.s32 %v7155, 1
      %v7160 = vsel %vm7158, %v7159, %v7155
      %v7161 = vadd.s32 %v7156, %v7160
      %v7162 = vadd.s32 %v7161, 536870912
      %v7163 = vshrl.u32 %v7162, 30
      %v7164 = vshll.u32 %v7163, 30
      %v7165 = vsub.s32 %v7161, %v7164
      %vm7166 = vcmp.lt.s32.totalorder %v7165, 0
      %v7167 = vsub.s32 0, %v7165
      %v7168 = vsel %vm7166, %v7167, %v7165
      %v7169 = vclz %v7168
      %v7170 = vsub.s32 %v7169, 2
      %vm7171 = vcmp.gt.s32.totalorder 0, %v7170
      %v7172 = vsel %vm7171, 0, %v7170
      %v7173 = vsub.s32 32, %v7172
      %v7174 = vshll.u32 %v7165, %v7172
      %v7175 = vshrl.u32 %v7157, %v7173
      %v7176 = vor.u32 %v7174, %v7175
      %v7177 = vsub.s32 4294967266, %v7172
      %v7178 = vadd.s32 %v7177, 127
      %v7179 = vshll.u32 %v7178, 23
      %v7180 = vor.u32 4788187, %v7179
      %v7181 = vand.u32 2147483647, %v7180
      %v7183 = vcvt.s32.f32 %v7176
      %v7184 = vmul.f32 %v7183, %v7181
      %v7185 = vxor.u32 %v7184, 2147483648
      %v7186 = vsel %vm7103, %v7185, %v7184
      %v7187 = vsub.s32 4, %v7163
      %v7188 = vsel %vm7103, %v7187, %v7163
      %v7189 = vsel %vm7102, %v982, %v7186
      %v7190 = vsel %vm7102, 0, %v7188
      %v7191 = vcosq.f32.pop %v7189
      %v7192 = vsinq.f32.pop %v7189
      %vm7193 = vweird.f32 %v982
      %v7194 = vadd.s32 %v7190, 3
      %v7195 = vand.u32 %v7194, 3
      %vm7196 = vcmp.lt.s32.totalorder %v7195, 2
      %vm7197 = vcmp.eq.s32.totalorder %v7195, 0
      %v7198 = vxor.u32 %v7192, 2147483648
      %v7199 = vsel %vm7197, %v7191, %v7198
      %vm7200 = vcmp.eq.s32.totalorder %v7195, 2
      %v7201 = vxor.u32 %v7191, 2147483648
      %v7202 = vsel %vm7200, %v7201, %v7192
      %v7203 = vsel %vm7196, %v7199, %v7202
      %v7204 = vsel %vm7193, nan, %v7203
      %v7205 = vand.u32 2147483647, %v1123
      %vm7206 = vcmp.le.f32.partialorder %v7205, 0.7853982
      %vm7207 = vcmp.lt.s32.totalorder %v1123, 0
      %v7208 = vand.u32 %v1123, 2139095040
      %v7209 = vshrl.u32 %v7208, 23
      %v7210 = vsub.s32 %v7209, 127
      %v7211 = vand.u32 2147483647, %v1123
      %v7212 = vand.u32 %v7211, 8388607
      %v7213 = vor.u32 %v7212, 8388608
      %v7214 = vsub.s32 0, %v7213
      %v7215 = vadd.s32 %v7210, 1
      %vm7216 = vcmp.gt.s32.totalorder %v7215, 0
      %v7217 = vsel %vm7216, %v7215, 0
      %v7218 = vshrl.u32 %v7217, 5
      %v7219 = vand.u32 %v7217, 31
      %v7220 = vsub.s32 32, %v7219
      %v7221 = vshrl.u32 683565275, %v7220
      %v7222 = vshll.u32 683565275, %v7219
      %v7223 = vshrl.u32 2475754826, %v7220
      %v7224 = vor.u32 %v7222, %v7223
      %v7225 = vshll.u32 2475754826, %v7219
      %v7226 = vshrl.u32 2131351028, %v7220
      %v7227 = vor.u32 %v7225, %v7226
      %v7228 = vshll.u32 2131351028, %v7219
      %v7229 = vshrl.u32 2102212464, %v7220
      %v7230 = vor.u32 %v7228, %v7229
      %v7231 = vshll.u32 2102212464, %v7219
      %v7232 = vshrl.u32 920167782, %v7220
      %v7233 = vor.u32 %v7231, %v7232
      %v7234 = vshll.u32 920167782, %v7219
      %v7235 = vshrl.u32 1326507024, %v7220
      %v7236 = vor.u32 %v7234, %v7235
      %vm7237 = vcmp.lt.s32.totalorder %v7218, 1
      %vm7238 = vcmp.lt.s32.totalorder %v7218, 2
      %vm7239 = vcmp.lt.s32.totalorder %v7218, 3
      %vm7240 = vcmp.lt.s32.totalorder %v7218, 4
      %v7241 = vsel %vm7237, %v7221, %v7224
      %v7242 = vsel %vm7240, %v7230, 2102212464
      %v7243 = vsel %vm7239, %v7227, %v7242
      %v7244 = vsel %vm7238, %v7241, %v7243
      %v7245 = vsel %vm7237, %v7224, %v7227
      %v7246 = vsel %vm7240, %v7233, 920167782
      %v7247 = vsel %vm7239, %v7230, %v7246
      %v7248 = vsel %vm7238, %v7245, %v7247
      %v7249 = vsel %vm7237, %v7227, %v7230
      %v7250 = vsel %vm7240, %v7236, 1326507024
      %v7251 = vsel %vm7239, %v7233, %v7250
      %v7252 = vsel %vm7238, %v7249, %v7251
      %v7253 = vshll.u32 %v7213, 8
      %v7254 = vmul.u32.u64.compose %v7253, %v7252
      %v7255 = vextract.low.u32 %v7254
      %v7256 = vextract.high.u32 %v7254
      %v7257 = vmul.u32.u64.compose %v7253, %v7248
      %v7258 = vextract.low.u32 %v7257
      %v7259 = vextract.high.u32 %v7257
      %v7260 = vmul.u32 %v7253, %v7244
      %v7261 = vadd.s32 %v7256, %v7258
      %vm7262 = vc.u32 %v7256, %v7258
      %v7263 = vadd.s32 %v7259, 1
      %v7264 = vsel %vm7262, %v7263, %v7259
      %v7265 = vadd.s32 %v7260, %v7264
      %v7266 = vadd.s32 %v7265, 536870912
      %v7267 = vshrl.u32 %v7266, 30
      %v7268 = vshll.u32 %v7267, 30
      %v7269 = vsub.s32 %v7265, %v7268
      %vm7270 = vcmp.lt.s32.totalorder %v7269, 0
      %v7271 = vsub.s32 0, %v7269
      %v7272 = vsel %vm7270, %v7271, %v7269
      %v7273 = vclz %v7272
      %v7274 = vsub.s32 %v7273, 2
      %vm7275 = vcmp.gt.s32.totalorder 0, %v7274
      %v7276 = vsel %vm7275, 0, %v7274
      %v7277 = vsub.s32 32, %v7276
      %v7278 = vshll.u32 %v7269, %v7276
      %v7279 = vshrl.u32 %v7261, %v7277
      %v7280 = vor.u32 %v7278, %v7279
      %v7281 = vsub.s32 4294967266, %v7276
      %v7282 = vadd.s32 %v7281, 127
      %v7283 = vshll.u32 %v7282, 23
      %v7284 = vor.u32 4788187, %v7283
      %v7285 = vand.u32 2147483647, %v7284
      %v7287 = vcvt.s32.f32 %v7280
      %v7288 = vmul.f32 %v7287, %v7285
      %v7289 = vxor.u32 %v7288, 2147483648
      %v7290 = vsel %vm7207, %v7289, %v7288
      %v7291 = vsub.s32 4, %v7267
      %v7292 = vsel %vm7207, %v7291, %v7267
      %v7293 = vsel %vm7206, %v1123, %v7290
      %v7294 = vsel %vm7206, 0, %v7292
      %v7295 = vcosq.f32.pop %v7293
      %v7296 = vsinq.f32.pop %v7293
      %vm7297 = vweird.f32 %v1123
      %v7298 = vadd.s32 %v7294, 3
      %v7299 = vand.u32 %v7298, 3
      %vm7300 = vcmp.lt.s32.totalorder %v7299, 2
      %vm7301 = vcmp.eq.s32.totalorder %v7299, 0
      %v7302 = vxor.u32 %v7296, 2147483648
      %v7303 = vsel %vm7301, %v7295, %v7302
      %vm7304 = vcmp.eq.s32.totalorder %v7299, 2
      %v7305 = vxor.u32 %v7295, 2147483648
      %v7306 = vsel %vm7304, %v7305, %v7296
      %v7307 = vsel %vm7300, %v7303, %v7306
      %v7308 = vsel %vm7297, nan, %v7307
      %v7309 = vand.u32 2147483647, %v1125
      %vm7310 = vcmp.le.f32.partialorder %v7309, 0.7853982
      %vm7311 = vcmp.lt.s32.totalorder %v1125, 0
      %v7312 = vand.u32 %v1125, 2139095040
      %v7313 = vshrl.u32 %v7312, 23
      %v7314 = vsub.s32 %v7313, 127
      %v7315 = vand.u32 2147483647, %v1125
      %v7316 = vand.u32 %v7315, 8388607
      %v7317 = vor.u32 %v7316, 8388608
      %v7318 = vsub.s32 0, %v7317
      %v7319 = vadd.s32 %v7314, 1
      %vm7320 = vcmp.gt.s32.totalorder %v7319, 0
      %v7321 = vsel %vm7320, %v7319, 0
      %v7322 = vshrl.u32 %v7321, 5
      %v7323 = vand.u32 %v7321, 31
      %v7324 = vsub.s32 32, %v7323
      %v7325 = vshrl.u32 683565275, %v7324
      %v7326 = vshll.u32 683565275, %v7323
      %v7327 = vshrl.u32 2475754826, %v7324
      %v7328 = vor.u32 %v7326, %v7327
      %v7329 = vshll.u32 2475754826, %v7323
      %v7330 = vshrl.u32 2131351028, %v7324
      %v7331 = vor.u32 %v7329, %v7330
      %v7332 = vshll.u32 2131351028, %v7323
      %v7333 = vshrl.u32 2102212464, %v7324
      %v7334 = vor.u32 %v7332, %v7333
      %v7335 = vshll.u32 2102212464, %v7323
      %v7336 = vshrl.u32 920167782, %v7324
      %v7337 = vor.u32 %v7335, %v7336
      %v7338 = vshll.u32 920167782, %v7323
      %v7339 = vshrl.u32 1326507024, %v7324
      %v7340 = vor.u32 %v7338, %v7339
      %vm7341 = vcmp.lt.s32.totalorder %v7322, 1
      %vm7342 = vcmp.lt.s32.totalorder %v7322, 2
      %vm7343 = vcmp.lt.s32.totalorder %v7322, 3
      %vm7344 = vcmp.lt.s32.totalorder %v7322, 4
      %v7345 = vsel %vm7341, %v7325, %v7328
      %v7346 = vsel %vm7344, %v7334, 2102212464
      %v7347 = vsel %vm7343, %v7331, %v7346
      %v7348 = vsel %vm7342, %v7345, %v7347
      %v7349 = vsel %vm7341, %v7328, %v7331
      %v7350 = vsel %vm7344, %v7337, 920167782
      %v7351 = vsel %vm7343, %v7334, %v7350
      %v7352 = vsel %vm7342, %v7349, %v7351
      %v7353 = vsel %vm7341, %v7331, %v7334
      %v7354 = vsel %vm7344, %v7340, 1326507024
      %v7355 = vsel %vm7343, %v7337, %v7354
      %v7356 = vsel %vm7342, %v7353, %v7355
      %v7357 = vshll.u32 %v7317, 8
      %v7358 = vmul.u32.u64.compose %v7357, %v7356
      %v7359 = vextract.low.u32 %v7358
      %v7360 = vextract.high.u32 %v7358
      %v7361 = vmul.u32.u64.compose %v7357, %v7352
      %v7362 = vextract.low.u32 %v7361
      %v7363 = vextract.high.u32 %v7361
      %v7364 = vmul.u32 %v7357, %v7348
      %v7365 = vadd.s32 %v7360, %v7362
      %vm7366 = vc.u32 %v7360, %v7362
      %v7367 = vadd.s32 %v7363, 1
      %v7368 = vsel %vm7366, %v7367, %v7363
      %v7369 = vadd.s32 %v7364, %v7368
      %v7370 = vadd.s32 %v7369, 536870912
      %v7371 = vshrl.u32 %v7370, 30
      %v7372 = vshll.u32 %v7371, 30
      %v7373 = vsub.s32 %v7369, %v7372
      %vm7374 = vcmp.lt.s32.totalorder %v7373, 0
      %v7375 = vsub.s32 0, %v7373
      %v7376 = vsel %vm7374, %v7375, %v7373
      %v7377 = vclz %v7376
      %v7378 = vsub.s32 %v7377, 2
      %vm7379 = vcmp.gt.s32.totalorder 0, %v7378
      %v7380 = vsel %vm7379, 0, %v7378
      %v7381 = vsub.s32 32, %v7380
      %v7382 = vshll.u32 %v7373, %v7380
      %v7383 = vshrl.u32 %v7365, %v7381
      %v7384 = vor.u32 %v7382, %v7383
      %v7385 = vsub.s32 4294967266, %v7380
      %v7386 = vadd.s32 %v7385, 127
      %v7387 = vshll.u32 %v7386, 23
      %v7388 = vor.u32 4788187, %v7387
      %v7389 = vand.u32 2147483647, %v7388
      %v7391 = vcvt.s32.f32 %v7384
      %v7392 = vmul.f32 %v7391, %v7389
      %v7393 = vxor.u32 %v7392, 2147483648
      %v7394 = vsel %vm7311, %v7393, %v7392
      %v7395 = vsub.s32 4, %v7371
      %v7396 = vsel %vm7311, %v7395, %v7371
      %v7397 = vsel %vm7310, %v1125, %v7394
      %v7398 = vsel %vm7310, 0, %v7396
      %v7399 = vcosq.f32.pop %v7397
      %v7400 = vsinq.f32.pop %v7397
      %vm7401 = vweird.f32 %v1125
      %v7402 = vadd.s32 %v7398, 3
      %v7403 = vand.u32 %v7402, 3
      %vm7404 = vcmp.lt.s32.totalorder %v7403, 2
      %vm7405 = vcmp.eq.s32.totalorder %v7403, 0
      %v7406 = vxor.u32 %v7400, 2147483648
      %v7407 = vsel %vm7405, %v7399, %v7406
      %vm7408 = vcmp.eq.s32.totalorder %v7403, 2
      %v7409 = vxor.u32 %v7399, 2147483648
      %v7410 = vsel %vm7408, %v7409, %v7400
      %v7411 = vsel %vm7404, %v7407, %v7410
      %v7412 = vsel %vm7401, nan, %v7411
      %v7413 = vpack.c.bf16 %v6684, %v5852
      %v7414 = vpack.c.bf16 %v6788, %v5956
      %v7415 = vpack.c.bf16 %v6892, %v6060
      %v7416 = vpack.c.bf16 %v6996, %v6164
      %v7417 = vpack.c.bf16 %v7100, %v6268
      %v7418 = vpack.c.bf16 %v7204, %v6372
      %v7419 = vpack.c.bf16 %v7308, %v6476
      %v7420 = vpack.c.bf16 %v7412, %v6580
      %v7425 = vunpack.c.l.b16 %v5745
      %v7426 = vunpack.c.l.b16 %v5746
      %v7427 = vunpack.c.l.b16 %v5747
      %v7428 = vunpack.c.l.b16 %v5748
      %v7429 = vpack.c.b16 %v7426, %v7425
      %v7430 = vpack.c.b16 %v7428, %v7427
      %vm7431 = vcmask 130048
      %v7433 = vsel %vm7431, %v7429, 0
      %v7436 = vsel %vm7431, %v7430, 0
      %7438 = vmatprep.subr.bf16.mxu0 %v7414
      %7439 = vmatpush1.bf16.msra.mxu0 %v7413
      %7440 = vmatprep.subr.bf16.mxu0 0
      %7441 = vmatpush1.bf16.msra.mxu0 0
      %7442 = vmatprep.subr.bf16.mxu0 0
      %7443 = vmatpush1.bf16.msra.mxu0 0
      %7444 = vmatprep.subr.bf16.mxu0 0
      %7445 = vmatpush1.bf16.msra.mxu0 0
      %7446 = vmatprep.subr.bf16.mxu0 0
      %7447 = vmatpush1.bf16.msra.mxu0 0
      %7448 = vmatprep.subr.bf16.mxu0 0
      %7449 = vmatpush1.bf16.msra.mxu0 0
      %7450 = vmatprep.subr.bf16.mxu0 0
      %7451 = vmatpush1.bf16.msra.mxu0 0
      %7452 = vmatprep.subr.bf16.mxu0 0
      %7453 = vmatpush1.bf16.msra.mxu0 0
      %7454 = vmatprep.subr.bf16.mxu0 0
      %7455 = vmatpush1.bf16.msra.mxu0 0
      %7456 = vmatprep.subr.bf16.mxu0 0
      %7457 = vmatpush1.bf16.msra.mxu0 0
      %7458 = vmatprep.subr.bf16.mxu0 0
      %7459 = vmatpush1.bf16.msra.mxu0 0
      %7460 = vmatprep.subr.bf16.mxu0 0
      %7461 = vmatpush1.bf16.msra.mxu0 0
      %7462 = vmatprep.subr.bf16.mxu0 0
      %7463 = vmatpush1.bf16.msra.mxu0 0
      %7464 = vmatprep.subr.bf16.mxu0 0
      %7465 = vmatpush1.bf16.msra.mxu0 0
      %7466 = vmatprep.subr.bf16.mxu0 0
      %7467 = vmatpush1.bf16.msra.mxu0 0
      %7468 = vmatprep.subr.bf16.mxu0 0
      %7469 = vmatpush1.bf16.msra.mxu0 0
      %7470 = vmatprep.mubr.bf16.mxu0 0
      %7471 = vmatmul.mubr.bf16.gmra.mrb[0].mxu0 %v7433
      %v7472 = vpop.f32.mrb[0].mxu0
      %v7473 = vadd.f32 0.0, %v7472
      %v7474 = vpop.f32.mrb[0].mxu0
      %v7475 = vadd.f32 0.0, %v7474
      %v7476 = vpop.f32.mrb[0].mxu0
      %v7477 = vadd.f32 0.0, %v7476
      %v7478 = vpop.f32.mrb[0].mxu0
      %v7479 = vadd.f32 0.0, %v7478
      %7480 = vmatprep.mubr.bf16.mxu0 0
      %7481 = vmatmul.mubr.bf16.gmra.mrb[0].mxu0 %v7436
      %v7482 = vpop.f32.mrb[0].mxu0
      %v7483 = vadd.f32 0.0, %v7482
      %v7484 = vpop.f32.mrb[0].mxu0
      %v7485 = vadd.f32 0.0, %v7484
      %v7486 = vpop.f32.mrb[0].mxu0
      %v7487 = vadd.f32 0.0, %v7486
      %v7488 = vpop.f32.mrb[0].mxu0
      %v7489 = vadd.f32 0.0, %v7488
      %7490 = vdwg.mxu0
      %7491 = vmatprep.subr.bf16.mxu0 %v7416
      %7492 = vmatpush1.bf16.msra.mxu0 %v7415
      %7493 = vmatprep.subr.bf16.mxu0 0
      %7494 = vmatpush1.bf16.msra.mxu0 0
      %7495 = vmatprep.subr.bf16.mxu0 0
      %7496 = vmatpush1.bf16.msra.mxu0 0
      %7497 = vmatprep.subr.bf16.mxu0 0
      %7498 = vmatpush1.bf16.msra.mxu0 0
      %7499 = vmatprep.subr.bf16.mxu0 0
      %7500 = vmatpush1.bf16.msra.mxu0 0
      %7501 = vmatprep.subr.bf16.mxu0 0
      %7502 = vmatpush1.bf16.msra.mxu0 0
      %7503 = vmatprep.subr.bf16.mxu0 0
      %7504 = vmatpush1.bf16.msra.mxu0 0
      %7505 = vmatprep.subr.bf16.mxu0 0
      %7506 = vmatpush1.bf16.msra.mxu0 0
      %7507 = vmatprep.subr.bf16.mxu0 0
      %7508 = vmatpush1.bf16.msra.mxu0 0
      %7509 = vmatprep.subr.bf16.mxu0 0
      %7510 = vmatpush1.bf16.msra.mxu0 0
      %7511 = vmatprep.subr.bf16.mxu0 0
      %7512 = vmatpush1.bf16.msra.mxu0 0
      %7513 = vmatprep.subr.bf16.mxu0 0
      %7514 = vmatpush1.bf16.msra.mxu0 0
      %7515 = vmatprep.subr.bf16.mxu0 0
      %7516 = vmatpush1.bf16.msra.mxu0 0
      %7517 = vmatprep.subr.bf16.mxu0 0
      %7518 = vmatpush1.bf16.msra.mxu0 0
      %7519 = vmatprep.subr.bf16.mxu0 0
      %7520 = vmatpush1.bf16.msra.mxu0 0
      %7521 = vmatprep.subr.bf16.mxu0 0
      %7522 = vmatpush1.bf16.msra.mxu0 0
      %7523 = vmatprep.mubr.bf16.mxu0 0
      %7524 = vmatmul.mubr.bf16.gmra.mrb[0].mxu0 %v7433
      %v7525 = vpop.f32.mrb[0].mxu0
      %v7526 = vadd.f32 0.0, %v7525
      %v7527 = vpop.f32.mrb[0].mxu0
      %v7528 = vadd.f32 0.0, %v7527
      %v7529 = vpop.f32.mrb[0].mxu0
      %v7530 = vadd.f32 0.0, %v7529
      %v7531 = vpop.f32.mrb[0].mxu0
      %v7532 = vadd.f32 0.0, %v7531
      %7533 = vmatprep.mubr.bf16.mxu0 0
      %7534 = vmatmul.mubr.bf16.gmra.mrb[0].mxu0 %v7436
      %v7535 = vpop.f32.mrb[0].mxu0
      %v7536 = vadd.f32 0.0, %v7535
      %v7537 = vpop.f32.mrb[0].mxu0
      %v7538 = vadd.f32 0.0, %v7537
      %v7539 = vpop.f32.mrb[0].mxu0
      %v7540 = vadd.f32 0.0, %v7539
      %v7541 = vpop.f32.mrb[0].mxu0
      %v7542 = vadd.f32 0.0, %v7541
      %7543 = vdwg.mxu0
      %7544 = vmatprep.subr.bf16.mxu0 %v7418
      %7545 = vmatpush1.bf16.msra.mxu0 %v7417
      %7546 = vmatprep.subr.bf16.mxu0 0
      %7547 = vmatpush1.bf16.msra.mxu0 0
      %7548 = vmatprep.subr.bf16.mxu0 0
      %7549 = vmatpush1.bf16.msra.mxu0 0
      %7550 = vmatprep.subr.bf16.mxu0 0
      %7551 = vmatpush1.bf16.msra.mxu0 0
      %7552 = vmatprep.subr.bf16.mxu0 0
      %7553 = vmatpush1.bf16.msra.mxu0 0
      %7554 = vmatprep.subr.bf16.mxu0 0
      %7555 = vmatpush1.bf16.msra.mxu0 0
      %7556 = vmatprep.subr.bf16.mxu0 0
      %7557 = vmatpush1.bf16.msra.mxu0 0
      %7558 = vmatprep.subr.bf16.mxu0 0
      %7559 = vmatpush1.bf16.msra.mxu0 0
      %7560 = vmatprep.subr.bf16.mxu0 0
      %7561 = vmatpush1.bf16.msra.mxu0 0
      %7562 = vmatprep.subr.bf16.mxu0 0
      %7563 = vmatpush1.bf16.msra.mxu0 0
      %7564 = vmatprep.subr.bf16.mxu0 0
      %7565 = vmatpush1.bf16.msra.mxu0 0
      %7566 = vmatprep.subr.bf16.mxu0 0
      %7567 = vmatpush1.bf16.msra.mxu0 0
      %7568 = vmatprep.subr.bf16.mxu0 0
      %7569 = vmatpush1.bf16.msra.mxu0 0
      %7570 = vmatprep.subr.bf16.mxu0 0
      %7571 = vmatpush1.bf16.msra.mxu0 0
      %7572 = vmatprep.subr.bf16.mxu0 0
      %7573 = vmatpush1.bf16.msra.mxu0 0
      %7574 = vmatprep.subr.bf16.mxu0 0
      %7575 = vmatpush1.bf16.msra.mxu0 0
      %7576 = vmatprep.mubr.bf16.mxu0 0
      %7577 = vmatmul.mubr.bf16.gmra.mrb[0].mxu0 %v7433
      %v7578 = vpop.f32.mrb[0].mxu0
      %v7579 = vadd.f32 0.0, %v7578
      %v7580 = vpop.f32.mrb[0].mxu0
      %v7581 = vadd.f32 0.0, %v7580
      %v7582 = vpop.f32.mrb[0].mxu0
      %v7583 = vadd.f32 0.0, %v7582
      %v7584 = vpop.f32.mrb[0].mxu0
      %v7585 = vadd.f32 0.0, %v7584
      %7586 = vmatprep.mubr.bf16.mxu0 0
      %7587 = vmatmul.mubr.bf16.gmra.mrb[0].mxu0 %v7436
      %v7588 = vpop.f32.mrb[0].mxu0
      %v7589 = vadd.f32 0.0, %v7588
      %v7590 = vpop.f32.mrb[0].mxu0
      %v7591 = vadd.f32 0.0, %v7590
      %v7592 = vpop.f32.mrb[0].mxu0
      %v7593 = vadd.f32 0.0, %v7592
      %v7594 = vpop.f32.mrb[0].mxu0
      %v7595 = vadd.f32 0.0, %v7594
      %7596 = vdwg.mxu0
      %7597 = vmatprep.subr.bf16.mxu0 %v7420
      %7598 = vmatpush1.bf16.msra.mxu0 %v7419
      %7599 = vmatprep.subr.bf16.mxu0 0
      %7600 = vmatpush1.bf16.msra.mxu0 0
      %7601 = vmatprep.subr.bf16.mxu0 0
      %7602 = vmatpush1.bf16.msra.mxu0 0
      %7603 = vmatprep.subr.bf16.mxu0 0
      %7604 = vmatpush1.bf16.msra.mxu0 0
      %7605 = vmatprep.subr.bf16.mxu0 0
      %7606 = vmatpush1.bf16.msra.mxu0 0
      %7607 = vmatprep.subr.bf16.mxu0 0
      %7608 = vmatpush1.bf16.msra.mxu0 0
      %7609 = vmatprep.subr.bf16.mxu0 0
      %7610 = vmatpush1.bf16.msra.mxu0 0
      %7611 = vmatprep.subr.bf16.mxu0 0
      %7612 = vmatpush1.bf16.msra.mxu0 0
      %7613 = vmatprep.subr.bf16.mxu0 0
      %7614 = vmatpush1.bf16.msra.mxu0 0
      %7615 = vmatprep.subr.bf16.mxu0 0
      %7616 = vmatpush1.bf16.msra.mxu0 0
      %7617 = vmatprep.subr.bf16.mxu0 0
      %7618 = vmatpush1.bf16.msra.mxu0 0
      %7619 = vmatprep.subr.bf16.mxu0 0
      %7620 = vmatpush1.bf16.msra.mxu0 0
      %7621 = vmatprep.subr.bf16.mxu0 0
      %7622 = vmatpush1.bf16.msra.mxu0 0
      %7623 = vmatprep.subr.bf16.mxu0 0
      %7624 = vmatpush1.bf16.msra.mxu0 0
      %7625 = vmatprep.subr.bf16.mxu0 0
      %7626 = vmatpush1.bf16.msra.mxu0 0
      %7627 = vmatprep.subr.bf16.mxu0 0
      %7628 = vmatpush1.bf16.msra.mxu0 0
      %7629 = vmatprep.mubr.bf16.mxu0 0
      %7630 = vmatmul.mubr.bf16.gmra.mrb[0].mxu0 %v7433
      %v7631 = vpop.f32.mrb[0].mxu0
      %v7632 = vadd.f32 0.0, %v7631
      %v7633 = vpop.f32.mrb[0].mxu0
      %v7634 = vadd.f32 0.0, %v7633
      %v7635 = vpop.f32.mrb[0].mxu0
      %v7636 = vadd.f32 0.0, %v7635
      %v7637 = vpop.f32.mrb[0].mxu0
      %v7638 = vadd.f32 0.0, %v7637
      %7639 = vmatprep.mubr.bf16.mxu0 0
      %7640 = vmatmul.mubr.bf16.gmra.mrb[0].mxu0 %v7436
      %v7641 = vpop.f32.mrb[0].mxu0
      %v7642 = vadd.f32 0.0, %v7641
      %v7643 = vpop.f32.mrb[0].mxu0
      %v7644 = vadd.f32 0.0, %v7643
      %v7645 = vpop.f32.mrb[0].mxu0
      %v7646 = vadd.f32 0.0, %v7645
      %v7647 = vpop.f32.mrb[0].mxu0
      %v7648 = vadd.f32 0.0, %v7647
      %7649 = vdwg.mxu0
      %v7650 = vadd.f32 %v5713, %v7473
      %v7651 = vadd.f32 %v5714, %v7475
      %v7652 = vadd.f32 %v5715, %v7526
      %v7653 = vadd.f32 %v5716, %v7528
      %v7654 = vadd.f32 %v5717, %v7579
      %v7655 = vadd.f32 %v5718, %v7581
      %v7656 = vadd.f32 %v5719, %v7632
      %v7657 = vadd.f32 %v5720, %v7634
      %v7658 = vadd.f32 %v5721, %v7477
      %v7659 = vadd.f32 %v5722, %v7479
      %v7660 = vadd.f32 %v5723, %v7530
      %v7661 = vadd.f32 %v5724, %v7532
      %v7662 = vadd.f32 %v5725, %v7583
      %v7663 = vadd.f32 %v5726, %v7585
      %v7664 = vadd.f32 %v5727, %v7636
      %v7665 = vadd.f32 %v5728, %v7638
      %v7666 = vadd.f32 %v5729, %v7483
      %v7667 = vadd.f32 %v5730, %v7485
      %v7668 = vadd.f32 %v5731, %v7536
      %v7669 = vadd.f32 %v5732, %v7538
      %v7670 = vadd.f32 %v5733, %v7589
      %v7671 = vadd.f32 %v5734, %v7591
      %v7672 = vadd.f32 %v5735, %v7642
      %v7673 = vadd.f32 %v5736, %v7644
      %v7674 = vadd.f32 %v5737, %v7487
      %v7675 = vadd.f32 %v5738, %v7489
      %v7676 = vadd.f32 %v5739, %v7540
      %v7677 = vadd.f32 %v5740, %v7542
      %v7678 = vadd.f32 %v5741, %v7593
      %v7679 = vadd.f32 %v5742, %v7595
      %v7680 = vadd.f32 %v5743, %v7646
      %v7681 = vadd.f32 %v5744, %v7648
      %v7682 = vmax.f32 %v7650, 0.0
      %v7683 = vmax.f32 %v7651, 0.0
      %v7684 = vmax.f32 %v7652, 0.0
      %v7685 = vmax.f32 %v7653, 0.0
      %v7686 = vmax.f32 %v7654, 0.0
      %v7687 = vmax.f32 %v7655, 0.0
      %v7688 = vmax.f32 %v7656, 0.0
      %v7689 = vmax.f32 %v7657, 0.0
      %v7690 = vmax.f32 %v7658, 0.0
      %v7691 = vmax.f32 %v7659, 0.0
      %v7692 = vmax.f32 %v7660, 0.0
      %v7693 = vmax.f32 %v7661, 0.0
      %v7694 = vmax.f32 %v7662, 0.0
      %v7695 = vmax.f32 %v7663, 0.0
      %v7696 = vmax.f32 %v7664, 0.0
      %v7697 = vmax.f32 %v7665, 0.0
      %v7698 = vmax.f32 %v7666, 0.0
      %v7699 = vmax.f32 %v7667, 0.0
      %v7700 = vmax.f32 %v7668, 0.0
      %v7701 = vmax.f32 %v7669, 0.0
      %v7702 = vmax.f32 %v7670, 0.0
      %v7703 = vmax.f32 %v7671, 0.0
      %v7704 = vmax.f32 %v7672, 0.0
      %v7705 = vmax.f32 %v7673, 0.0
      %v7706 = vmax.f32 %v7674, 0.0
      %v7707 = vmax.f32 %v7675, 0.0
      %v7708 = vmax.f32 %v7676, 0.0
      %v7709 = vmax.f32 %v7677, 0.0
      %v7710 = vmax.f32 %v7678, 0.0
      %v7711 = vmax.f32 %v7679, 0.0
      %v7712 = vmax.f32 %v7680, 0.0
      %v7713 = vmax.f32 %v7681, 0.0
      %v7714 = vld [vmem:[%s9] sm:$0x7]
      %v7715 = vld [vmem:[%s10] sm:$0x7]
      %7717 = vset.pattern.permute.xlu0 0
      %7718 = vperm.xlu0 %7717, %v7715
      %v7719 = vpop.permute.xlu0 %7718
      %v7722 = vsel %vm4015, %v7714, 0
      %7724 = vmatprep.subr.mxu0 %v7683
      %7725 = vmatpush1.msra.mxu0 %v7682
      %7726 = vmatprep.subr.mxu0 %v7691
      %7727 = vmatpush1.msra.mxu0 %v7690
      %7728 = vmatprep.subr.mxu0 %v7699
      %7729 = vmatpush1.msra.mxu0 %v7698
      %7730 = vmatprep.subr.mxu0 %v7707
      %7731 = vmatpush1.msra.mxu0 %v7706
      %7732 = vmatprep.subr.mxu0 0.0
      %7733 = vmatpush1.msra.mxu0 0.0
      %7734 = vmatprep.subr.mxu0 0.0
      %7735 = vmatpush1.msra.mxu0 0.0
      %7736 = vmatprep.subr.mxu0 0.0
      %7737 = vmatpush1.msra.mxu0 0.0
      %7738 = vmatprep.subr.mxu0 0.0
      %7739 = vmatpush1.msra.mxu0 0.0
      %7740 = vmatprep.subr.mxu0 0.0
      %7741 = vmatpush1.msra.mxu0 0.0
      %7742 = vmatprep.subr.mxu0 0.0
      %7743 = vmatpush1.msra.mxu0 0.0
      %7744 = vmatprep.subr.mxu0 0.0
      %7745 = vmatpush1.msra.mxu0 0.0
      %7746 = vmatprep.subr.mxu0 0.0
      %7747 = vmatpush1.msra.mxu0 0.0
      %7748 = vmatprep.subr.mxu0 0.0
      %7749 = vmatpush1.msra.mxu0 0.0
      %7750 = vmatprep.subr.mxu0 0.0
      %7751 = vmatpush1.msra.mxu0 0.0
      %7752 = vmatprep.subr.mxu0 0.0
      %7753 = vmatpush1.msra.mxu0 0.0
      %7754 = vmatprep.subr.mxu0 0.0
      %7755 = vmatpush1.msra.mxu0 0.0
      %7756 = vmatprep.subr.mxu0 0.0
      %7757 = vmatpush1.msra.mxu0 0.0
      %7758 = vmatprep.subr.mxu0 0.0
      %7759 = vmatpush1.msra.mxu0 0.0
      %7760 = vmatprep.subr.mxu0 0.0
      %7761 = vmatpush1.msra.mxu0 0.0
      %7762 = vmatprep.subr.mxu0 0.0
      %7763 = vmatpush1.msra.mxu0 0.0
      %7764 = vmatprep.subr.mxu0 0.0
      %7765 = vmatpush1.msra.mxu0 0.0
      %7766 = vmatprep.subr.mxu0 0.0
      %7767 = vmatpush1.msra.mxu0 0.0
      %7768 = vmatprep.subr.mxu0 0.0
      %7769 = vmatpush1.msra.mxu0 0.0
      %7770 = vmatprep.subr.mxu0 0.0
      %7771 = vmatpush1.msra.mxu0 0.0
      %7772 = vmatprep.subr.mxu0 0.0
      %7773 = vmatpush1.msra.mxu0 0.0
      %7774 = vmatprep.subr.mxu0 0.0
      %7775 = vmatpush1.msra.mxu0 0.0
      %7776 = vmatprep.subr.mxu0 0.0
      %7777 = vmatpush1.msra.mxu0 0.0
      %7778 = vmatprep.subr.mxu0 0.0
      %7779 = vmatpush1.msra.mxu0 0.0
      %7780 = vmatprep.subr.mxu0 0.0
      %7781 = vmatpush1.msra.mxu0 0.0
      %7782 = vmatprep.subr.mxu0 0.0
      %7783 = vmatpush1.msra.mxu0 0.0
      %7784 = vmatprep.subr.mxu0 0.0
      %7785 = vmatpush1.msra.mxu0 0.0
      %7786 = vmatprep.subr.mxu0 0.0
      %7787 = vmatpush1.msra.mxu0 0.0
      %7788 = vmatprep.mubr.f32.mxu0 0.0
      %7789 = vmatmul.mubr.f32.gmra.mrb[0].mxu0 %v7722
      %v7790 = vpop.f32.mrb[0].mxu0
      %v7791 = vadd.f32 %v7719, %v7790
      %v7792 = vpop.f32.mrb[0].mxu0
      %v7793 = vadd.f32 %v7719, %v7792
      %7794 = vdwg.mxu0
      %7795 = vmatprep.subr.mxu0 %v7685
      %7796 = vmatpush1.msra.mxu0 %v7684
      %7797 = vmatprep.subr.mxu0 %v7693
      %7798 = vmatpush1.msra.mxu0 %v7692
      %7799 = vmatprep.subr.mxu0 %v7701
      %7800 = vmatpush1.msra.mxu0 %v7700
      %7801 = vmatprep.subr.mxu0 %v7709
      %7802 = vmatpush1.msra.mxu0 %v7708
      %7803 = vmatprep.subr.mxu0 0.0
      %7804 = vmatpush1.msra.mxu0 0.0
      %7805 = vmatprep.subr.mxu0 0.0
      %7806 = vmatpush1.msra.mxu0 0.0
      %7807 = vmatprep.subr.mxu0 0.0
      %7808 = vmatpush1.msra.mxu0 0.0
      %7809 = vmatprep.subr.mxu0 0.0
      %7810 = vmatpush1.msra.mxu0 0.0
      %7811 = vmatprep.subr.mxu0 0.0
      %7812 = vmatpush1.msra.mxu0 0.0
      %7813 = vmatprep.subr.mxu0 0.0
      %7814 = vmatpush1.msra.mxu0 0.0
      %7815 = vmatprep.subr.mxu0 0.0
      %7816 = vmatpush1.msra.mxu0 0.0
      %7817 = vmatprep.subr.mxu0 0.0
      %7818 = vmatpush1.msra.mxu0 0.0
      %7819 = vmatprep.subr.mxu0 0.0
      %7820 = vmatpush1.msra.mxu0 0.0
      %7821 = vmatprep.subr.mxu0 0.0
      %7822 = vmatpush1.msra.mxu0 0.0
      %7823 = vmatprep.subr.mxu0 0.0
      %7824 = vmatpush1.msra.mxu0 0.0
      %7825 = vmatprep.subr.mxu0 0.0
      %7826 = vmatpush1.msra.mxu0 0.0
      %7827 = vmatprep.subr.mxu0 0.0
      %7828 = vmatpush1.msra.mxu0 0.0
      %7829 = vmatprep.subr.mxu0 0.0
      %7830 = vmatpush1.msra.mxu0 0.0
      %7831 = vmatprep.subr.mxu0 0.0
      %7832 = vmatpush1.msra.mxu0 0.0
      %7833 = vmatprep.subr.mxu0 0.0
      %7834 = vmatpush1.msra.mxu0 0.0
      %7835 = vmatprep.subr.mxu0 0.0
      %7836 = vmatpush1.msra.mxu0 0.0
      %7837 = vmatprep.subr.mxu0 0.0
      %7838 = vmatpush1.msra.mxu0 0.0
      %7839 = vmatprep.subr.mxu0 0.0
      %7840 = vmatpush1.msra.mxu0 0.0
      %7841 = vmatprep.subr.mxu0 0.0
      %7842 = vmatpush1.msra.mxu0 0.0
      %7843 = vmatprep.subr.mxu0 0.0
      %7844 = vmatpush1.msra.mxu0 0.0
      %7845 = vmatprep.subr.mxu0 0.0
      %7846 = vmatpush1.msra.mxu0 0.0
      %7847 = vmatprep.subr.mxu0 0.0
      %7848 = vmatpush1.msra.mxu0 0.0
      %7849 = vmatprep.subr.mxu0 0.0
      %7850 = vmatpush1.msra.mxu0 0.0
      %7851 = vmatprep.subr.mxu0 0.0
      %7852 = vmatpush1.msra.mxu0 0.0
      %7853 = vmatprep.subr.mxu0 0.0
      %7854 = vmatpush1.msra.mxu0 0.0
      %7855 = vmatprep.subr.mxu0 0.0
      %7856 = vmatpush1.msra.mxu0 0.0
      %7857 = vmatprep.subr.mxu0 0.0
      %7858 = vmatpush1.msra.mxu0 0.0
      %7859 = vmatprep.mubr.f32.mxu0 0.0
      %7860 = vmatmul.mubr.f32.gmra.mrb[0].mxu0 %v7722
      %v7861 = vpop.f32.mrb[0].mxu0
      %v7862 = vadd.f32 %v7719, %v7861
      %v7863 = vpop.f32.mrb[0].mxu0
      %v7864 = vadd.f32 %v7719, %v7863
      %7865 = vdwg.mxu0
      %7866 = vmatprep.subr.mxu0 %v7687
      %7867 = vmatpush1.msra.mxu0 %v7686
      %7868 = vmatprep.subr.mxu0 %v7695
      %7869 = vmatpush1.msra.mxu0 %v7694
      %7870 = vmatprep.subr.mxu0 %v7703
      %7871 = vmatpush1.msra.mxu0 %v7702
      %7872 = vmatprep.subr.mxu0 %v7711
      %7873 = vmatpush1.msra.mxu0 %v7710
      %7874 = vmatprep.subr.mxu0 0.0
      %7875 = vmatpush1.msra.mxu0 0.0
      %7876 = vmatprep.subr.mxu0 0.0
      %7877 = vmatpush1.msra.mxu0 0.0
      %7878 = vmatprep.subr.mxu0 0.0
      %7879 = vmatpush1.msra.mxu0 0.0
      %7880 = vmatprep.subr.mxu0 0.0
      %7881 = vmatpush1.msra.mxu0 0.0
      %7882 = vmatprep.subr.mxu0 0.0
      %7883 = vmatpush1.msra.mxu0 0.0
      %7884 = vmatprep.subr.mxu0 0.0
      %7885 = vmatpush1.msra.mxu0 0.0
      %7886 = vmatprep.subr.mxu0 0.0
      %7887 = vmatpush1.msra.mxu0 0.0
      %7888 = vmatprep.subr.mxu0 0.0
      %7889 = vmatpush1.msra.mxu0 0.0
      %7890 = vmatprep.subr.mxu0 0.0
      %7891 = vmatpush1.msra.mxu0 0.0
      %7892 = vmatprep.subr.mxu0 0.0
      %7893 = vmatpush1.msra.mxu0 0.0
      %7894 = vmatprep.subr.mxu0 0.0
      %7895 = vmatpush1.msra.mxu0 0.0
      %7896 = vmatprep.subr.mxu0 0.0
      %7897 = vmatpush1.msra.mxu0 0.0
      %7898 = vmatprep.subr.mxu0 0.0
      %7899 = vmatpush1.msra.mxu0 0.0
      %7900 = vmatprep.subr.mxu0 0.0
      %7901 = vmatpush1.msra.mxu0 0.0
      %7902 = vmatprep.subr.mxu0 0.0
      %7903 = vmatpush1.msra.mxu0 0.0
      %7904 = vmatprep.subr.mxu0 0.0
      %7905 = vmatpush1.msra.mxu0 0.0
      %7906 = vmatprep.subr.mxu0 0.0
      %7907 = vmatpush1.msra.mxu0 0.0
      %7908 = vmatprep.subr.mxu0 0.0
      %7909 = vmatpush1.msra.mxu0 0.0
      %7910 = vmatprep.subr.mxu0 0.0
      %7911 = vmatpush1.msra.mxu0 0.0
      %7912 = vmatprep.subr.mxu0 0.0
      %7913 = vmatpush1.msra.mxu0 0.0
      %7914 = vmatprep.subr.mxu0 0.0
      %7915 = vmatpush1.msra.mxu0 0.0
      %7916 = vmatprep.subr.mxu0 0.0
      %7917 = vmatpush1.msra.mxu0 0.0
      %7918 = vmatprep.subr.mxu0 0.0
      %7919 = vmatpush1.msra.mxu0 0.0
      %7920 = vmatprep.subr.mxu0 0.0
      %7921 = vmatpush1.msra.mxu0 0.0
      %7922 = vmatprep.subr.mxu0 0.0
      %7923 = vmatpush1.msra.mxu0 0.0
      %7924 = vmatprep.subr.mxu0 0.0
      %7925 = vmatpush1.msra.mxu0 0.0
      %7926 = vmatprep.subr.mxu0 0.0
      %7927 = vmatpush1.msra.mxu0 0.0
      %7928 = vmatprep.subr.mxu0 0.0
      %7929 = vmatpush1.msra.mxu0 0.0
      %7930 = vmatprep.mubr.f32.mxu0 0.0
      %7931 = vmatmul.mubr.f32.gmra.mrb[0].mxu0 %v7722
      %v7932 = vpop.f32.mrb[0].mxu0
      %v7933 = vadd.f32 %v7719, %v7932
      %v7934 = vpop.f32.mrb[0].mxu0
      %v7935 = vadd.f32 %v7719, %v7934
      %7936 = vdwg.mxu0
      %7937 = vmatprep.subr.mxu0 %v7689
      %7938 = vmatpush1.msra.mxu0 %v7688
      %7939 = vmatprep.subr.mxu0 %v7697
      %7940 = vmatpush1.msra.mxu0 %v7696
      %7941 = vmatprep.subr.mxu0 %v7705
      %7942 = vmatpush1.msra.mxu0 %v7704
      %7943 = vmatprep.subr.mxu0 %v7713
      %7944 = vmatpush1.msra.mxu0 %v7712
      %7945 = vmatprep.subr.mxu0 0.0
      %7946 = vmatpush1.msra.mxu0 0.0
      %7947 = vmatprep.subr.mxu0 0.0
      %7948 = vmatpush1.msra.mxu0 0.0
      %7949 = vmatprep.subr.mxu0 0.0
      %7950 = vmatpush1.msra.mxu0 0.0
      %7951 = vmatprep.subr.mxu0 0.0
      %7952 = vmatpush1.msra.mxu0 0.0
      %7953 = vmatprep.subr.mxu0 0.0
      %7954 = vmatpush1.msra.mxu0 0.0
      %7955 = vmatprep.subr.mxu0 0.0
      %7956 = vmatpush1.msra.mxu0 0.0
      %7957 = vmatprep.subr.mxu0 0.0
      %7958 = vmatpush1.msra.mxu0 0.0
      %7959 = vmatprep.subr.mxu0 0.0
      %7960 = vmatpush1.msra.mxu0 0.0
      %7961 = vmatprep.subr.mxu0 0.0
      %7962 = vmatpush1.msra.mxu0 0.0
      %7963 = vmatprep.subr.mxu0 0.0
      %7964 = vmatpush1.msra.mxu0 0.0
      %7965 = vmatprep.subr.mxu0 0.0
      %7966 = vmatpush1.msra.mxu0 0.0
      %7967 = vmatprep.subr.mxu0 0.0
      %7968 = vmatpush1.msra.mxu0 0.0
      %7969 = vmatprep.subr.mxu0 0.0
      %7970 = vmatpush1.msra.mxu0 0.0
      %7971 = vmatprep.subr.mxu0 0.0
      %7972 = vmatpush1.msra.mxu0 0.0
      %7973 = vmatprep.subr.mxu0 0.0
      %7974 = vmatpush1.msra.mxu0 0.0
      %7975 = vmatprep.subr.mxu0 0.0
      %7976 = vmatpush1.msra.mxu0 0.0
      %7977 = vmatprep.subr.mxu0 0.0
      %7978 = vmatpush1.msra.mxu0 0.0
      %7979 = vmatprep.subr.mxu0 0.0
      %7980 = vmatpush1.msra.mxu0 0.0
      %7981 = vmatprep.subr.mxu0 0.0
      %7982 = vmatpush1.msra.mxu0 0.0
      %7983 = vmatprep.subr.mxu0 0.0
      %7984 = vmatpush1.msra.mxu0 0.0
      %7985 = vmatprep.subr.mxu0 0.0
      %7986 = vmatpush1.msra.mxu0 0.0
      %7987 = vmatprep.subr.mxu0 0.0
      %7988 = vmatpush1.msra.mxu0 0.0
      %7989 = vmatprep.subr.mxu0 0.0
      %7990 = vmatpush1.msra.mxu0 0.0
      %7991 = vmatprep.subr.mxu0 0.0
      %7992 = vmatpush1.msra.mxu0 0.0
      %7993 = vmatprep.subr.mxu0 0.0
      %7994 = vmatpush1.msra.mxu0 0.0
      %7995 = vmatprep.subr.mxu0 0.0
      %7996 = vmatpush1.msra.mxu0 0.0
      %7997 = vmatprep.subr.mxu0 0.0
      %7998 = vmatpush1.msra.mxu0 0.0
      %7999 = vmatprep.subr.mxu0 0.0
      %8000 = vmatpush1.msra.mxu0 0.0
      %8001 = vmatprep.mubr.f32.mxu0 0.0
      %8002 = vmatmul.mubr.f32.gmra.mrb[0].mxu0 %v7722
      %v8003 = vpop.f32.mrb[0].mxu0
      %v8004 = vadd.f32 %v7719, %v8003
      %v8005 = vpop.f32.mrb[0].mxu0
      %v8006 = vadd.f32 %v7719, %v8005
      %8007 = vdwg.mxu0
      %v8008 = vxor.u32 %v7791, 2147483648
      %v8009 = vxor.u32 %v7793, 2147483648
      %v8010 = vxor.u32 %v7862, 2147483648
      %v8011 = vxor.u32 %v7864, 2147483648
      %v8012 = vxor.u32 %v7933, 2147483648
      %v8013 = vxor.u32 %v7935, 2147483648
      %v8014 = vxor.u32 %v8004, 2147483648
      %v8015 = vxor.u32 %v8006, 2147483648
      %v8016 = vmul.f32 %v8008, 1.442695
      %v8017 = vpow.pop %v8016
      %v8018 = vmul.f32 %v8009, 1.442695
      %v8019 = vpow.pop %v8018
      %v8020 = vmul.f32 %v8010, 1.442695
      %v8021 = vpow.pop %v8020
      %v8022 = vmul.f32 %v8011, 1.442695
      %v8023 = vpow.pop %v8022
      %v8024 = vmul.f32 %v8012, 1.442695
      %v8025 = vpow.pop %v8024
      %v8026 = vmul.f32 %v8013, 1.442695
      %v8027 = vpow.pop %v8026
      %v8028 = vmul.f32 %v8014, 1.442695
      %v8029 = vpow.pop %v8028
      %v8030 = vmul.f32 %v8015, 1.442695
      %v8031 = vpow.pop %v8030
      %v8032 = vadd.f32 %v8017, 1.0
      %v8033 = vadd.f32 %v8019, 1.0
      %v8034 = vadd.f32 %v8021, 1.0
      %v8035 = vadd.f32 %v8023, 1.0
      %v8036 = vadd.f32 %v8025, 1.0
      %v8037 = vadd.f32 %v8027, 1.0
      %v8038 = vadd.f32 %v8029, 1.0
      %v8039 = vadd.f32 %v8031, 1.0
      %v8040 = vrcp.pop %v8032
      %v8041 = vmul.f32 1.0, %v8040
      %v8042 = vrcp.pop %v8033
      %v8043 = vmul.f32 1.0, %v8042
      %v8044 = vrcp.pop %v8034
      %v8045 = vmul.f32 1.0, %v8044
      %v8046 = vrcp.pop %v8035
      %v8047 = vmul.f32 1.0, %v8046
      %v8048 = vrcp.pop %v8036
      %v8049 = vmul.f32 1.0, %v8048
      %v8050 = vrcp.pop %v8037
      %v8051 = vmul.f32 1.0, %v8050
      %v8052 = vrcp.pop %v8038
      %v8053 = vmul.f32 1.0, %v8052
      %v8054 = vrcp.pop %v8039
      %v8055 = vmul.f32 1.0, %v8054
      %v8064 = vcombine.low %v8041, %v8043
      %v8065 = vcombine.low %v8045, %v8047
      %v8066 = vcombine.low %v8049, %v8051
      %v8067 = vcombine.low %v8053, %v8055
      %8072 = vst [vmem:[%s388] sm:$0x77] %v8064
      %8073 = vst [vmem:[%s388 + $0x8] sm:$0x77] %v8065
      %8074 = vst [vmem:[%s388 + $0x10] sm:$0x77] %v8066
      %8075 = vst [vmem:[%s388 + $0x18] sm:$0x77] %v8067
      %s8076 = smul.u32 8, %s22
      %p8077 = scmp.lt.s32.totalorder %s8076, 15
      %s8078 = scalar_select %p8077, %s8076, 15
      %s8079 = smul.addr %s8078, 4
      %s8080 = scalar_lea.vmem %s11, %s8079
      // Predicated region
      $region65: #{nerf_moe_forward.1} parent=63 // pred_check
        %p8081 = pneg %p276
      $region66: #{nerf_moe_forward.1} parent=63 // pred_check_branch
        %8083 = sbr.rel (%p8081) target = $region68
      $region67: #{nerf_moe_forward.1} parent=63 // pred_region
        %s8084 = smul.u32 8, %s22
      $region68: #{nerf_moe_forward.1} parent=63 // pred_fallthru
        _
    $region64: #{nerf_moe_forward.1} parent=5 // pred_fallthru
      _
    %p8085 = scmp.le.s32.totalorder 2, %s17
    // Predicated region
    $region69: #{nerf_moe_forward.1} parent=5 // pred_check
      %p8086 = pneg %p8085
    $region70: #{nerf_moe_forward.1} parent=5 // pred_check_branch
      %8088 = sbr.rel (%p8086) target = $region72
    $region71: #{nerf_moe_forward.1} parent=5 // pred_region
      %s8089 = ssub.s32 %s17, 2
      // Predicated region
      $region73: #{nerf_moe_forward.1} parent=71 // pred_check
        %p8090 = pneg %p282
      $region74: #{nerf_moe_forward.1} parent=71 // pred_check_branch
        %8092 = sbr.rel (%p8090) target = $region76
      $region75: #{nerf_moe_forward.1} parent=71 // pred_region
        %s8093 = smul.u32 8, %s23
        %p8094 = scmp.lt.s32.totalorder %s8093, 15
        %s8095 = scalar_select %p8094, %s8093, 15
        %s8096 = smul.addr %s8095, 4
        %s8097 = scalar_lea.vmem %s11, %s8096
      $region76: #{nerf_moe_forward.1} parent=71 // pred_fallthru
        _
    $region72: #{nerf_moe_forward.1} parent=5 // pred_fallthru
      _
  $region6: #{nerf_moe_forward.1} parent=0 // loop_footer
    %s21 = sadd.s32 1, %s17
  $region7: #{nerf_moe_forward.1} parent=0 // loop_footer_branch
    %16 = sbr.rel target = $region3
  $region8: #{nerf_moe_forward.1} parent=0 // loop_exit
    _

</llo_original>
